<compile_context>
chip_gen: v7x
topology: tpu7x:2x2x1
jax: 0.10.0
libtpu: 0.0.40
codegen_flags: <defaults>
</compile_context>

<pallas_src>
import functools

import jax
import jax.numpy as jnp
from jax import lax
from jax.experimental import pallas as pl
from jax.experimental.pallas import tpu as pltpu


# ---------------------------------------------------------------------------
# small in-kernel helpers (all lower to VPU / EUP ops)
# ---------------------------------------------------------------------------
def _silu(x):
    return x * jax.nn.sigmoid(x)


def _softplus(x):
    # numerically stable softplus using only exp/log
    return jnp.maximum(x, 0.0) + jnp.log(1.0 + jnp.exp(-jnp.abs(x)))


def _layernorm_withbias(x, w, b):
    # WithBias_LayerNorm: (x - mu) / sqrt(var + 1e-5) * w + b   (var unbiased=False)
    mu = jnp.mean(x, axis=-1, keepdims=True)
    xc = x - mu
    var = jnp.mean(xc * xc, axis=-1, keepdims=True)
    return xc * lax.rsqrt(var + 1e-5) * w + b


# ---------------------------------------------------------------------------
# fused kernel: one batch element per grid step
# ---------------------------------------------------------------------------
def _cross_mamba_kernel(
    t2_ref, t2resi_ref, t1_ref,
    ln1w_ref, ln1b_ref, ln2w_ref, ln2b_ref,
    winx_ref, winz_ref, winb_ref,
    cw_ref, cb_ref, cwb_ref, cbb_ref,
    wdt_ref, bdt_ref, wb_ref, wc_ref,
    at_ref, d_ref,
    wout_ref, bout_ref,
    dww_ref, dwb_ref,
    out_ref, resi_ref,
    dA_s, dBu_s, hall_s,
    *, H, W, d_inner, d_state, d_conv):
    f32 = jnp.float32
    L = H * W
    C = out_ref.shape[-1]

    # ---- residual add + double WithBias LayerNorm (as in the reference forward) ----
    resi = t2_ref[0] + t2resi_ref[0]                        # (L, C)
    resi_ref[0] = resi
    ln1w, ln1b = ln1w_ref[...], ln1b_ref[...]
    ln2w, ln2b = ln2w_ref[...], ln2b_ref[...]
    xm = _layernorm_withbias(_layernorm_withbias(resi, ln1w, ln1b), ln1w, ln1b)
    xe = _layernorm_withbias(_layernorm_withbias(t1_ref[0], ln2w, ln2b), ln2w, ln2b)

    # ---- in-projections (main -> SSM input + gate; extra -> parameter stream) ----
    x_main = jnp.dot(xm, winx_ref[...], preferred_element_type=f32)   # (L, d_inner)
    z      = jnp.dot(xm, winz_ref[...], preferred_element_type=f32)   # (L, d_inner)
    x_ext  = jnp.dot(xe, winb_ref[...], preferred_element_type=f32)   # (L, d_inner)

    # ---- causal depthwise conv1d (kernel d_conv, padding d_conv-1, truncate) ----
    def causal_dwconv(x, w_ref_, b_ref_):
        w = w_ref_[...]                                     # (K, d_inner)
        y = x * w[d_conv - 1:d_conv, :] + b_ref_[...]
        for s in range(1, d_conv):
            shifted = jnp.concatenate(
                [jnp.zeros((s, d_inner), f32), x[:L - s, :]], axis=0)
            y = y + shifted * w[d_conv - 1 - s:d_conv - s, :]
        return y

    u = _silu(causal_dwconv(x_main, cw_ref, cb_ref))        # (L, d_inner)
    v = _silu(causal_dwconv(x_ext, cwb_ref, cbb_ref))       # (L, d_inner)

    # ---- cross-conditioned SSM parameters from the extra stream ----
    dt = _softplus(jnp.dot(v, wdt_ref[...], preferred_element_type=f32)
                   + bdt_ref[...])                          # (L, d_inner)
    bp = jnp.dot(v, wb_ref[...], preferred_element_type=f32)   # (L, d_state)
    cp = jnp.dot(v, wc_ref[...], preferred_element_type=f32)   # (L, d_state)

    # ---- selective scan: precompute per-step operands, then O(L) recurrence ----
    at = at_ref[...]                                        # (d_state, d_inner) = -exp(A_log).T
    dA_s[...]  = jnp.exp(dt[:, None, :] * at[None, :, :])   # (L, ds, di)
    dBu_s[...] = bp[:, :, None] * (dt * u)[:, None, :]      # (L, ds, di)

    def scan_body(t, h):
        h = dA_s[t] * h + dBu_s[t]                          # (ds, di)
        hall_s[t] = h
        return h

    lax.fori_loop(0, L, scan_body, jnp.zeros((d_state, d_inner), f32))

    hall = hall_s[...]                                      # (L, ds, di)
    y = jnp.sum(hall * cp[:, :, None], axis=1)              # (L, d_inner)
    y = y + u * d_ref[...]                                  # D skip connection
    y = y * _silu(z)                                        # gate from main stream
    gf = jnp.dot(y, wout_ref[...], preferred_element_type=f32) + bout_ref[...]   # (L, C)

    # ---- 3x3 depthwise conv2d (padding=1) over the (H, W) grid + residual ----
    g3 = gf.reshape(H, W, C)
    acc = jnp.zeros((H, W, C), f32) + dwb_ref[...].reshape(1, 1, C)
    for dh in (-1, 0, 1):
        if dh == -1:
            xh = jnp.concatenate([jnp.zeros((1, W, C), f32), g3[:H - 1]], axis=0)
        elif dh == 1:
            xh = jnp.concatenate([g3[1:], jnp.zeros((1, W, C), f32)], axis=0)
        else:
            xh = g3
        for dw in (-1, 0, 1):
            if dw == -1:
                xs = jnp.concatenate([jnp.zeros((H, 1, C), f32), xh[:, :W - 1]], axis=1)
            elif dw == 1:
                xs = jnp.concatenate([xh[:, 1:], jnp.zeros((H, 1, C), f32)], axis=1)
            else:
                xs = xh
            idx = (dh + 1) * 3 + (dw + 1)
            tap = dww_ref[idx:idx + 1, :]                   # (1, C)
            acc = acc + xs * tap.reshape(1, 1, C)
    out_ref[0] = acc.reshape(L, C) + gf


# ---------------------------------------------------------------------------
# wrapper
# ---------------------------------------------------------------------------
def cross_mamba_forward(t2, t2_resi, t1, params, H, W):
    """CrossMamba.forward(t2, t2_resi, t1) -> (t2_out, t2_resi_out); all (B, H*W, C)."""
    B, L, C = t2.shape
    assert L == H * W
    f32 = jnp.float32

    d_inner = params["A_log"].shape[0]
    d_state = params["A_log"].shape[1]
    d_conv = params["conv1d_w"].shape[1]
    dt_rank = params["dt_proj_w"].shape[1]

    # ---- exact (linear-algebra only) parameter prep, done once per call ----
    in_w = params["in_proj_w"]                         # (2*d_inner, C)
    winx = in_w[:d_inner].T                            # (C, d_inner)
    winz = in_w[d_inner:].T                            # (C, d_inner)
    winb = params["in_proj_b_w"].T                     # (C, d_inner)
    cw   = params["conv1d_w"].T                        # (K, d_inner)
    cb   = params["conv1d_b"][None]                    # (1, d_inner)
    cwb  = params["conv1d_b_w"].T
    cbb  = params["conv1d_b_b"][None]
    xp   = params["x_proj_w"]                          # (dt_rank + 2*ds, d_inner)
    wdt  = xp[:dt_rank].T @ params["dt_proj_w"].T      # composed low-rank dt proj -> (di, di)
    bdt  = params["dt_proj_b"][None]                   # (1, d_inner)
    wb   = xp[dt_rank:dt_rank + d_state].T             # (d_inner, d_state)
    wc   = xp[dt_rank + d_state:].T                    # (d_inner, d_state)
    at   = -(jnp.exp(params["A_log"])).T               # (d_state, d_inner)
    drow = params["D"][None]                           # (1, d_inner)
    wout = params["out_proj_w"].T                      # (d_inner, C)
    bout = params["out_proj_b"][None]                  # (1, C)
    dww  = params["dwconv_w"].reshape(C, 9).T          # (9, C)
    dwb  = params["dwconv_b"][None]                    # (1, C)
    ln1w, ln1b = params["ln1_w"][None], params["ln1_b"][None]
    ln2w, ln2b = params["ln2_w"][None], params["ln2_b"][None]

    weights = [ln1w, ln1b, ln2w, ln2b, winx, winz, winb,
               cw, cb, cwb, cbb, wdt, bdt, wb, wc, at, drow,
               wout, bout, dww, dwb]

    def batch_spec():
        return pl.BlockSpec((1, L, C), lambda b: (b, 0, 0))

    def wspec(a):
        return pl.BlockSpec(a.shape, lambda b: (0, 0))

    in_specs = [batch_spec(), batch_spec(), batch_spec()] + [wspec(w) for w in weights]

    kernel = functools.partial(_cross_mamba_kernel, H=H, W=W,
                               d_inner=d_inner, d_state=d_state, d_conv=d_conv)

    out, resi = pl.pallas_call(
        kernel,
        out_shape=(jax.ShapeDtypeStruct((B, L, C), f32),
                   jax.ShapeDtypeStruct((B, L, C), f32)),
        grid=(B,),
        in_specs=in_specs,
        out_specs=(batch_spec(), batch_spec()),
        scratch_shapes=[pltpu.VMEM((L, d_state, d_inner), f32),
                        pltpu.VMEM((L, d_state, d_inner), f32),
                        pltpu.VMEM((L, d_state, d_inner), f32)],
        compiler_params=pltpu.CompilerParams(
            dimension_semantics=("parallel",)),
    )(t2, t2_resi, t1, *weights)
    return out, resi


# ---------------------------------------------------------------------------
# deterministic parameter init (mirrors CrossMamba / Mamba hyper-parameters)
# ---------------------------------------------------------------------------
def init_params(key, dim, d_state=16, d_conv=4, expand=2):
    d_inner = expand * dim
    dt_rank = max(dim // 16, 1)
    ks = jax.random.split(key, 12)

    def rnd(k, shape, scale=0.1):
        return scale * jax.random.normal(k, shape, jnp.float32)

    A = jnp.tile(jnp.arange(1, d_state + 1, dtype=jnp.float32)[None, :], (d_inner, 1))
    return dict(
        ln1_w=jnp.ones((dim,), jnp.float32), ln1_b=jnp.zeros((dim,), jnp.float32),
        ln2_w=jnp.ones((dim,), jnp.float32), ln2_b=jnp.zeros((dim,), jnp.float32),
        in_proj_w=rnd(ks[0], (2 * d_inner, dim)),
        in_proj_b_w=rnd(ks[1], (d_inner, dim)),
        conv1d_w=rnd(ks[2], (d_inner, d_conv)),
        conv1d_b=rnd(ks[3], (d_inner,)),
        conv1d_b_w=rnd(ks[4], (d_inner, d_conv)),
        conv1d_b_b=rnd(ks[5], (d_inner,)),
        x_proj_w=rnd(ks[6], (dt_rank + 2 * d_state, d_inner)),
        dt_proj_w=rnd(ks[7], (d_inner, dt_rank)),
        dt_proj_b=rnd(ks[8], (d_inner,)),
        A_log=jnp.log(A),
        D=jnp.ones((d_inner,), jnp.float32),
        out_proj_w=rnd(ks[9], (dim, d_inner)),
        out_proj_b=rnd(ks[10], (dim,)),
        dwconv_w=rnd(ks[11], (dim, 3, 3)),
        dwconv_b=jnp.zeros((dim,), jnp.float32),
    )


if __name__ == "__main__":
    B, C, H, W = 2, 32, 8, 8
    L = H * W
    key = jax.random.PRNGKey(0)
    k1, k2, k3, kp = jax.random.split(key, 4)
    t2 = jax.random.normal(k1, (B, L, C), jnp.float32)
    t2_resi = jax.random.normal(k2, (B, L, C), jnp.float32)
    t1 = jax.random.normal(k3, (B, L, C), jnp.float32)
    params = init_params(kp, C)

    fwd = jax.jit(functools.partial(cross_mamba_forward, H=H, W=W))
    out, resi = fwd(t2, t2_resi, t1, params)
    out, resi = jax.block_until_ready((out, resi))
    assert out.shape == (B, L, C) and resi.shape == (B, L, C)
    assert bool(jnp.all(jnp.isfinite(out))) and bool(jnp.all(jnp.isfinite(resi)))
    print("KERNEL_OK")
</pallas_src>

<mosaic_0001>
module attributes {stable_mosaic.version = 11 : i64} {
  func.func @_cross_mamba_kernel(%arg0: i32, %arg1: memref<1x64x32xf32, #tpu.memory_space<vmem>>, %arg2: memref<1x64x32xf32, #tpu.memory_space<vmem>>, %arg3: memref<1x64x32xf32, #tpu.memory_space<vmem>>, %arg4: memref<1x32xf32, #tpu.memory_space<vmem>>, %arg5: memref<1x32xf32, #tpu.memory_space<vmem>>, %arg6: memref<1x32xf32, #tpu.memory_space<vmem>>, %arg7: memref<1x32xf32, #tpu.memory_space<vmem>>, %arg8: memref<32x64xf32, #tpu.memory_space<vmem>>, %arg9: memref<32x64xf32, #tpu.memory_space<vmem>>, %arg10: memref<32x64xf32, #tpu.memory_space<vmem>>, %arg11: memref<4x64xf32, #tpu.memory_space<vmem>>, %arg12: memref<1x64xf32, #tpu.memory_space<vmem>>, %arg13: memref<4x64xf32, #tpu.memory_space<vmem>>, %arg14: memref<1x64xf32, #tpu.memory_space<vmem>>, %arg15: memref<64x64xf32, #tpu.memory_space<vmem>>, %arg16: memref<1x64xf32, #tpu.memory_space<vmem>>, %arg17: memref<64x16xf32, #tpu.memory_space<vmem>>, %arg18: memref<64x16xf32, #tpu.memory_space<vmem>>, %arg19: memref<16x64xf32, #tpu.memory_space<vmem>>, %arg20: memref<1x64xf32, #tpu.memory_space<vmem>>, %arg21: memref<64x32xf32, #tpu.memory_space<vmem>>, %arg22: memref<1x32xf32, #tpu.memory_space<vmem>>, %arg23: memref<9x32xf32, #tpu.memory_space<vmem>>, %arg24: memref<1x32xf32, #tpu.memory_space<vmem>>, %arg25: memref<1x64x32xf32, #tpu.memory_space<vmem>>, %arg26: memref<1x64x32xf32, #tpu.memory_space<vmem>>, %arg27: memref<64x16x64xf32, #tpu.memory_space<vmem>>, %arg28: memref<64x16x64xf32, #tpu.memory_space<vmem>>, %arg29: memref<64x16x64xf32, #tpu.memory_space<vmem>>) attributes {dimension_semantics = [#tpu.dimension_semantics<parallel>], iteration_bounds = array<i64: 2>, scalar_prefetch = 0 : i64, scratch_operands = 3 : i64, tpu.core_type = #tpu.core_type<tc>, window_params = [{transform_indices = @transform_0, window_bounds = array<i64: 1, 64, 32>}, {transform_indices = @transform_1, window_bounds = array<i64: 1, 64, 32>}, {transform_indices = @transform_2, window_bounds = array<i64: 1, 64, 32>}, {pipeline_mode = #tpu.pipeline_mode<synchronous>, transform_indices = @transform_3, window_bounds = array<i64: 1, 32>}, {pipeline_mode = #tpu.pipeline_mode<synchronous>, transform_indices = @transform_4, window_bounds = array<i64: 1, 32>}, {pipeline_mode = #tpu.pipeline_mode<synchronous>, transform_indices = @transform_5, window_bounds = array<i64: 1, 32>}, {pipeline_mode = #tpu.pipeline_mode<synchronous>, transform_indices = @transform_6, window_bounds = array<i64: 1, 32>}, {pipeline_mode = #tpu.pipeline_mode<synchronous>, transform_indices = @transform_7, window_bounds = array<i64: 32, 64>}, {pipeline_mode = #tpu.pipeline_mode<synchronous>, transform_indices = @transform_8, window_bounds = array<i64: 32, 64>}, {pipeline_mode = #tpu.pipeline_mode<synchronous>, transform_indices = @transform_9, window_bounds = array<i64: 32, 64>}, {pipeline_mode = #tpu.pipeline_mode<synchronous>, transform_indices = @transform_10, window_bounds = array<i64: 4, 64>}, {pipeline_mode = #tpu.pipeline_mode<synchronous>, transform_indices = @transform_11, window_bounds = array<i64: 1, 64>}, {pipeline_mode = #tpu.pipeline_mode<synchronous>, transform_indices = @transform_12, window_bounds = array<i64: 4, 64>}, {pipeline_mode = #tpu.pipeline_mode<synchronous>, transform_indices = @transform_13, window_bounds = array<i64: 1, 64>}, {pipeline_mode = #tpu.pipeline_mode<synchronous>, transform_indices = @transform_14, window_bounds = array<i64: 64, 64>}, {pipeline_mode = #tpu.pipeline_mode<synchronous>, transform_indices = @transform_15, window_bounds = array<i64: 1, 64>}, {pipeline_mode = #tpu.pipeline_mode<synchronous>, transform_indices = @transform_16, window_bounds = array<i64: 64, 16>}, {pipeline_mode = #tpu.pipeline_mode<synchronous>, transform_indices = @transform_17, window_bounds = array<i64: 64, 16>}, {pipeline_mode = #tpu.pipeline_mode<synchronous>, transform_indices = @transform_18, window_bounds = array<i64: 16, 64>}, {pipeline_mode = #tpu.pipeline_mode<synchronous>, transform_indices = @transform_19, window_bounds = array<i64: 1, 64>}, {pipeline_mode = #tpu.pipeline_mode<synchronous>, transform_indices = @transform_20, window_bounds = array<i64: 64, 32>}, {pipeline_mode = #tpu.pipeline_mode<synchronous>, transform_indices = @transform_21, window_bounds = array<i64: 1, 32>}, {pipeline_mode = #tpu.pipeline_mode<synchronous>, transform_indices = @transform_22, window_bounds = array<i64: 9, 32>}, {pipeline_mode = #tpu.pipeline_mode<synchronous>, transform_indices = @transform_23, window_bounds = array<i64: 1, 32>}, {transform_indices = @transform_24, window_bounds = array<i64: 1, 64, 32>}, {transform_indices = @transform_25, window_bounds = array<i64: 1, 64, 32>}]} {
    %c0 = arith.constant 0 : index
    %c0_0 = arith.constant 0 : index
    %c0_1 = arith.constant 0 : index
    %0 = vector.load %arg1[%c0, %c0_0, %c0_1] : memref<1x64x32xf32, #tpu.memory_space<vmem>>, vector<1x64x32xf32>
    %1 = vector.shape_cast %0 : vector<1x64x32xf32> to vector<64x32xf32>
    %c0_2 = arith.constant 0 : index
    %c0_3 = arith.constant 0 : index
    %c0_4 = arith.constant 0 : index
    %2 = vector.load %arg2[%c0_2, %c0_3, %c0_4] : memref<1x64x32xf32, #tpu.memory_space<vmem>>, vector<1x64x32xf32>
    %3 = vector.shape_cast %2 : vector<1x64x32xf32> to vector<64x32xf32>
    %4 = arith.addf %1, %3 : vector<64x32xf32>
    %c0_5 = arith.constant 0 : index
    %c0_6 = arith.constant 0 : index
    %c0_7 = arith.constant 0 : index
    %5 = vector.load %arg26[%c0_5, %c0_6, %c0_7] : memref<1x64x32xf32, #tpu.memory_space<vmem>>, vector<1x64x32xf32>
    %6 = vector.shape_cast %5 : vector<1x64x32xf32> to vector<64x32xf32>
    %7 = vector.shape_cast %4 : vector<64x32xf32> to vector<1x64x32xf32>
    tpu.vector_store %arg26[%c0_5, %c0_6, %c0_7], %7 {strides = array<i32>} : memref<1x64x32xf32, #tpu.memory_space<vmem>>, vector<1x64x32xf32>,
    %c0_8 = arith.constant 0 : index
    %c0_9 = arith.constant 0 : index
    %8 = vector.load %arg4[%c0_8, %c0_9] : memref<1x32xf32, #tpu.memory_space<vmem>>, vector<1x32xf32>
    %c0_10 = arith.constant 0 : index
    %c0_11 = arith.constant 0 : index
    %9 = vector.load %arg5[%c0_10, %c0_11] : memref<1x32xf32, #tpu.memory_space<vmem>>, vector<1x32xf32>
    %c0_12 = arith.constant 0 : index
    %c0_13 = arith.constant 0 : index
    %10 = vector.load %arg6[%c0_12, %c0_13] : memref<1x32xf32, #tpu.memory_space<vmem>>, vector<1x32xf32>
    %c0_14 = arith.constant 0 : index
    %c0_15 = arith.constant 0 : index
    %11 = vector.load %arg7[%c0_14, %c0_15] : memref<1x32xf32, #tpu.memory_space<vmem>>, vector<1x32xf32>
    %cst = arith.constant dense<0.000000e+00> : vector<64xf32>
    %12 = vector.multi_reduction <add>, %4, %cst [1] : vector<64x32xf32> to vector<64xf32>
    %13 = vector.shape_cast %12 : vector<64xf32> to vector<64x1xf32>
    %cst_16 = arith.constant 3.200000e+01 : f32
    %14 = vector.broadcast %cst_16 : f32 to vector<64x1xf32>
    %15 = arith.divf %13, %14 : vector<64x1xf32>
    %16 = vector.broadcast %15 : vector<64x1xf32> to vector<64x32xf32>
    %17 = arith.subf %4, %16 : vector<64x32xf32>
    %18 = arith.mulf %17, %17 : vector<64x32xf32>
    %cst_17 = arith.constant dense<0.000000e+00> : vector<64xf32>
    %19 = vector.multi_reduction <add>, %18, %cst_17 [1] : vector<64x32xf32> to vector<64xf32>
    %20 = vector.shape_cast %19 : vector<64xf32> to vector<64x1xf32>
    %cst_18 = arith.constant 3.200000e+01 : f32
    %21 = vector.broadcast %cst_18 : f32 to vector<64x1xf32>
    %22 = arith.divf %20, %21 : vector<64x1xf32>
    %cst_19 = arith.constant 9.99999974E-6 : f32
    %23 = vector.broadcast %cst_19 : f32 to vector<64x1xf32>
    %24 = arith.addf %22, %23 : vector<64x1xf32>
    %25 = math.rsqrt %24 : vector<64x1xf32>
    %26 = vector.broadcast %25 : vector<64x1xf32> to vector<64x32xf32>
    %27 = arith.mulf %17, %26 : vector<64x32xf32>
    %28 = vector.broadcast %8 : vector<1x32xf32> to vector<64x32xf32>
    %29 = arith.mulf %27, %28 : vector<64x32xf32>
    %30 = vector.broadcast %9 : vector<1x32xf32> to vector<64x32xf32>
    %31 = arith.addf %29, %30 : vector<64x32xf32>
    %cst_20 = arith.constant dense<0.000000e+00> : vector<64xf32>
    %32 = vector.multi_reduction <add>, %31, %cst_20 [1] : vector<64x32xf32> to vector<64xf32>
    %33 = vector.shape_cast %32 : vector<64xf32> to vector<64x1xf32>
    %cst_21 = arith.constant 3.200000e+01 : f32
    %34 = vector.broadcast %cst_21 : f32 to vector<64x1xf32>
    %35 = arith.divf %33, %34 : vector<64x1xf32>
    %36 = vector.broadcast %35 : vector<64x1xf32> to vector<64x32xf32>
    %37 = arith.subf %31, %36 : vector<64x32xf32>
    %38 = arith.mulf %37, %37 : vector<64x32xf32>
    %cst_22 = arith.constant dense<0.000000e+00> : vector<64xf32>
    %39 = vector.multi_reduction <add>, %38, %cst_22 [1] : vector<64x32xf32> to vector<64xf32>
    %40 = vector.shape_cast %39 : vector<64xf32> to vector<64x1xf32>
    %cst_23 = arith.constant 3.200000e+01 : f32
    %41 = vector.broadcast %cst_23 : f32 to vector<64x1xf32>
    %42 = arith.divf %40, %41 : vector<64x1xf32>
    %cst_24 = arith.constant 9.99999974E-6 : f32
    %43 = vector.broadcast %cst_24 : f32 to vector<64x1xf32>
    %44 = arith.addf %42, %43 : vector<64x1xf32>
    %45 = math.rsqrt %44 : vector<64x1xf32>
    %46 = vector.broadcast %45 : vector<64x1xf32> to vector<64x32xf32>
    %47 = arith.mulf %37, %46 : vector<64x32xf32>
    %48 = vector.broadcast %8 : vector<1x32xf32> to vector<64x32xf32>
    %49 = arith.mulf %47, %48 : vector<64x32xf32>
    %50 = vector.broadcast %9 : vector<1x32xf32> to vector<64x32xf32>
    %51 = arith.addf %49, %50 : vector<64x32xf32>
    %c0_25 = arith.constant 0 : index
    %c0_26 = arith.constant 0 : index
    %c0_27 = arith.constant 0 : index
    %52 = vector.load %arg3[%c0_25, %c0_26, %c0_27] : memref<1x64x32xf32, #tpu.memory_space<vmem>>, vector<1x64x32xf32>
    %53 = vector.shape_cast %52 : vector<1x64x32xf32> to vector<64x32xf32>
    %cst_28 = arith.constant dense<0.000000e+00> : vector<64xf32>
    %54 = vector.multi_reduction <add>, %53, %cst_28 [1] : vector<64x32xf32> to vector<64xf32>
    %55 = vector.shape_cast %54 : vector<64xf32> to vector<64x1xf32>
    %cst_29 = arith.constant 3.200000e+01 : f32
    %56 = vector.broadcast %cst_29 : f32 to vector<64x1xf32>
    %57 = arith.divf %55, %56 : vector<64x1xf32>
    %58 = vector.broadcast %57 : vector<64x1xf32> to vector<64x32xf32>
    %59 = arith.subf %53, %58 : vector<64x32xf32>
    %60 = arith.mulf %59, %59 : vector<64x32xf32>
    %cst_30 = arith.constant dense<0.000000e+00> : vector<64xf32>
    %61 = vector.multi_reduction <add>, %60, %cst_30 [1] : vector<64x32xf32> to vector<64xf32>
    %62 = vector.shape_cast %61 : vector<64xf32> to vector<64x1xf32>
    %cst_31 = arith.constant 3.200000e+01 : f32
    %63 = vector.broadcast %cst_31 : f32 to vector<64x1xf32>
    %64 = arith.divf %62, %63 : vector<64x1xf32>
    %cst_32 = arith.constant 9.99999974E-6 : f32
    %65 = vector.broadcast %cst_32 : f32 to vector<64x1xf32>
    %66 = arith.addf %64, %65 : vector<64x1xf32>
    %67 = math.rsqrt %66 : vector<64x1xf32>
    %68 = vector.broadcast %67 : vector<64x1xf32> to vector<64x32xf32>
    %69 = arith.mulf %59, %68 : vector<64x32xf32>
    %70 = vector.broadcast %10 : vector<1x32xf32> to vector<64x32xf32>
    %71 = arith.mulf %69, %70 : vector<64x32xf32>
    %72 = vector.broadcast %11 : vector<1x32xf32> to vector<64x32xf32>
    %73 = arith.addf %71, %72 : vector<64x32xf32>
    %cst_33 = arith.constant dense<0.000000e+00> : vector<64xf32>
    %74 = vector.multi_reduction <add>, %73, %cst_33 [1] : vector<64x32xf32> to vector<64xf32>
    %75 = vector.shape_cast %74 : vector<64xf32> to vector<64x1xf32>
    %cst_34 = arith.constant 3.200000e+01 : f32
    %76 = vector.broadcast %cst_34 : f32 to vector<64x1xf32>
    %77 = arith.divf %75, %76 : vector<64x1xf32>
    %78 = vector.broadcast %77 : vector<64x1xf32> to vector<64x32xf32>
    %79 = arith.subf %73, %78 : vector<64x32xf32>
    %80 = arith.mulf %79, %79 : vector<64x32xf32>
    %cst_35 = arith.constant dense<0.000000e+00> : vector<64xf32>
    %81 = vector.multi_reduction <add>, %80, %cst_35 [1] : vector<64x32xf32> to vector<64xf32>
    %82 = vector.shape_cast %81 : vector<64xf32> to vector<64x1xf32>
    %cst_36 = arith.constant 3.200000e+01 : f32
    %83 = vector.broadcast %cst_36 : f32 to vector<64x1xf32>
    %84 = arith.divf %82, %83 : vector<64x1xf32>
    %cst_37 = arith.constant 9.99999974E-6 : f32
    %85 = vector.broadcast %cst_37 : f32 to vector<64x1xf32>
    %86 = arith.addf %84, %85 : vector<64x1xf32>
    %87 = math.rsqrt %86 : vector<64x1xf32>
    %88 = vector.broadcast %87 : vector<64x1xf32> to vector<64x32xf32>
    %89 = arith.mulf %79, %88 : vector<64x32xf32>
    %90 = vector.broadcast %10 : vector<1x32xf32> to vector<64x32xf32>
    %91 = arith.mulf %89, %90 : vector<64x32xf32>
    %92 = vector.broadcast %11 : vector<1x32xf32> to vector<64x32xf32>
    %93 = arith.addf %91, %92 : vector<64x32xf32>
    %c0_38 = arith.constant 0 : index
    %c0_39 = arith.constant 0 : index
    %94 = vector.load %arg8[%c0_38, %c0_39] : memref<32x64xf32, #tpu.memory_space<vmem>>, vector<32x64xf32>
    %cst_40 = arith.constant dense<0.000000e+00> : vector<64x64xf32>
    %95 = tpu.matmul %51, %94, %cst_40 {dimension_numbers = #tpu.dot_dimension_numbers<[1], [0], [0], [1], [0, 0, 1, 1], [], []>} : vector<64x32xf32>, vector<32x64xf32>, vector<64x64xf32> -> vector<64x64xf32>
    %c0_41 = arith.constant 0 : index
    %c0_42 = arith.constant 0 : index
    %96 = vector.load %arg9[%c0_41, %c0_42] : memref<32x64xf32, #tpu.memory_space<vmem>>, vector<32x64xf32>
    %cst_43 = arith.constant dense<0.000000e+00> : vector<64x64xf32>
    %97 = tpu.matmul %51, %96, %cst_43 {dimension_numbers = #tpu.dot_dimension_numbers<[1], [0], [0], [1], [0, 0, 1, 1], [], []>} : vector<64x32xf32>, vector<32x64xf32>, vector<64x64xf32> -> vector<64x64xf32>
    %c0_44 = arith.constant 0 : index
    %c0_45 = arith.constant 0 : index
    %98 = vector.load %arg10[%c0_44, %c0_45] : memref<32x64xf32, #tpu.memory_space<vmem>>, vector<32x64xf32>
    %cst_46 = arith.constant dense<0.000000e+00> : vector<64x64xf32>
    %99 = tpu.matmul %93, %98, %cst_46 {dimension_numbers = #tpu.dot_dimension_numbers<[1], [0], [0], [1], [0, 0, 1, 1], [], []>} : vector<64x32xf32>, vector<32x64xf32>, vector<64x64xf32> -> vector<64x64xf32>
    %c0_47 = arith.constant 0 : index
    %c0_48 = arith.constant 0 : index
    %100 = vector.load %arg11[%c0_47, %c0_48] : memref<4x64xf32, #tpu.memory_space<vmem>>, vector<4x64xf32>
    %101 = vector.extract_strided_slice %100 {offsets = [3, 0], sizes = [1, 64], strides = [1, 1]} : vector<4x64xf32> to vector<1x64xf32>
    %102 = vector.broadcast %101 : vector<1x64xf32> to vector<64x64xf32>
    %103 = arith.mulf %95, %102 : vector<64x64xf32>
    %c0_49 = arith.constant 0 : index
    %c0_50 = arith.constant 0 : index
    %104 = vector.load %arg12[%c0_49, %c0_50] : memref<1x64xf32, #tpu.memory_space<vmem>>, vector<1x64xf32>
    %105 = vector.broadcast %104 : vector<1x64xf32> to vector<64x64xf32>
    %106 = arith.addf %103, %105 : vector<64x64xf32>
    %cst_51 = arith.constant 0.000000e+00 : f32
    %107 = vector.broadcast %cst_51 : f32 to vector<1x64xf32>
    %108 = vector.extract_strided_slice %95 {offsets = [0, 0], sizes = [63, 64], strides = [1, 1]} : vector<64x64xf32> to vector<63x64xf32>
    %109 = tpu.concatenate %107, %108 in 0 : vector<1x64xf32>, vector<63x64xf32> -> vector<64x64xf32>
    %110 = vector.extract_strided_slice %100 {offsets = [2, 0], sizes = [1, 64], strides = [1, 1]} : vector<4x64xf32> to vector<1x64xf32>
    %111 = vector.broadcast %110 : vector<1x64xf32> to vector<64x64xf32>
    %112 = arith.mulf %109, %111 : vector<64x64xf32>
    %113 = arith.addf %106, %112 : vector<64x64xf32>
    %cst_52 = arith.constant 0.000000e+00 : f32
    %114 = vector.broadcast %cst_52 : f32 to vector<2x64xf32>
    %115 = vector.extract_strided_slice %95 {offsets = [0, 0], sizes = [62, 64], strides = [1, 1]} : vector<64x64xf32> to vector<62x64xf32>
    %116 = tpu.concatenate %114, %115 in 0 : vector<2x64xf32>, vector<62x64xf32> -> vector<64x64xf32>
    %117 = vector.extract_strided_slice %100 {offsets = [1, 0], sizes = [1, 64], strides = [1, 1]} : vector<4x64xf32> to vector<1x64xf32>
    %118 = vector.broadcast %117 : vector<1x64xf32> to vector<64x64xf32>
    %119 = arith.mulf %116, %118 : vector<64x64xf32>
    %120 = arith.addf %113, %119 : vector<64x64xf32>
    %cst_53 = arith.constant 0.000000e+00 : f32
    %121 = vector.broadcast %cst_53 : f32 to vector<3x64xf32>
    %122 = vector.extract_strided_slice %95 {offsets = [0, 0], sizes = [61, 64], strides = [1, 1]} : vector<64x64xf32> to vector<61x64xf32>
    %123 = tpu.concatenate %121, %122 in 0 : vector<3x64xf32>, vector<61x64xf32> -> vector<64x64xf32>
    %124 = vector.extract_strided_slice %100 {offsets = [0, 0], sizes = [1, 64], strides = [1, 1]} : vector<4x64xf32> to vector<1x64xf32>
    %125 = vector.broadcast %124 : vector<1x64xf32> to vector<64x64xf32>
    %126 = arith.mulf %123, %125 : vector<64x64xf32>
    %127 = arith.addf %120, %126 : vector<64x64xf32>
    %128 = arith.negf %127 : vector<64x64xf32>
    %129 = math.exp %128 : vector<64x64xf32>
    %cst_54 = arith.constant 1.000000e+00 : f32
    %130 = vector.broadcast %cst_54 : f32 to vector<64x64xf32>
    %131 = arith.addf %130, %129 : vector<64x64xf32>
    %132 = arith.divf %130, %131 : vector<64x64xf32>
    %133 = arith.mulf %127, %132 : vector<64x64xf32>
    %c0_55 = arith.constant 0 : index
    %c0_56 = arith.constant 0 : index
    %134 = vector.load %arg13[%c0_55, %c0_56] : memref<4x64xf32, #tpu.memory_space<vmem>>, vector<4x64xf32>
    %135 = vector.extract_strided_slice %134 {offsets = [3, 0], sizes = [1, 64], strides = [1, 1]} : vector<4x64xf32> to vector<1x64xf32>
    %136 = vector.broadcast %135 : vector<1x64xf32> to vector<64x64xf32>
    %137 = arith.mulf %99, %136 : vector<64x64xf32>
    %c0_57 = arith.constant 0 : index
    %c0_58 = arith.constant 0 : index
    %138 = vector.load %arg14[%c0_57, %c0_58] : memref<1x64xf32, #tpu.memory_space<vmem>>, vector<1x64xf32>
    %139 = vector.broadcast %138 : vector<1x64xf32> to vector<64x64xf32>
    %140 = arith.addf %137, %139 : vector<64x64xf32>
    %cst_59 = arith.constant 0.000000e+00 : f32
    %141 = vector.broadcast %cst_59 : f32 to vector<1x64xf32>
    %142 = vector.extract_strided_slice %99 {offsets = [0, 0], sizes = [63, 64], strides = [1, 1]} : vector<64x64xf32> to vector<63x64xf32>
    %143 = tpu.concatenate %141, %142 in 0 : vector<1x64xf32>, vector<63x64xf32> -> vector<64x64xf32>
    %144 = vector.extract_strided_slice %134 {offsets = [2, 0], sizes = [1, 64], strides = [1, 1]} : vector<4x64xf32> to vector<1x64xf32>
    %145 = vector.broadcast %144 : vector<1x64xf32> to vector<64x64xf32>
    %146 = arith.mulf %143, %145 : vector<64x64xf32>
    %147 = arith.addf %140, %146 : vector<64x64xf32>
    %cst_60 = arith.constant 0.000000e+00 : f32
    %148 = vector.broadcast %cst_60 : f32 to vector<2x64xf32>
    %149 = vector.extract_strided_slice %99 {offsets = [0, 0], sizes = [62, 64], strides = [1, 1]} : vector<64x64xf32> to vector<62x64xf32>
    %150 = tpu.concatenate %148, %149 in 0 : vector<2x64xf32>, vector<62x64xf32> -> vector<64x64xf32>
    %151 = vector.extract_strided_slice %134 {offsets = [1, 0], sizes = [1, 64], strides = [1, 1]} : vector<4x64xf32> to vector<1x64xf32>
    %152 = vector.broadcast %151 : vector<1x64xf32> to vector<64x64xf32>
    %153 = arith.mulf %150, %152 : vector<64x64xf32>
    %154 = arith.addf %147, %153 : vector<64x64xf32>
    %cst_61 = arith.constant 0.000000e+00 : f32
    %155 = vector.broadcast %cst_61 : f32 to vector<3x64xf32>
    %156 = vector.extract_strided_slice %99 {offsets = [0, 0], sizes = [61, 64], strides = [1, 1]} : vector<64x64xf32> to vector<61x64xf32>
    %157 = tpu.concatenate %155, %156 in 0 : vector<3x64xf32>, vector<61x64xf32> -> vector<64x64xf32>
    %158 = vector.extract_strided_slice %134 {offsets = [0, 0], sizes = [1, 64], strides = [1, 1]} : vector<4x64xf32> to vector<1x64xf32>
    %159 = vector.broadcast %158 : vector<1x64xf32> to vector<64x64xf32>
    %160 = arith.mulf %157, %159 : vector<64x64xf32>
    %161 = arith.addf %154, %160 : vector<64x64xf32>
    %162 = arith.negf %161 : vector<64x64xf32>
    %163 = math.exp %162 : vector<64x64xf32>
    %cst_62 = arith.constant 1.000000e+00 : f32
    %164 = vector.broadcast %cst_62 : f32 to vector<64x64xf32>
    %165 = arith.addf %164, %163 : vector<64x64xf32>
    %166 = arith.divf %164, %165 : vector<64x64xf32>
    %167 = arith.mulf %161, %166 : vector<64x64xf32>
    %c0_63 = arith.constant 0 : index
    %c0_64 = arith.constant 0 : index
    %168 = vector.load %arg15[%c0_63, %c0_64] : memref<64x64xf32, #tpu.memory_space<vmem>>, vector<64x64xf32>
    %cst_65 = arith.constant dense<0.000000e+00> : vector<64x64xf32>
    %169 = tpu.matmul %167, %168, %cst_65 {dimension_numbers = #tpu.dot_dimension_numbers<[1], [0], [0], [1], [0, 0, 1, 1], [], []>} : vector<64x64xf32>, vector<64x64xf32>, vector<64x64xf32> -> vector<64x64xf32>
    %c0_66 = arith.constant 0 : index
    %c0_67 = arith.constant 0 : index
    %170 = vector.load %arg16[%c0_66, %c0_67] : memref<1x64xf32, #tpu.memory_space<vmem>>, vector<1x64xf32>
    %171 = vector.broadcast %170 : vector<1x64xf32> to vector<64x64xf32>
    %172 = arith.addf %169, %171 : vector<64x64xf32>
    %cst_68 = arith.constant 0.000000e+00 : f32
    %173 = vector.broadcast %cst_68 : f32 to vector<64x64xf32>
    %174 = arith.maximumf %172, %173 : vector<64x64xf32>
    %175 = math.absf %172 : vector<64x64xf32>
    %cst_69 = arith.constant 0.000000e+00 : f32
    %176 = vector.broadcast %cst_69 : f32 to vector<64x64xf32>
    %177 = arith.subf %176, %175 : vector<64x64xf32>
    %178 = math.exp %177 : vector<64x64xf32>
    %cst_70 = arith.constant 1.000000e+00 : f32
    %179 = vector.broadcast %cst_70 : f32 to vector<64x64xf32>
    %180 = arith.addf %179, %178 : vector<64x64xf32>
    %181 = math.log %180 : vector<64x64xf32>
    %182 = arith.addf %174, %181 : vector<64x64xf32>
    %c0_71 = arith.constant 0 : index
    %c0_72 = arith.constant 0 : index
    %183 = vector.load %arg17[%c0_71, %c0_72] : memref<64x16xf32, #tpu.memory_space<vmem>>, vector<64x16xf32>
    %cst_73 = arith.constant dense<0.000000e+00> : vector<64x16xf32>
    %184 = tpu.matmul %167, %183, %cst_73 {dimension_numbers = #tpu.dot_dimension_numbers<[1], [0], [0], [1], [0, 0, 1, 1], [], []>} : vector<64x64xf32>, vector<64x16xf32>, vector<64x16xf32> -> vector<64x16xf32>
    %c0_74 = arith.constant 0 : index
    %c0_75 = arith.constant 0 : index
    %185 = vector.load %arg18[%c0_74, %c0_75] : memref<64x16xf32, #tpu.memory_space<vmem>>, vector<64x16xf32>
    %cst_76 = arith.constant dense<0.000000e+00> : vector<64x16xf32>
    %186 = tpu.matmul %167, %185, %cst_76 {dimension_numbers = #tpu.dot_dimension_numbers<[1], [0], [0], [1], [0, 0, 1, 1], [], []>} : vector<64x64xf32>, vector<64x16xf32>, vector<64x16xf32> -> vector<64x16xf32>
    %c0_77 = arith.constant 0 : index
    %c0_78 = arith.constant 0 : index
    %187 = vector.load %arg19[%c0_77, %c0_78] : memref<16x64xf32, #tpu.memory_space<vmem>>, vector<16x64xf32>
    %188 = vector.shape_cast %182 : vector<64x64xf32> to vector<64x1x64xf32>
    %189 = vector.shape_cast %187 : vector<16x64xf32> to vector<1x16x64xf32>
    %190 = vector.broadcast %188 : vector<64x1x64xf32> to vector<64x16x64xf32>
    %191 = vector.broadcast %189 : vector<1x16x64xf32> to vector<64x16x64xf32>
    %192 = arith.mulf %190, %191 : vector<64x16x64xf32>
    %193 = math.exp %192 : vector<64x16x64xf32>
    %c0_79 = arith.constant 0 : index
    %c0_80 = arith.constant 0 : index
    %c0_81 = arith.constant 0 : index
    %194 = vector.load %arg27[%c0_79, %c0_80, %c0_81] : memref<64x16x64xf32, #tpu.memory_space<vmem>>, vector<64x16x64xf32>
    tpu.vector_store %arg27[%c0_79, %c0_80, %c0_81], %193 {strides = array<i32>} : memref<64x16x64xf32, #tpu.memory_space<vmem>>, vector<64x16x64xf32>,
    %195 = vector.shape_cast %184 : vector<64x16xf32> to vector<64x16x1xf32>
    %196 = arith.mulf %182, %133 : vector<64x64xf32>
    %197 = vector.shape_cast %196 : vector<64x64xf32> to vector<64x1x64xf32>
    %198 = vector.broadcast %195 : vector<64x16x1xf32> to vector<64x16x64xf32>
    %199 = vector.broadcast %197 : vector<64x1x64xf32> to vector<64x16x64xf32>
    %200 = arith.mulf %198, %199 : vector<64x16x64xf32>
    %c0_82 = arith.constant 0 : index
    %c0_83 = arith.constant 0 : index
    %c0_84 = arith.constant 0 : index
    %201 = vector.load %arg28[%c0_82, %c0_83, %c0_84] : memref<64x16x64xf32, #tpu.memory_space<vmem>>, vector<64x16x64xf32>
    tpu.vector_store %arg28[%c0_82, %c0_83, %c0_84], %200 {strides = array<i32>} : memref<64x16x64xf32, #tpu.memory_space<vmem>>, vector<64x16x64xf32>,
    %cst_85 = arith.constant 0.000000e+00 : f32
    %202 = vector.broadcast %cst_85 : f32 to vector<16x64xf32>
    %c0_i32 = arith.constant 0 : i32
    %c64_i32 = arith.constant 64 : i32
    %203 = arith.addi %c0_i32, %c64_i32 : i32
    %c1_i32 = arith.constant 1 : i32
    %204 = scf.for %arg30 = %c0_i32 to %203 step %c1_i32 iter_args(%arg31 = %202) -> (vector<16x64xf32>)  : i32 {
      %306 = arith.index_cast %arg30 : i32 to index
      %c0_123 = arith.constant 0 : index
      %c0_124 = arith.constant 0 : index
      %307 = vector.load %arg27[%306, %c0_123, %c0_124] : memref<64x16x64xf32, #tpu.memory_space<vmem>>, vector<1x16x64xf32>
      %308 = vector.shape_cast %307 : vector<1x16x64xf32> to vector<16x64xf32>
      %309 = arith.mulf %308, %arg31 : vector<16x64xf32>
      %310 = arith.index_cast %arg30 : i32 to index
      %c0_125 = arith.constant 0 : index
      %c0_126 = arith.constant 0 : index
      %311 = vector.load %arg28[%310, %c0_125, %c0_126] : memref<64x16x64xf32, #tpu.memory_space<vmem>>, vector<1x16x64xf32>
      %312 = vector.shape_cast %311 : vector<1x16x64xf32> to vector<16x64xf32>
      %313 = arith.addf %309, %312 : vector<16x64xf32>
      %314 = arith.index_cast %arg30 : i32 to index
      %c0_127 = arith.constant 0 : index
      %c0_128 = arith.constant 0 : index
      %315 = vector.load %arg29[%314, %c0_127, %c0_128] : memref<64x16x64xf32, #tpu.memory_space<vmem>>, vector<1x16x64xf32>
      %316 = vector.shape_cast %315 : vector<1x16x64xf32> to vector<16x64xf32>
      %317 = vector.shape_cast %313 : vector<16x64xf32> to vector<1x16x64xf32>
      tpu.vector_store %arg29[%314, %c0_127, %c0_128], %317 {strides = array<i32>} : memref<64x16x64xf32, #tpu.memory_space<vmem>>, vector<1x16x64xf32>,
      scf.yield %313 : vector<16x64xf32>
    }
    %c64_i32_86 = arith.constant 64 : i32
    %c0_87 = arith.constant 0 : index
    %c0_88 = arith.constant 0 : index
    %c0_89 = arith.constant 0 : index
    %205 = vector.load %arg29[%c0_87, %c0_88, %c0_89] : memref<64x16x64xf32, #tpu.memory_space<vmem>>, vector<64x16x64xf32>
    %206 = vector.shape_cast %186 : vector<64x16xf32> to vector<64x16x1xf32>
    %207 = vector.broadcast %206 : vector<64x16x1xf32> to vector<64x16x64xf32>
    %208 = arith.mulf %205, %207 : vector<64x16x64xf32>
    %cst_90 = arith.constant dense<0.000000e+00> : vector<64x64xf32>
    %209 = vector.multi_reduction <add>, %208, %cst_90 [1] : vector<64x16x64xf32> to vector<64x64xf32>
    %c0_91 = arith.constant 0 : index
    %c0_92 = arith.constant 0 : index
    %210 = vector.load %arg20[%c0_91, %c0_92] : memref<1x64xf32, #tpu.memory_space<vmem>>, vector<1x64xf32>
    %211 = vector.broadcast %210 : vector<1x64xf32> to vector<64x64xf32>
    %212 = arith.mulf %133, %211 : vector<64x64xf32>
    %213 = arith.addf %209, %212 : vector<64x64xf32>
    %214 = arith.negf %97 : vector<64x64xf32>
    %215 = math.exp %214 : vector<64x64xf32>
    %cst_93 = arith.constant 1.000000e+00 : f32
    %216 = vector.broadcast %cst_93 : f32 to vector<64x64xf32>
    %217 = arith.addf %216, %215 : vector<64x64xf32>
    %218 = arith.divf %216, %217 : vector<64x64xf32>
    %219 = arith.mulf %97, %218 : vector<64x64xf32>
    %220 = arith.mulf %213, %219 : vector<64x64xf32>
    %c0_94 = arith.constant 0 : index
    %c0_95 = arith.constant 0 : index
    %221 = vector.load %arg21[%c0_94, %c0_95] : memref<64x32xf32, #tpu.memory_space<vmem>>, vector<64x32xf32>
    %cst_96 = arith.constant dense<0.000000e+00> : vector<64x32xf32>
    %222 = tpu.matmul %220, %221, %cst_96 {dimension_numbers = #tpu.dot_dimension_numbers<[1], [0], [0], [1], [0, 0, 1, 1], [], []>} : vector<64x64xf32>, vector<64x32xf32>, vector<64x32xf32> -> vector<64x32xf32>
    %c0_97 = arith.constant 0 : index
    %c0_98 = arith.constant 0 : index
    %223 = vector.load %arg22[%c0_97, %c0_98] : memref<1x32xf32, #tpu.memory_space<vmem>>, vector<1x32xf32>
    %224 = vector.broadcast %223 : vector<1x32xf32> to vector<64x32xf32>
    %225 = arith.addf %222, %224 : vector<64x32xf32>
    %226 = vector.shape_cast %225 : vector<64x32xf32> to vector<8x8x32xf32>
    %cst_99 = arith.constant 0.000000e+00 : f32
    %227 = vector.broadcast %cst_99 : f32 to vector<8x8x32xf32>
    %c0_100 = arith.constant 0 : index
    %c0_101 = arith.constant 0 : index
    %228 = vector.load %arg24[%c0_100, %c0_101] : memref<1x32xf32, #tpu.memory_space<vmem>>, vector<1x32xf32>
    %229 = vector.shape_cast %228 : vector<1x32xf32> to vector<1x1x32xf32>
    %230 = vector.broadcast %229 : vector<1x1x32xf32> to vector<8x8x32xf32>
    %231 = arith.addf %227, %230 : vector<8x8x32xf32>
    %cst_102 = arith.constant 0.000000e+00 : f32
    %232 = vector.broadcast %cst_102 : f32 to vector<1x8x32xf32>
    %233 = vector.extract_strided_slice %226 {offsets = [0, 0, 0], sizes = [7, 8, 32], strides = [1, 1, 1]} : vector<8x8x32xf32> to vector<7x8x32xf32>
    %234 = tpu.concatenate %232, %233 in 0 : vector<1x8x32xf32>, vector<7x8x32xf32> -> vector<8x8x32xf32>
    %cst_103 = arith.constant 0.000000e+00 : f32
    %235 = vector.broadcast %cst_103 : f32 to vector<8x1x32xf32>
    %236 = vector.extract_strided_slice %234 {offsets = [0, 0, 0], sizes = [8, 7, 32], strides = [1, 1, 1]} : vector<8x8x32xf32> to vector<8x7x32xf32>
    %237 = tpu.concatenate %235, %236 in 1 : vector<8x1x32xf32>, vector<8x7x32xf32> -> vector<8x8x32xf32>
    %c0_104 = arith.constant 0 : index
    %c0_105 = arith.constant 0 : index
    %238 = vector.load %arg23[%c0_104, %c0_105] : memref<9x32xf32, #tpu.memory_space<vmem>>, vector<1x32xf32>
    %239 = vector.shape_cast %238 : vector<1x32xf32> to vector<1x1x32xf32>
    %240 = vector.broadcast %239 : vector<1x1x32xf32> to vector<8x8x32xf32>
    %241 = arith.mulf %237, %240 : vector<8x8x32xf32>
    %242 = arith.addf %231, %241 : vector<8x8x32xf32>
    %c1 = arith.constant 1 : index
    %c0_106 = arith.constant 0 : index
    %243 = vector.load %arg23[%c1, %c0_106] : memref<9x32xf32, #tpu.memory_space<vmem>>, vector<1x32xf32>
    %244 = vector.shape_cast %243 : vector<1x32xf32> to vector<1x1x32xf32>
    %245 = vector.broadcast %244 : vector<1x1x32xf32> to vector<8x8x32xf32>
    %246 = arith.mulf %234, %245 : vector<8x8x32xf32>
    %247 = arith.addf %242, %246 : vector<8x8x32xf32>
    %248 = vector.extract_strided_slice %234 {offsets = [0, 1, 0], sizes = [8, 7, 32], strides = [1, 1, 1]} : vector<8x8x32xf32> to vector<8x7x32xf32>
    %cst_107 = arith.constant 0.000000e+00 : f32
    %249 = vector.broadcast %cst_107 : f32 to vector<8x1x32xf32>
    %250 = tpu.concatenate %248, %249 in 1 : vector<8x7x32xf32>, vector<8x1x32xf32> -> vector<8x8x32xf32>
    %c2 = arith.constant 2 : index
    %c0_108 = arith.constant 0 : index
    %251 = vector.load %arg23[%c2, %c0_108] : memref<9x32xf32, #tpu.memory_space<vmem>>, vector<1x32xf32>
    %252 = vector.shape_cast %251 : vector<1x32xf32> to vector<1x1x32xf32>
    %253 = vector.broadcast %252 : vector<1x1x32xf32> to vector<8x8x32xf32>
    %254 = arith.mulf %250, %253 : vector<8x8x32xf32>
    %255 = arith.addf %247, %254 : vector<8x8x32xf32>
    %cst_109 = arith.constant 0.000000e+00 : f32
    %256 = vector.broadcast %cst_109 : f32 to vector<8x1x32xf32>
    %257 = vector.extract_strided_slice %226 {offsets = [0, 0, 0], sizes = [8, 7, 32], strides = [1, 1, 1]} : vector<8x8x32xf32> to vector<8x7x32xf32>
    %258 = tpu.concatenate %256, %257 in 1 : vector<8x1x32xf32>, vector<8x7x32xf32> -> vector<8x8x32xf32>
    %c3 = arith.constant 3 : index
    %c0_110 = arith.constant 0 : index
    %259 = vector.load %arg23[%c3, %c0_110] : memref<9x32xf32, #tpu.memory_space<vmem>>, vector<1x32xf32>
    %260 = vector.shape_cast %259 : vector<1x32xf32> to vector<1x1x32xf32>
    %261 = vector.broadcast %260 : vector<1x1x32xf32> to vector<8x8x32xf32>
    %262 = arith.mulf %258, %261 : vector<8x8x32xf32>
    %263 = arith.addf %255, %262 : vector<8x8x32xf32>
    %c4 = arith.constant 4 : index
    %c0_111 = arith.constant 0 : index
    %264 = vector.load %arg23[%c4, %c0_111] : memref<9x32xf32, #tpu.memory_space<vmem>>, vector<1x32xf32>
    %265 = vector.shape_cast %264 : vector<1x32xf32> to vector<1x1x32xf32>
    %266 = vector.broadcast %265 : vector<1x1x32xf32> to vector<8x8x32xf32>
    %267 = arith.mulf %226, %266 : vector<8x8x32xf32>
    %268 = arith.addf %263, %267 : vector<8x8x32xf32>
    %269 = vector.extract_strided_slice %226 {offsets = [0, 1, 0], sizes = [8, 7, 32], strides = [1, 1, 1]} : vector<8x8x32xf32> to vector<8x7x32xf32>
    %cst_112 = arith.constant 0.000000e+00 : f32
    %270 = vector.broadcast %cst_112 : f32 to vector<8x1x32xf32>
    %271 = tpu.concatenate %269, %270 in 1 : vector<8x7x32xf32>, vector<8x1x32xf32> -> vector<8x8x32xf32>
    %c5 = arith.constant 5 : index
    %c0_113 = arith.constant 0 : index
    %272 = vector.load %arg23[%c5, %c0_113] : memref<9x32xf32, #tpu.memory_space<vmem>>, vector<1x32xf32>
    %273 = vector.shape_cast %272 : vector<1x32xf32> to vector<1x1x32xf32>
    %274 = vector.broadcast %273 : vector<1x1x32xf32> to vector<8x8x32xf32>
    %275 = arith.mulf %271, %274 : vector<8x8x32xf32>
    %276 = arith.addf %268, %275 : vector<8x8x32xf32>
    %277 = vector.extract_strided_slice %226 {offsets = [1, 0, 0], sizes = [7, 8, 32], strides = [1, 1, 1]} : vector<8x8x32xf32> to vector<7x8x32xf32>
    %cst_114 = arith.constant 0.000000e+00 : f32
    %278 = vector.broadcast %cst_114 : f32 to vector<1x8x32xf32>
    %279 = tpu.concatenate %277, %278 in 0 : vector<7x8x32xf32>, vector<1x8x32xf32> -> vector<8x8x32xf32>
    %cst_115 = arith.constant 0.000000e+00 : f32
    %280 = vector.broadcast %cst_115 : f32 to vector<8x1x32xf32>
    %281 = vector.extract_strided_slice %279 {offsets = [0, 0, 0], sizes = [8, 7, 32], strides = [1, 1, 1]} : vector<8x8x32xf32> to vector<8x7x32xf32>
    %282 = tpu.concatenate %280, %281 in 1 : vector<8x1x32xf32>, vector<8x7x32xf32> -> vector<8x8x32xf32>
    %c6 = arith.constant 6 : index
    %c0_116 = arith.constant 0 : index
    %283 = vector.load %arg23[%c6, %c0_116] : memref<9x32xf32, #tpu.memory_space<vmem>>, vector<1x32xf32>
    %284 = vector.shape_cast %283 : vector<1x32xf32> to vector<1x1x32xf32>
    %285 = vector.broadcast %284 : vector<1x1x32xf32> to vector<8x8x32xf32>
    %286 = arith.mulf %282, %285 : vector<8x8x32xf32>
    %287 = arith.addf %276, %286 : vector<8x8x32xf32>
    %c7 = arith.constant 7 : index
    %c0_117 = arith.constant 0 : index
    %288 = vector.load %arg23[%c7, %c0_117] : memref<9x32xf32, #tpu.memory_space<vmem>>, vector<1x32xf32>
    %289 = vector.shape_cast %288 : vector<1x32xf32> to vector<1x1x32xf32>
    %290 = vector.broadcast %289 : vector<1x1x32xf32> to vector<8x8x32xf32>
    %291 = arith.mulf %279, %290 : vector<8x8x32xf32>
    %292 = arith.addf %287, %291 : vector<8x8x32xf32>
    %293 = vector.extract_strided_slice %279 {offsets = [0, 1, 0], sizes = [8, 7, 32], strides = [1, 1, 1]} : vector<8x8x32xf32> to vector<8x7x32xf32>
    %cst_118 = arith.constant 0.000000e+00 : f32
    %294 = vector.broadcast %cst_118 : f32 to vector<8x1x32xf32>
    %295 = tpu.concatenate %293, %294 in 1 : vector<8x7x32xf32>, vector<8x1x32xf32> -> vector<8x8x32xf32>
    %c8 = arith.constant 8 : index
    %c0_119 = arith.constant 0 : index
    %296 = vector.load %arg23[%c8, %c0_119] : memref<9x32xf32, #tpu.memory_space<vmem>>, vector<1x32xf32>
    %297 = vector.shape_cast %296 : vector<1x32xf32> to vector<1x1x32xf32>
    %298 = vector.broadcast %297 : vector<1x1x32xf32> to vector<8x8x32xf32>
    %299 = arith.mulf %295, %298 : vector<8x8x32xf32>
    %300 = arith.addf %292, %299 : vector<8x8x32xf32>
    %301 = vector.shape_cast %300 : vector<8x8x32xf32> to vector<64x32xf32>
    %302 = arith.addf %301, %225 : vector<64x32xf32>
    %c0_120 = arith.constant 0 : index
    %c0_121 = arith.constant 0 : index
    %c0_122 = arith.constant 0 : index
    %303 = vector.load %arg25[%c0_120, %c0_121, %c0_122] : memref<1x64x32xf32, #tpu.memory_space<vmem>>, vector<1x64x32xf32>
    %304 = vector.shape_cast %303 : vector<1x64x32xf32> to vector<64x32xf32>
    %305 = vector.shape_cast %302 : vector<64x32xf32> to vector<1x64x32xf32>
    tpu.vector_store %arg25[%c0_120, %c0_121, %c0_122], %305 {strides = array<i32>} : memref<1x64x32xf32, #tpu.memory_space<vmem>>, vector<1x64x32xf32>,
    return
  }
  func.func @transform_0(%arg0: i32) -> (i32, i32, i32) {
    %c0_i32 = arith.constant 0 : i32
    %c0_i32_0 = arith.constant 0 : i32
    %c0_i32_1 = arith.constant 0 : i32
    return %arg0, %c0_i32, %c0_i32_0 : i32, i32, i32
  }
  func.func @transform_1(%arg0: i32) -> (i32, i32, i32) {
    %c0_i32 = arith.constant 0 : i32
    %c0_i32_0 = arith.constant 0 : i32
    %c0_i32_1 = arith.constant 0 : i32
    return %arg0, %c0_i32, %c0_i32_0 : i32, i32, i32
  }
  func.func @transform_2(%arg0: i32) -> (i32, i32, i32) {
    %c0_i32 = arith.constant 0 : i32
    %c0_i32_0 = arith.constant 0 : i32
    %c0_i32_1 = arith.constant 0 : i32
    return %arg0, %c0_i32, %c0_i32_0 : i32, i32, i32
  }
  func.func @transform_3(%arg0: i32) -> (i32, i32) {
    %c0_i32 = arith.constant 0 : i32
    %c0_i32_0 = arith.constant 0 : i32
    %c0_i32_1 = arith.constant 0 : i32
    return %c0_i32, %c0_i32_0 : i32, i32
  }
  func.func @transform_4(%arg0: i32) -> (i32, i32) {
    %c0_i32 = arith.constant 0 : i32
    %c0_i32_0 = arith.constant 0 : i32
    %c0_i32_1 = arith.constant 0 : i32
    return %c0_i32, %c0_i32_0 : i32, i32
  }
  func.func @transform_5(%arg0: i32) -> (i32, i32) {
    %c0_i32 = arith.constant 0 : i32
    %c0_i32_0 = arith.constant 0 : i32
    %c0_i32_1 = arith.constant 0 : i32
    return %c0_i32, %c0_i32_0 : i32, i32
  }
  func.func @transform_6(%arg0: i32) -> (i32, i32) {
    %c0_i32 = arith.constant 0 : i32
    %c0_i32_0 = arith.constant 0 : i32
    %c0_i32_1 = arith.constant 0 : i32
    return %c0_i32, %c0_i32_0 : i32, i32
  }
  func.func @transform_7(%arg0: i32) -> (i32, i32) {
    %c0_i32 = arith.constant 0 : i32
    %c0_i32_0 = arith.constant 0 : i32
    %c0_i32_1 = arith.constant 0 : i32
    return %c0_i32, %c0_i32_0 : i32, i32
  }
  func.func @transform_8(%arg0: i32) -> (i32, i32) {
    %c0_i32 = arith.constant 0 : i32
    %c0_i32_0 = arith.constant 0 : i32
    %c0_i32_1 = arith.constant 0 : i32
    return %c0_i32, %c0_i32_0 : i32, i32
  }
  func.func @transform_9(%arg0: i32) -> (i32, i32) {
    %c0_i32 = arith.constant 0 : i32
    %c0_i32_0 = arith.constant 0 : i32
    %c0_i32_1 = arith.constant 0 : i32
    return %c0_i32, %c0_i32_0 : i32, i32
  }
  func.func @transform_10(%arg0: i32) -> (i32, i32) {
    %c0_i32 = arith.constant 0 : i32
    %c0_i32_0 = arith.constant 0 : i32
    %c0_i32_1 = arith.constant 0 : i32
    return %c0_i32, %c0_i32_0 : i32, i32
  }
  func.func @transform_11(%arg0: i32) -> (i32, i32) {
    %c0_i32 = arith.constant 0 : i32
    %c0_i32_0 = arith.constant 0 : i32
    %c0_i32_1 = arith.constant 0 : i32
    return %c0_i32, %c0_i32_0 : i32, i32
  }
  func.func @transform_12(%arg0: i32) -> (i32, i32) {
    %c0_i32 = arith.constant 0 : i32
    %c0_i32_0 = arith.constant 0 : i32
    %c0_i32_1 = arith.constant 0 : i32
    return %c0_i32, %c0_i32_0 : i32, i32
  }
  func.func @transform_13(%arg0: i32) -> (i32, i32) {
    %c0_i32 = arith.constant 0 : i32
    %c0_i32_0 = arith.constant 0 : i32
    %c0_i32_1 = arith.constant 0 : i32
    return %c0_i32, %c0_i32_0 : i32, i32
  }
  func.func @transform_14(%arg0: i32) -> (i32, i32) {
    %c0_i32 = arith.constant 0 : i32
    %c0_i32_0 = arith.constant 0 : i32
    %c0_i32_1 = arith.constant 0 : i32
    return %c0_i32, %c0_i32_0 : i32, i32
  }
  func.func @transform_15(%arg0: i32) -> (i32, i32) {
    %c0_i32 = arith.constant 0 : i32
    %c0_i32_0 = arith.constant 0 : i32
    %c0_i32_1 = arith.constant 0 : i32
    return %c0_i32, %c0_i32_0 : i32, i32
  }
  func.func @transform_16(%arg0: i32) -> (i32, i32) {
    %c0_i32 = arith.constant 0 : i32
    %c0_i32_0 = arith.constant 0 : i32
    %c0_i32_1 = arith.constant 0 : i32
    return %c0_i32, %c0_i32_0 : i32, i32
  }
  func.func @transform_17(%arg0: i32) -> (i32, i32) {
    %c0_i32 = arith.constant 0 : i32
    %c0_i32_0 = arith.constant 0 : i32
    %c0_i32_1 = arith.constant 0 : i32
    return %c0_i32, %c0_i32_0 : i32, i32
  }
  func.func @transform_18(%arg0: i32) -> (i32, i32) {
    %c0_i32 = arith.constant 0 : i32
    %c0_i32_0 = arith.constant 0 : i32
    %c0_i32_1 = arith.constant 0 : i32
    return %c0_i32, %c0_i32_0 : i32, i32
  }
  func.func @transform_19(%arg0: i32) -> (i32, i32) {
    %c0_i32 = arith.constant 0 : i32
    %c0_i32_0 = arith.constant 0 : i32
    %c0_i32_1 = arith.constant 0 : i32
    return %c0_i32, %c0_i32_0 : i32, i32
  }
  func.func @transform_20(%arg0: i32) -> (i32, i32) {
    %c0_i32 = arith.constant 0 : i32
    %c0_i32_0 = arith.constant 0 : i32
    %c0_i32_1 = arith.constant 0 : i32
    return %c0_i32, %c0_i32_0 : i32, i32
  }
  func.func @transform_21(%arg0: i32) -> (i32, i32) {
    %c0_i32 = arith.constant 0 : i32
    %c0_i32_0 = arith.constant 0 : i32
    %c0_i32_1 = arith.constant 0 : i32
    return %c0_i32, %c0_i32_0 : i32, i32
  }
  func.func @transform_22(%arg0: i32) -> (i32, i32) {
    %c0_i32 = arith.constant 0 : i32
    %c0_i32_0 = arith.constant 0 : i32
    %c0_i32_1 = arith.constant 0 : i32
    return %c0_i32, %c0_i32_0 : i32, i32
  }
  func.func @transform_23(%arg0: i32) -> (i32, i32) {
    %c0_i32 = arith.constant 0 : i32
    %c0_i32_0 = arith.constant 0 : i32
    %c0_i32_1 = arith.constant 0 : i32
    return %c0_i32, %c0_i32_0 : i32, i32
  }
  func.func @transform_24(%arg0: i32) -> (i32, i32, i32) {
    %c0_i32 = arith.constant 0 : i32
    %c0_i32_0 = arith.constant 0 : i32
    %c0_i32_1 = arith.constant 0 : i32
    return %arg0, %c0_i32, %c0_i32_0 : i32, i32, i32
  }
  func.func @transform_25(%arg0: i32) -> (i32, i32, i32) {
    %c0_i32 = arith.constant 0 : i32
    %c0_i32_0 = arith.constant 0 : i32
    %c0_i32_1 = arith.constant 0 : i32
    return %arg0, %c0_i32, %c0_i32_0 : i32, i32, i32
  }
}

</mosaic_0001>

<llo_original>
// kernel: cross_mamba_forward.1
$region0: #{cross_mamba_forward.1}
  #allocation0 [shape = 'u32[]', space=smem, size = 0x4, offset = 0x4, fixed_abs, tag = 'smem constant byte address 0x4 - core index']
  #allocation1 [shape = 'u32[144,128]{1,0:T(1,128)}', space=vmem, size = 0x12000, scoped, tag = 'internal scratch']
  #allocation2 [shape = 'f32[64,16,64]{2,1,0:T(8,128)}', space=vmem, size = 0x80000, scoped, tag = 'scratch operand']
  #allocation3 [shape = 'f32[64,16,64]{2,1,0:T(8,128)}', space=vmem, size = 0x80000, scoped, tag = 'scratch operand']
  #allocation4 [shape = 'f32[64,16,64]{2,1,0:T(8,128)}', space=vmem, size = 0x80000, scoped, tag = 'scratch operand']
  %s0 = inlined_call_operand.vmem [shape: f32[2,64,32], index: 0, kind: input, shape index: {}]
  %s1 = inlined_call_operand.vmem [shape: f32[2,64,32], index: 1, kind: input, shape index: {}]
  %s2 = inlined_call_operand.vmem [shape: f32[2,64,32], index: 2, kind: input, shape index: {}]
  %s3 = inlined_call_operand.vmem [shape: f32[1,32], index: 3, kind: input, shape index: {}]
  %s4 = inlined_call_operand.vmem [shape: f32[1,32], index: 4, kind: input, shape index: {}]
  %s5 = inlined_call_operand.vmem [shape: f32[1,32], index: 5, kind: input, shape index: {}]
  %s6 = inlined_call_operand.vmem [shape: f32[1,32], index: 6, kind: input, shape index: {}]
  %s7 = inlined_call_operand.vmem [shape: f32[32,64], index: 7, kind: input, shape index: {}]
  %s8 = inlined_call_operand.vmem [shape: f32[32,64], index: 8, kind: input, shape index: {}]
  %s9 = inlined_call_operand.vmem [shape: f32[32,64], index: 9, kind: input, shape index: {}]
  %s10 = inlined_call_operand.vmem [shape: f32[4,64], index: 10, kind: input, shape index: {}]
  %s11 = inlined_call_operand.vmem [shape: f32[1,64], index: 11, kind: input, shape index: {}]
  %s12 = inlined_call_operand.vmem [shape: f32[4,64], index: 12, kind: input, shape index: {}]
  %s13 = inlined_call_operand.vmem [shape: f32[1,64], index: 13, kind: input, shape index: {}]
  %s14 = inlined_call_operand.vmem [shape: f32[64,64], index: 14, kind: input, shape index: {}]
  %s15 = inlined_call_operand.vmem [shape: f32[1,64], index: 15, kind: input, shape index: {}]
  %s16 = inlined_call_operand.vmem [shape: f32[64,16], index: 16, kind: input, shape index: {}]
  %s17 = inlined_call_operand.vmem [shape: f32[64,16], index: 17, kind: input, shape index: {}]
  %s18 = inlined_call_operand.vmem [shape: f32[16,64], index: 18, kind: input, shape index: {}]
  %s19 = inlined_call_operand.vmem [shape: f32[1,64], index: 19, kind: input, shape index: {}]
  %s20 = inlined_call_operand.vmem [shape: f32[64,32], index: 20, kind: input, shape index: {}]
  %s21 = inlined_call_operand.vmem [shape: f32[1,32], index: 21, kind: input, shape index: {}]
  %s22 = inlined_call_operand.vmem [shape: f32[9,32], index: 22, kind: input, shape index: {}]
  %s23 = inlined_call_operand.vmem [shape: f32[1,32], index: 23, kind: input, shape index: {}]
  %s24 = inlined_call_operand.vmem [shape: f32[2,64,32], index: 24, kind: output, shape index: {0}]
  %s25 = inlined_call_operand.vmem [shape: f32[2,64,32], index: 25, kind: output, shape index: {1}]
  %26 = xla_tuple %s24, %s25
  %s27 = sld [smem:[#allocation0]]
  $region144: #{cross_mamba_forward.1} parent=0
    _
  %s29 = ssub.s32 1, %s27
  %s30 = scalar_select 0, %s29, %s27
  loop: start=0, step=1, limit=4
  $region2: #{cross_mamba_forward.1} parent=0 // loop_pre_header
    _
  $region3: #{cross_mamba_forward.1} parent=0 // loop_header
    %s32 = sphi 0, %s36
    %p33 = scmp.ge.s32.totalorder %s32, 4
    %s42 = sphi 0, %s44
    %s45 = sphi 0, %s42
    %s46 = sphi 0, %s45
    %s62 = sphi 0, %s46
    %s68 = sphi 0, %s70
    %s71 = sphi 0, %s68
    %s72 = sphi 0, %s71
    %s88 = sphi 0, %s72
    %s94 = sphi 0, %s96
    %s97 = sphi 0, %s94
    %s98 = sphi 0, %s97
    %s114 = sphi 0, %s98
    %s118 = sphi 0, %s118
    %s120 = sphi 0, %s118
    %s121 = sphi 0, %s120
    %s135 = sphi 0, %s121
    %s139 = sphi 0, %s139
    %s141 = sphi 0, %s139
    %s142 = sphi 0, %s141
    %s156 = sphi 0, %s142
    %s160 = sphi 0, %s160
    %s162 = sphi 0, %s160
    %s163 = sphi 0, %s162
    %s177 = sphi 0, %s163
    %s181 = sphi 0, %s181
    %s183 = sphi 0, %s181
    %s184 = sphi 0, %s183
    %s198 = sphi 0, %s184
    %s202 = sphi 0, %s202
    %s204 = sphi 0, %s202
    %s205 = sphi 0, %s204
    %s219 = sphi 0, %s205
    %s223 = sphi 0, %s223
    %s225 = sphi 0, %s223
    %s226 = sphi 0, %s225
    %s240 = sphi 0, %s226
    %s244 = sphi 0, %s244
    %s246 = sphi 0, %s244
    %s247 = sphi 0, %s246
    %s261 = sphi 0, %s247
    %s265 = sphi 0, %s265
    %s267 = sphi 0, %s265
    %s268 = sphi 0, %s267
    %s282 = sphi 0, %s268
    %s286 = sphi 0, %s286
    %s288 = sphi 0, %s286
    %s289 = sphi 0, %s288
    %s303 = sphi 0, %s289
    %s307 = sphi 0, %s307
    %s309 = sphi 0, %s307
    %s310 = sphi 0, %s309
    %s324 = sphi 0, %s310
    %s328 = sphi 0, %s328
    %s330 = sphi 0, %s328
    %s331 = sphi 0, %s330
    %s345 = sphi 0, %s331
    %s349 = sphi 0, %s349
    %s351 = sphi 0, %s349
    %s352 = sphi 0, %s351
    %s366 = sphi 0, %s352
    %s370 = sphi 0, %s370
    %s372 = sphi 0, %s370
    %s373 = sphi 0, %s372
    %s387 = sphi 0, %s373
    %s391 = sphi 0, %s391
    %s393 = sphi 0, %s391
    %s394 = sphi 0, %s393
    %s408 = sphi 0, %s394
    %s412 = sphi 0, %s412
    %s414 = sphi 0, %s412
    %s415 = sphi 0, %s414
    %s429 = sphi 0, %s415
    %s433 = sphi 0, %s433
    %s435 = sphi 0, %s433
    %s436 = sphi 0, %s435
    %s450 = sphi 0, %s436
    %s454 = sphi 0, %s454
    %s456 = sphi 0, %s454
    %s457 = sphi 0, %s456
    %s471 = sphi 0, %s457
    %s475 = sphi 0, %s475
    %s477 = sphi 0, %s475
    %s478 = sphi 0, %s477
    %s492 = sphi 0, %s478
    %s496 = sphi 0, %s496
    %s498 = sphi 0, %s496
    %s499 = sphi 0, %s498
    %s513 = sphi 0, %s499
    %s517 = sphi 0, %s517
    %s519 = sphi 0, %s517
    %s520 = sphi 0, %s519
    %s534 = sphi 0, %s520
    %s538 = sphi 0, %s538
    %s540 = sphi 0, %s538
    %s541 = sphi 0, %s540
    %s555 = sphi 0, %s541
    %s561 = sphi 0, %s563
    %s564 = sphi 0, %s561
    %s565 = sphi 0, %s564
    %s581 = sphi 0, %s565
    %s587 = sphi 0, %s589
    %s590 = sphi 0, %s587
    %s591 = sphi 0, %s590
    %s607 = sphi 0, %s591
  $region4: #{cross_mamba_forward.1} parent=0 // loop_header_branch
    %35 = sbr.rel (%p33) target = $region8
  $region5: #{cross_mamba_forward.1} parent=0 // loop_body
    %s37 = ssub.s32 %s32, 1
    %s38 = ssub.s32 %s32, 2
    %s39 = sadd.s32 %s32, 1
    %s40 = ssub.s32 %s32, %s39
    %p41 = scmp.eq.s32.totalorder %s40, 0
    %s43 = sadd.s32 %s42, 1
    %s44 = scalar_select %p41, %s42, %s43
    %p47 = pneg %p41
    %p48 = scmp.eq.s32.totalorder %s32, 1
    %p49 = por %p47, %p48
    %p50 = scmp.ne.s32.totalorder %s42, %s45
    %p51 = scmp.eq.s32.totalorder %s32, 0
    %p52 = por %p50, %p51
    %p53 = scmp.ne.s32.totalorder %s42, %s45
    %p54 = scmp.eq.s32.totalorder %s37, 1
    %p55 = por %p53, %p54
    %p56 = scmp.ne.s32.totalorder %s45, %s46
    %p57 = scmp.eq.s32.totalorder %s37, 0
    %p58 = por %p56, %p57
    %p59 = scmp.ne.s32.totalorder %s45, %s46
    %p60 = scmp.eq.s32.totalorder %s38, 1
    %p61 = por %p59, %p60
    %p63 = scmp.ne.s32.totalorder %s46, %s62
    %p64 = scmp.eq.s32.totalorder %s38, 0
    %p65 = por %p63, %p64
    %s66 = ssub.s32 %s32, %s39
    %p67 = scmp.eq.s32.totalorder %s66, 0
    %s69 = sadd.s32 %s68, 1
    %s70 = scalar_select %p67, %s68, %s69
    %p73 = pneg %p67
    %p74 = scmp.eq.s32.totalorder %s32, 1
    %p75 = por %p73, %p74
    %p76 = scmp.ne.s32.totalorder %s68, %s71
    %p77 = scmp.eq.s32.totalorder %s32, 0
    %p78 = por %p76, %p77
    %p79 = scmp.ne.s32.totalorder %s68, %s71
    %p80 = scmp.eq.s32.totalorder %s37, 1
    %p81 = por %p79, %p80
    %p82 = scmp.ne.s32.totalorder %s71, %s72
    %p83 = scmp.eq.s32.totalorder %s37, 0
    %p84 = por %p82, %p83
    %p85 = scmp.ne.s32.totalorder %s71, %s72
    %p86 = scmp.eq.s32.totalorder %s38, 1
    %p87 = por %p85, %p86
    %p89 = scmp.ne.s32.totalorder %s72, %s88
    %p90 = scmp.eq.s32.totalorder %s38, 0
    %p91 = por %p89, %p90
    %s92 = ssub.s32 %s32, %s39
    %p93 = scmp.eq.s32.totalorder %s92, 0
    %s95 = sadd.s32 %s94, 1
    %s96 = scalar_select %p93, %s94, %s95
    %p99 = pneg %p93
    %p100 = scmp.eq.s32.totalorder %s32, 1
    %p101 = por %p99, %p100
    %p102 = scmp.ne.s32.totalorder %s94, %s97
    %p103 = scmp.eq.s32.totalorder %s32, 0
    %p104 = por %p102, %p103
    %p105 = scmp.ne.s32.totalorder %s94, %s97
    %p106 = scmp.eq.s32.totalorder %s37, 1
    %p107 = por %p105, %p106
    %p108 = scmp.ne.s32.totalorder %s97, %s98
    %p109 = scmp.eq.s32.totalorder %s37, 0
    %p110 = por %p108, %p109
    %p111 = scmp.ne.s32.totalorder %s97, %s98
    %p112 = scmp.eq.s32.totalorder %s38, 1
    %p113 = por %p111, %p112
    %p115 = scmp.ne.s32.totalorder %s98, %s114
    %p116 = scmp.eq.s32.totalorder %s38, 0
    %p117 = por %p115, %p116
    %s119 = sadd.s32 %s118, 1
    %p122 = scmp.eq.s32.totalorder %s32, 1
    %p123 = scmp.ne.s32.totalorder %s118, %s120
    %p124 = scmp.eq.s32.totalorder %s32, 0
    %p125 = por %p123, %p124
    %p126 = scmp.ne.s32.totalorder %s118, %s120
    %p127 = scmp.eq.s32.totalorder %s37, 1
    %p128 = por %p126, %p127
    %p129 = scmp.ne.s32.totalorder %s120, %s121
    %p130 = scmp.eq.s32.totalorder %s37, 0
    %p131 = por %p129, %p130
    %p132 = scmp.ne.s32.totalorder %s120, %s121
    %p133 = scmp.eq.s32.totalorder %s38, 1
    %p134 = por %p132, %p133
    %p136 = scmp.ne.s32.totalorder %s121, %s135
    %p137 = scmp.eq.s32.totalorder %s38, 0
    %p138 = por %p136, %p137
    %s140 = sadd.s32 %s139, 1
    %p143 = scmp.eq.s32.totalorder %s32, 1
    %p144 = scmp.ne.s32.totalorder %s139, %s141
    %p145 = scmp.eq.s32.totalorder %s32, 0
    %p146 = por %p144, %p145
    %p147 = scmp.ne.s32.totalorder %s139, %s141
    %p148 = scmp.eq.s32.totalorder %s37, 1
    %p149 = por %p147, %p148
    %p150 = scmp.ne.s32.totalorder %s141, %s142
    %p151 = scmp.eq.s32.totalorder %s37, 0
    %p152 = por %p150, %p151
    %p153 = scmp.ne.s32.totalorder %s141, %s142
    %p154 = scmp.eq.s32.totalorder %s38, 1
    %p155 = por %p153, %p154
    %p157 = scmp.ne.s32.totalorder %s142, %s156
    %p158 = scmp.eq.s32.totalorder %s38, 0
    %p159 = por %p157, %p158
    %s161 = sadd.s32 %s160, 1
    %p164 = scmp.eq.s32.totalorder %s32, 1
    %p165 = scmp.ne.s32.totalorder %s160, %s162
    %p166 = scmp.eq.s32.totalorder %s32, 0
    %p167 = por %p165, %p166
    %p168 = scmp.ne.s32.totalorder %s160, %s162
    %p169 = scmp.eq.s32.totalorder %s37, 1
    %p170 = por %p168, %p169
    %p171 = scmp.ne.s32.totalorder %s162, %s163
    %p172 = scmp.eq.s32.totalorder %s37, 0
    %p173 = por %p171, %p172
    %p174 = scmp.ne.s32.totalorder %s162, %s163
    %p175 = scmp.eq.s32.totalorder %s38, 1
    %p176 = por %p174, %p175
    %p178 = scmp.ne.s32.totalorder %s163, %s177
    %p179 = scmp.eq.s32.totalorder %s38, 0
    %p180 = por %p178, %p179
    %s182 = sadd.s32 %s181, 1
    %p185 = scmp.eq.s32.totalorder %s32, 1
    %p186 = scmp.ne.s32.totalorder %s181, %s183
    %p187 = scmp.eq.s32.totalorder %s32, 0
    %p188 = por %p186, %p187
    %p189 = scmp.ne.s32.totalorder %s181, %s183
    %p190 = scmp.eq.s32.totalorder %s37, 1
    %p191 = por %p189, %p190
    %p192 = scmp.ne.s32.totalorder %s183, %s184
    %p193 = scmp.eq.s32.totalorder %s37, 0
    %p194 = por %p192, %p193
    %p195 = scmp.ne.s32.totalorder %s183, %s184
    %p196 = scmp.eq.s32.totalorder %s38, 1
    %p197 = por %p195, %p196
    %p199 = scmp.ne.s32.totalorder %s184, %s198
    %p200 = scmp.eq.s32.totalorder %s38, 0
    %p201 = por %p199, %p200
    %s203 = sadd.s32 %s202, 1
    %p206 = scmp.eq.s32.totalorder %s32, 1
    %p207 = scmp.ne.s32.totalorder %s202, %s204
    %p208 = scmp.eq.s32.totalorder %s32, 0
    %p209 = por %p207, %p208
    %p210 = scmp.ne.s32.totalorder %s202, %s204
    %p211 = scmp.eq.s32.totalorder %s37, 1
    %p212 = por %p210, %p211
    %p213 = scmp.ne.s32.totalorder %s204, %s205
    %p214 = scmp.eq.s32.totalorder %s37, 0
    %p215 = por %p213, %p214
    %p216 = scmp.ne.s32.totalorder %s204, %s205
    %p217 = scmp.eq.s32.totalorder %s38, 1
    %p218 = por %p216, %p217
    %p220 = scmp.ne.s32.totalorder %s205, %s219
    %p221 = scmp.eq.s32.totalorder %s38, 0
    %p222 = por %p220, %p221
    %s224 = sadd.s32 %s223, 1
    %p227 = scmp.eq.s32.totalorder %s32, 1
    %p228 = scmp.ne.s32.totalorder %s223, %s225
    %p229 = scmp.eq.s32.totalorder %s32, 0
    %p230 = por %p228, %p229
    %p231 = scmp.ne.s32.totalorder %s223, %s225
    %p232 = scmp.eq.s32.totalorder %s37, 1
    %p233 = por %p231, %p232
    %p234 = scmp.ne.s32.totalorder %s225, %s226
    %p235 = scmp.eq.s32.totalorder %s37, 0
    %p236 = por %p234, %p235
    %p237 = scmp.ne.s32.totalorder %s225, %s226
    %p238 = scmp.eq.s32.totalorder %s38, 1
    %p239 = por %p237, %p238
    %p241 = scmp.ne.s32.totalorder %s226, %s240
    %p242 = scmp.eq.s32.totalorder %s38, 0
    %p243 = por %p241, %p242
    %s245 = sadd.s32 %s244, 1
    %p248 = scmp.eq.s32.totalorder %s32, 1
    %p249 = scmp.ne.s32.totalorder %s244, %s246
    %p250 = scmp.eq.s32.totalorder %s32, 0
    %p251 = por %p249, %p250
    %p252 = scmp.ne.s32.totalorder %s244, %s246
    %p253 = scmp.eq.s32.totalorder %s37, 1
    %p254 = por %p252, %p253
    %p255 = scmp.ne.s32.totalorder %s246, %s247
    %p256 = scmp.eq.s32.totalorder %s37, 0
    %p257 = por %p255, %p256
    %p258 = scmp.ne.s32.totalorder %s246, %s247
    %p259 = scmp.eq.s32.totalorder %s38, 1
    %p260 = por %p258, %p259
    %p262 = scmp.ne.s32.totalorder %s247, %s261
    %p263 = scmp.eq.s32.totalorder %s38, 0
    %p264 = por %p262, %p263
    %s266 = sadd.s32 %s265, 1
    %p269 = scmp.eq.s32.totalorder %s32, 1
    %p270 = scmp.ne.s32.totalorder %s265, %s267
    %p271 = scmp.eq.s32.totalorder %s32, 0
    %p272 = por %p270, %p271
    %p273 = scmp.ne.s32.totalorder %s265, %s267
    %p274 = scmp.eq.s32.totalorder %s37, 1
    %p275 = por %p273, %p274
    %p276 = scmp.ne.s32.totalorder %s267, %s268
    %p277 = scmp.eq.s32.totalorder %s37, 0
    %p278 = por %p276, %p277
    %p279 = scmp.ne.s32.totalorder %s267, %s268
    %p280 = scmp.eq.s32.totalorder %s38, 1
    %p281 = por %p279, %p280
    %p283 = scmp.ne.s32.totalorder %s268, %s282
    %p284 = scmp.eq.s32.totalorder %s38, 0
    %p285 = por %p283, %p284
    %s287 = sadd.s32 %s286, 1
    %p290 = scmp.eq.s32.totalorder %s32, 1
    %p291 = scmp.ne.s32.totalorder %s286, %s288
    %p292 = scmp.eq.s32.totalorder %s32, 0
    %p293 = por %p291, %p292
    %p294 = scmp.ne.s32.totalorder %s286, %s288
    %p295 = scmp.eq.s32.totalorder %s37, 1
    %p296 = por %p294, %p295
    %p297 = scmp.ne.s32.totalorder %s288, %s289
    %p298 = scmp.eq.s32.totalorder %s37, 0
    %p299 = por %p297, %p298
    %p300 = scmp.ne.s32.totalorder %s288, %s289
    %p301 = scmp.eq.s32.totalorder %s38, 1
    %p302 = por %p300, %p301
    %p304 = scmp.ne.s32.totalorder %s289, %s303
    %p305 = scmp.eq.s32.totalorder %s38, 0
    %p306 = por %p304, %p305
    %s308 = sadd.s32 %s307, 1
    %p311 = scmp.eq.s32.totalorder %s32, 1
    %p312 = scmp.ne.s32.totalorder %s307, %s309
    %p313 = scmp.eq.s32.totalorder %s32, 0
    %p314 = por %p312, %p313
    %p315 = scmp.ne.s32.totalorder %s307, %s309
    %p316 = scmp.eq.s32.totalorder %s37, 1
    %p317 = por %p315, %p316
    %p318 = scmp.ne.s32.totalorder %s309, %s310
    %p319 = scmp.eq.s32.totalorder %s37, 0
    %p320 = por %p318, %p319
    %p321 = scmp.ne.s32.totalorder %s309, %s310
    %p322 = scmp.eq.s32.totalorder %s38, 1
    %p323 = por %p321, %p322
    %p325 = scmp.ne.s32.totalorder %s310, %s324
    %p326 = scmp.eq.s32.totalorder %s38, 0
    %p327 = por %p325, %p326
    %s329 = sadd.s32 %s328, 1
    %p332 = scmp.eq.s32.totalorder %s32, 1
    %p333 = scmp.ne.s32.totalorder %s328, %s330
    %p334 = scmp.eq.s32.totalorder %s32, 0
    %p335 = por %p333, %p334
    %p336 = scmp.ne.s32.totalorder %s328, %s330
    %p337 = scmp.eq.s32.totalorder %s37, 1
    %p338 = por %p336, %p337
    %p339 = scmp.ne.s32.totalorder %s330, %s331
    %p340 = scmp.eq.s32.totalorder %s37, 0
    %p341 = por %p339, %p340
    %p342 = scmp.ne.s32.totalorder %s330, %s331
    %p343 = scmp.eq.s32.totalorder %s38, 1
    %p344 = por %p342, %p343
    %p346 = scmp.ne.s32.totalorder %s331, %s345
    %p347 = scmp.eq.s32.totalorder %s38, 0
    %p348 = por %p346, %p347
    %s350 = sadd.s32 %s349, 1
    %p353 = scmp.eq.s32.totalorder %s32, 1
    %p354 = scmp.ne.s32.totalorder %s349, %s351
    %p355 = scmp.eq.s32.totalorder %s32, 0
    %p356 = por %p354, %p355
    %p357 = scmp.ne.s32.totalorder %s349, %s351
    %p358 = scmp.eq.s32.totalorder %s37, 1
    %p359 = por %p357, %p358
    %p360 = scmp.ne.s32.totalorder %s351, %s352
    %p361 = scmp.eq.s32.totalorder %s37, 0
    %p362 = por %p360, %p361
    %p363 = scmp.ne.s32.totalorder %s351, %s352
    %p364 = scmp.eq.s32.totalorder %s38, 1
    %p365 = por %p363, %p364
    %p367 = scmp.ne.s32.totalorder %s352, %s366
    %p368 = scmp.eq.s32.totalorder %s38, 0
    %p369 = por %p367, %p368
    %s371 = sadd.s32 %s370, 1
    %p374 = scmp.eq.s32.totalorder %s32, 1
    %p375 = scmp.ne.s32.totalorder %s370, %s372
    %p376 = scmp.eq.s32.totalorder %s32, 0
    %p377 = por %p375, %p376
    %p378 = scmp.ne.s32.totalorder %s370, %s372
    %p379 = scmp.eq.s32.totalorder %s37, 1
    %p380 = por %p378, %p379
    %p381 = scmp.ne.s32.totalorder %s372, %s373
    %p382 = scmp.eq.s32.totalorder %s37, 0
    %p383 = por %p381, %p382
    %p384 = scmp.ne.s32.totalorder %s372, %s373
    %p385 = scmp.eq.s32.totalorder %s38, 1
    %p386 = por %p384, %p385
    %p388 = scmp.ne.s32.totalorder %s373, %s387
    %p389 = scmp.eq.s32.totalorder %s38, 0
    %p390 = por %p388, %p389
    %s392 = sadd.s32 %s391, 1
    %p395 = scmp.eq.s32.totalorder %s32, 1
    %p396 = scmp.ne.s32.totalorder %s391, %s393
    %p397 = scmp.eq.s32.totalorder %s32, 0
    %p398 = por %p396, %p397
    %p399 = scmp.ne.s32.totalorder %s391, %s393
    %p400 = scmp.eq.s32.totalorder %s37, 1
    %p401 = por %p399, %p400
    %p402 = scmp.ne.s32.totalorder %s393, %s394
    %p403 = scmp.eq.s32.totalorder %s37, 0
    %p404 = por %p402, %p403
    %p405 = scmp.ne.s32.totalorder %s393, %s394
    %p406 = scmp.eq.s32.totalorder %s38, 1
    %p407 = por %p405, %p406
    %p409 = scmp.ne.s32.totalorder %s394, %s408
    %p410 = scmp.eq.s32.totalorder %s38, 0
    %p411 = por %p409, %p410
    %s413 = sadd.s32 %s412, 1
    %p416 = scmp.eq.s32.totalorder %s32, 1
    %p417 = scmp.ne.s32.totalorder %s412, %s414
    %p418 = scmp.eq.s32.totalorder %s32, 0
    %p419 = por %p417, %p418
    %p420 = scmp.ne.s32.totalorder %s412, %s414
    %p421 = scmp.eq.s32.totalorder %s37, 1
    %p422 = por %p420, %p421
    %p423 = scmp.ne.s32.totalorder %s414, %s415
    %p424 = scmp.eq.s32.totalorder %s37, 0
    %p425 = por %p423, %p424
    %p426 = scmp.ne.s32.totalorder %s414, %s415
    %p427 = scmp.eq.s32.totalorder %s38, 1
    %p428 = por %p426, %p427
    %p430 = scmp.ne.s32.totalorder %s415, %s429
    %p431 = scmp.eq.s32.totalorder %s38, 0
    %p432 = por %p430, %p431
    %s434 = sadd.s32 %s433, 1
    %p437 = scmp.eq.s32.totalorder %s32, 1
    %p438 = scmp.ne.s32.totalorder %s433, %s435
    %p439 = scmp.eq.s32.totalorder %s32, 0
    %p440 = por %p438, %p439
    %p441 = scmp.ne.s32.totalorder %s433, %s435
    %p442 = scmp.eq.s32.totalorder %s37, 1
    %p443 = por %p441, %p442
    %p444 = scmp.ne.s32.totalorder %s435, %s436
    %p445 = scmp.eq.s32.totalorder %s37, 0
    %p446 = por %p444, %p445
    %p447 = scmp.ne.s32.totalorder %s435, %s436
    %p448 = scmp.eq.s32.totalorder %s38, 1
    %p449 = por %p447, %p448
    %p451 = scmp.ne.s32.totalorder %s436, %s450
    %p452 = scmp.eq.s32.totalorder %s38, 0
    %p453 = por %p451, %p452
    %s455 = sadd.s32 %s454, 1
    %p458 = scmp.eq.s32.totalorder %s32, 1
    %p459 = scmp.ne.s32.totalorder %s454, %s456
    %p460 = scmp.eq.s32.totalorder %s32, 0
    %p461 = por %p459, %p460
    %p462 = scmp.ne.s32.totalorder %s454, %s456
    %p463 = scmp.eq.s32.totalorder %s37, 1
    %p464 = por %p462, %p463
    %p465 = scmp.ne.s32.totalorder %s456, %s457
    %p466 = scmp.eq.s32.totalorder %s37, 0
    %p467 = por %p465, %p466
    %p468 = scmp.ne.s32.totalorder %s456, %s457
    %p469 = scmp.eq.s32.totalorder %s38, 1
    %p470 = por %p468, %p469
    %p472 = scmp.ne.s32.totalorder %s457, %s471
    %p473 = scmp.eq.s32.totalorder %s38, 0
    %p474 = por %p472, %p473
    %s476 = sadd.s32 %s475, 1
    %p479 = scmp.eq.s32.totalorder %s32, 1
    %p480 = scmp.ne.s32.totalorder %s475, %s477
    %p481 = scmp.eq.s32.totalorder %s32, 0
    %p482 = por %p480, %p481
    %p483 = scmp.ne.s32.totalorder %s475, %s477
    %p484 = scmp.eq.s32.totalorder %s37, 1
    %p485 = por %p483, %p484
    %p486 = scmp.ne.s32.totalorder %s477, %s478
    %p487 = scmp.eq.s32.totalorder %s37, 0
    %p488 = por %p486, %p487
    %p489 = scmp.ne.s32.totalorder %s477, %s478
    %p490 = scmp.eq.s32.totalorder %s38, 1
    %p491 = por %p489, %p490
    %p493 = scmp.ne.s32.totalorder %s478, %s492
    %p494 = scmp.eq.s32.totalorder %s38, 0
    %p495 = por %p493, %p494
    %s497 = sadd.s32 %s496, 1
    %p500 = scmp.eq.s32.totalorder %s32, 1
    %p501 = scmp.ne.s32.totalorder %s496, %s498
    %p502 = scmp.eq.s32.totalorder %s32, 0
    %p503 = por %p501, %p502
    %p504 = scmp.ne.s32.totalorder %s496, %s498
    %p505 = scmp.eq.s32.totalorder %s37, 1
    %p506 = por %p504, %p505
    %p507 = scmp.ne.s32.totalorder %s498, %s499
    %p508 = scmp.eq.s32.totalorder %s37, 0
    %p509 = por %p507, %p508
    %p510 = scmp.ne.s32.totalorder %s498, %s499
    %p511 = scmp.eq.s32.totalorder %s38, 1
    %p512 = por %p510, %p511
    %p514 = scmp.ne.s32.totalorder %s499, %s513
    %p515 = scmp.eq.s32.totalorder %s38, 0
    %p516 = por %p514, %p515
    %s518 = sadd.s32 %s517, 1
    %p521 = scmp.eq.s32.totalorder %s32, 1
    %p522 = scmp.ne.s32.totalorder %s517, %s519
    %p523 = scmp.eq.s32.totalorder %s32, 0
    %p524 = por %p522, %p523
    %p525 = scmp.ne.s32.totalorder %s517, %s519
    %p526 = scmp.eq.s32.totalorder %s37, 1
    %p527 = por %p525, %p526
    %p528 = scmp.ne.s32.totalorder %s519, %s520
    %p529 = scmp.eq.s32.totalorder %s37, 0
    %p530 = por %p528, %p529
    %p531 = scmp.ne.s32.totalorder %s519, %s520
    %p532 = scmp.eq.s32.totalorder %s38, 1
    %p533 = por %p531, %p532
    %p535 = scmp.ne.s32.totalorder %s520, %s534
    %p536 = scmp.eq.s32.totalorder %s38, 0
    %p537 = por %p535, %p536
    %s539 = sadd.s32 %s538, 1
    %p542 = scmp.eq.s32.totalorder %s32, 1
    %p543 = scmp.ne.s32.totalorder %s538, %s540
    %p544 = scmp.eq.s32.totalorder %s32, 0
    %p545 = por %p543, %p544
    %p546 = scmp.ne.s32.totalorder %s538, %s540
    %p547 = scmp.eq.s32.totalorder %s37, 1
    %p548 = por %p546, %p547
    %p549 = scmp.ne.s32.totalorder %s540, %s541
    %p550 = scmp.eq.s32.totalorder %s37, 0
    %p551 = por %p549, %p550
    %p552 = scmp.ne.s32.totalorder %s540, %s541
    %p553 = scmp.eq.s32.totalorder %s38, 1
    %p554 = por %p552, %p553
    %p556 = scmp.ne.s32.totalorder %s541, %s555
    %p557 = scmp.eq.s32.totalorder %s38, 0
    %p558 = por %p556, %p557
    %s559 = ssub.s32 %s32, %s39
    %p560 = scmp.eq.s32.totalorder %s559, 0
    %s562 = sadd.s32 %s561, 1
    %s563 = scalar_select %p560, %s561, %s562
    %p566 = pneg %p560
    %p567 = scmp.eq.s32.totalorder %s32, 1
    %p568 = por %p566, %p567
    %p569 = scmp.ne.s32.totalorder %s561, %s564
    %p570 = scmp.eq.s32.totalorder %s32, 0
    %p571 = por %p569, %p570
    %p572 = scmp.ne.s32.totalorder %s561, %s564
    %p573 = scmp.eq.s32.totalorder %s37, 1
    %p574 = por %p572, %p573
    %p575 = scmp.ne.s32.totalorder %s564, %s565
    %p576 = scmp.eq.s32.totalorder %s37, 0
    %p577 = por %p575, %p576
    %p578 = scmp.ne.s32.totalorder %s564, %s565
    %p579 = scmp.eq.s32.totalorder %s38, 1
    %p580 = por %p578, %p579
    %p582 = scmp.ne.s32.totalorder %s565, %s581
    %p583 = scmp.eq.s32.totalorder %s38, 0
    %p584 = por %p582, %p583
    %s585 = ssub.s32 %s32, %s39
    %p586 = scmp.eq.s32.totalorder %s585, 0
    %s588 = sadd.s32 %s587, 1
    %s589 = scalar_select %p586, %s587, %s588
    %p592 = pneg %p586
    %p593 = scmp.eq.s32.totalorder %s32, 1
    %p594 = por %p592, %p593
    %p595 = scmp.ne.s32.totalorder %s587, %s590
    %p596 = scmp.eq.s32.totalorder %s32, 0
    %p597 = por %p595, %p596
    %p598 = scmp.ne.s32.totalorder %s587, %s590
    %p599 = scmp.eq.s32.totalorder %s37, 1
    %p600 = por %p598, %p599
    %p601 = scmp.ne.s32.totalorder %s590, %s591
    %p602 = scmp.eq.s32.totalorder %s37, 0
    %p603 = por %p601, %p602
    %p604 = scmp.ne.s32.totalorder %s590, %s591
    %p605 = scmp.eq.s32.totalorder %s38, 1
    %p606 = por %p604, %p605
    %p608 = scmp.ne.s32.totalorder %s591, %s607
    %p609 = scmp.eq.s32.totalorder %s38, 0
    %p610 = por %p608, %p609
    %p611 = scmp.le.s32.totalorder 1, %s32
    %p612 = scmp.lt.s32.totalorder %s32, 3
    %p613 = pnand %p611, %p612
    %p614 = pneg %p613
    // Predicated region
    $region9: #{cross_mamba_forward.1} parent=5 // pred_check
      _
    $region10: #{cross_mamba_forward.1} parent=5 // pred_check_branch
      %616 = sbr.rel (%p613) target = $region12
    $region11: #{cross_mamba_forward.1} parent=5 // pred_region
      %s617 = ssub.s32 %s32, 1
      // Predicated region
      $region13: #{cross_mamba_forward.1} parent=11 // pred_check
        %p618 = pneg %p131
      $region14: #{cross_mamba_forward.1} parent=11 // pred_check_branch
        %620 = sbr.rel (%p618) target = $region16
      $region15: #{cross_mamba_forward.1} parent=11 // pred_region
        _
      $region16: #{cross_mamba_forward.1} parent=11 // pred_fallthru
        _
      // Predicated region
      $region17: #{cross_mamba_forward.1} parent=11 // pred_check
        %p621 = pneg %p152
      $region18: #{cross_mamba_forward.1} parent=11 // pred_check_branch
        %623 = sbr.rel (%p621) target = $region20
      $region19: #{cross_mamba_forward.1} parent=11 // pred_region
        _
      $region20: #{cross_mamba_forward.1} parent=11 // pred_fallthru
        _
      // Predicated region
      $region21: #{cross_mamba_forward.1} parent=11 // pred_check
        %p624 = pneg %p173
      $region22: #{cross_mamba_forward.1} parent=11 // pred_check_branch
        %626 = sbr.rel (%p624) target = $region24
      $region23: #{cross_mamba_forward.1} parent=11 // pred_region
        _
      $region24: #{cross_mamba_forward.1} parent=11 // pred_fallthru
        _
      // Predicated region
      $region25: #{cross_mamba_forward.1} parent=11 // pred_check
        %p627 = pneg %p194
      $region26: #{cross_mamba_forward.1} parent=11 // pred_check_branch
        %629 = sbr.rel (%p627) target = $region28
      $region27: #{cross_mamba_forward.1} parent=11 // pred_region
        _
      $region28: #{cross_mamba_forward.1} parent=11 // pred_fallthru
        _
      // Predicated region
      $region29: #{cross_mamba_forward.1} parent=11 // pred_check
        %p630 = pneg %p215
      $region30: #{cross_mamba_forward.1} parent=11 // pred_check_branch
        %632 = sbr.rel (%p630) target = $region32
      $region31: #{cross_mamba_forward.1} parent=11 // pred_region
        _
      $region32: #{cross_mamba_forward.1} parent=11 // pred_fallthru
        _
      // Predicated region
      $region33: #{cross_mamba_forward.1} parent=11 // pred_check
        %p633 = pneg %p236
      $region34: #{cross_mamba_forward.1} parent=11 // pred_check_branch
        %635 = sbr.rel (%p633) target = $region36
      $region35: #{cross_mamba_forward.1} parent=11 // pred_region
        _
      $region36: #{cross_mamba_forward.1} parent=11 // pred_fallthru
        _
      // Predicated region
      $region37: #{cross_mamba_forward.1} parent=11 // pred_check
        %p636 = pneg %p257
      $region38: #{cross_mamba_forward.1} parent=11 // pred_check_branch
        %638 = sbr.rel (%p636) target = $region40
      $region39: #{cross_mamba_forward.1} parent=11 // pred_region
        _
      $region40: #{cross_mamba_forward.1} parent=11 // pred_fallthru
        _
      // Predicated region
      $region41: #{cross_mamba_forward.1} parent=11 // pred_check
        %p639 = pneg %p278
      $region42: #{cross_mamba_forward.1} parent=11 // pred_check_branch
        %641 = sbr.rel (%p639) target = $region44
      $region43: #{cross_mamba_forward.1} parent=11 // pred_region
        _
      $region44: #{cross_mamba_forward.1} parent=11 // pred_fallthru
        _
      // Predicated region
      $region45: #{cross_mamba_forward.1} parent=11 // pred_check
        %p642 = pneg %p299
      $region46: #{cross_mamba_forward.1} parent=11 // pred_check_branch
        %644 = sbr.rel (%p642) target = $region48
      $region47: #{cross_mamba_forward.1} parent=11 // pred_region
        _
      $region48: #{cross_mamba_forward.1} parent=11 // pred_fallthru
        _
      // Predicated region
      $region49: #{cross_mamba_forward.1} parent=11 // pred_check
        %p645 = pneg %p320
      $region50: #{cross_mamba_forward.1} parent=11 // pred_check_branch
        %647 = sbr.rel (%p645) target = $region52
      $region51: #{cross_mamba_forward.1} parent=11 // pred_region
        _
      $region52: #{cross_mamba_forward.1} parent=11 // pred_fallthru
        _
      // Predicated region
      $region53: #{cross_mamba_forward.1} parent=11 // pred_check
        %p648 = pneg %p341
      $region54: #{cross_mamba_forward.1} parent=11 // pred_check_branch
        %650 = sbr.rel (%p648) target = $region56
      $region55: #{cross_mamba_forward.1} parent=11 // pred_region
        _
      $region56: #{cross_mamba_forward.1} parent=11 // pred_fallthru
        _
      // Predicated region
      $region57: #{cross_mamba_forward.1} parent=11 // pred_check
        %p651 = pneg %p362
      $region58: #{cross_mamba_forward.1} parent=11 // pred_check_branch
        %653 = sbr.rel (%p651) target = $region60
      $region59: #{cross_mamba_forward.1} parent=11 // pred_region
        _
      $region60: #{cross_mamba_forward.1} parent=11 // pred_fallthru
        _
      // Predicated region
      $region61: #{cross_mamba_forward.1} parent=11 // pred_check
        %p654 = pneg %p383
      $region62: #{cross_mamba_forward.1} parent=11 // pred_check_branch
        %656 = sbr.rel (%p654) target = $region64
      $region63: #{cross_mamba_forward.1} parent=11 // pred_region
        _
      $region64: #{cross_mamba_forward.1} parent=11 // pred_fallthru
        _
      // Predicated region
      $region65: #{cross_mamba_forward.1} parent=11 // pred_check
        %p657 = pneg %p404
      $region66: #{cross_mamba_forward.1} parent=11 // pred_check_branch
        %659 = sbr.rel (%p657) target = $region68
      $region67: #{cross_mamba_forward.1} parent=11 // pred_region
        _
      $region68: #{cross_mamba_forward.1} parent=11 // pred_fallthru
        _
      // Predicated region
      $region69: #{cross_mamba_forward.1} parent=11 // pred_check
        %p660 = pneg %p425
      $region70: #{cross_mamba_forward.1} parent=11 // pred_check_branch
        %662 = sbr.rel (%p660) target = $region72
      $region71: #{cross_mamba_forward.1} parent=11 // pred_region
        _
      $region72: #{cross_mamba_forward.1} parent=11 // pred_fallthru
        _
      // Predicated region
      $region73: #{cross_mamba_forward.1} parent=11 // pred_check
        %p663 = pneg %p446
      $region74: #{cross_mamba_forward.1} parent=11 // pred_check_branch
        %665 = sbr.rel (%p663) target = $region76
      $region75: #{cross_mamba_forward.1} parent=11 // pred_region
        _
      $region76: #{cross_mamba_forward.1} parent=11 // pred_fallthru
        _
      // Predicated region
      $region77: #{cross_mamba_forward.1} parent=11 // pred_check
        %p666 = pneg %p467
      $region78: #{cross_mamba_forward.1} parent=11 // pred_check_branch
        %668 = sbr.rel (%p666) target = $region80
      $region79: #{cross_mamba_forward.1} parent=11 // pred_region
        _
      $region80: #{cross_mamba_forward.1} parent=11 // pred_fallthru
        _
      // Predicated region
      $region81: #{cross_mamba_forward.1} parent=11 // pred_check
        %p669 = pneg %p488
      $region82: #{cross_mamba_forward.1} parent=11 // pred_check_branch
        %671 = sbr.rel (%p669) target = $region84
      $region83: #{cross_mamba_forward.1} parent=11 // pred_region
        _
      $region84: #{cross_mamba_forward.1} parent=11 // pred_fallthru
        _
      // Predicated region
      $region85: #{cross_mamba_forward.1} parent=11 // pred_check
        %p672 = pneg %p509
      $region86: #{cross_mamba_forward.1} parent=11 // pred_check_branch
        %674 = sbr.rel (%p672) target = $region88
      $region87: #{cross_mamba_forward.1} parent=11 // pred_region
        _
      $region88: #{cross_mamba_forward.1} parent=11 // pred_fallthru
        _
      // Predicated region
      $region89: #{cross_mamba_forward.1} parent=11 // pred_check
        %p675 = pneg %p530
      $region90: #{cross_mamba_forward.1} parent=11 // pred_check_branch
        %677 = sbr.rel (%p675) target = $region92
      $region91: #{cross_mamba_forward.1} parent=11 // pred_region
        _
      $region92: #{cross_mamba_forward.1} parent=11 // pred_fallthru
        _
      // Predicated region
      $region93: #{cross_mamba_forward.1} parent=11 // pred_check
        %p678 = pneg %p551
      $region94: #{cross_mamba_forward.1} parent=11 // pred_check_branch
        %680 = sbr.rel (%p678) target = $region96
      $region95: #{cross_mamba_forward.1} parent=11 // pred_region
        _
      $region96: #{cross_mamba_forward.1} parent=11 // pred_fallthru
        _
    $region12: #{cross_mamba_forward.1} parent=5 // pred_fallthru
      _
    %p681 = scmp.lt.s32.totalorder %s32, 2
    // Predicated region
    $region97: #{cross_mamba_forward.1} parent=5 // pred_check
      %p682 = pneg %p681
    $region98: #{cross_mamba_forward.1} parent=5 // pred_check_branch
      %684 = sbr.rel (%p682) target = $region100
    $region99: #{cross_mamba_forward.1} parent=5 // pred_region
      // Predicated region
      $region101: #{cross_mamba_forward.1} parent=99 // pred_check
        %p685 = pneg %p52
      $region102: #{cross_mamba_forward.1} parent=99 // pred_check_branch
        %687 = sbr.rel (%p685) target = $region104
      $region103: #{cross_mamba_forward.1} parent=99 // pred_region
        %p688 = scmp.lt.s32.totalorder %s32, 1
        %s689 = scalar_select %p688, %s32, 1
        %s690 = smul.addr %s689, 8
        %s691 = smul.addr %s690, 8
        %s692 = scalar_lea.vmem %s0, %s691
      $region104: #{cross_mamba_forward.1} parent=99 // pred_fallthru
        _
      // Predicated region
      $region105: #{cross_mamba_forward.1} parent=99 // pred_check
        %p693 = pneg %p78
      $region106: #{cross_mamba_forward.1} parent=99 // pred_check_branch
        %695 = sbr.rel (%p693) target = $region108
      $region107: #{cross_mamba_forward.1} parent=99 // pred_region
        %p696 = scmp.lt.s32.totalorder %s32, 1
        %s697 = scalar_select %p696, %s32, 1
        %s698 = smul.addr %s697, 8
        %s699 = smul.addr %s698, 8
        %s700 = scalar_lea.vmem %s1, %s699
      $region108: #{cross_mamba_forward.1} parent=99 // pred_fallthru
        _
      // Predicated region
      $region109: #{cross_mamba_forward.1} parent=99 // pred_check
        %p701 = pneg %p104
      $region110: #{cross_mamba_forward.1} parent=99 // pred_check_branch
        %703 = sbr.rel (%p701) target = $region112
      $region111: #{cross_mamba_forward.1} parent=99 // pred_region
        %p704 = scmp.lt.s32.totalorder %s32, 1
        %s705 = scalar_select %p704, %s32, 1
        %s706 = smul.addr %s705, 8
        %s707 = smul.addr %s706, 8
        %s708 = scalar_lea.vmem %s2, %s707
      $region112: #{cross_mamba_forward.1} parent=99 // pred_fallthru
        _
    $region100: #{cross_mamba_forward.1} parent=5 // pred_fallthru
      _
    %p709 = scmp.le.s32.totalorder 1, %s32
    %p710 = scmp.lt.s32.totalorder %s32, 3
    %p711 = pnand %p709, %p710
    %p712 = pneg %p711
    // Predicated region
    $region113: #{cross_mamba_forward.1} parent=5 // pred_check
      _
    $region114: #{cross_mamba_forward.1} parent=5 // pred_check_branch
      %714 = sbr.rel (%p711) target = $region116
    $region115: #{cross_mamba_forward.1} parent=5 // pred_region
      %s715 = ssub.s32 %s32, 1
      %p716 = scmp.lt.s32.totalorder %s37, 1
      %s717 = scalar_select %p716, %s37, 1
      %s718 = smul.addr %s717, 8
      %s719 = smul.addr %s718, 8
      %s720 = scalar_lea.vmem %s0, %s719
      %p721 = pneg %p58
      %p722 = pneg %p55
      %p723 = scmp.lt.s32.totalorder %s37, 1
      %s724 = scalar_select %p723, %s37, 1
      %s725 = smul.addr %s724, 8
      %s726 = smul.addr %s725, 8
      %s727 = scalar_lea.vmem %s1, %s726
      %p728 = pneg %p84
      %p729 = pneg %p81
      %p730 = scmp.lt.s32.totalorder %s37, 1
      %s731 = scalar_select %p730, %s37, 1
      %s732 = smul.addr %s731, 8
      %s733 = smul.addr %s732, 8
      %s734 = scalar_lea.vmem %s2, %s733
      %p735 = pneg %p110
      %p736 = pneg %p107
      %p737 = pneg %p131
      %p738 = pneg %p128
      %p739 = pneg %p152
      %p740 = pneg %p149
      %p741 = pneg %p173
      %p742 = pneg %p170
      %p743 = pneg %p194
      %p744 = pneg %p191
      %p745 = pneg %p215
      %p746 = pneg %p212
      %p747 = pneg %p236
      %p748 = pneg %p233
      %p749 = pneg %p257
      %p750 = pneg %p254
      %p751 = pneg %p278
      %p752 = pneg %p275
      %p753 = pneg %p299
      %p754 = pneg %p296
      %p755 = pneg %p320
      %p756 = pneg %p317
      %p757 = pneg %p341
      %p758 = pneg %p338
      %p759 = pneg %p362
      %p760 = pneg %p359
      %p761 = pneg %p383
      %p762 = pneg %p380
      %p763 = pneg %p404
      %p764 = pneg %p401
      %p765 = pneg %p425
      %p766 = pneg %p422
      %p767 = pneg %p446
      %p768 = pneg %p443
      %p769 = pneg %p467
      %p770 = pneg %p464
      %p771 = pneg %p488
      %p772 = pneg %p485
      %p773 = pneg %p509
      %p774 = pneg %p506
      %p775 = pneg %p530
      %p776 = pneg %p527
      %p777 = pneg %p551
      %p778 = pneg %p548
      %p779 = pneg %p577
      %p780 = pneg %p574
      %p781 = scmp.lt.s32.totalorder %s37, 1
      %s782 = scalar_select %p781, %s37, 1
      %s783 = smul.addr %s782, 8
      %s784 = smul.addr %s783, 8
      %s785 = scalar_lea.vmem %s24, %s784
      %p786 = pneg %p603
      %p787 = pneg %p600
      %p788 = scmp.lt.s32.totalorder %s37, 1
      %s789 = scalar_select %p788, %s37, 1
      %s790 = smul.addr %s789, 8
      %s791 = smul.addr %s790, 8
      %s792 = scalar_lea.vmem %s25, %s791
      %p793 = scmp.lt.s32.totalorder %s37, 1
      %s794 = scalar_select %p793, %s37, 1
      %s795 = smul.addr %s794, 8
      %s796 = smul.addr %s795, 8
      %s797 = scalar_lea.vmem %s0, %s796
      %p798 = scmp.lt.s32.totalorder %s37, 1
      %s799 = scalar_select %p798, %s37, 1
      %s800 = smul.addr %s799, 8
      %s801 = smul.addr %s800, 8
      %s802 = scalar_lea.vmem %s1, %s801
      %p803 = scmp.lt.s32.totalorder %s37, 1
      %s804 = scalar_select %p803, %s37, 1
      %s805 = smul.addr %s804, 8
      %s806 = smul.addr %s805, 8
      %s807 = scalar_lea.vmem %s2, %s806
      %p808 = scmp.lt.s32.totalorder %s37, 1
      %s809 = scalar_select %p808, %s37, 1
      %s810 = smul.addr %s809, 8
      %s811 = smul.addr %s810, 8
      %s812 = scalar_lea.vmem %s24, %s811
      %p813 = scmp.lt.s32.totalorder %s37, 1
      %s814 = scalar_select %p813, %s37, 1
      %s815 = smul.addr %s814, 8
      %s816 = smul.addr %s815, 8
      %s817 = scalar_lea.vmem %s25, %s816
      %v818 = vld [vmem:[%s797] sm:$0xff]
      %v819 = vld [vmem:[%s797 + $0x8] sm:$0xff]
      %v820 = vld [vmem:[%s797 + $0x10] sm:$0xff]
      %v821 = vld [vmem:[%s797 + $0x18] sm:$0xff]
      %v822 = vld [vmem:[%s797 + $0x20] sm:$0xff]
      %v823 = vld [vmem:[%s797 + $0x28] sm:$0xff]
      %v824 = vld [vmem:[%s797 + $0x30] sm:$0xff]
      %v825 = vld [vmem:[%s797 + $0x38] sm:$0xff]
      %v826 = vld [vmem:[%s802] sm:$0xff]
      %v827 = vld [vmem:[%s802 + $0x8] sm:$0xff]
      %v828 = vld [vmem:[%s802 + $0x10] sm:$0xff]
      %v829 = vld [vmem:[%s802 + $0x18] sm:$0xff]
      %v830 = vld [vmem:[%s802 + $0x20] sm:$0xff]
      %v831 = vld [vmem:[%s802 + $0x28] sm:$0xff]
      %v832 = vld [vmem:[%s802 + $0x30] sm:$0xff]
      %v833 = vld [vmem:[%s802 + $0x38] sm:$0xff]
      %v834 = vadd.f32 %v818, %v826
      %v835 = vadd.f32 %v819, %v827
      %v836 = vadd.f32 %v820, %v828
      %v837 = vadd.f32 %v821, %v829
      %v838 = vadd.f32 %v822, %v830
      %v839 = vadd.f32 %v823, %v831
      %v840 = vadd.f32 %v824, %v832
      %v841 = vadd.f32 %v825, %v833
      %vm842 = vcmask 261120
      %843 = vst.msk [vmem:[%s817] sm:$0xff] %vm842, %v834
      %844 = vst.msk [vmem:[%s817 + $0x8] sm:$0xff] %vm842, %v835
      %845 = vst.msk [vmem:[%s817 + $0x10] sm:$0xff] %vm842, %v836
      %846 = vst.msk [vmem:[%s817 + $0x18] sm:$0xff] %vm842, %v837
      %847 = vst.msk [vmem:[%s817 + $0x20] sm:$0xff] %vm842, %v838
      %848 = vst.msk [vmem:[%s817 + $0x28] sm:$0xff] %vm842, %v839
      %849 = vst.msk [vmem:[%s817 + $0x30] sm:$0xff] %vm842, %v840
      %850 = vst.msk [vmem:[%s817 + $0x38] sm:$0xff] %vm842, %v841
      %v851 = vld [vmem:[%s3] sm:$0x1]
      %v852 = vld [vmem:[%s4] sm:$0x1]
      %v853 = vld [vmem:[%s5] sm:$0x1]
      %v854 = vld [vmem:[%s6] sm:$0x1]
      %v855 = vsel %vm842, %v834, 0.0
      %856 = vadd.xlane.f32.xlu0 %v855
      %v857 = vpop.xlane.xlu0 %856
      %v858 = vsel %vm842, %v835, 0.0
      %859 = vadd.xlane.f32.xlu0 %v858
      %v860 = vpop.xlane.xlu0 %859
      %v861 = vsel %vm842, %v836, 0.0
      %862 = vadd.xlane.f32.xlu0 %v861
      %v863 = vpop.xlane.xlu0 %862
      %v864 = vsel %vm842, %v837, 0.0
      %865 = vadd.xlane.f32.xlu0 %v864
      %v866 = vpop.xlane.xlu0 %865
      %v867 = vsel %vm842, %v838, 0.0
      %868 = vadd.xlane.f32.xlu0 %v867
      %v869 = vpop.xlane.xlu0 %868
      %v870 = vsel %vm842, %v839, 0.0
      %871 = vadd.xlane.f32.xlu0 %v870
      %v872 = vpop.xlane.xlu0 %871
      %v873 = vsel %vm842, %v840, 0.0
      %874 = vadd.xlane.f32.xlu0 %v873
      %v875 = vpop.xlane.xlu0 %874
      %v876 = vsel %vm842, %v841, 0.0
      %877 = vadd.xlane.f32.xlu0 %v876
      %v878 = vpop.xlane.xlu0 %877
      %v879 = vrcp.pop 32.0
      %v880 = vmul.f32 %v857, %v879
      %v881 = vmul.f32 %v860, %v879
      %v882 = vmul.f32 %v863, %v879
      %v883 = vmul.f32 %v866, %v879
      %v884 = vmul.f32 %v869, %v879
      %v885 = vmul.f32 %v872, %v879
      %v886 = vmul.f32 %v875, %v879
      %v887 = vmul.f32 %v878, %v879
      %v888 = vsub.f32 %v834, %v880
      %v889 = vsub.f32 %v835, %v881
      %v890 = vsub.f32 %v836, %v882
      %v891 = vsub.f32 %v837, %v883
      %v892 = vsub.f32 %v838, %v884
      %v893 = vsub.f32 %v839, %v885
      %v894 = vsub.f32 %v840, %v886
      %v895 = vsub.f32 %v841, %v887
      %v896 = vmul.f32 %v888, %v888
      %v897 = vmul.f32 %v889, %v889
      %v898 = vmul.f32 %v890, %v890
      %v899 = vmul.f32 %v891, %v891
      %v900 = vmul.f32 %v892, %v892
      %v901 = vmul.f32 %v893, %v893
      %v902 = vmul.f32 %v894, %v894
      %v903 = vmul.f32 %v895, %v895
      %v904 = vsel %vm842, %v896, 0.0
      %905 = vadd.xlane.f32.xlu0 %v904
      %v906 = vpop.xlane.xlu0 %905
      %v907 = vsel %vm842, %v897, 0.0
      %908 = vadd.xlane.f32.xlu0 %v907
      %v909 = vpop.xlane.xlu0 %908
      %v910 = vsel %vm842, %v898, 0.0
      %911 = vadd.xlane.f32.xlu0 %v910
      %v912 = vpop.xlane.xlu0 %911
      %v913 = vsel %vm842, %v899, 0.0
      %914 = vadd.xlane.f32.xlu0 %v913
      %v915 = vpop.xlane.xlu0 %914
      %v916 = vsel %vm842, %v900, 0.0
      %917 = vadd.xlane.f32.xlu0 %v916
      %v918 = vpop.xlane.xlu0 %917
      %v919 = vsel %vm842, %v901, 0.0
      %920 = vadd.xlane.f32.xlu0 %v919
      %v921 = vpop.xlane.xlu0 %920
      %v922 = vsel %vm842, %v902, 0.0
      %923 = vadd.xlane.f32.xlu0 %v922
      %v924 = vpop.xlane.xlu0 %923
      %v925 = vsel %vm842, %v903, 0.0
      %926 = vadd.xlane.f32.xlu0 %v925
      %v927 = vpop.xlane.xlu0 %926
      %v928 = vmul.f32 %v906, %v879
      %v929 = vmul.f32 %v909, %v879
      %v930 = vmul.f32 %v912, %v879
      %v931 = vmul.f32 %v915, %v879
      %v932 = vmul.f32 %v918, %v879
      %v933 = vmul.f32 %v921, %v879
      %v934 = vmul.f32 %v924, %v879
      %v935 = vmul.f32 %v927, %v879
      %v936 = vadd.f32 %v928, 1e-05
      %v937 = vadd.f32 %v929, 1e-05
      %v938 = vadd.f32 %v930, 1e-05
      %v939 = vadd.f32 %v931, 1e-05
      %v940 = vadd.f32 %v932, 1e-05
      %v941 = vadd.f32 %v933, 1e-05
      %v942 = vadd.f32 %v934, 1e-05
      %v943 = vadd.f32 %v935, 1e-05
      %v944 = vrsqrt.pop %v936
      %v945 = vrsqrt.pop %v937
      %v946 = vrsqrt.pop %v938
      %v947 = vrsqrt.pop %v939
      %v948 = vrsqrt.pop %v940
      %v949 = vrsqrt.pop %v941
      %v950 = vrsqrt.pop %v942
      %v951 = vrsqrt.pop %v943
      %v952 = vmul.f32 %v888, %v944
      %v953 = vmul.f32 %v889, %v945
      %v954 = vmul.f32 %v890, %v946
      %v955 = vmul.f32 %v891, %v947
      %v956 = vmul.f32 %v892, %v948
      %v957 = vmul.f32 %v893, %v949
      %v958 = vmul.f32 %v894, %v950
      %v959 = vmul.f32 %v895, %v951
      %v961 = vlaneseq
      %v962 = vshrl.u32 %v961, 7
      %v963 = vsub.s32 0, %v962
      %v964 = vrot.slane %v851, %v963
      %v966 = vmul.f32 %v952, %v964
      %v967 = vmul.f32 %v953, %v964
      %v968 = vmul.f32 %v954, %v964
      %v969 = vmul.f32 %v955, %v964
      %v970 = vmul.f32 %v956, %v964
      %v971 = vmul.f32 %v957, %v964
      %v972 = vmul.f32 %v958, %v964
      %v973 = vmul.f32 %v959, %v964
      %v975 = vlaneseq
      %v976 = vshrl.u32 %v975, 7
      %v977 = vsub.s32 0, %v976
      %v978 = vrot.slane %v852, %v977
      %v980 = vadd.f32 %v966, %v978
      %v981 = vadd.f32 %v967, %v978
      %v982 = vadd.f32 %v968, %v978
      %v983 = vadd.f32 %v969, %v978
      %v984 = vadd.f32 %v970, %v978
      %v985 = vadd.f32 %v971, %v978
      %v986 = vadd.f32 %v972, %v978
      %v987 = vadd.f32 %v973, %v978
      %v988 = vsel %vm842, %v980, 0.0
      %989 = vadd.xlane.f32.xlu0 %v988
      %v990 = vpop.xlane.xlu0 %989
      %v991 = vsel %vm842, %v981, 0.0
      %992 = vadd.xlane.f32.xlu0 %v991
      %v993 = vpop.xlane.xlu0 %992
      %v994 = vsel %vm842, %v982, 0.0
      %995 = vadd.xlane.f32.xlu0 %v994
      %v996 = vpop.xlane.xlu0 %995
      %v997 = vsel %vm842, %v983, 0.0
      %998 = vadd.xlane.f32.xlu0 %v997
      %v999 = vpop.xlane.xlu0 %998
      %v1000 = vsel %vm842, %v984, 0.0
      %1001 = vadd.xlane.f32.xlu0 %v1000
      %v1002 = vpop.xlane.xlu0 %1001
      %v1003 = vsel %vm842, %v985, 0.0
      %1004 = vadd.xlane.f32.xlu0 %v1003
      %v1005 = vpop.xlane.xlu0 %1004
      %v1006 = vsel %vm842, %v986, 0.0
      %1007 = vadd.xlane.f32.xlu0 %v1006
      %v1008 = vpop.xlane.xlu0 %1007
      %v1009 = vsel %vm842, %v987, 0.0
      %1010 = vadd.xlane.f32.xlu0 %v1009
      %v1011 = vpop.xlane.xlu0 %1010
      %v1012 = vmul.f32 %v990, %v879
      %v1013 = vmul.f32 %v993, %v879
      %v1014 = vmul.f32 %v996, %v879
      %v1015 = vmul.f32 %v999, %v879
      %v1016 = vmul.f32 %v1002, %v879
      %v1017 = vmul.f32 %v1005, %v879
      %v1018 = vmul.f32 %v1008, %v879
      %v1019 = vmul.f32 %v1011, %v879
      %v1020 = vsub.f32 %v980, %v1012
      %v1021 = vsub.f32 %v981, %v1013
      %v1022 = vsub.f32 %v982, %v1014
      %v1023 = vsub.f32 %v983, %v1015
      %v1024 = vsub.f32 %v984, %v1016
      %v1025 = vsub.f32 %v985, %v1017
      %v1026 = vsub.f32 %v986, %v1018
      %v1027 = vsub.f32 %v987, %v1019
      %v1028 = vmul.f32 %v1020, %v1020
      %v1029 = vmul.f32 %v1021, %v1021
      %v1030 = vmul.f32 %v1022, %v1022
      %v1031 = vmul.f32 %v1023, %v1023
      %v1032 = vmul.f32 %v1024, %v1024
      %v1033 = vmul.f32 %v1025, %v1025
      %v1034 = vmul.f32 %v1026, %v1026
      %v1035 = vmul.f32 %v1027, %v1027
      %v1036 = vsel %vm842, %v1028, 0.0
      %1037 = vadd.xlane.f32.xlu0 %v1036
      %v1038 = vpop.xlane.xlu0 %1037
      %v1039 = vsel %vm842, %v1029, 0.0
      %1040 = vadd.xlane.f32.xlu0 %v1039
      %v1041 = vpop.xlane.xlu0 %1040
      %v1042 = vsel %vm842, %v1030, 0.0
      %1043 = vadd.xlane.f32.xlu0 %v1042
      %v1044 = vpop.xlane.xlu0 %1043
      %v1045 = vsel %vm842, %v1031, 0.0
      %1046 = vadd.xlane.f32.xlu0 %v1045
      %v1047 = vpop.xlane.xlu0 %1046
      %v1048 = vsel %vm842, %v1032, 0.0
      %1049 = vadd.xlane.f32.xlu0 %v1048
      %v1050 = vpop.xlane.xlu0 %1049
      %v1051 = vsel %vm842, %v1033, 0.0
      %1052 = vadd.xlane.f32.xlu0 %v1051
      %v1053 = vpop.xlane.xlu0 %1052
      %v1054 = vsel %vm842, %v1034, 0.0
      %1055 = vadd.xlane.f32.xlu0 %v1054
      %v1056 = vpop.xlane.xlu0 %1055
      %v1057 = vsel %vm842, %v1035, 0.0
      %1058 = vadd.xlane.f32.xlu0 %v1057
      %v1059 = vpop.xlane.xlu0 %1058
      %v1060 = vmul.f32 %v1038, %v879
      %v1061 = vmul.f32 %v1041, %v879
      %v1062 = vmul.f32 %v1044, %v879
      %v1063 = vmul.f32 %v1047, %v879
      %v1064 = vmul.f32 %v1050, %v879
      %v1065 = vmul.f32 %v1053, %v879
      %v1066 = vmul.f32 %v1056, %v879
      %v1067 = vmul.f32 %v1059, %v879
      %v1068 = vadd.f32 %v1060, 1e-05
      %v1069 = vadd.f32 %v1061, 1e-05
      %v1070 = vadd.f32 %v1062, 1e-05
      %v1071 = vadd.f32 %v1063, 1e-05
      %v1072 = vadd.f32 %v1064, 1e-05
      %v1073 = vadd.f32 %v1065, 1e-05
      %v1074 = vadd.f32 %v1066, 1e-05
      %v1075 = vadd.f32 %v1067, 1e-05
      %v1076 = vrsqrt.pop %v1068
      %v1077 = vrsqrt.pop %v1069
      %v1078 = vrsqrt.pop %v1070
      %v1079 = vrsqrt.pop %v1071
      %v1080 = vrsqrt.pop %v1072
      %v1081 = vrsqrt.pop %v1073
      %v1082 = vrsqrt.pop %v1074
      %v1083 = vrsqrt.pop %v1075
      %v1084 = vmul.f32 %v1020, %v1076
      %v1085 = vmul.f32 %v1021, %v1077
      %v1086 = vmul.f32 %v1022, %v1078
      %v1087 = vmul.f32 %v1023, %v1079
      %v1088 = vmul.f32 %v1024, %v1080
      %v1089 = vmul.f32 %v1025, %v1081
      %v1090 = vmul.f32 %v1026, %v1082
      %v1091 = vmul.f32 %v1027, %v1083
      %v1092 = vmul.f32 %v1084, %v964
      %v1093 = vmul.f32 %v1085, %v964
      %v1094 = vmul.f32 %v1086, %v964
      %v1095 = vmul.f32 %v1087, %v964
      %v1096 = vmul.f32 %v1088, %v964
      %v1097 = vmul.f32 %v1089, %v964
      %v1098 = vmul.f32 %v1090, %v964
      %v1099 = vmul.f32 %v1091, %v964
      %v1100 = vadd.f32 %v1092, %v978
      %v1101 = vadd.f32 %v1093, %v978
      %v1102 = vadd.f32 %v1094, %v978
      %v1103 = vadd.f32 %v1095, %v978
      %v1104 = vadd.f32 %v1096, %v978
      %v1105 = vadd.f32 %v1097, %v978
      %v1106 = vadd.f32 %v1098, %v978
      %v1107 = vadd.f32 %v1099, %v978
      %v1108 = vld [vmem:[%s807] sm:$0xff]
      %v1109 = vld [vmem:[%s807 + $0x8] sm:$0xff]
      %v1110 = vld [vmem:[%s807 + $0x10] sm:$0xff]
      %v1111 = vld [vmem:[%s807 + $0x18] sm:$0xff]
      %v1112 = vld [vmem:[%s807 + $0x20] sm:$0xff]
      %v1113 = vld [vmem:[%s807 + $0x28] sm:$0xff]
      %v1114 = vld [vmem:[%s807 + $0x30] sm:$0xff]
      %v1115 = vld [vmem:[%s807 + $0x38] sm:$0xff]
      %v1116 = vsel %vm842, %v1108, 0.0
      %1117 = vadd.xlane.f32.xlu0 %v1116
      %v1118 = vpop.xlane.xlu0 %1117
      %v1119 = vsel %vm842, %v1109, 0.0
      %1120 = vadd.xlane.f32.xlu0 %v1119
      %v1121 = vpop.xlane.xlu0 %1120
      %v1122 = vsel %vm842, %v1110, 0.0
      %1123 = vadd.xlane.f32.xlu0 %v1122
      %v1124 = vpop.xlane.xlu0 %1123
      %v1125 = vsel %vm842, %v1111, 0.0
      %1126 = vadd.xlane.f32.xlu0 %v1125
      %v1127 = vpop.xlane.xlu0 %1126
      %v1128 = vsel %vm842, %v1112, 0.0
      %1129 = vadd.xlane.f32.xlu0 %v1128
      %v1130 = vpop.xlane.xlu0 %1129
      %v1131 = vsel %vm842, %v1113, 0.0
      %1132 = vadd.xlane.f32.xlu0 %v1131
      %v1133 = vpop.xlane.xlu0 %1132
      %v1134 = vsel %vm842, %v1114, 0.0
      %1135 = vadd.xlane.f32.xlu0 %v1134
      %v1136 = vpop.xlane.xlu0 %1135
      %v1137 = vsel %vm842, %v1115, 0.0
      %1138 = vadd.xlane.f32.xlu0 %v1137
      %v1139 = vpop.xlane.xlu0 %1138
      %v1140 = vmul.f32 %v1118, %v879
      %v1141 = vmul.f32 %v1121, %v879
      %v1142 = vmul.f32 %v1124, %v879
      %v1143 = vmul.f32 %v1127, %v879
      %v1144 = vmul.f32 %v1130, %v879
      %v1145 = vmul.f32 %v1133, %v879
      %v1146 = vmul.f32 %v1136, %v879
      %v1147 = vmul.f32 %v1139, %v879
      %v1148 = vsub.f32 %v1108, %v1140
      %v1149 = vsub.f32 %v1109, %v1141
      %v1150 = vsub.f32 %v1110, %v1142
      %v1151 = vsub.f32 %v1111, %v1143
      %v1152 = vsub.f32 %v1112, %v1144
      %v1153 = vsub.f32 %v1113, %v1145
      %v1154 = vsub.f32 %v1114, %v1146
      %v1155 = vsub.f32 %v1115, %v1147
      %v1156 = vmul.f32 %v1148, %v1148
      %v1157 = vmul.f32 %v1149, %v1149
      %v1158 = vmul.f32 %v1150, %v1150
      %v1159 = vmul.f32 %v1151, %v1151
      %v1160 = vmul.f32 %v1152, %v1152
      %v1161 = vmul.f32 %v1153, %v1153
      %v1162 = vmul.f32 %v1154, %v1154
      %v1163 = vmul.f32 %v1155, %v1155
      %v1164 = vsel %vm842, %v1156, 0.0
      %1165 = vadd.xlane.f32.xlu0 %v1164
      %v1166 = vpop.xlane.xlu0 %1165
      %v1167 = vsel %vm842, %v1157, 0.0
      %1168 = vadd.xlane.f32.xlu0 %v1167
      %v1169 = vpop.xlane.xlu0 %1168
      %v1170 = vsel %vm842, %v1158, 0.0
      %1171 = vadd.xlane.f32.xlu0 %v1170
      %v1172 = vpop.xlane.xlu0 %1171
      %v1173 = vsel %vm842, %v1159, 0.0
      %1174 = vadd.xlane.f32.xlu0 %v1173
      %v1175 = vpop.xlane.xlu0 %1174
      %v1176 = vsel %vm842, %v1160, 0.0
      %1177 = vadd.xlane.f32.xlu0 %v1176
      %v1178 = vpop.xlane.xlu0 %1177
      %v1179 = vsel %vm842, %v1161, 0.0
      %1180 = vadd.xlane.f32.xlu0 %v1179
      %v1181 = vpop.xlane.xlu0 %1180
      %v1182 = vsel %vm842, %v1162, 0.0
      %1183 = vadd.xlane.f32.xlu0 %v1182
      %v1184 = vpop.xlane.xlu0 %1183
      %v1185 = vsel %vm842, %v1163, 0.0
      %1186 = vadd.xlane.f32.xlu0 %v1185
      %v1187 = vpop.xlane.xlu0 %1186
      %v1188 = vmul.f32 %v1166, %v879
      %v1189 = vmul.f32 %v1169, %v879
      %v1190 = vmul.f32 %v1172, %v879
      %v1191 = vmul.f32 %v1175, %v879
      %v1192 = vmul.f32 %v1178, %v879
      %v1193 = vmul.f32 %v1181, %v879
      %v1194 = vmul.f32 %v1184, %v879
      %v1195 = vmul.f32 %v1187, %v879
      %v1196 = vadd.f32 %v1188, 1e-05
      %v1197 = vadd.f32 %v1189, 1e-05
      %v1198 = vadd.f32 %v1190, 1e-05
      %v1199 = vadd.f32 %v1191, 1e-05
      %v1200 = vadd.f32 %v1192, 1e-05
      %v1201 = vadd.f32 %v1193, 1e-05
      %v1202 = vadd.f32 %v1194, 1e-05
      %v1203 = vadd.f32 %v1195, 1e-05
      %v1204 = vrsqrt.pop %v1196
      %v1205 = vrsqrt.pop %v1197
      %v1206 = vrsqrt.pop %v1198
      %v1207 = vrsqrt.pop %v1199
      %v1208 = vrsqrt.pop %v1200
      %v1209 = vrsqrt.pop %v1201
      %v1210 = vrsqrt.pop %v1202
      %v1211 = vrsqrt.pop %v1203
      %v1212 = vmul.f32 %v1148, %v1204
      %v1213 = vmul.f32 %v1149, %v1205
      %v1214 = vmul.f32 %v1150, %v1206
      %v1215 = vmul.f32 %v1151, %v1207
      %v1216 = vmul.f32 %v1152, %v1208
      %v1217 = vmul.f32 %v1153, %v1209
      %v1218 = vmul.f32 %v1154, %v1210
      %v1219 = vmul.f32 %v1155, %v1211
      %v1221 = vlaneseq
      %v1222 = vshrl.u32 %v1221, 7
      %v1223 = vsub.s32 0, %v1222
      %v1224 = vrot.slane %v853, %v1223
      %v1226 = vmul.f32 %v1212, %v1224
      %v1227 = vmul.f32 %v1213, %v1224
      %v1228 = vmul.f32 %v1214, %v1224
      %v1229 = vmul.f32 %v1215, %v1224
      %v1230 = vmul.f32 %v1216, %v1224
      %v1231 = vmul.f32 %v1217, %v1224
      %v1232 = vmul.f32 %v1218, %v1224
      %v1233 = vmul.f32 %v1219, %v1224
      %v1235 = vlaneseq
      %v1236 = vshrl.u32 %v1235, 7
      %v1237 = vsub.s32 0, %v1236
      %v1238 = vrot.slane %v854, %v1237
      %v1240 = vadd.f32 %v1226, %v1238
      %v1241 = vadd.f32 %v1227, %v1238
      %v1242 = vadd.f32 %v1228, %v1238
      %v1243 = vadd.f32 %v1229, %v1238
      %v1244 = vadd.f32 %v1230, %v1238
      %v1245 = vadd.f32 %v1231, %v1238
      %v1246 = vadd.f32 %v1232, %v1238
      %v1247 = vadd.f32 %v1233, %v1238
      %v1248 = vsel %vm842, %v1240, 0.0
      %1249 = vadd.xlane.f32.xlu0 %v1248
      %v1250 = vpop.xlane.xlu0 %1249
      %v1251 = vsel %vm842, %v1241, 0.0
      %1252 = vadd.xlane.f32.xlu0 %v1251
      %v1253 = vpop.xlane.xlu0 %1252
      %v1254 = vsel %vm842, %v1242, 0.0
      %1255 = vadd.xlane.f32.xlu0 %v1254
      %v1256 = vpop.xlane.xlu0 %1255
      %v1257 = vsel %vm842, %v1243, 0.0
      %1258 = vadd.xlane.f32.xlu0 %v1257
      %v1259 = vpop.xlane.xlu0 %1258
      %v1260 = vsel %vm842, %v1244, 0.0
      %1261 = vadd.xlane.f32.xlu0 %v1260
      %v1262 = vpop.xlane.xlu0 %1261
      %v1263 = vsel %vm842, %v1245, 0.0
      %1264 = vadd.xlane.f32.xlu0 %v1263
      %v1265 = vpop.xlane.xlu0 %1264
      %v1266 = vsel %vm842, %v1246, 0.0
      %1267 = vadd.xlane.f32.xlu0 %v1266
      %v1268 = vpop.xlane.xlu0 %1267
      %v1269 = vsel %vm842, %v1247, 0.0
      %1270 = vadd.xlane.f32.xlu0 %v1269
      %v1271 = vpop.xlane.xlu0 %1270
      %v1272 = vmul.f32 %v1250, %v879
      %v1273 = vmul.f32 %v1253, %v879
      %v1274 = vmul.f32 %v1256, %v879
      %v1275 = vmul.f32 %v1259, %v879
      %v1276 = vmul.f32 %v1262, %v879
      %v1277 = vmul.f32 %v1265, %v879
      %v1278 = vmul.f32 %v1268, %v879
      %v1279 = vmul.f32 %v1271, %v879
      %v1280 = vsub.f32 %v1240, %v1272
      %v1281 = vsub.f32 %v1241, %v1273
      %v1282 = vsub.f32 %v1242, %v1274
      %v1283 = vsub.f32 %v1243, %v1275
      %v1284 = vsub.f32 %v1244, %v1276
      %v1285 = vsub.f32 %v1245, %v1277
      %v1286 = vsub.f32 %v1246, %v1278
      %v1287 = vsub.f32 %v1247, %v1279
      %v1288 = vmul.f32 %v1280, %v1280
      %v1289 = vmul.f32 %v1281, %v1281
      %v1290 = vmul.f32 %v1282, %v1282
      %v1291 = vmul.f32 %v1283, %v1283
      %v1292 = vmul.f32 %v1284, %v1284
      %v1293 = vmul.f32 %v1285, %v1285
      %v1294 = vmul.f32 %v1286, %v1286
      %v1295 = vmul.f32 %v1287, %v1287
      %v1296 = vsel %vm842, %v1288, 0.0
      %1297 = vadd.xlane.f32.xlu0 %v1296
      %v1298 = vpop.xlane.xlu0 %1297
      %v1299 = vsel %vm842, %v1289, 0.0
      %1300 = vadd.xlane.f32.xlu0 %v1299
      %v1301 = vpop.xlane.xlu0 %1300
      %v1302 = vsel %vm842, %v1290, 0.0
      %1303 = vadd.xlane.f32.xlu0 %v1302
      %v1304 = vpop.xlane.xlu0 %1303
      %v1305 = vsel %vm842, %v1291, 0.0
      %1306 = vadd.xlane.f32.xlu0 %v1305
      %v1307 = vpop.xlane.xlu0 %1306
      %v1308 = vsel %vm842, %v1292, 0.0
      %1309 = vadd.xlane.f32.xlu0 %v1308
      %v1310 = vpop.xlane.xlu0 %1309
      %v1311 = vsel %vm842, %v1293, 0.0
      %1312 = vadd.xlane.f32.xlu0 %v1311
      %v1313 = vpop.xlane.xlu0 %1312
      %v1314 = vsel %vm842, %v1294, 0.0
      %1315 = vadd.xlane.f32.xlu0 %v1314
      %v1316 = vpop.xlane.xlu0 %1315
      %v1317 = vsel %vm842, %v1295, 0.0
      %1318 = vadd.xlane.f32.xlu0 %v1317
      %v1319 = vpop.xlane.xlu0 %1318
      %v1320 = vmul.f32 %v1298, %v879
      %v1321 = vmul.f32 %v1301, %v879
      %v1322 = vmul.f32 %v1304, %v879
      %v1323 = vmul.f32 %v1307, %v879
      %v1324 = vmul.f32 %v1310, %v879
      %v1325 = vmul.f32 %v1313, %v879
      %v1326 = vmul.f32 %v1316, %v879
      %v1327 = vmul.f32 %v1319, %v879
      %v1328 = vadd.f32 %v1320, 1e-05
      %v1329 = vadd.f32 %v1321, 1e-05
      %v1330 = vadd.f32 %v1322, 1e-05
      %v1331 = vadd.f32 %v1323, 1e-05
      %v1332 = vadd.f32 %v1324, 1e-05
      %v1333 = vadd.f32 %v1325, 1e-05
      %v1334 = vadd.f32 %v1326, 1e-05
      %v1335 = vadd.f32 %v1327, 1e-05
      %v1336 = vrsqrt.pop %v1328
      %v1337 = vrsqrt.pop %v1329
      %v1338 = vrsqrt.pop %v1330
      %v1339 = vrsqrt.pop %v1331
      %v1340 = vrsqrt.pop %v1332
      %v1341 = vrsqrt.pop %v1333
      %v1342 = vrsqrt.pop %v1334
      %v1343 = vrsqrt.pop %v1335
      %v1344 = vmul.f32 %v1280, %v1336
      %v1345 = vmul.f32 %v1281, %v1337
      %v1346 = vmul.f32 %v1282, %v1338
      %v1347 = vmul.f32 %v1283, %v1339
      %v1348 = vmul.f32 %v1284, %v1340
      %v1349 = vmul.f32 %v1285, %v1341
      %v1350 = vmul.f32 %v1286, %v1342
      %v1351 = vmul.f32 %v1287, %v1343
      %v1352 = vmul.f32 %v1344, %v1224
      %v1353 = vmul.f32 %v1345, %v1224
      %v1354 = vmul.f32 %v1346, %v1224
      %v1355 = vmul.f32 %v1347, %v1224
      %v1356 = vmul.f32 %v1348, %v1224
      %v1357 = vmul.f32 %v1349, %v1224
      %v1358 = vmul.f32 %v1350, %v1224
      %v1359 = vmul.f32 %v1351, %v1224
      %v1360 = vadd.f32 %v1352, %v1238
      %v1361 = vadd.f32 %v1353, %v1238
      %v1362 = vadd.f32 %v1354, %v1238
      %v1363 = vadd.f32 %v1355, %v1238
      %v1364 = vadd.f32 %v1356, %v1238
      %v1365 = vadd.f32 %v1357, %v1238
      %v1366 = vadd.f32 %v1358, %v1238
      %v1367 = vadd.f32 %v1359, %v1238
      %v1368 = vld [vmem:[%s7] sm:$0xff]
      %v1369 = vld [vmem:[%s7 + $0x8] sm:$0xff]
      %v1370 = vld [vmem:[%s7 + $0x10] sm:$0xff]
      %v1371 = vld [vmem:[%s7 + $0x18] sm:$0xff]
      %v1373 = vsel %vm842, %v1100, 0
      %v1376 = vsel %vm842, %v1101, 0
      %v1379 = vsel %vm842, %v1102, 0
      %v1382 = vsel %vm842, %v1103, 0
      %v1385 = vsel %vm842, %v1104, 0
      %v1388 = vsel %vm842, %v1105, 0
      %v1391 = vsel %vm842, %v1106, 0
      %v1394 = vsel %vm842, %v1107, 0
      %1396 = vmatprep.subr.mxu0 0.0
      %1397 = vmatpush1.msra.mxu0 %v1368
      %1398 = vmatprep.subr.mxu0 0.0
      %1399 = vmatpush1.msra.mxu0 %v1369
      %1400 = vmatprep.subr.mxu0 0.0
      %1401 = vmatpush1.msra.mxu0 %v1370
      %1402 = vmatprep.subr.mxu0 0.0
      %1403 = vmatpush1.msra.mxu0 %v1371
      %1404 = vmatprep.subr.mxu0 0.0
      %1405 = vmatpush1.msra.mxu0 0.0
      %1406 = vmatprep.subr.mxu0 0.0
      %1407 = vmatpush1.msra.mxu0 0.0
      %1408 = vmatprep.subr.mxu0 0.0
      %1409 = vmatpush1.msra.mxu0 0.0
      %1410 = vmatprep.subr.mxu0 0.0
      %1411 = vmatpush1.msra.mxu0 0.0
      %1412 = vmatprep.subr.mxu0 0.0
      %1413 = vmatpush1.msra.mxu0 0.0
      %1414 = vmatprep.subr.mxu0 0.0
      %1415 = vmatpush1.msra.mxu0 0.0
      %1416 = vmatprep.subr.mxu0 0.0
      %1417 = vmatpush1.msra.mxu0 0.0
      %1418 = vmatprep.subr.mxu0 0.0
      %1419 = vmatpush1.msra.mxu0 0.0
      %1420 = vmatprep.subr.mxu0 0.0
      %1421 = vmatpush1.msra.mxu0 0.0
      %1422 = vmatprep.subr.mxu0 0.0
      %1423 = vmatpush1.msra.mxu0 0.0
      %1424 = vmatprep.subr.mxu0 0.0
      %1425 = vmatpush1.msra.mxu0 0.0
      %1426 = vmatprep.subr.mxu0 0.0
      %1427 = vmatpush1.msra.mxu0 0.0
      %1428 = vmatprep.subr.mxu0 0.0
      %1429 = vmatpush1.msra.mxu0 0.0
      %1430 = vmatprep.subr.mxu0 0.0
      %1431 = vmatpush1.msra.mxu0 0.0
      %1432 = vmatprep.subr.mxu0 0.0
      %1433 = vmatpush1.msra.mxu0 0.0
      %1434 = vmatprep.subr.mxu0 0.0
      %1435 = vmatpush1.msra.mxu0 0.0
      %1436 = vmatprep.subr.mxu0 0.0
      %1437 = vmatpush1.msra.mxu0 0.0
      %1438 = vmatprep.subr.mxu0 0.0
      %1439 = vmatpush1.msra.mxu0 0.0
      %1440 = vmatprep.subr.mxu0 0.0
      %1441 = vmatpush1.msra.mxu0 0.0
      %1442 = vmatprep.subr.mxu0 0.0
      %1443 = vmatpush1.msra.mxu0 0.0
      %1444 = vmatprep.subr.mxu0 0.0
      %1445 = vmatpush1.msra.mxu0 0.0
      %1446 = vmatprep.subr.mxu0 0.0
      %1447 = vmatpush1.msra.mxu0 0.0
      %1448 = vmatprep.subr.mxu0 0.0
      %1449 = vmatpush1.msra.mxu0 0.0
      %1450 = vmatprep.subr.mxu0 0.0
      %1451 = vmatpush1.msra.mxu0 0.0
      %1452 = vmatprep.subr.mxu0 0.0
      %1453 = vmatpush1.msra.mxu0 0.0
      %1454 = vmatprep.subr.mxu0 0.0
      %1455 = vmatpush1.msra.mxu0 0.0
      %1456 = vmatprep.subr.mxu0 0.0
      %1457 = vmatpush1.msra.mxu0 0.0
      %1458 = vmatprep.subr.mxu0 0.0
      %1459 = vmatpush1.msra.mxu0 0.0
      %1460 = vmatprep.mubr.f32.mxu0 0.0
      %1461 = vmatmul.mubr.f32.gmra.mrb[0].mxu0 %v1373
      %v1462 = vpop.f32.mrb[0].mxu0
      %v1463 = vadd.f32 0.0, %v1462
      %v1464 = vpop.f32.mrb[0].mxu0
      %1465 = vmatprep.mubr.f32.mxu0 0.0
      %1466 = vmatmul.mubr.f32.gmra.mrb[0].mxu0 %v1376
      %v1467 = vpop.f32.mrb[0].mxu0
      %v1468 = vadd.f32 0.0, %v1467
      %v1469 = vpop.f32.mrb[0].mxu0
      %1470 = vmatprep.mubr.f32.mxu0 0.0
      %1471 = vmatmul.mubr.f32.gmra.mrb[0].mxu0 %v1379
      %v1472 = vpop.f32.mrb[0].mxu0
      %v1473 = vadd.f32 0.0, %v1472
      %v1474 = vpop.f32.mrb[0].mxu0
      %1475 = vmatprep.mubr.f32.mxu0 0.0
      %1476 = vmatmul.mubr.f32.gmra.mrb[0].mxu0 %v1382
      %v1477 = vpop.f32.mrb[0].mxu0
      %v1478 = vadd.f32 0.0, %v1477
      %v1479 = vpop.f32.mrb[0].mxu0
      %1480 = vmatprep.mubr.f32.mxu0 0.0
      %1481 = vmatmul.mubr.f32.gmra.mrb[0].mxu0 %v1385
      %v1482 = vpop.f32.mrb[0].mxu0
      %v1483 = vadd.f32 0.0, %v1482
      %v1484 = vpop.f32.mrb[0].mxu0
      %1485 = vmatprep.mubr.f32.mxu0 0.0
      %1486 = vmatmul.mubr.f32.gmra.mrb[0].mxu0 %v1388
      %v1487 = vpop.f32.mrb[0].mxu0
      %v1488 = vadd.f32 0.0, %v1487
      %v1489 = vpop.f32.mrb[0].mxu0
      %1490 = vmatprep.mubr.f32.mxu0 0.0
      %1491 = vmatmul.mubr.f32.gmra.mrb[0].mxu0 %v1391
      %v1492 = vpop.f32.mrb[0].mxu0
      %v1493 = vadd.f32 0.0, %v1492
      %v1494 = vpop.f32.mrb[0].mxu0
      %1495 = vmatprep.mubr.f32.mxu0 0.0
      %1496 = vmatmul.mubr.f32.gmra.mrb[0].mxu0 %v1394
      %v1497 = vpop.f32.mrb[0].mxu0
      %v1498 = vadd.f32 0.0, %v1497
      %v1499 = vpop.f32.mrb[0].mxu0
      %1500 = vdwg.mxu0
      %v1501 = vld [vmem:[%s8] sm:$0xff]
      %v1502 = vld [vmem:[%s8 + $0x8] sm:$0xff]
      %v1503 = vld [vmem:[%s8 + $0x10] sm:$0xff]
      %v1504 = vld [vmem:[%s8 + $0x18] sm:$0xff]
      %1505 = vmatprep.subr.mxu0 0.0
      %1506 = vmatpush1.msra.mxu0 %v1501
      %1507 = vmatprep.subr.mxu0 0.0
      %1508 = vmatpush1.msra.mxu0 %v1502
      %1509 = vmatprep.subr.mxu0 0.0
      %1510 = vmatpush1.msra.mxu0 %v1503
      %1511 = vmatprep.subr.mxu0 0.0
      %1512 = vmatpush1.msra.mxu0 %v1504
      %1513 = vmatprep.subr.mxu0 0.0
      %1514 = vmatpush1.msra.mxu0 0.0
      %1515 = vmatprep.subr.mxu0 0.0
      %1516 = vmatpush1.msra.mxu0 0.0
      %1517 = vmatprep.subr.mxu0 0.0
      %1518 = vmatpush1.msra.mxu0 0.0
      %1519 = vmatprep.subr.mxu0 0.0
      %1520 = vmatpush1.msra.mxu0 0.0
      %1521 = vmatprep.subr.mxu0 0.0
      %1522 = vmatpush1.msra.mxu0 0.0
      %1523 = vmatprep.subr.mxu0 0.0
      %1524 = vmatpush1.msra.mxu0 0.0
      %1525 = vmatprep.subr.mxu0 0.0
      %1526 = vmatpush1.msra.mxu0 0.0
      %1527 = vmatprep.subr.mxu0 0.0
      %1528 = vmatpush1.msra.mxu0 0.0
      %1529 = vmatprep.subr.mxu0 0.0
      %1530 = vmatpush1.msra.mxu0 0.0
      %1531 = vmatprep.subr.mxu0 0.0
      %1532 = vmatpush1.msra.mxu0 0.0
      %1533 = vmatprep.subr.mxu0 0.0
      %1534 = vmatpush1.msra.mxu0 0.0
      %1535 = vmatprep.subr.mxu0 0.0
      %1536 = vmatpush1.msra.mxu0 0.0
      %1537 = vmatprep.subr.mxu0 0.0
      %1538 = vmatpush1.msra.mxu0 0.0
      %1539 = vmatprep.subr.mxu0 0.0
      %1540 = vmatpush1.msra.mxu0 0.0
      %1541 = vmatprep.subr.mxu0 0.0
      %1542 = vmatpush1.msra.mxu0 0.0
      %1543 = vmatprep.subr.mxu0 0.0
      %1544 = vmatpush1.msra.mxu0 0.0
      %1545 = vmatprep.subr.mxu0 0.0
      %1546 = vmatpush1.msra.mxu0 0.0
      %1547 = vmatprep.subr.mxu0 0.0
      %1548 = vmatpush1.msra.mxu0 0.0
      %1549 = vmatprep.subr.mxu0 0.0
      %1550 = vmatpush1.msra.mxu0 0.0
      %1551 = vmatprep.subr.mxu0 0.0
      %1552 = vmatpush1.msra.mxu0 0.0
      %1553 = vmatprep.subr.mxu0 0.0
      %1554 = vmatpush1.msra.mxu0 0.0
      %1555 = vmatprep.subr.mxu0 0.0
      %1556 = vmatpush1.msra.mxu0 0.0
      %1557 = vmatprep.subr.mxu0 0.0
      %1558 = vmatpush1.msra.mxu0 0.0
      %1559 = vmatprep.subr.mxu0 0.0
      %1560 = vmatpush1.msra.mxu0 0.0
      %1561 = vmatprep.subr.mxu0 0.0
      %1562 = vmatpush1.msra.mxu0 0.0
      %1563 = vmatprep.subr.mxu0 0.0
      %1564 = vmatpush1.msra.mxu0 0.0
      %1565 = vmatprep.subr.mxu0 0.0
      %1566 = vmatpush1.msra.mxu0 0.0
      %1567 = vmatprep.subr.mxu0 0.0
      %1568 = vmatpush1.msra.mxu0 0.0
      %1569 = vmatprep.mubr.f32.mxu0 0.0
      %1570 = vmatmul.mubr.f32.gmra.mrb[0].mxu0 %v1373
      %v1571 = vpop.f32.mrb[0].mxu0
      %v1572 = vadd.f32 0.0, %v1571
      %v1573 = vpop.f32.mrb[0].mxu0
      %1574 = vmatprep.mubr.f32.mxu0 0.0
      %1575 = vmatmul.mubr.f32.gmra.mrb[0].mxu0 %v1376
      %v1576 = vpop.f32.mrb[0].mxu0
      %v1577 = vadd.f32 0.0, %v1576
      %v1578 = vpop.f32.mrb[0].mxu0
      %1579 = vmatprep.mubr.f32.mxu0 0.0
      %1580 = vmatmul.mubr.f32.gmra.mrb[0].mxu0 %v1379
      %v1581 = vpop.f32.mrb[0].mxu0
      %v1582 = vadd.f32 0.0, %v1581
      %v1583 = vpop.f32.mrb[0].mxu0
      %1584 = vmatprep.mubr.f32.mxu0 0.0
      %1585 = vmatmul.mubr.f32.gmra.mrb[0].mxu0 %v1382
      %v1586 = vpop.f32.mrb[0].mxu0
      %v1587 = vadd.f32 0.0, %v1586
      %v1588 = vpop.f32.mrb[0].mxu0
      %1589 = vmatprep.mubr.f32.mxu0 0.0
      %1590 = vmatmul.mubr.f32.gmra.mrb[0].mxu0 %v1385
      %v1591 = vpop.f32.mrb[0].mxu0
      %v1592 = vadd.f32 0.0, %v1591
      %v1593 = vpop.f32.mrb[0].mxu0
      %1594 = vmatprep.mubr.f32.mxu0 0.0
      %1595 = vmatmul.mubr.f32.gmra.mrb[0].mxu0 %v1388
      %v1596 = vpop.f32.mrb[0].mxu0
      %v1597 = vadd.f32 0.0, %v1596
      %v1598 = vpop.f32.mrb[0].mxu0
      %1599 = vmatprep.mubr.f32.mxu0 0.0
      %1600 = vmatmul.mubr.f32.gmra.mrb[0].mxu0 %v1391
      %v1601 = vpop.f32.mrb[0].mxu0
      %v1602 = vadd.f32 0.0, %v1601
      %v1603 = vpop.f32.mrb[0].mxu0
      %1604 = vmatprep.mubr.f32.mxu0 0.0
      %1605 = vmatmul.mubr.f32.gmra.mrb[0].mxu0 %v1394
      %v1606 = vpop.f32.mrb[0].mxu0
      %v1607 = vadd.f32 0.0, %v1606
      %v1608 = vpop.f32.mrb[0].mxu0
      %1609 = vdwg.mxu0
      %v1610 = vld [vmem:[%s9] sm:$0xff]
      %v1611 = vld [vmem:[%s9 + $0x8] sm:$0xff]
      %v1612 = vld [vmem:[%s9 + $0x10] sm:$0xff]
      %v1613 = vld [vmem:[%s9 + $0x18] sm:$0xff]
      %v1615 = vsel %vm842, %v1360, 0
      %v1618 = vsel %vm842, %v1361, 0
      %v1621 = vsel %vm842, %v1362, 0
      %v1624 = vsel %vm842, %v1363, 0
      %v1627 = vsel %vm842, %v1364, 0
      %v1630 = vsel %vm842, %v1365, 0
      %v1633 = vsel %vm842, %v1366, 0
      %v1636 = vsel %vm842, %v1367, 0
      %1638 = vmatprep.subr.mxu0 0.0
      %1639 = vmatpush1.msra.mxu0 %v1610
      %1640 = vmatprep.subr.mxu0 0.0
      %1641 = vmatpush1.msra.mxu0 %v1611
      %1642 = vmatprep.subr.mxu0 0.0
      %1643 = vmatpush1.msra.mxu0 %v1612
      %1644 = vmatprep.subr.mxu0 0.0
      %1645 = vmatpush1.msra.mxu0 %v1613
      %1646 = vmatprep.subr.mxu0 0.0
      %1647 = vmatpush1.msra.mxu0 0.0
      %1648 = vmatprep.subr.mxu0 0.0
      %1649 = vmatpush1.msra.mxu0 0.0
      %1650 = vmatprep.subr.mxu0 0.0
      %1651 = vmatpush1.msra.mxu0 0.0
      %1652 = vmatprep.subr.mxu0 0.0
      %1653 = vmatpush1.msra.mxu0 0.0
      %1654 = vmatprep.subr.mxu0 0.0
      %1655 = vmatpush1.msra.mxu0 0.0
      %1656 = vmatprep.subr.mxu0 0.0
      %1657 = vmatpush1.msra.mxu0 0.0
      %1658 = vmatprep.subr.mxu0 0.0
      %1659 = vmatpush1.msra.mxu0 0.0
      %1660 = vmatprep.subr.mxu0 0.0
      %1661 = vmatpush1.msra.mxu0 0.0
      %1662 = vmatprep.subr.mxu0 0.0
      %1663 = vmatpush1.msra.mxu0 0.0
      %1664 = vmatprep.subr.mxu0 0.0
      %1665 = vmatpush1.msra.mxu0 0.0
      %1666 = vmatprep.subr.mxu0 0.0
      %1667 = vmatpush1.msra.mxu0 0.0
      %1668 = vmatprep.subr.mxu0 0.0
      %1669 = vmatpush1.msra.mxu0 0.0
      %1670 = vmatprep.subr.mxu0 0.0
      %1671 = vmatpush1.msra.mxu0 0.0
      %1672 = vmatprep.subr.mxu0 0.0
      %1673 = vmatpush1.msra.mxu0 0.0
      %1674 = vmatprep.subr.mxu0 0.0
      %1675 = vmatpush1.msra.mxu0 0.0
      %1676 = vmatprep.subr.mxu0 0.0
      %1677 = vmatpush1.msra.mxu0 0.0
      %1678 = vmatprep.subr.mxu0 0.0
      %1679 = vmatpush1.msra.mxu0 0.0
      %1680 = vmatprep.subr.mxu0 0.0
      %1681 = vmatpush1.msra.mxu0 0.0
      %1682 = vmatprep.subr.mxu0 0.0
      %1683 = vmatpush1.msra.mxu0 0.0
      %1684 = vmatprep.subr.mxu0 0.0
      %1685 = vmatpush1.msra.mxu0 0.0
      %1686 = vmatprep.subr.mxu0 0.0
      %1687 = vmatpush1.msra.mxu0 0.0
      %1688 = vmatprep.subr.mxu0 0.0
      %1689 = vmatpush1.msra.mxu0 0.0
      %1690 = vmatprep.subr.mxu0 0.0
      %1691 = vmatpush1.msra.mxu0 0.0
      %1692 = vmatprep.subr.mxu0 0.0
      %1693 = vmatpush1.msra.mxu0 0.0
      %1694 = vmatprep.subr.mxu0 0.0
      %1695 = vmatpush1.msra.mxu0 0.0
      %1696 = vmatprep.subr.mxu0 0.0
      %1697 = vmatpush1.msra.mxu0 0.0
      %1698 = vmatprep.subr.mxu0 0.0
      %1699 = vmatpush1.msra.mxu0 0.0
      %1700 = vmatprep.subr.mxu0 0.0
      %1701 = vmatpush1.msra.mxu0 0.0
      %1702 = vmatprep.mubr.f32.mxu0 0.0
      %1703 = vmatmul.mubr.f32.gmra.mrb[0].mxu0 %v1615
      %v1704 = vpop.f32.mrb[0].mxu0
      %v1705 = vadd.f32 0.0, %v1704
      %v1706 = vpop.f32.mrb[0].mxu0
      %1707 = vmatprep.mubr.f32.mxu0 0.0
      %1708 = vmatmul.mubr.f32.gmra.mrb[0].mxu0 %v1618
      %v1709 = vpop.f32.mrb[0].mxu0
      %v1710 = vadd.f32 0.0, %v1709
      %v1711 = vpop.f32.mrb[0].mxu0
      %1712 = vmatprep.mubr.f32.mxu0 0.0
      %1713 = vmatmul.mubr.f32.gmra.mrb[0].mxu0 %v1621
      %v1714 = vpop.f32.mrb[0].mxu0
      %v1715 = vadd.f32 0.0, %v1714
      %v1716 = vpop.f32.mrb[0].mxu0
      %1717 = vmatprep.mubr.f32.mxu0 0.0
      %1718 = vmatmul.mubr.f32.gmra.mrb[0].mxu0 %v1624
      %v1719 = vpop.f32.mrb[0].mxu0
      %v1720 = vadd.f32 0.0, %v1719
      %v1721 = vpop.f32.mrb[0].mxu0
      %1722 = vmatprep.mubr.f32.mxu0 0.0
      %1723 = vmatmul.mubr.f32.gmra.mrb[0].mxu0 %v1627
      %v1724 = vpop.f32.mrb[0].mxu0
      %v1725 = vadd.f32 0.0, %v1724
      %v1726 = vpop.f32.mrb[0].mxu0
      %1727 = vmatprep.mubr.f32.mxu0 0.0
      %1728 = vmatmul.mubr.f32.gmra.mrb[0].mxu0 %v1630
      %v1729 = vpop.f32.mrb[0].mxu0
      %v1730 = vadd.f32 0.0, %v1729
      %v1731 = vpop.f32.mrb[0].mxu0
      %1732 = vmatprep.mubr.f32.mxu0 0.0
      %1733 = vmatmul.mubr.f32.gmra.mrb[0].mxu0 %v1633
      %v1734 = vpop.f32.mrb[0].mxu0
      %v1735 = vadd.f32 0.0, %v1734
      %v1736 = vpop.f32.mrb[0].mxu0
      %1737 = vmatprep.mubr.f32.mxu0 0.0
      %1738 = vmatmul.mubr.f32.gmra.mrb[0].mxu0 %v1636
      %v1739 = vpop.f32.mrb[0].mxu0
      %v1740 = vadd.f32 0.0, %v1739
      %v1741 = vpop.f32.mrb[0].mxu0
      %1742 = vdwg.mxu0
      %v1743 = vld [vmem:[%s10] sm:$0xf]
      %v1744 = vlaneseq
      %v1745 = vshrl.u32 %v1744, 7
      %v1746 = vsub.s32 3, %v1745
      %v1747 = vrot.slane %v1743, %v1746
      %v1748 = vmul.f32 %v1463, %v1747
      %v1749 = vmul.f32 %v1468, %v1747
      %v1750 = vmul.f32 %v1473, %v1747
      %v1751 = vmul.f32 %v1478, %v1747
      %v1752 = vmul.f32 %v1483, %v1747
      %v1753 = vmul.f32 %v1488, %v1747
      %v1754 = vmul.f32 %v1493, %v1747
      %v1755 = vmul.f32 %v1498, %v1747
      %v1756 = vld [vmem:[%s11] sm:$0x1]
      %v1758 = vlaneseq
      %v1759 = vshrl.u32 %v1758, 7
      %v1760 = vsub.s32 0, %v1759
      %v1761 = vrot.slane %v1756, %v1760
      %v1763 = vadd.f32 %v1748, %v1761
      %v1764 = vadd.f32 %v1749, %v1761
      %v1765 = vadd.f32 %v1750, %v1761
      %v1766 = vadd.f32 %v1751, %v1761
      %v1767 = vadd.f32 %v1752, %v1761
      %v1768 = vadd.f32 %v1753, %v1761
      %v1769 = vadd.f32 %v1754, %v1761
      %v1770 = vadd.f32 %v1755, %v1761
      %vm1779 = vcmask 1040384
      %v1780 = vrot.slane %v1463, 7
      %v1781 = vrot.slane %v1468, 7
      %v1782 = vsel %vm1779, %v1780, %v1781
      %v1783 = vrot.slane %v1473, 7
      %v1784 = vsel %vm1779, %v1781, %v1783
      %v1785 = vrot.slane %v1478, 7
      %v1786 = vsel %vm1779, %v1783, %v1785
      %v1787 = vrot.slane %v1483, 7
      %v1788 = vsel %vm1779, %v1785, %v1787
      %v1789 = vrot.slane %v1488, 7
      %v1790 = vsel %vm1779, %v1787, %v1789
      %v1791 = vrot.slane %v1493, 7
      %v1792 = vsel %vm1779, %v1789, %v1791
      %v1793 = vrot.slane %v1498, 7
      %v1794 = vsel %vm1779, %v1791, %v1793
      %v1803 = vsel %vm1779, 0.0, %v1780
      %v1804 = vlaneseq
      %v1805 = vshrl.u32 %v1804, 7
      %v1806 = vsub.s32 2, %v1805
      %v1807 = vrot.slane %v1743, %v1806
      %v1808 = vmul.f32 %v1803, %v1807
      %v1809 = vmul.f32 %v1782, %v1807
      %v1810 = vmul.f32 %v1784, %v1807
      %v1811 = vmul.f32 %v1786, %v1807
      %v1812 = vmul.f32 %v1788, %v1807
      %v1813 = vmul.f32 %v1790, %v1807
      %v1814 = vmul.f32 %v1792, %v1807
      %v1815 = vmul.f32 %v1794, %v1807
      %v1816 = vadd.f32 %v1763, %v1808
      %v1817 = vadd.f32 %v1764, %v1809
      %v1818 = vadd.f32 %v1765, %v1810
      %v1819 = vadd.f32 %v1766, %v1811
      %v1820 = vadd.f32 %v1767, %v1812
      %v1821 = vadd.f32 %v1768, %v1813
      %v1822 = vadd.f32 %v1769, %v1814
      %v1823 = vadd.f32 %v1770, %v1815
      %vm1824 = vcmask 1041408
      %v1825 = vrot.slane %v1463, 6
      %v1826 = vrot.slane %v1468, 6
      %v1827 = vsel %vm1824, %v1825, %v1826
      %v1828 = vrot.slane %v1473, 6
      %v1829 = vsel %vm1824, %v1826, %v1828
      %v1830 = vrot.slane %v1478, 6
      %v1831 = vsel %vm1824, %v1828, %v1830
      %v1832 = vrot.slane %v1483, 6
      %v1833 = vsel %vm1824, %v1830, %v1832
      %v1834 = vrot.slane %v1488, 6
      %v1835 = vsel %vm1824, %v1832, %v1834
      %v1836 = vrot.slane %v1493, 6
      %v1837 = vsel %vm1824, %v1834, %v1836
      %v1838 = vrot.slane %v1498, 6
      %v1839 = vsel %vm1824, %v1836, %v1838
      %v1848 = vsel %vm1824, 0.0, %v1825
      %v1849 = vlaneseq
      %v1850 = vshrl.u32 %v1849, 7
      %v1851 = vsub.s32 1, %v1850
      %v1852 = vrot.slane %v1743, %v1851
      %v1853 = vmul.f32 %v1848, %v1852
      %v1854 = vmul.f32 %v1827, %v1852
      %v1855 = vmul.f32 %v1829, %v1852
      %v1856 = vmul.f32 %v1831, %v1852
      %v1857 = vmul.f32 %v1833, %v1852
      %v1858 = vmul.f32 %v1835, %v1852
      %v1859 = vmul.f32 %v1837, %v1852
      %v1860 = vmul.f32 %v1839, %v1852
      %v1861 = vadd.f32 %v1816, %v1853
      %v1862 = vadd.f32 %v1817, %v1854
      %v1863 = vadd.f32 %v1818, %v1855
      %v1864 = vadd.f32 %v1819, %v1856
      %v1865 = vadd.f32 %v1820, %v1857
      %v1866 = vadd.f32 %v1821, %v1858
      %v1867 = vadd.f32 %v1822, %v1859
      %v1868 = vadd.f32 %v1823, %v1860
      %vm1869 = vcmask 1042432
      %v1870 = vrot.slane %v1463, 5
      %v1871 = vrot.slane %v1468, 5
      %v1872 = vsel %vm1869, %v1870, %v1871
      %v1873 = vrot.slane %v1473, 5
      %v1874 = vsel %vm1869, %v1871, %v1873
      %v1875 = vrot.slane %v1478, 5
      %v1876 = vsel %vm1869, %v1873, %v1875
      %v1877 = vrot.slane %v1483, 5
      %v1878 = vsel %vm1869, %v1875, %v1877
      %v1879 = vrot.slane %v1488, 5
      %v1880 = vsel %vm1869, %v1877, %v1879
      %v1881 = vrot.slane %v1493, 5
      %v1882 = vsel %vm1869, %v1879, %v1881
      %v1883 = vrot.slane %v1498, 5
      %v1884 = vsel %vm1869, %v1881, %v1883
      %v1893 = vsel %vm1869, 0.0, %v1870
      %v1894 = vlaneseq
      %v1895 = vshrl.u32 %v1894, 7
      %v1896 = vsub.s32 0, %v1895
      %v1897 = vrot.slane %v1743, %v1896
      %v1898 = vmul.f32 %v1893, %v1897
      %v1899 = vmul.f32 %v1872, %v1897
      %v1900 = vmul.f32 %v1874, %v1897
      %v1901 = vmul.f32 %v1876, %v1897
      %v1902 = vmul.f32 %v1878, %v1897
      %v1903 = vmul.f32 %v1880, %v1897
      %v1904 = vmul.f32 %v1882, %v1897
      %v1905 = vmul.f32 %v1884, %v1897
      %v1906 = vadd.f32 %v1861, %v1898
      %v1907 = vadd.f32 %v1862, %v1899
      %v1908 = vadd.f32 %v1863, %v1900
      %v1909 = vadd.f32 %v1864, %v1901
      %v1910 = vadd.f32 %v1865, %v1902
      %v1911 = vadd.f32 %v1866, %v1903
      %v1912 = vadd.f32 %v1867, %v1904
      %v1913 = vadd.f32 %v1868, %v1905
      %v1914 = vxor.u32 %v1906, 2147483648
      %v1915 = vxor.u32 %v1907, 2147483648
      %v1916 = vxor.u32 %v1908, 2147483648
      %v1917 = vxor.u32 %v1909, 2147483648
      %v1918 = vxor.u32 %v1910, 2147483648
      %v1919 = vxor.u32 %v1911, 2147483648
      %v1920 = vxor.u32 %v1912, 2147483648
      %v1921 = vxor.u32 %v1913, 2147483648
      %v1922 = vmul.f32 %v1914, 1.442695
      %v1923 = vpow.pop %v1922
      %v1924 = vmul.f32 %v1915, 1.442695
      %v1925 = vpow.pop %v1924
      %v1926 = vmul.f32 %v1916, 1.442695
      %v1927 = vpow.pop %v1926
      %v1928 = vmul.f32 %v1917, 1.442695
      %v1929 = vpow.pop %v1928
      %v1930 = vmul.f32 %v1918, 1.442695
      %v1931 = vpow.pop %v1930
      %v1932 = vmul.f32 %v1919, 1.442695
      %v1933 = vpow.pop %v1932
      %v1934 = vmul.f32 %v1920, 1.442695
      %v1935 = vpow.pop %v1934
      %v1936 = vmul.f32 %v1921, 1.442695
      %v1937 = vpow.pop %v1936
      %v1938 = vadd.f32 %v1923, 1.0
      %v1939 = vadd.f32 %v1925, 1.0
      %v1940 = vadd.f32 %v1927, 1.0
      %v1941 = vadd.f32 %v1929, 1.0
      %v1942 = vadd.f32 %v1931, 1.0
      %v1943 = vadd.f32 %v1933, 1.0
      %v1944 = vadd.f32 %v1935, 1.0
      %v1945 = vadd.f32 %v1937, 1.0
      %v1946 = vrcp.pop %v1938
      %v1947 = vmul.f32 1.0, %v1946
      %v1948 = vrcp.pop %v1939
      %v1949 = vmul.f32 1.0, %v1948
      %v1950 = vrcp.pop %v1940
      %v1951 = vmul.f32 1.0, %v1950
      %v1952 = vrcp.pop %v1941
      %v1953 = vmul.f32 1.0, %v1952
      %v1954 = vrcp.pop %v1942
      %v1955 = vmul.f32 1.0, %v1954
      %v1956 = vrcp.pop %v1943
      %v1957 = vmul.f32 1.0, %v1956
      %v1958 = vrcp.pop %v1944
      %v1959 = vmul.f32 1.0, %v1958
      %v1960 = vrcp.pop %v1945
      %v1961 = vmul.f32 1.0, %v1960
      %v1962 = vmul.f32 %v1906, %v1947
      %v1963 = vmul.f32 %v1907, %v1949
      %v1964 = vmul.f32 %v1908, %v1951
      %v1965 = vmul.f32 %v1909, %v1953
      %v1966 = vmul.f32 %v1910, %v1955
      %v1967 = vmul.f32 %v1911, %v1957
      %v1968 = vmul.f32 %v1912, %v1959
      %v1969 = vmul.f32 %v1913, %v1961
      %v1970 = vld [vmem:[%s12] sm:$0xf]
      %v1971 = vlaneseq
      %v1972 = vshrl.u32 %v1971, 7
      %v1973 = vsub.s32 3, %v1972
      %v1974 = vrot.slane %v1970, %v1973
      %v1975 = vmul.f32 %v1705, %v1974
      %v1976 = vmul.f32 %v1710, %v1974
      %v1977 = vmul.f32 %v1715, %v1974
      %v1978 = vmul.f32 %v1720, %v1974
      %v1979 = vmul.f32 %v1725, %v1974
      %v1980 = vmul.f32 %v1730, %v1974
      %v1981 = vmul.f32 %v1735, %v1974
      %v1982 = vmul.f32 %v1740, %v1974
      %v1983 = vld [vmem:[%s13] sm:$0x1]
      %v1985 = vlaneseq
      %v1986 = vshrl.u32 %v1985, 7
      %v1987 = vsub.s32 0, %v1986
      %v1988 = vrot.slane %v1983, %v1987
      %v1990 = vadd.f32 %v1975, %v1988
      %v1991 = vadd.f32 %v1976, %v1988
      %v1992 = vadd.f32 %v1977, %v1988
      %v1993 = vadd.f32 %v1978, %v1988
      %v1994 = vadd.f32 %v1979, %v1988
      %v1995 = vadd.f32 %v1980, %v1988
      %v1996 = vadd.f32 %v1981, %v1988
      %v1997 = vadd.f32 %v1982, %v1988
      %v2006 = vrot.slane %v1705, 7
      %v2007 = vrot.slane %v1710, 7
      %v2008 = vsel %vm1779, %v2006, %v2007
      %v2009 = vrot.slane %v1715, 7
      %v2010 = vsel %vm1779, %v2007, %v2009
      %v2011 = vrot.slane %v1720, 7
      %v2012 = vsel %vm1779, %v2009, %v2011
      %v2013 = vrot.slane %v1725, 7
      %v2014 = vsel %vm1779, %v2011, %v2013
      %v2015 = vrot.slane %v1730, 7
      %v2016 = vsel %vm1779, %v2013, %v2015
      %v2017 = vrot.slane %v1735, 7
      %v2018 = vsel %vm1779, %v2015, %v2017
      %v2019 = vrot.slane %v1740, 7
      %v2020 = vsel %vm1779, %v2017, %v2019
      %v2029 = vsel %vm1779, 0.0, %v2006
      %v2030 = vlaneseq
      %v2031 = vshrl.u32 %v2030, 7
      %v2032 = vsub.s32 2, %v2031
      %v2033 = vrot.slane %v1970, %v2032
      %v2034 = vmul.f32 %v2029, %v2033
      %v2035 = vmul.f32 %v2008, %v2033
      %v2036 = vmul.f32 %v2010, %v2033
      %v2037 = vmul.f32 %v2012, %v2033
      %v2038 = vmul.f32 %v2014, %v2033
      %v2039 = vmul.f32 %v2016, %v2033
      %v2040 = vmul.f32 %v2018, %v2033
      %v2041 = vmul.f32 %v2020, %v2033
      %v2042 = vadd.f32 %v1990, %v2034
      %v2043 = vadd.f32 %v1991, %v2035
      %v2044 = vadd.f32 %v1992, %v2036
      %v2045 = vadd.f32 %v1993, %v2037
      %v2046 = vadd.f32 %v1994, %v2038
      %v2047 = vadd.f32 %v1995, %v2039
      %v2048 = vadd.f32 %v1996, %v2040
      %v2049 = vadd.f32 %v1997, %v2041
      %v2050 = vrot.slane %v1705, 6
      %v2051 = vrot.slane %v1710, 6
      %v2052 = vsel %vm1824, %v2050, %v2051
      %v2053 = vrot.slane %v1715, 6
      %v2054 = vsel %vm1824, %v2051, %v2053
      %v2055 = vrot.slane %v1720, 6
      %v2056 = vsel %vm1824, %v2053, %v2055
      %v2057 = vrot.slane %v1725, 6
      %v2058 = vsel %vm1824, %v2055, %v2057
      %v2059 = vrot.slane %v1730, 6
      %v2060 = vsel %vm1824, %v2057, %v2059
      %v2061 = vrot.slane %v1735, 6
      %v2062 = vsel %vm1824, %v2059, %v2061
      %v2063 = vrot.slane %v1740, 6
      %v2064 = vsel %vm1824, %v2061, %v2063
      %v2073 = vsel %vm1824, 0.0, %v2050
      %v2074 = vlaneseq
      %v2075 = vshrl.u32 %v2074, 7
      %v2076 = vsub.s32 1, %v2075
      %v2077 = vrot.slane %v1970, %v2076
      %v2078 = vmul.f32 %v2073, %v2077
      %v2079 = vmul.f32 %v2052, %v2077
      %v2080 = vmul.f32 %v2054, %v2077
      %v2081 = vmul.f32 %v2056, %v2077
      %v2082 = vmul.f32 %v2058, %v2077
      %v2083 = vmul.f32 %v2060, %v2077
      %v2084 = vmul.f32 %v2062, %v2077
      %v2085 = vmul.f32 %v2064, %v2077
      %v2086 = vadd.f32 %v2042, %v2078
      %v2087 = vadd.f32 %v2043, %v2079
      %v2088 = vadd.f32 %v2044, %v2080
      %v2089 = vadd.f32 %v2045, %v2081
      %v2090 = vadd.f32 %v2046, %v2082
      %v2091 = vadd.f32 %v2047, %v2083
      %v2092 = vadd.f32 %v2048, %v2084
      %v2093 = vadd.f32 %v2049, %v2085
      %v2094 = vrot.slane %v1705, 5
      %v2095 = vrot.slane %v1710, 5
      %v2096 = vsel %vm1869, %v2094, %v2095
      %v2097 = vrot.slane %v1715, 5
      %v2098 = vsel %vm1869, %v2095, %v2097
      %v2099 = vrot.slane %v1720, 5
      %v2100 = vsel %vm1869, %v2097, %v2099
      %v2101 = vrot.slane %v1725, 5
      %v2102 = vsel %vm1869, %v2099, %v2101
      %v2103 = vrot.slane %v1730, 5
      %v2104 = vsel %vm1869, %v2101, %v2103
      %v2105 = vrot.slane %v1735, 5
      %v2106 = vsel %vm1869, %v2103, %v2105
      %v2107 = vrot.slane %v1740, 5
      %v2108 = vsel %vm1869, %v2105, %v2107
      %v2117 = vsel %vm1869, 0.0, %v2094
      %v2118 = vlaneseq
      %v2119 = vshrl.u32 %v2118, 7
      %v2120 = vsub.s32 0, %v2119
      %v2121 = vrot.slane %v1970, %v2120
      %v2122 = vmul.f32 %v2117, %v2121
      %v2123 = vmul.f32 %v2096, %v2121
      %v2124 = vmul.f32 %v2098, %v2121
      %v2125 = vmul.f32 %v2100, %v2121
      %v2126 = vmul.f32 %v2102, %v2121
      %v2127 = vmul.f32 %v2104, %v2121
      %v2128 = vmul.f32 %v2106, %v2121
      %v2129 = vmul.f32 %v2108, %v2121
      %v2130 = vadd.f32 %v2086, %v2122
      %v2131 = vadd.f32 %v2087, %v2123
      %v2132 = vadd.f32 %v2088, %v2124
      %v2133 = vadd.f32 %v2089, %v2125
      %v2134 = vadd.f32 %v2090, %v2126
      %v2135 = vadd.f32 %v2091, %v2127
      %v2136 = vadd.f32 %v2092, %v2128
      %v2137 = vadd.f32 %v2093, %v2129
      %v2138 = vxor.u32 %v2130, 2147483648
      %v2139 = vxor.u32 %v2131, 2147483648
      %v2140 = vxor.u32 %v2132, 2147483648
      %v2141 = vxor.u32 %v2133, 2147483648
      %v2142 = vxor.u32 %v2134, 2147483648
      %v2143 = vxor.u32 %v2135, 2147483648
      %v2144 = vxor.u32 %v2136, 2147483648
      %v2145 = vxor.u32 %v2137, 2147483648
      %v2146 = vmul.f32 %v2138, 1.442695
      %v2147 = vpow.pop %v2146
      %v2148 = vmul.f32 %v2139, 1.442695
      %v2149 = vpow.pop %v2148
      %v2150 = vmul.f32 %v2140, 1.442695
      %v2151 = vpow.pop %v2150
      %v2152 = vmul.f32 %v2141, 1.442695
      %v2153 = vpow.pop %v2152
      %v2154 = vmul.f32 %v2142, 1.442695
      %v2155 = vpow.pop %v2154
      %v2156 = vmul.f32 %v2143, 1.442695
      %v2157 = vpow.pop %v2156
      %v2158 = vmul.f32 %v2144, 1.442695
      %v2159 = vpow.pop %v2158
      %v2160 = vmul.f32 %v2145, 1.442695
      %v2161 = vpow.pop %v2160
      %v2162 = vadd.f32 %v2147, 1.0
      %v2163 = vadd.f32 %v2149, 1.0
      %v2164 = vadd.f32 %v2151, 1.0
      %v2165 = vadd.f32 %v2153, 1.0
      %v2166 = vadd.f32 %v2155, 1.0
      %v2167 = vadd.f32 %v2157, 1.0
      %v2168 = vadd.f32 %v2159, 1.0
      %v2169 = vadd.f32 %v2161, 1.0
      %v2170 = vrcp.pop %v2162
      %v2171 = vmul.f32 1.0, %v2170
      %v2172 = vrcp.pop %v2163
      %v2173 = vmul.f32 1.0, %v2172
      %v2174 = vrcp.pop %v2164
      %v2175 = vmul.f32 1.0, %v2174
      %v2176 = vrcp.pop %v2165
      %v2177 = vmul.f32 1.0, %v2176
      %v2178 = vrcp.pop %v2166
      %v2179 = vmul.f32 1.0, %v2178
      %v2180 = vrcp.pop %v2167
      %v2181 = vmul.f32 1.0, %v2180
      %v2182 = vrcp.pop %v2168
      %v2183 = vmul.f32 1.0, %v2182
      %v2184 = vrcp.pop %v2169
      %v2185 = vmul.f32 1.0, %v2184
      %v2186 = vmul.f32 %v2130, %v2171
      %v2187 = vmul.f32 %v2131, %v2173
      %v2188 = vmul.f32 %v2132, %v2175
      %v2189 = vmul.f32 %v2133, %v2177
      %v2190 = vmul.f32 %v2134, %v2179
      %v2191 = vmul.f32 %v2135, %v2181
      %v2192 = vmul.f32 %v2136, %v2183
      %v2193 = vmul.f32 %v2137, %v2185
      %v2194 = vld [vmem:[%s14] sm:$0xff]
      %v2195 = vld [vmem:[%s14 + $0x8] sm:$0xff]
      %v2196 = vld [vmem:[%s14 + $0x10] sm:$0xff]
      %v2197 = vld [vmem:[%s14 + $0x18] sm:$0xff]
      %v2198 = vld [vmem:[%s14 + $0x20] sm:$0xff]
      %v2199 = vld [vmem:[%s14 + $0x28] sm:$0xff]
      %v2200 = vld [vmem:[%s14 + $0x30] sm:$0xff]
      %v2201 = vld [vmem:[%s14 + $0x38] sm:$0xff]
      %v2202 = vld [vmem:[%s15] sm:$0x1]
      %v2204 = vlaneseq
      %v2205 = vshrl.u32 %v2204, 7
      %v2206 = vsub.s32 0, %v2205
      %v2207 = vrot.slane %v2202, %v2206
      %vm2209 = vcmask 523264
      %v2211 = vsel %vm2209, %v2186, 0
      %v2214 = vsel %vm2209, %v2187, 0
      %v2217 = vsel %vm2209, %v2188, 0
      %v2220 = vsel %vm2209, %v2189, 0
      %v2223 = vsel %vm2209, %v2190, 0
      %v2226 = vsel %vm2209, %v2191, 0
      %v2229 = vsel %vm2209, %v2192, 0
      %v2232 = vsel %vm2209, %v2193, 0
      %2234 = vmatprep.subr.mxu0 0.0
      %2235 = vmatpush1.msra.mxu0 %v2194
      %2236 = vmatprep.subr.mxu0 0.0
      %2237 = vmatpush1.msra.mxu0 %v2195
      %2238 = vmatprep.subr.mxu0 0.0
      %2239 = vmatpush1.msra.mxu0 %v2196
      %2240 = vmatprep.subr.mxu0 0.0
      %2241 = vmatpush1.msra.mxu0 %v2197
      %2242 = vmatprep.subr.mxu0 0.0
      %2243 = vmatpush1.msra.mxu0 %v2198
      %2244 = vmatprep.subr.mxu0 0.0
      %2245 = vmatpush1.msra.mxu0 %v2199
      %2246 = vmatprep.subr.mxu0 0.0
      %2247 = vmatpush1.msra.mxu0 %v2200
      %2248 = vmatprep.subr.mxu0 0.0
      %2249 = vmatpush1.msra.mxu0 %v2201
      %2250 = vmatprep.subr.mxu0 0.0
      %2251 = vmatpush1.msra.mxu0 0.0
      %2252 = vmatprep.subr.mxu0 0.0
      %2253 = vmatpush1.msra.mxu0 0.0
      %2254 = vmatprep.subr.mxu0 0.0
      %2255 = vmatpush1.msra.mxu0 0.0
      %2256 = vmatprep.subr.mxu0 0.0
      %2257 = vmatpush1.msra.mxu0 0.0
      %2258 = vmatprep.subr.mxu0 0.0
      %2259 = vmatpush1.msra.mxu0 0.0
      %2260 = vmatprep.subr.mxu0 0.0
      %2261 = vmatpush1.msra.mxu0 0.0
      %2262 = vmatprep.subr.mxu0 0.0
      %2263 = vmatpush1.msra.mxu0 0.0
      %2264 = vmatprep.subr.mxu0 0.0
      %2265 = vmatpush1.msra.mxu0 0.0
      %2266 = vmatprep.subr.mxu0 0.0
      %2267 = vmatpush1.msra.mxu0 0.0
      %2268 = vmatprep.subr.mxu0 0.0
      %2269 = vmatpush1.msra.mxu0 0.0
      %2270 = vmatprep.subr.mxu0 0.0
      %2271 = vmatpush1.msra.mxu0 0.0
      %2272 = vmatprep.subr.mxu0 0.0
      %2273 = vmatpush1.msra.mxu0 0.0
      %2274 = vmatprep.subr.mxu0 0.0
      %2275 = vmatpush1.msra.mxu0 0.0
      %2276 = vmatprep.subr.mxu0 0.0
      %2277 = vmatpush1.msra.mxu0 0.0
      %2278 = vmatprep.subr.mxu0 0.0
      %2279 = vmatpush1.msra.mxu0 0.0
      %2280 = vmatprep.subr.mxu0 0.0
      %2281 = vmatpush1.msra.mxu0 0.0
      %2282 = vmatprep.subr.mxu0 0.0
      %2283 = vmatpush1.msra.mxu0 0.0
      %2284 = vmatprep.subr.mxu0 0.0
      %2285 = vmatpush1.msra.mxu0 0.0
      %2286 = vmatprep.subr.mxu0 0.0
      %2287 = vmatpush1.msra.mxu0 0.0
      %2288 = vmatprep.subr.mxu0 0.0
      %2289 = vmatpush1.msra.mxu0 0.0
      %2290 = vmatprep.subr.mxu0 0.0
      %2291 = vmatpush1.msra.mxu0 0.0
      %2292 = vmatprep.subr.mxu0 0.0
      %2293 = vmatpush1.msra.mxu0 0.0
      %2294 = vmatprep.subr.mxu0 0.0
      %2295 = vmatpush1.msra.mxu0 0.0
      %2296 = vmatprep.subr.mxu0 0.0
      %2297 = vmatpush1.msra.mxu0 0.0
      %2298 = vmatprep.mubr.f32.mxu0 0.0
      %2299 = vmatmul.mubr.f32.gmra.mrb[0].mxu0 %v2211
      %v2300 = vpop.f32.mrb[0].mxu0
      %v2301 = vadd.f32 %v2207, %v2300
      %v2302 = vpop.f32.mrb[0].mxu0
      %2303 = vmatprep.mubr.f32.mxu0 0.0
      %2304 = vmatmul.mubr.f32.gmra.mrb[0].mxu0 %v2214
      %v2305 = vpop.f32.mrb[0].mxu0
      %v2306 = vadd.f32 %v2207, %v2305
      %v2307 = vpop.f32.mrb[0].mxu0
      %2308 = vmatprep.mubr.f32.mxu0 0.0
      %2309 = vmatmul.mubr.f32.gmra.mrb[0].mxu0 %v2217
      %v2310 = vpop.f32.mrb[0].mxu0
      %v2311 = vadd.f32 %v2207, %v2310
      %v2312 = vpop.f32.mrb[0].mxu0
      %2313 = vmatprep.mubr.f32.mxu0 0.0
      %2314 = vmatmul.mubr.f32.gmra.mrb[0].mxu0 %v2220
      %v2315 = vpop.f32.mrb[0].mxu0
      %v2316 = vadd.f32 %v2207, %v2315
      %v2317 = vpop.f32.mrb[0].mxu0
      %2318 = vmatprep.mubr.f32.mxu0 0.0
      %2319 = vmatmul.mubr.f32.gmra.mrb[0].mxu0 %v2223
      %v2320 = vpop.f32.mrb[0].mxu0
      %v2321 = vadd.f32 %v2207, %v2320
      %v2322 = vpop.f32.mrb[0].mxu0
      %2323 = vmatprep.mubr.f32.mxu0 0.0
      %2324 = vmatmul.mubr.f32.gmra.mrb[0].mxu0 %v2226
      %v2325 = vpop.f32.mrb[0].mxu0
      %v2326 = vadd.f32 %v2207, %v2325
      %v2327 = vpop.f32.mrb[0].mxu0
      %2328 = vmatprep.mubr.f32.mxu0 0.0
      %2329 = vmatmul.mubr.f32.gmra.mrb[0].mxu0 %v2229
      %v2330 = vpop.f32.mrb[0].mxu0
      %v2331 = vadd.f32 %v2207, %v2330
      %v2332 = vpop.f32.mrb[0].mxu0
      %2333 = vmatprep.mubr.f32.mxu0 0.0
      %2334 = vmatmul.mubr.f32.gmra.mrb[0].mxu0 %v2232
      %v2335 = vpop.f32.mrb[0].mxu0
      %v2336 = vadd.f32 %v2207, %v2335
      %v2337 = vpop.f32.mrb[0].mxu0
      %2338 = vdwg.mxu0
      %v2339 = vmax.f32 %v2301, 0.0
      %v2340 = vmax.f32 %v2306, 0.0
      %v2341 = vmax.f32 %v2311, 0.0
      %v2342 = vmax.f32 %v2316, 0.0
      %v2343 = vmax.f32 %v2321, 0.0
      %v2344 = vmax.f32 %v2326, 0.0
      %v2345 = vmax.f32 %v2331, 0.0
      %v2346 = vmax.f32 %v2336, 0.0
      %v2347 = vand.u32 2147483647, %v2301
      %v2348 = vand.u32 2147483647, %v2306
      %v2349 = vand.u32 2147483647, %v2311
      %v2350 = vand.u32 2147483647, %v2316
      %v2351 = vand.u32 2147483647, %v2321
      %v2352 = vand.u32 2147483647, %v2326
      %v2353 = vand.u32 2147483647, %v2331
      %v2354 = vand.u32 2147483647, %v2336
      %v2355 = vsub.f32 0.0, %v2347
      %v2356 = vsub.f32 0.0, %v2348
      %v2357 = vsub.f32 0.0, %v2349
      %v2358 = vsub.f32 0.0, %v2350
      %v2359 = vsub.f32 0.0, %v2351
      %v2360 = vsub.f32 0.0, %v2352
      %v2361 = vsub.f32 0.0, %v2353
      %v2362 = vsub.f32 0.0, %v2354
      %v2363 = vmul.f32 %v2355, 1.442695
      %v2364 = vpow.pop %v2363
      %v2365 = vmul.f32 %v2356, 1.442695
      %v2366 = vpow.pop %v2365
      %v2367 = vmul.f32 %v2357, 1.442695
      %v2368 = vpow.pop %v2367
      %v2369 = vmul.f32 %v2358, 1.442695
      %v2370 = vpow.pop %v2369
      %v2371 = vmul.f32 %v2359, 1.442695
      %v2372 = vpow.pop %v2371
      %v2373 = vmul.f32 %v2360, 1.442695
      %v2374 = vpow.pop %v2373
      %v2375 = vmul.f32 %v2361, 1.442695
      %v2376 = vpow.pop %v2375
      %v2377 = vmul.f32 %v2362, 1.442695
      %v2378 = vpow.pop %v2377
      %v2379 = vadd.f32 %v2364, 1.0
      %v2380 = vadd.f32 %v2366, 1.0
      %v2381 = vadd.f32 %v2368, 1.0
      %v2382 = vadd.f32 %v2370, 1.0
      %v2383 = vadd.f32 %v2372, 1.0
      %v2384 = vadd.f32 %v2374, 1.0
      %v2385 = vadd.f32 %v2376, 1.0
      %v2386 = vadd.f32 %v2378, 1.0
      %v2387 = vlog2.pop %v2379
      %v2388 = vmul.f32 %v2387, 0.6931472
      %v2389 = vlog2.pop %v2380
      %v2390 = vmul.f32 %v2389, 0.6931472
      %v2391 = vlog2.pop %v2381
      %v2392 = vmul.f32 %v2391, 0.6931472
      %v2393 = vlog2.pop %v2382
      %v2394 = vmul.f32 %v2393, 0.6931472
      %v2395 = vlog2.pop %v2383
      %v2396 = vmul.f32 %v2395, 0.6931472
      %v2397 = vlog2.pop %v2384
      %v2398 = vmul.f32 %v2397, 0.6931472
      %v2399 = vlog2.pop %v2385
      %v2400 = vmul.f32 %v2399, 0.6931472
      %v2401 = vlog2.pop %v2386
      %v2402 = vmul.f32 %v2401, 0.6931472
      %v2403 = vadd.f32 %v2339, %v2388
      %v2404 = vadd.f32 %v2340, %v2390
      %v2405 = vadd.f32 %v2341, %v2392
      %v2406 = vadd.f32 %v2342, %v2394
      %v2407 = vadd.f32 %v2343, %v2396
      %v2408 = vadd.f32 %v2344, %v2398
      %v2409 = vadd.f32 %v2345, %v2400
      %v2410 = vadd.f32 %v2346, %v2402
      %v2411 = vld [vmem:[%s16] sm:$0xff]
      %v2412 = vld [vmem:[%s16 + $0x8] sm:$0xff]
      %v2413 = vld [vmem:[%s16 + $0x10] sm:$0xff]
      %v2414 = vld [vmem:[%s16 + $0x18] sm:$0xff]
      %v2415 = vld [vmem:[%s16 + $0x20] sm:$0xff]
      %v2416 = vld [vmem:[%s16 + $0x28] sm:$0xff]
      %v2417 = vld [vmem:[%s16 + $0x30] sm:$0xff]
      %v2418 = vld [vmem:[%s16 + $0x38] sm:$0xff]
      %2419 = vmatprep.subr.mxu0 0.0
      %2420 = vmatpush1.msra.mxu0 %v2411
      %2421 = vmatprep.subr.mxu0 0.0
      %2422 = vmatpush1.msra.mxu0 %v2412
      %2423 = vmatprep.subr.mxu0 0.0
      %2424 = vmatpush1.msra.mxu0 %v2413
      %2425 = vmatprep.subr.mxu0 0.0
      %2426 = vmatpush1.msra.mxu0 %v2414
      %2427 = vmatprep.subr.mxu0 0.0
      %2428 = vmatpush1.msra.mxu0 %v2415
      %2429 = vmatprep.subr.mxu0 0.0
      %2430 = vmatpush1.msra.mxu0 %v2416
      %2431 = vmatprep.subr.mxu0 0.0
      %2432 = vmatpush1.msra.mxu0 %v2417
      %2433 = vmatprep.subr.mxu0 0.0
      %2434 = vmatpush1.msra.mxu0 %v2418
      %2435 = vmatprep.subr.mxu0 0.0
      %2436 = vmatpush1.msra.mxu0 0.0
      %2437 = vmatprep.subr.mxu0 0.0
      %2438 = vmatpush1.msra.mxu0 0.0
      %2439 = vmatprep.subr.mxu0 0.0
      %2440 = vmatpush1.msra.mxu0 0.0
      %2441 = vmatprep.subr.mxu0 0.0
      %2442 = vmatpush1.msra.mxu0 0.0
      %2443 = vmatprep.subr.mxu0 0.0
      %2444 = vmatpush1.msra.mxu0 0.0
      %2445 = vmatprep.subr.mxu0 0.0
      %2446 = vmatpush1.msra.mxu0 0.0
      %2447 = vmatprep.subr.mxu0 0.0
      %2448 = vmatpush1.msra.mxu0 0.0
      %2449 = vmatprep.subr.mxu0 0.0
      %2450 = vmatpush1.msra.mxu0 0.0
      %2451 = vmatprep.subr.mxu0 0.0
      %2452 = vmatpush1.msra.mxu0 0.0
      %2453 = vmatprep.subr.mxu0 0.0
      %2454 = vmatpush1.msra.mxu0 0.0
      %2455 = vmatprep.subr.mxu0 0.0
      %2456 = vmatpush1.msra.mxu0 0.0
      %2457 = vmatprep.subr.mxu0 0.0
      %2458 = vmatpush1.msra.mxu0 0.0
      %2459 = vmatprep.subr.mxu0 0.0
      %2460 = vmatpush1.msra.mxu0 0.0
      %2461 = vmatprep.subr.mxu0 0.0
      %2462 = vmatpush1.msra.mxu0 0.0
      %2463 = vmatprep.subr.mxu0 0.0
      %2464 = vmatpush1.msra.mxu0 0.0
      %2465 = vmatprep.subr.mxu0 0.0
      %2466 = vmatpush1.msra.mxu0 0.0
      %2467 = vmatprep.subr.mxu0 0.0
      %2468 = vmatpush1.msra.mxu0 0.0
      %2469 = vmatprep.subr.mxu0 0.0
      %2470 = vmatpush1.msra.mxu0 0.0
      %2471 = vmatprep.subr.mxu0 0.0
      %2472 = vmatpush1.msra.mxu0 0.0
      %2473 = vmatprep.subr.mxu0 0.0
      %2474 = vmatpush1.msra.mxu0 0.0
      %2475 = vmatprep.subr.mxu0 0.0
      %2476 = vmatpush1.msra.mxu0 0.0
      %2477 = vmatprep.subr.mxu0 0.0
      %2478 = vmatpush1.msra.mxu0 0.0
      %2479 = vmatprep.subr.mxu0 0.0
      %2480 = vmatpush1.msra.mxu0 0.0
      %2481 = vmatprep.subr.mxu0 0.0
      %2482 = vmatpush1.msra.mxu0 0.0
      %2483 = vmatprep.mubr.f32.mxu0 0.0
      %2484 = vmatmul.mubr.f32.gmra.mrb[0].mxu0 %v2211
      %v2485 = vpop.f32.mrb[0].mxu0
      %v2486 = vadd.f32 0.0, %v2485
      %v2487 = vpop.f32.mrb[0].mxu0
      %2488 = vmatprep.mubr.f32.mxu0 0.0
      %2489 = vmatmul.mubr.f32.gmra.mrb[0].mxu0 %v2214
      %v2490 = vpop.f32.mrb[0].mxu0
      %v2491 = vadd.f32 0.0, %v2490
      %v2492 = vpop.f32.mrb[0].mxu0
      %2493 = vmatprep.mubr.f32.mxu0 0.0
      %2494 = vmatmul.mubr.f32.gmra.mrb[0].mxu0 %v2217
      %v2495 = vpop.f32.mrb[0].mxu0
      %v2496 = vadd.f32 0.0, %v2495
      %v2497 = vpop.f32.mrb[0].mxu0
      %2498 = vmatprep.mubr.f32.mxu0 0.0
      %2499 = vmatmul.mubr.f32.gmra.mrb[0].mxu0 %v2220
      %v2500 = vpop.f32.mrb[0].mxu0
      %v2501 = vadd.f32 0.0, %v2500
      %v2502 = vpop.f32.mrb[0].mxu0
      %2503 = vmatprep.mubr.f32.mxu0 0.0
      %2504 = vmatmul.mubr.f32.gmra.mrb[0].mxu0 %v2223
      %v2505 = vpop.f32.mrb[0].mxu0
      %v2506 = vadd.f32 0.0, %v2505
      %v2507 = vpop.f32.mrb[0].mxu0
      %2508 = vmatprep.mubr.f32.mxu0 0.0
      %2509 = vmatmul.mubr.f32.gmra.mrb[0].mxu0 %v2226
      %v2510 = vpop.f32.mrb[0].mxu0
      %v2511 = vadd.f32 0.0, %v2510
      %v2512 = vpop.f32.mrb[0].mxu0
      %2513 = vmatprep.mubr.f32.mxu0 0.0
      %2514 = vmatmul.mubr.f32.gmra.mrb[0].mxu0 %v2229
      %v2515 = vpop.f32.mrb[0].mxu0
      %v2516 = vadd.f32 0.0, %v2515
      %v2517 = vpop.f32.mrb[0].mxu0
      %2518 = vmatprep.mubr.f32.mxu0 0.0
      %2519 = vmatmul.mubr.f32.gmra.mrb[0].mxu0 %v2232
      %v2520 = vpop.f32.mrb[0].mxu0
      %v2521 = vadd.f32 0.0, %v2520
      %v2522 = vpop.f32.mrb[0].mxu0
      %2523 = vdwg.mxu0
      %v2524 = vld [vmem:[%s17] sm:$0xff]
      %v2525 = vld [vmem:[%s17 + $0x8] sm:$0xff]
      %v2526 = vld [vmem:[%s17 + $0x10] sm:$0xff]
      %v2527 = vld [vmem:[%s17 + $0x18] sm:$0xff]
      %v2528 = vld [vmem:[%s17 + $0x20] sm:$0xff]
      %v2529 = vld [vmem:[%s17 + $0x28] sm:$0xff]
      %v2530 = vld [vmem:[%s17 + $0x30] sm:$0xff]
      %v2531 = vld [vmem:[%s17 + $0x38] sm:$0xff]
      %2532 = vmatprep.subr.mxu0 0.0
      %2533 = vmatpush1.msra.mxu0 %v2524
      %2534 = vmatprep.subr.mxu0 0.0
      %2535 = vmatpush1.msra.mxu0 %v2525
      %2536 = vmatprep.subr.mxu0 0.0
      %2537 = vmatpush1.msra.mxu0 %v2526
      %2538 = vmatprep.subr.mxu0 0.0
      %2539 = vmatpush1.msra.mxu0 %v2527
      %2540 = vmatprep.subr.mxu0 0.0
      %2541 = vmatpush1.msra.mxu0 %v2528
      %2542 = vmatprep.subr.mxu0 0.0
      %2543 = vmatpush1.msra.mxu0 %v2529
      %2544 = vmatprep.subr.mxu0 0.0
      %2545 = vmatpush1.msra.mxu0 %v2530
      %2546 = vmatprep.subr.mxu0 0.0
      %2547 = vmatpush1.msra.mxu0 %v2531
      %2548 = vmatprep.subr.mxu0 0.0
      %2549 = vmatpush1.msra.mxu0 0.0
      %2550 = vmatprep.subr.mxu0 0.0
      %2551 = vmatpush1.msra.mxu0 0.0
      %2552 = vmatprep.subr.mxu0 0.0
      %2553 = vmatpush1.msra.mxu0 0.0
      %2554 = vmatprep.subr.mxu0 0.0
      %2555 = vmatpush1.msra.mxu0 0.0
      %2556 = vmatprep.subr.mxu0 0.0
      %2557 = vmatpush1.msra.mxu0 0.0
      %2558 = vmatprep.subr.mxu0 0.0
      %2559 = vmatpush1.msra.mxu0 0.0
      %2560 = vmatprep.subr.mxu0 0.0
      %2561 = vmatpush1.msra.mxu0 0.0
      %2562 = vmatprep.subr.mxu0 0.0
      %2563 = vmatpush1.msra.mxu0 0.0
      %2564 = vmatprep.subr.mxu0 0.0
      %2565 = vmatpush1.msra.mxu0 0.0
      %2566 = vmatprep.subr.mxu0 0.0
      %2567 = vmatpush1.msra.mxu0 0.0
      %2568 = vmatprep.subr.mxu0 0.0
      %2569 = vmatpush1.msra.mxu0 0.0
      %2570 = vmatprep.subr.mxu0 0.0
      %2571 = vmatpush1.msra.mxu0 0.0
      %2572 = vmatprep.subr.mxu0 0.0
      %2573 = vmatpush1.msra.mxu0 0.0
      %2574 = vmatprep.subr.mxu0 0.0
      %2575 = vmatpush1.msra.mxu0 0.0
      %2576 = vmatprep.subr.mxu0 0.0
      %2577 = vmatpush1.msra.mxu0 0.0
      %2578 = vmatprep.subr.mxu0 0.0
      %2579 = vmatpush1.msra.mxu0 0.0
      %2580 = vmatprep.subr.mxu0 0.0
      %2581 = vmatpush1.msra.mxu0 0.0
      %2582 = vmatprep.subr.mxu0 0.0
      %2583 = vmatpush1.msra.mxu0 0.0
      %2584 = vmatprep.subr.mxu0 0.0
      %2585 = vmatpush1.msra.mxu0 0.0
      %2586 = vmatprep.subr.mxu0 0.0
      %2587 = vmatpush1.msra.mxu0 0.0
      %2588 = vmatprep.subr.mxu0 0.0
      %2589 = vmatpush1.msra.mxu0 0.0
      %2590 = vmatprep.subr.mxu0 0.0
      %2591 = vmatpush1.msra.mxu0 0.0
      %2592 = vmatprep.subr.mxu0 0.0
      %2593 = vmatpush1.msra.mxu0 0.0
      %2594 = vmatprep.subr.mxu0 0.0
      %2595 = vmatpush1.msra.mxu0 0.0
      %2596 = vmatprep.mubr.f32.mxu0 0.0
      %2597 = vmatmul.mubr.f32.gmra.mrb[0].mxu0 %v2211
      %v2598 = vpop.f32.mrb[0].mxu0
      %v2599 = vadd.f32 0.0, %v2598
      %v2600 = vpop.f32.mrb[0].mxu0
      %2601 = vmatprep.mubr.f32.mxu0 0.0
      %2602 = vmatmul.mubr.f32.gmra.mrb[0].mxu0 %v2214
      %v2603 = vpop.f32.mrb[0].mxu0
      %v2604 = vadd.f32 0.0, %v2603
      %v2605 = vpop.f32.mrb[0].mxu0
      %2606 = vmatprep.mubr.f32.mxu0 0.0
      %2607 = vmatmul.mubr.f32.gmra.mrb[0].mxu0 %v2217
      %v2608 = vpop.f32.mrb[0].mxu0
      %v2609 = vadd.f32 0.0, %v2608
      %v2610 = vpop.f32.mrb[0].mxu0
      %2611 = vmatprep.mubr.f32.mxu0 0.0
      %2612 = vmatmul.mubr.f32.gmra.mrb[0].mxu0 %v2220
      %v2613 = vpop.f32.mrb[0].mxu0
      %v2614 = vadd.f32 0.0, %v2613
      %v2615 = vpop.f32.mrb[0].mxu0
      %2616 = vmatprep.mubr.f32.mxu0 0.0
      %2617 = vmatmul.mubr.f32.gmra.mrb[0].mxu0 %v2223
      %v2618 = vpop.f32.mrb[0].mxu0
      %v2619 = vadd.f32 0.0, %v2618
      %v2620 = vpop.f32.mrb[0].mxu0
      %2621 = vmatprep.mubr.f32.mxu0 0.0
      %2622 = vmatmul.mubr.f32.gmra.mrb[0].mxu0 %v2226
      %v2623 = vpop.f32.mrb[0].mxu0
      %v2624 = vadd.f32 0.0, %v2623
      %v2625 = vpop.f32.mrb[0].mxu0
      %2626 = vmatprep.mubr.f32.mxu0 0.0
      %2627 = vmatmul.mubr.f32.gmra.mrb[0].mxu0 %v2229
      %v2628 = vpop.f32.mrb[0].mxu0
      %v2629 = vadd.f32 0.0, %v2628
      %v2630 = vpop.f32.mrb[0].mxu0
      %2631 = vmatprep.mubr.f32.mxu0 0.0
      %2632 = vmatmul.mubr.f32.gmra.mrb[0].mxu0 %v2232
      %v2633 = vpop.f32.mrb[0].mxu0
      %v2634 = vadd.f32 0.0, %v2633
      %v2635 = vpop.f32.mrb[0].mxu0
      %2636 = vdwg.mxu0
      %v2637 = vld [vmem:[%s18] sm:$0xff]
      %v2638 = vld [vmem:[%s18 + $0x8] sm:$0xff]
      %v2647 = vcombine.high %v2403, %v2403
      %v2649 = vunpack.c.l.s4 1966171168
      %v2650 = vunpack.c.0.s8 %v2649
      %v2651 = vlaneseq
      %v2652 = vshrl.u32 %v2651, 7
      %v2653 = vsub.s32 %v2650, %v2652
      %v2654 = vrot.slane %v2403, %v2653
      %v2656 = vunpack.c.l.s4 1966171168
      %v2657 = vunpack.c.0.s8 %v2656
      %v2658 = vlaneseq
      %v2659 = vshrl.u32 %v2658, 7
      %v2660 = vsub.s32 %v2657, %v2659
      %v2661 = vrot.slane %v2647, %v2660
      %v2662 = vcombine.high %v2654, %v2654
      %v2663 = vcombine.high %v2661, %v2661
      %v2665 = vunpack.c.l.s4 1966171168
      %v2666 = vunpack.c.0.s8 %v2665
      %v2667 = vlaneseq
      %v2668 = vshrl.u32 %v2667, 7
      %v2669 = vsub.s32 %v2666, %v2668
      %v2670 = vrot.slane %v2654, %v2669
      %v2672 = vunpack.c.l.s4 1966171168
      %v2673 = vunpack.c.0.s8 %v2672
      %v2674 = vlaneseq
      %v2675 = vshrl.u32 %v2674, 7
      %v2676 = vsub.s32 %v2673, %v2675
      %v2677 = vrot.slane %v2661, %v2676
      %v2679 = vunpack.c.l.s4 1966171168
      %v2680 = vunpack.c.0.s8 %v2679
      %v2681 = vlaneseq
      %v2682 = vshrl.u32 %v2681, 7
      %v2683 = vsub.s32 %v2680, %v2682
      %v2684 = vrot.slane %v2662, %v2683
      %v2686 = vunpack.c.l.s4 1966171168
      %v2687 = vunpack.c.0.s8 %v2686
      %v2688 = vlaneseq
      %v2689 = vshrl.u32 %v2688, 7
      %v2690 = vsub.s32 %v2687, %v2689
      %v2691 = vrot.slane %v2663, %v2690
      %v2692 = vcombine.high %v2670, %v2670
      %v2693 = vcombine.high %v2677, %v2677
      %v2694 = vcombine.high %v2684, %v2684
      %v2695 = vcombine.high %v2691, %v2691
      %v2696 = vcombine.high %v2404, %v2404
      %v2698 = vunpack.c.l.s4 1966171168
      %v2699 = vunpack.c.0.s8 %v2698
      %v2700 = vlaneseq
      %v2701 = vshrl.u32 %v2700, 7
      %v2702 = vsub.s32 %v2699, %v2701
      %v2703 = vrot.slane %v2404, %v2702
      %v2705 = vunpack.c.l.s4 1966171168
      %v2706 = vunpack.c.0.s8 %v2705
      %v2707 = vlaneseq
      %v2708 = vshrl.u32 %v2707, 7
      %v2709 = vsub.s32 %v2706, %v2708
      %v2710 = vrot.slane %v2696, %v2709
      %v2711 = vcombine.high %v2703, %v2703
      %v2712 = vcombine.high %v2710, %v2710
      %v2714 = vunpack.c.l.s4 1966171168
      %v2715 = vunpack.c.0.s8 %v2714
      %v2716 = vlaneseq
      %v2717 = vshrl.u32 %v2716, 7
      %v2718 = vsub.s32 %v2715, %v2717
      %v2719 = vrot.slane %v2703, %v2718
      %v2721 = vunpack.c.l.s4 1966171168
      %v2722 = vunpack.c.0.s8 %v2721
      %v2723 = vlaneseq
      %v2724 = vshrl.u32 %v2723, 7
      %v2725 = vsub.s32 %v2722, %v2724
      %v2726 = vrot.slane %v2710, %v2725
      %v2728 = vunpack.c.l.s4 1966171168
      %v2729 = vunpack.c.0.s8 %v2728
      %v2730 = vlaneseq
      %v2731 = vshrl.u32 %v2730, 7
      %v2732 = vsub.s32 %v2729, %v2731
      %v2733 = vrot.slane %v2711, %v2732
      %v2735 = vunpack.c.l.s4 1966171168
      %v2736 = vunpack.c.0.s8 %v2735
      %v2737 = vlaneseq
      %v2738 = vshrl.u32 %v2737, 7
      %v2739 = vsub.s32 %v2736, %v2738
      %v2740 = vrot.slane %v2712, %v2739
      %v2741 = vcombine.high %v2719, %v2719
      %v2742 = vcombine.high %v2726, %v2726
      %v2743 = vcombine.high %v2733, %v2733
      %v2744 = vcombine.high %v2740, %v2740
      %v2745 = vcombine.high %v2405, %v2405
      %v2747 = vunpack.c.l.s4 1966171168
      %v2748 = vunpack.c.0.s8 %v2747
      %v2749 = vlaneseq
      %v2750 = vshrl.u32 %v2749, 7
      %v2751 = vsub.s32 %v2748, %v2750
      %v2752 = vrot.slane %v2405, %v2751
      %v2754 = vunpack.c.l.s4 1966171168
      %v2755 = vunpack.c.0.s8 %v2754
      %v2756 = vlaneseq
      %v2757 = vshrl.u32 %v2756, 7
      %v2758 = vsub.s32 %v2755, %v2757
      %v2759 = vrot.slane %v2745, %v2758
      %v2760 = vcombine.high %v2752, %v2752
      %v2761 = vcombine.high %v2759, %v2759
      %v2763 = vunpack.c.l.s4 1966171168
      %v2764 = vunpack.c.0.s8 %v2763
      %v2765 = vlaneseq
      %v2766 = vshrl.u32 %v2765, 7
      %v2767 = vsub.s32 %v2764, %v2766
      %v2768 = vrot.slane %v2752, %v2767
      %v2770 = vunpack.c.l.s4 1966171168
      %v2771 = vunpack.c.0.s8 %v2770
      %v2772 = vlaneseq
      %v2773 = vshrl.u32 %v2772, 7
      %v2774 = vsub.s32 %v2771, %v2773
      %v2775 = vrot.slane %v2759, %v2774
      %v2777 = vunpack.c.l.s4 1966171168
      %v2778 = vunpack.c.0.s8 %v2777
      %v2779 = vlaneseq
      %v2780 = vshrl.u32 %v2779, 7
      %v2781 = vsub.s32 %v2778, %v2780
      %v2782 = vrot.slane %v2760, %v2781
      %v2784 = vunpack.c.l.s4 1966171168
      %v2785 = vunpack.c.0.s8 %v2784
      %v2786 = vlaneseq
      %v2787 = vshrl.u32 %v2786, 7
      %v2788 = vsub.s32 %v2785, %v2787
      %v2789 = vrot.slane %v2761, %v2788
      %v2790 = vcombine.high %v2768, %v2768
      %v2791 = vcombine.high %v2775, %v2775
      %v2792 = vcombine.high %v2782, %v2782
      %v2793 = vcombine.high %v2789, %v2789
      %v2794 = vcombine.high %v2406, %v2406
      %v2796 = vunpack.c.l.s4 1966171168
      %v2797 = vunpack.c.0.s8 %v2796
      %v2798 = vlaneseq
      %v2799 = vshrl.u32 %v2798, 7
      %v2800 = vsub.s32 %v2797, %v2799
      %v2801 = vrot.slane %v2406, %v2800
      %v2803 = vunpack.c.l.s4 1966171168
      %v2804 = vunpack.c.0.s8 %v2803
      %v2805 = vlaneseq
      %v2806 = vshrl.u32 %v2805, 7
      %v2807 = vsub.s32 %v2804, %v2806
      %v2808 = vrot.slane %v2794, %v2807
      %v2809 = vcombine.high %v2801, %v2801
      %v2810 = vcombine.high %v2808, %v2808
      %v2812 = vunpack.c.l.s4 1966171168
      %v2813 = vunpack.c.0.s8 %v2812
      %v2814 = vlaneseq
      %v2815 = vshrl.u32 %v2814, 7
      %v2816 = vsub.s32 %v2813, %v2815
      %v2817 = vrot.slane %v2801, %v2816
      %v2819 = vunpack.c.l.s4 1966171168
      %v2820 = vunpack.c.0.s8 %v2819
      %v2821 = vlaneseq
      %v2822 = vshrl.u32 %v2821, 7
      %v2823 = vsub.s32 %v2820, %v2822
      %v2824 = vrot.slane %v2808, %v2823
      %v2826 = vunpack.c.l.s4 1966171168
      %v2827 = vunpack.c.0.s8 %v2826
      %v2828 = vlaneseq
      %v2829 = vshrl.u32 %v2828, 7
      %v2830 = vsub.s32 %v2827, %v2829
      %v2831 = vrot.slane %v2809, %v2830
      %v2833 = vunpack.c.l.s4 1966171168
      %v2834 = vunpack.c.0.s8 %v2833
      %v2835 = vlaneseq
      %v2836 = vshrl.u32 %v2835, 7
      %v2837 = vsub.s32 %v2834, %v2836
      %v2838 = vrot.slane %v2810, %v2837
      %v2839 = vcombine.high %v2817, %v2817
      %v2840 = vcombine.high %v2824, %v2824
      %v2841 = vcombine.high %v2831, %v2831
      %v2842 = vcombine.high %v2838, %v2838
      %v2843 = vcombine.high %v2407, %v2407
      %v2845 = vunpack.c.l.s4 1966171168
      %v2846 = vunpack.c.0.s8 %v2845
      %v2847 = vlaneseq
      %v2848 = vshrl.u32 %v2847, 7
      %v2849 = vsub.s32 %v2846, %v2848
      %v2850 = vrot.slane %v2407, %v2849
      %v2852 = vunpack.c.l.s4 1966171168
      %v2853 = vunpack.c.0.s8 %v2852
      %v2854 = vlaneseq
      %v2855 = vshrl.u32 %v2854, 7
      %v2856 = vsub.s32 %v2853, %v2855
      %v2857 = vrot.slane %v2843, %v2856
      %v2858 = vcombine.high %v2850, %v2850
      %v2859 = vcombine.high %v2857, %v2857
      %v2861 = vunpack.c.l.s4 1966171168
      %v2862 = vunpack.c.0.s8 %v2861
      %v2863 = vlaneseq
      %v2864 = vshrl.u32 %v2863, 7
      %v2865 = vsub.s32 %v2862, %v2864
      %v2866 = vrot.slane %v2850, %v2865
      %v2868 = vunpack.c.l.s4 1966171168
      %v2869 = vunpack.c.0.s8 %v2868
      %v2870 = vlaneseq
      %v2871 = vshrl.u32 %v2870, 7
      %v2872 = vsub.s32 %v2869, %v2871
      %v2873 = vrot.slane %v2857, %v2872
      %v2875 = vunpack.c.l.s4 1966171168
      %v2876 = vunpack.c.0.s8 %v2875
      %v2877 = vlaneseq
      %v2878 = vshrl.u32 %v2877, 7
      %v2879 = vsub.s32 %v2876, %v2878
      %v2880 = vrot.slane %v2858, %v2879
      %v2882 = vunpack.c.l.s4 1966171168
      %v2883 = vunpack.c.0.s8 %v2882
      %v2884 = vlaneseq
      %v2885 = vshrl.u32 %v2884, 7
      %v2886 = vsub.s32 %v2883, %v2885
      %v2887 = vrot.slane %v2859, %v2886
      %v2888 = vcombine.high %v2866, %v2866
      %v2889 = vcombine.high %v2873, %v2873
      %v2890 = vcombine.high %v2880, %v2880
      %v2891 = vcombine.high %v2887, %v2887
      %v2892 = vcombine.high %v2408, %v2408
      %v2894 = vunpack.c.l.s4 1966171168
      %v2895 = vunpack.c.0.s8 %v2894
      %v2896 = vlaneseq
      %v2897 = vshrl.u32 %v2896, 7
      %v2898 = vsub.s32 %v2895, %v2897
      %v2899 = vrot.slane %v2408, %v2898
      %v2901 = vunpack.c.l.s4 1966171168
      %v2902 = vunpack.c.0.s8 %v2901
      %v2903 = vlaneseq
      %v2904 = vshrl.u32 %v2903, 7
      %v2905 = vsub.s32 %v2902, %v2904
      %v2906 = vrot.slane %v2892, %v2905
      %v2907 = vcombine.high %v2899, %v2899
      %v2908 = vcombine.high %v2906, %v2906
      %v2910 = vunpack.c.l.s4 1966171168
      %v2911 = vunpack.c.0.s8 %v2910
      %v2912 = vlaneseq
      %v2913 = vshrl.u32 %v2912, 7
      %v2914 = vsub.s32 %v2911, %v2913
      %v2915 = vrot.slane %v2899, %v2914
      %v2917 = vunpack.c.l.s4 1966171168
      %v2918 = vunpack.c.0.s8 %v2917
      %v2919 = vlaneseq
      %v2920 = vshrl.u32 %v2919, 7
      %v2921 = vsub.s32 %v2918, %v2920
      %v2922 = vrot.slane %v2906, %v2921
      %v2924 = vunpack.c.l.s4 1966171168
      %v2925 = vunpack.c.0.s8 %v2924
      %v2926 = vlaneseq
      %v2927 = vshrl.u32 %v2926, 7
      %v2928 = vsub.s32 %v2925, %v2927
      %v2929 = vrot.slane %v2907, %v2928
      %v2931 = vunpack.c.l.s4 1966171168
      %v2932 = vunpack.c.0.s8 %v2931
      %v2933 = vlaneseq
      %v2934 = vshrl.u32 %v2933, 7
      %v2935 = vsub.s32 %v2932, %v2934
      %v2936 = vrot.slane %v2908, %v2935
      %v2937 = vcombine.high %v2915, %v2915
      %v2938 = vcombine.high %v2922, %v2922
      %v2939 = vcombine.high %v2929, %v2929
      %v2940 = vcombine.high %v2936, %v2936
      %v2941 = vcombine.high %v2409, %v2409
      %v2943 = vunpack.c.l.s4 1966171168
      %v2944 = vunpack.c.0.s8 %v2943
      %v2945 = vlaneseq
      %v2946 = vshrl.u32 %v2945, 7
      %v2947 = vsub.s32 %v2944, %v2946
      %v2948 = vrot.slane %v2409, %v2947
      %v2950 = vunpack.c.l.s4 1966171168
      %v2951 = vunpack.c.0.s8 %v2950
      %v2952 = vlaneseq
      %v2953 = vshrl.u32 %v2952, 7
      %v2954 = vsub.s32 %v2951, %v2953
      %v2955 = vrot.slane %v2941, %v2954
      %v2956 = vcombine.high %v2948, %v2948
      %v2957 = vcombine.high %v2955, %v2955
      %v2959 = vunpack.c.l.s4 1966171168
      %v2960 = vunpack.c.0.s8 %v2959
      %v2961 = vlaneseq
      %v2962 = vshrl.u32 %v2961, 7
      %v2963 = vsub.s32 %v2960, %v2962
      %v2964 = vrot.slane %v2948, %v2963
      %v2966 = vunpack.c.l.s4 1966171168
      %v2967 = vunpack.c.0.s8 %v2966
      %v2968 = vlaneseq
      %v2969 = vshrl.u32 %v2968, 7
      %v2970 = vsub.s32 %v2967, %v2969
      %v2971 = vrot.slane %v2955, %v2970
      %v2973 = vunpack.c.l.s4 1966171168
      %v2974 = vunpack.c.0.s8 %v2973
      %v2975 = vlaneseq
      %v2976 = vshrl.u32 %v2975, 7
      %v2977 = vsub.s32 %v2974, %v2976
      %v2978 = vrot.slane %v2956, %v2977
      %v2980 = vunpack.c.l.s4 1966171168
      %v2981 = vunpack.c.0.s8 %v2980
      %v2982 = vlaneseq
      %v2983 = vshrl.u32 %v2982, 7
      %v2984 = vsub.s32 %v2981, %v2983
      %v2985 = vrot.slane %v2957, %v2984
      %v2986 = vcombine.high %v2964, %v2964
      %v2987 = vcombine.high %v2971, %v2971
      %v2988 = vcombine.high %v2978, %v2978
      %v2989 = vcombine.high %v2985, %v2985
      %v2990 = vcombine.high %v2410, %v2410
      %v2992 = vunpack.c.l.s4 1966171168
      %v2993 = vunpack.c.0.s8 %v2992
      %v2994 = vlaneseq
      %v2995 = vshrl.u32 %v2994, 7
      %v2996 = vsub.s32 %v2993, %v2995
      %v2997 = vrot.slane %v2410, %v2996
      %v2999 = vunpack.c.l.s4 1966171168
      %v3000 = vunpack.c.0.s8 %v2999
      %v3001 = vlaneseq
      %v3002 = vshrl.u32 %v3001, 7
      %v3003 = vsub.s32 %v3000, %v3002
      %v3004 = vrot.slane %v2990, %v3003
      %v3005 = vcombine.high %v2997, %v2997
      %v3006 = vcombine.high %v3004, %v3004
      %v3008 = vunpack.c.l.s4 1966171168
      %v3009 = vunpack.c.0.s8 %v3008
      %v3010 = vlaneseq
      %v3011 = vshrl.u32 %v3010, 7
      %v3012 = vsub.s32 %v3009, %v3011
      %v3013 = vrot.slane %v2997, %v3012
      %v3015 = vunpack.c.l.s4 1966171168
      %v3016 = vunpack.c.0.s8 %v3015
      %v3017 = vlaneseq
      %v3018 = vshrl.u32 %v3017, 7
      %v3019 = vsub.s32 %v3016, %v3018
      %v3020 = vrot.slane %v3004, %v3019
      %v3022 = vunpack.c.l.s4 1966171168
      %v3023 = vunpack.c.0.s8 %v3022
      %v3024 = vlaneseq
      %v3025 = vshrl.u32 %v3024, 7
      %v3026 = vsub.s32 %v3023, %v3025
      %v3027 = vrot.slane %v3005, %v3026
      %v3029 = vunpack.c.l.s4 1966171168
      %v3030 = vunpack.c.0.s8 %v3029
      %v3031 = vlaneseq
      %v3032 = vshrl.u32 %v3031, 7
      %v3033 = vsub.s32 %v3030, %v3032
      %v3034 = vrot.slane %v3006, %v3033
      %v3035 = vcombine.high %v3013, %v3013
      %v3036 = vcombine.high %v3020, %v3020
      %v3037 = vcombine.high %v3027, %v3027
      %v3038 = vcombine.high %v3034, %v3034
      %v3039 = vlaneseq
      %v3040 = vshrl.u32 %v3039, 7
      %v3041 = vsub.s32 0, %v3040
      %v3042 = vrot.slane %v2670, %v3041
      %v3043 = vlaneseq
      %v3044 = vshrl.u32 %v3043, 7
      %v3045 = vsub.s32 0, %v3044
      %v3046 = vrot.slane %v2684, %v3045
      %v3047 = vlaneseq
      %v3048 = vshrl.u32 %v3047, 7
      %v3049 = vsub.s32 0, %v3048
      %v3050 = vrot.slane %v2692, %v3049
      %v3051 = vlaneseq
      %v3052 = vshrl.u32 %v3051, 7
      %v3053 = vsub.s32 0, %v3052
      %v3054 = vrot.slane %v2694, %v3053
      %v3055 = vlaneseq
      %v3056 = vshrl.u32 %v3055, 7
      %v3057 = vsub.s32 0, %v3056
      %v3058 = vrot.slane %v2677, %v3057
      %v3059 = vlaneseq
      %v3060 = vshrl.u32 %v3059, 7
      %v3061 = vsub.s32 0, %v3060
      %v3062 = vrot.slane %v2691, %v3061
      %v3063 = vlaneseq
      %v3064 = vshrl.u32 %v3063, 7
      %v3065 = vsub.s32 0, %v3064
      %v3066 = vrot.slane %v2693, %v3065
      %v3067 = vlaneseq
      %v3068 = vshrl.u32 %v3067, 7
      %v3069 = vsub.s32 0, %v3068
      %v3070 = vrot.slane %v2695, %v3069
      %v3071 = vlaneseq
      %v3072 = vshrl.u32 %v3071, 7
      %v3073 = vsub.s32 0, %v3072
      %v3074 = vrot.slane %v2719, %v3073
      %v3075 = vlaneseq
      %v3076 = vshrl.u32 %v3075, 7
      %v3077 = vsub.s32 0, %v3076
      %v3078 = vrot.slane %v2733, %v3077
      %v3079 = vlaneseq
      %v3080 = vshrl.u32 %v3079, 7
      %v3081 = vsub.s32 0, %v3080
      %v3082 = vrot.slane %v2741, %v3081
      %v3083 = vlaneseq
      %v3084 = vshrl.u32 %v3083, 7
      %v3085 = vsub.s32 0, %v3084
      %v3086 = vrot.slane %v2743, %v3085
      %v3087 = vlaneseq
      %v3088 = vshrl.u32 %v3087, 7
      %v3089 = vsub.s32 0, %v3088
      %v3090 = vrot.slane %v2726, %v3089
      %v3091 = vlaneseq
      %v3092 = vshrl.u32 %v3091, 7
      %v3093 = vsub.s32 0, %v3092
      %v3094 = vrot.slane %v2740, %v3093
      %v3095 = vlaneseq
      %v3096 = vshrl.u32 %v3095, 7
      %v3097 = vsub.s32 0, %v3096
      %v3098 = vrot.slane %v2742, %v3097
      %v3099 = vlaneseq
      %v3100 = vshrl.u32 %v3099, 7
      %v3101 = vsub.s32 0, %v3100
      %v3102 = vrot.slane %v2744, %v3101
      %v3103 = vlaneseq
      %v3104 = vshrl.u32 %v3103, 7
      %v3105 = vsub.s32 0, %v3104
      %v3106 = vrot.slane %v2768, %v3105
      %v3107 = vlaneseq
      %v3108 = vshrl.u32 %v3107, 7
      %v3109 = vsub.s32 0, %v3108
      %v3110 = vrot.slane %v2782, %v3109
      %v3111 = vlaneseq
      %v3112 = vshrl.u32 %v3111, 7
      %v3113 = vsub.s32 0, %v3112
      %v3114 = vrot.slane %v2790, %v3113
      %v3115 = vlaneseq
      %v3116 = vshrl.u32 %v3115, 7
      %v3117 = vsub.s32 0, %v3116
      %v3118 = vrot.slane %v2792, %v3117
      %v3119 = vlaneseq
      %v3120 = vshrl.u32 %v3119, 7
      %v3121 = vsub.s32 0, %v3120
      %v3122 = vrot.slane %v2775, %v3121
      %v3123 = vlaneseq
      %v3124 = vshrl.u32 %v3123, 7
      %v3125 = vsub.s32 0, %v3124
      %v3126 = vrot.slane %v2789, %v3125
      %v3127 = vlaneseq
      %v3128 = vshrl.u32 %v3127, 7
      %v3129 = vsub.s32 0, %v3128
      %v3130 = vrot.slane %v2791, %v3129
      %v3131 = vlaneseq
      %v3132 = vshrl.u32 %v3131, 7
      %v3133 = vsub.s32 0, %v3132
      %v3134 = vrot.slane %v2793, %v3133
      %v3135 = vlaneseq
      %v3136 = vshrl.u32 %v3135, 7
      %v3137 = vsub.s32 0, %v3136
      %v3138 = vrot.slane %v2817, %v3137
      %v3139 = vlaneseq
      %v3140 = vshrl.u32 %v3139, 7
      %v3141 = vsub.s32 0, %v3140
      %v3142 = vrot.slane %v2831, %v3141
      %v3143 = vlaneseq
      %v3144 = vshrl.u32 %v3143, 7
      %v3145 = vsub.s32 0, %v3144
      %v3146 = vrot.slane %v2839, %v3145
      %v3147 = vlaneseq
      %v3148 = vshrl.u32 %v3147, 7
      %v3149 = vsub.s32 0, %v3148
      %v3150 = vrot.slane %v2841, %v3149
      %v3151 = vlaneseq
      %v3152 = vshrl.u32 %v3151, 7
      %v3153 = vsub.s32 0, %v3152
      %v3154 = vrot.slane %v2824, %v3153
      %v3155 = vlaneseq
      %v3156 = vshrl.u32 %v3155, 7
      %v3157 = vsub.s32 0, %v3156
      %v3158 = vrot.slane %v2838, %v3157
      %v3159 = vlaneseq
      %v3160 = vshrl.u32 %v3159, 7
      %v3161 = vsub.s32 0, %v3160
      %v3162 = vrot.slane %v2840, %v3161
      %v3163 = vlaneseq
      %v3164 = vshrl.u32 %v3163, 7
      %v3165 = vsub.s32 0, %v3164
      %v3166 = vrot.slane %v2842, %v3165
      %v3167 = vlaneseq
      %v3168 = vshrl.u32 %v3167, 7
      %v3169 = vsub.s32 0, %v3168
      %v3170 = vrot.slane %v2866, %v3169
      %v3171 = vlaneseq
      %v3172 = vshrl.u32 %v3171, 7
      %v3173 = vsub.s32 0, %v3172
      %v3174 = vrot.slane %v2880, %v3173
      %v3175 = vlaneseq
      %v3176 = vshrl.u32 %v3175, 7
      %v3177 = vsub.s32 0, %v3176
      %v3178 = vrot.slane %v2888, %v3177
      %v3179 = vlaneseq
      %v3180 = vshrl.u32 %v3179, 7
      %v3181 = vsub.s32 0, %v3180
      %v3182 = vrot.slane %v2890, %v3181
      %v3183 = vlaneseq
      %v3184 = vshrl.u32 %v3183, 7
      %v3185 = vsub.s32 0, %v3184
      %v3186 = vrot.slane %v2873, %v3185
      %v3187 = vlaneseq
      %v3188 = vshrl.u32 %v3187, 7
      %v3189 = vsub.s32 0, %v3188
      %v3190 = vrot.slane %v2887, %v3189
      %v3191 = vlaneseq
      %v3192 = vshrl.u32 %v3191, 7
      %v3193 = vsub.s32 0, %v3192
      %v3194 = vrot.slane %v2889, %v3193
      %v3195 = vlaneseq
      %v3196 = vshrl.u32 %v3195, 7
      %v3197 = vsub.s32 0, %v3196
      %v3198 = vrot.slane %v2891, %v3197
      %v3199 = vlaneseq
      %v3200 = vshrl.u32 %v3199, 7
      %v3201 = vsub.s32 0, %v3200
      %v3202 = vrot.slane %v2915, %v3201
      %v3203 = vlaneseq
      %v3204 = vshrl.u32 %v3203, 7
      %v3205 = vsub.s32 0, %v3204
      %v3206 = vrot.slane %v2929, %v3205
      %v3207 = vlaneseq
      %v3208 = vshrl.u32 %v3207, 7
      %v3209 = vsub.s32 0, %v3208
      %v3210 = vrot.slane %v2937, %v3209
      %v3211 = vlaneseq
      %v3212 = vshrl.u32 %v3211, 7
      %v3213 = vsub.s32 0, %v3212
      %v3214 = vrot.slane %v2939, %v3213
      %v3215 = vlaneseq
      %v3216 = vshrl.u32 %v3215, 7
      %v3217 = vsub.s32 0, %v3216
      %v3218 = vrot.slane %v2922, %v3217
      %v3219 = vlaneseq
      %v3220 = vshrl.u32 %v3219, 7
      %v3221 = vsub.s32 0, %v3220
      %v3222 = vrot.slane %v2936, %v3221
      %v3223 = vlaneseq
      %v3224 = vshrl.u32 %v3223, 7
      %v3225 = vsub.s32 0, %v3224
      %v3226 = vrot.slane %v2938, %v3225
      %v3227 = vlaneseq
      %v3228 = vshrl.u32 %v3227, 7
      %v3229 = vsub.s32 0, %v3228
      %v3230 = vrot.slane %v2940, %v3229
      %v3231 = vlaneseq
      %v3232 = vshrl.u32 %v3231, 7
      %v3233 = vsub.s32 0, %v3232
      %v3234 = vrot.slane %v2964, %v3233
      %v3235 = vlaneseq
      %v3236 = vshrl.u32 %v3235, 7
      %v3237 = vsub.s32 0, %v3236
      %v3238 = vrot.slane %v2978, %v3237
      %v3239 = vlaneseq
      %v3240 = vshrl.u32 %v3239, 7
      %v3241 = vsub.s32 0, %v3240
      %v3242 = vrot.slane %v2986, %v3241
      %v3243 = vlaneseq
      %v3244 = vshrl.u32 %v3243, 7
      %v3245 = vsub.s32 0, %v3244
      %v3246 = vrot.slane %v2988, %v3245
      %v3247 = vlaneseq
      %v3248 = vshrl.u32 %v3247, 7
      %v3249 = vsub.s32 0, %v3248
      %v3250 = vrot.slane %v2971, %v3249
      %v3251 = vlaneseq
      %v3252 = vshrl.u32 %v3251, 7
      %v3253 = vsub.s32 0, %v3252
      %v3254 = vrot.slane %v2985, %v3253
      %v3255 = vlaneseq
      %v3256 = vshrl.u32 %v3255, 7
      %v3257 = vsub.s32 0, %v3256
      %v3258 = vrot.slane %v2987, %v3257
      %v3259 = vlaneseq
      %v3260 = vshrl.u32 %v3259, 7
      %v3261 = vsub.s32 0, %v3260
      %v3262 = vrot.slane %v2989, %v3261
      %v3263 = vlaneseq
      %v3264 = vshrl.u32 %v3263, 7
      %v3265 = vsub.s32 0, %v3264
      %v3266 = vrot.slane %v3013, %v3265
      %v3267 = vlaneseq
      %v3268 = vshrl.u32 %v3267, 7
      %v3269 = vsub.s32 0, %v3268
      %v3270 = vrot.slane %v3027, %v3269
      %v3271 = vlaneseq
      %v3272 = vshrl.u32 %v3271, 7
      %v3273 = vsub.s32 0, %v3272
      %v3274 = vrot.slane %v3035, %v3273
      %v3275 = vlaneseq
      %v3276 = vshrl.u32 %v3275, 7
      %v3277 = vsub.s32 0, %v3276
      %v3278 = vrot.slane %v3037, %v3277
      %v3279 = vlaneseq
      %v3280 = vshrl.u32 %v3279, 7
      %v3281 = vsub.s32 0, %v3280
      %v3282 = vrot.slane %v3020, %v3281
      %v3283 = vlaneseq
      %v3284 = vshrl.u32 %v3283, 7
      %v3285 = vsub.s32 0, %v3284
      %v3286 = vrot.slane %v3034, %v3285
      %v3287 = vlaneseq
      %v3288 = vshrl.u32 %v3287, 7
      %v3289 = vsub.s32 0, %v3288
      %v3290 = vrot.slane %v3036, %v3289
      %v3291 = vlaneseq
      %v3292 = vshrl.u32 %v3291, 7
      %v3293 = vsub.s32 0, %v3292
      %v3294 = vrot.slane %v3038, %v3293
      %v3359 = vmul.f32 %v3042, %v2637
      %v3360 = vmul.f32 %v3042, %v2638
      %v3361 = vmul.f32 %v3046, %v2637
      %v3362 = vmul.f32 %v3046, %v2638
      %v3363 = vmul.f32 %v3050, %v2637
      %v3364 = vmul.f32 %v3050, %v2638
      %v3365 = vmul.f32 %v3054, %v2637
      %v3366 = vmul.f32 %v3054, %v2638
      %v3367 = vmul.f32 %v3058, %v2637
      %v3368 = vmul.f32 %v3058, %v2638
      %v3369 = vmul.f32 %v3062, %v2637
      %v3370 = vmul.f32 %v3062, %v2638
      %v3371 = vmul.f32 %v3066, %v2637
      %v3372 = vmul.f32 %v3066, %v2638
      %v3373 = vmul.f32 %v3070, %v2637
      %v3374 = vmul.f32 %v3070, %v2638
      %v3375 = vmul.f32 %v3074, %v2637
      %v3376 = vmul.f32 %v3074, %v2638
      %v3377 = vmul.f32 %v3078, %v2637
      %v3378 = vmul.f32 %v3078, %v2638
      %v3379 = vmul.f32 %v3082, %v2637
      %v3380 = vmul.f32 %v3082, %v2638
      %v3381 = vmul.f32 %v3086, %v2637
      %v3382 = vmul.f32 %v3086, %v2638
      %v3383 = vmul.f32 %v3090, %v2637
      %v3384 = vmul.f32 %v3090, %v2638
      %v3385 = vmul.f32 %v3094, %v2637
      %v3386 = vmul.f32 %v3094, %v2638
      %v3387 = vmul.f32 %v3098, %v2637
      %v3388 = vmul.f32 %v3098, %v2638
      %v3389 = vmul.f32 %v3102, %v2637
      %v3390 = vmul.f32 %v3102, %v2638
      %v3391 = vmul.f32 %v3106, %v2637
      %v3392 = vmul.f32 %v3106, %v2638
      %v3393 = vmul.f32 %v3110, %v2637
      %v3394 = vmul.f32 %v3110, %v2638
      %v3395 = vmul.f32 %v3114, %v2637
      %v3396 = vmul.f32 %v3114, %v2638
      %v3397 = vmul.f32 %v3118, %v2637
      %v3398 = vmul.f32 %v3118, %v2638
      %v3399 = vmul.f32 %v3122, %v2637
      %v3400 = vmul.f32 %v3122, %v2638
      %v3401 = vmul.f32 %v3126, %v2637
      %v3402 = vmul.f32 %v3126, %v2638
      %v3403 = vmul.f32 %v3130, %v2637
      %v3404 = vmul.f32 %v3130, %v2638
      %v3405 = vmul.f32 %v3134, %v2637
      %v3406 = vmul.f32 %v3134, %v2638
      %v3407 = vmul.f32 %v3138, %v2637
      %v3408 = vmul.f32 %v3138, %v2638
      %v3409 = vmul.f32 %v3142, %v2637
      %v3410 = vmul.f32 %v3142, %v2638
      %v3411 = vmul.f32 %v3146, %v2637
      %v3412 = vmul.f32 %v3146, %v2638
      %v3413 = vmul.f32 %v3150, %v2637
      %v3414 = vmul.f32 %v3150, %v2638
      %v3415 = vmul.f32 %v3154, %v2637
      %v3416 = vmul.f32 %v3154, %v2638
      %v3417 = vmul.f32 %v3158, %v2637
      %v3418 = vmul.f32 %v3158, %v2638
      %v3419 = vmul.f32 %v3162, %v2637
      %v3420 = vmul.f32 %v3162, %v2638
      %v3421 = vmul.f32 %v3166, %v2637
      %v3422 = vmul.f32 %v3166, %v2638
      %v3423 = vmul.f32 %v3170, %v2637
      %v3424 = vmul.f32 %v3170, %v2638
      %v3425 = vmul.f32 %v3174, %v2637
      %v3426 = vmul.f32 %v3174, %v2638
      %v3427 = vmul.f32 %v3178, %v2637
      %v3428 = vmul.f32 %v3178, %v2638
      %v3429 = vmul.f32 %v3182, %v2637
      %v3430 = vmul.f32 %v3182, %v2638
      %v3431 = vmul.f32 %v3186, %v2637
      %v3432 = vmul.f32 %v3186, %v2638
      %v3433 = vmul.f32 %v3190, %v2637
      %v3434 = vmul.f32 %v3190, %v2638
      %v3435 = vmul.f32 %v3194, %v2637
      %v3436 = vmul.f32 %v3194, %v2638
      %v3437 = vmul.f32 %v3198, %v2637
      %v3438 = vmul.f32 %v3198, %v2638
      %v3439 = vmul.f32 %v3202, %v2637
      %v3440 = vmul.f32 %v3202, %v2638
      %v3441 = vmul.f32 %v3206, %v2637
      %v3442 = vmul.f32 %v3206, %v2638
      %v3443 = vmul.f32 %v3210, %v2637
      %v3444 = vmul.f32 %v3210, %v2638
      %v3445 = vmul.f32 %v3214, %v2637
      %v3446 = vmul.f32 %v3214, %v2638
      %v3447 = vmul.f32 %v3218, %v2637
      %v3448 = vmul.f32 %v3218, %v2638
      %v3449 = vmul.f32 %v3222, %v2637
      %v3450 = vmul.f32 %v3222, %v2638
      %v3451 = vmul.f32 %v3226, %v2637
      %v3452 = vmul.f32 %v3226, %v2638
      %v3453 = vmul.f32 %v3230, %v2637
      %v3454 = vmul.f32 %v3230, %v2638
      %v3455 = vmul.f32 %v3234, %v2637
      %v3456 = vmul.f32 %v3234, %v2638
      %v3457 = vmul.f32 %v3238, %v2637
      %v3458 = vmul.f32 %v3238, %v2638
      %v3459 = vmul.f32 %v3242, %v2637
      %v3460 = vmul.f32 %v3242, %v2638
      %v3461 = vmul.f32 %v3246, %v2637
      %v3462 = vmul.f32 %v3246, %v2638
      %v3463 = vmul.f32 %v3250, %v2637
      %v3464 = vmul.f32 %v3250, %v2638
      %v3465 = vmul.f32 %v3254, %v2637
      %v3466 = vmul.f32 %v3254, %v2638
      %v3467 = vmul.f32 %v3258, %v2637
      %v3468 = vmul.f32 %v3258, %v2638
      %v3469 = vmul.f32 %v3262, %v2637
      %v3470 = vmul.f32 %v3262, %v2638
      %v3471 = vmul.f32 %v3266, %v2637
      %v3472 = vmul.f32 %v3266, %v2638
      %v3473 = vmul.f32 %v3270, %v2637
      %v3474 = vmul.f32 %v3270, %v2638
      %v3475 = vmul.f32 %v3274, %v2637
      %v3476 = vmul.f32 %v3274, %v2638
      %v3477 = vmul.f32 %v3278, %v2637
      %v3478 = vmul.f32 %v3278, %v2638
      %v3479 = vmul.f32 %v3282, %v2637
      %v3480 = vmul.f32 %v3282, %v2638
      %v3481 = vmul.f32 %v3286, %v2637
      %v3482 = vmul.f32 %v3286, %v2638
      %v3483 = vmul.f32 %v3290, %v2637
      %v3484 = vmul.f32 %v3290, %v2638
      %v3485 = vmul.f32 %v3294, %v2637
      %v3486 = vmul.f32 %v3294, %v2638
      %v3487 = vmul.f32 %v3359, 1.442695
      %v3488 = vpow.pop %v3487
      %v3489 = vmul.f32 %v3360, 1.442695
      %v3490 = vpow.pop %v3489
      %v3491 = vmul.f32 %v3361, 1.442695
      %v3492 = vpow.pop %v3491
      %v3493 = vmul.f32 %v3362, 1.442695
      %v3494 = vpow.pop %v3493
      %v3495 = vmul.f32 %v3363, 1.442695
      %v3496 = vpow.pop %v3495
      %v3497 = vmul.f32 %v3364, 1.442695
      %v3498 = vpow.pop %v3497
      %v3499 = vmul.f32 %v3365, 1.442695
      %v3500 = vpow.pop %v3499
      %v3501 = vmul.f32 %v3366, 1.442695
      %v3502 = vpow.pop %v3501
      %v3503 = vmul.f32 %v3367, 1.442695
      %v3504 = vpow.pop %v3503
      %v3505 = vmul.f32 %v3368, 1.442695
      %v3506 = vpow.pop %v3505
      %v3507 = vmul.f32 %v3369, 1.442695
      %v3508 = vpow.pop %v3507
      %v3509 = vmul.f32 %v3370, 1.442695
      %v3510 = vpow.pop %v3509
      %v3511 = vmul.f32 %v3371, 1.442695
      %v3512 = vpow.pop %v3511
      %v3513 = vmul.f32 %v3372, 1.442695
      %v3514 = vpow.pop %v3513
      %v3515 = vmul.f32 %v3373, 1.442695
      %v3516 = vpow.pop %v3515
      %v3517 = vmul.f32 %v3374, 1.442695
      %v3518 = vpow.pop %v3517
      %v3519 = vmul.f32 %v3375, 1.442695
      %v3520 = vpow.pop %v3519
      %v3521 = vmul.f32 %v3376, 1.442695
      %v3522 = vpow.pop %v3521
      %v3523 = vmul.f32 %v3377, 1.442695
      %v3524 = vpow.pop %v3523
      %v3525 = vmul.f32 %v3378, 1.442695
      %v3526 = vpow.pop %v3525
      %v3527 = vmul.f32 %v3379, 1.442695
      %v3528 = vpow.pop %v3527
      %v3529 = vmul.f32 %v3380, 1.442695
      %v3530 = vpow.pop %v3529
      %v3531 = vmul.f32 %v3381, 1.442695
      %v3532 = vpow.pop %v3531
      %v3533 = vmul.f32 %v3382, 1.442695
      %v3534 = vpow.pop %v3533
      %v3535 = vmul.f32 %v3383, 1.442695
      %v3536 = vpow.pop %v3535
      %v3537 = vmul.f32 %v3384, 1.442695
      %v3538 = vpow.pop %v3537
      %v3539 = vmul.f32 %v3385, 1.442695
      %v3540 = vpow.pop %v3539
      %v3541 = vmul.f32 %v3386, 1.442695
      %v3542 = vpow.pop %v3541
      %v3543 = vmul.f32 %v3387, 1.442695
      %v3544 = vpow.pop %v3543
      %v3545 = vmul.f32 %v3388, 1.442695
      %v3546 = vpow.pop %v3545
      %v3547 = vmul.f32 %v3389, 1.442695
      %v3548 = vpow.pop %v3547
      %v3549 = vmul.f32 %v3390, 1.442695
      %v3550 = vpow.pop %v3549
      %v3551 = vmul.f32 %v3391, 1.442695
      %v3552 = vpow.pop %v3551
      %v3553 = vmul.f32 %v3392, 1.442695
      %v3554 = vpow.pop %v3553
      %v3555 = vmul.f32 %v3393, 1.442695
      %v3556 = vpow.pop %v3555
      %v3557 = vmul.f32 %v3394, 1.442695
      %v3558 = vpow.pop %v3557
      %v3559 = vmul.f32 %v3395, 1.442695
      %v3560 = vpow.pop %v3559
      %v3561 = vmul.f32 %v3396, 1.442695
      %v3562 = vpow.pop %v3561
      %v3563 = vmul.f32 %v3397, 1.442695
      %v3564 = vpow.pop %v3563
      %v3565 = vmul.f32 %v3398, 1.442695
      %v3566 = vpow.pop %v3565
      %v3567 = vmul.f32 %v3399, 1.442695
      %v3568 = vpow.pop %v3567
      %v3569 = vmul.f32 %v3400, 1.442695
      %v3570 = vpow.pop %v3569
      %v3571 = vmul.f32 %v3401, 1.442695
      %v3572 = vpow.pop %v3571
      %v3573 = vmul.f32 %v3402, 1.442695
      %v3574 = vpow.pop %v3573
      %v3575 = vmul.f32 %v3403, 1.442695
      %v3576 = vpow.pop %v3575
      %v3577 = vmul.f32 %v3404, 1.442695
      %v3578 = vpow.pop %v3577
      %v3579 = vmul.f32 %v3405, 1.442695
      %v3580 = vpow.pop %v3579
      %v3581 = vmul.f32 %v3406, 1.442695
      %v3582 = vpow.pop %v3581
      %v3583 = vmul.f32 %v3407, 1.442695
      %v3584 = vpow.pop %v3583
      %v3585 = vmul.f32 %v3408, 1.442695
      %v3586 = vpow.pop %v3585
      %v3587 = vmul.f32 %v3409, 1.442695
      %v3588 = vpow.pop %v3587
      %v3589 = vmul.f32 %v3410, 1.442695
      %v3590 = vpow.pop %v3589
      %v3591 = vmul.f32 %v3411, 1.442695
      %v3592 = vpow.pop %v3591
      %v3593 = vmul.f32 %v3412, 1.442695
      %v3594 = vpow.pop %v3593
      %v3595 = vmul.f32 %v3413, 1.442695
      %v3596 = vpow.pop %v3595
      %v3597 = vmul.f32 %v3414, 1.442695
      %v3598 = vpow.pop %v3597
      %v3599 = vmul.f32 %v3415, 1.442695
      %v3600 = vpow.pop %v3599
      %v3601 = vmul.f32 %v3416, 1.442695
      %v3602 = vpow.pop %v3601
      %v3603 = vmul.f32 %v3417, 1.442695
      %v3604 = vpow.pop %v3603
      %v3605 = vmul.f32 %v3418, 1.442695
      %v3606 = vpow.pop %v3605
      %v3607 = vmul.f32 %v3419, 1.442695
      %v3608 = vpow.pop %v3607
      %v3609 = vmul.f32 %v3420, 1.442695
      %v3610 = vpow.pop %v3609
      %v3611 = vmul.f32 %v3421, 1.442695
      %v3612 = vpow.pop %v3611
      %v3613 = vmul.f32 %v3422, 1.442695
      %v3614 = vpow.pop %v3613
      %v3615 = vmul.f32 %v3423, 1.442695
      %v3616 = vpow.pop %v3615
      %v3617 = vmul.f32 %v3424, 1.442695
      %v3618 = vpow.pop %v3617
      %v3619 = vmul.f32 %v3425, 1.442695
      %v3620 = vpow.pop %v3619
      %v3621 = vmul.f32 %v3426, 1.442695
      %v3622 = vpow.pop %v3621
      %v3623 = vmul.f32 %v3427, 1.442695
      %v3624 = vpow.pop %v3623
      %v3625 = vmul.f32 %v3428, 1.442695
      %v3626 = vpow.pop %v3625
      %v3627 = vmul.f32 %v3429, 1.442695
      %v3628 = vpow.pop %v3627
      %v3629 = vmul.f32 %v3430, 1.442695
      %v3630 = vpow.pop %v3629
      %v3631 = vmul.f32 %v3431, 1.442695
      %v3632 = vpow.pop %v3631
      %v3633 = vmul.f32 %v3432, 1.442695
      %v3634 = vpow.pop %v3633
      %v3635 = vmul.f32 %v3433, 1.442695
      %v3636 = vpow.pop %v3635
      %v3637 = vmul.f32 %v3434, 1.442695
      %v3638 = vpow.pop %v3637
      %v3639 = vmul.f32 %v3435, 1.442695
      %v3640 = vpow.pop %v3639
      %v3641 = vmul.f32 %v3436, 1.442695
      %v3642 = vpow.pop %v3641
      %v3643 = vmul.f32 %v3437, 1.442695
      %v3644 = vpow.pop %v3643
      %v3645 = vmul.f32 %v3438, 1.442695
      %v3646 = vpow.pop %v3645
      %v3647 = vmul.f32 %v3439, 1.442695
      %v3648 = vpow.pop %v3647
      %v3649 = vmul.f32 %v3440, 1.442695
      %v3650 = vpow.pop %v3649
      %v3651 = vmul.f32 %v3441, 1.442695
      %v3652 = vpow.pop %v3651
      %v3653 = vmul.f32 %v3442, 1.442695
      %v3654 = vpow.pop %v3653
      %v3655 = vmul.f32 %v3443, 1.442695
      %v3656 = vpow.pop %v3655
      %v3657 = vmul.f32 %v3444, 1.442695
      %v3658 = vpow.pop %v3657
      %v3659 = vmul.f32 %v3445, 1.442695
      %v3660 = vpow.pop %v3659
      %v3661 = vmul.f32 %v3446, 1.442695
      %v3662 = vpow.pop %v3661
      %v3663 = vmul.f32 %v3447, 1.442695
      %v3664 = vpow.pop %v3663
      %v3665 = vmul.f32 %v3448, 1.442695
      %v3666 = vpow.pop %v3665
      %v3667 = vmul.f32 %v3449, 1.442695
      %v3668 = vpow.pop %v3667
      %v3669 = vmul.f32 %v3450, 1.442695
      %v3670 = vpow.pop %v3669
      %v3671 = vmul.f32 %v3451, 1.442695
      %v3672 = vpow.pop %v3671
      %v3673 = vmul.f32 %v3452, 1.442695
      %v3674 = vpow.pop %v3673
      %v3675 = vmul.f32 %v3453, 1.442695
      %v3676 = vpow.pop %v3675
      %v3677 = vmul.f32 %v3454, 1.442695
      %v3678 = vpow.pop %v3677
      %v3679 = vmul.f32 %v3455, 1.442695
      %v3680 = vpow.pop %v3679
      %v3681 = vmul.f32 %v3456, 1.442695
      %v3682 = vpow.pop %v3681
      %v3683 = vmul.f32 %v3457, 1.442695
      %v3684 = vpow.pop %v3683
      %v3685 = vmul.f32 %v3458, 1.442695
      %v3686 = vpow.pop %v3685
      %v3687 = vmul.f32 %v3459, 1.442695
      %v3688 = vpow.pop %v3687
      %v3689 = vmul.f32 %v3460, 1.442695
      %v3690 = vpow.pop %v3689
      %v3691 = vmul.f32 %v3461, 1.442695
      %v3692 = vpow.pop %v3691
      %v3693 = vmul.f32 %v3462, 1.442695
      %v3694 = vpow.pop %v3693
      %v3695 = vmul.f32 %v3463, 1.442695
      %v3696 = vpow.pop %v3695
      %v3697 = vmul.f32 %v3464, 1.442695
      %v3698 = vpow.pop %v3697
      %v3699 = vmul.f32 %v3465, 1.442695
      %v3700 = vpow.pop %v3699
      %v3701 = vmul.f32 %v3466, 1.442695
      %v3702 = vpow.pop %v3701
      %v3703 = vmul.f32 %v3467, 1.442695
      %v3704 = vpow.pop %v3703
      %v3705 = vmul.f32 %v3468, 1.442695
      %v3706 = vpow.pop %v3705
      %v3707 = vmul.f32 %v3469, 1.442695
      %v3708 = vpow.pop %v3707
      %v3709 = vmul.f32 %v3470, 1.442695
      %v3710 = vpow.pop %v3709
      %v3711 = vmul.f32 %v3471, 1.442695
      %v3712 = vpow.pop %v3711
      %v3713 = vmul.f32 %v3472, 1.442695
      %v3714 = vpow.pop %v3713
      %v3715 = vmul.f32 %v3473, 1.442695
      %v3716 = vpow.pop %v3715
      %v3717 = vmul.f32 %v3474, 1.442695
      %v3718 = vpow.pop %v3717
      %v3719 = vmul.f32 %v3475, 1.442695
      %v3720 = vpow.pop %v3719
      %v3721 = vmul.f32 %v3476, 1.442695
      %v3722 = vpow.pop %v3721
      %v3723 = vmul.f32 %v3477, 1.442695
      %v3724 = vpow.pop %v3723
      %v3725 = vmul.f32 %v3478, 1.442695
      %v3726 = vpow.pop %v3725
      %v3727 = vmul.f32 %v3479, 1.442695
      %v3728 = vpow.pop %v3727
      %v3729 = vmul.f32 %v3480, 1.442695
      %v3730 = vpow.pop %v3729
      %v3731 = vmul.f32 %v3481, 1.442695
      %v3732 = vpow.pop %v3731
      %v3733 = vmul.f32 %v3482, 1.442695
      %v3734 = vpow.pop %v3733
      %v3735 = vmul.f32 %v3483, 1.442695
      %v3736 = vpow.pop %v3735
      %v3737 = vmul.f32 %v3484, 1.442695
      %v3738 = vpow.pop %v3737
      %v3739 = vmul.f32 %v3485, 1.442695
      %v3740 = vpow.pop %v3739
      %v3741 = vmul.f32 %v3486, 1.442695
      %v3742 = vpow.pop %v3741
      %3743 = vst.msk [vmem:[#allocation2] sm:$0xff] %vm2209, %v3488
      %3744 = vst.msk [vmem:[#allocation2 + $0x8] sm:$0xff] %vm2209, %v3490
      %3745 = vst.msk [vmem:[#allocation2 + $0x10] sm:$0xff] %vm2209, %v3492
      %3746 = vst.msk [vmem:[#allocation2 + $0x18] sm:$0xff] %vm2209, %v3494
      %3747 = vst.msk [vmem:[#allocation2 + $0x20] sm:$0xff] %vm2209, %v3496
      %3748 = vst.msk [vmem:[#allocation2 + $0x28] sm:$0xff] %vm2209, %v3498
      %3749 = vst.msk [vmem:[#allocation2 + $0x30] sm:$0xff] %vm2209, %v3500
      %3750 = vst.msk [vmem:[#allocation2 + $0x38] sm:$0xff] %vm2209, %v3502
      %3751 = vst.msk [vmem:[#allocation2 + $0x40] sm:$0xff] %vm2209, %v3504
      %3752 = vst.msk [vmem:[#allocation2 + $0x48] sm:$0xff] %vm2209, %v3506
      %3753 = vst.msk [vmem:[#allocation2 + $0x50] sm:$0xff] %vm2209, %v3508
      %3754 = vst.msk [vmem:[#allocation2 + $0x58] sm:$0xff] %vm2209, %v3510
      %3755 = vst.msk [vmem:[#allocation2 + $0x60] sm:$0xff] %vm2209, %v3512
      %3756 = vst.msk [vmem:[#allocation2 + $0x68] sm:$0xff] %vm2209, %v3514
      %3757 = vst.msk [vmem:[#allocation2 + $0x70] sm:$0xff] %vm2209, %v3516
      %3758 = vst.msk [vmem:[#allocation2 + $0x78] sm:$0xff] %vm2209, %v3518
      %3759 = vst.msk [vmem:[#allocation2 + $0x80] sm:$0xff] %vm2209, %v3520
      %3760 = vst.msk [vmem:[#allocation2 + $0x88] sm:$0xff] %vm2209, %v3522
      %3761 = vst.msk [vmem:[#allocation2 + $0x90] sm:$0xff] %vm2209, %v3524
      %3762 = vst.msk [vmem:[#allocation2 + $0x98] sm:$0xff] %vm2209, %v3526
      %3763 = vst.msk [vmem:[#allocation2 + $0xa0] sm:$0xff] %vm2209, %v3528
      %3764 = vst.msk [vmem:[#allocation2 + $0xa8] sm:$0xff] %vm2209, %v3530
      %3765 = vst.msk [vmem:[#allocation2 + $0xb0] sm:$0xff] %vm2209, %v3532
      %3766 = vst.msk [vmem:[#allocation2 + $0xb8] sm:$0xff] %vm2209, %v3534
      %3767 = vst.msk [vmem:[#allocation2 + $0xc0] sm:$0xff] %vm2209, %v3536
      %3768 = vst.msk [vmem:[#allocation2 + $0xc8] sm:$0xff] %vm2209, %v3538
      %3769 = vst.msk [vmem:[#allocation2 + $0xd0] sm:$0xff] %vm2209, %v3540
      %3770 = vst.msk [vmem:[#allocation2 + $0xd8] sm:$0xff] %vm2209, %v3542
      %3771 = vst.msk [vmem:[#allocation2 + $0xe0] sm:$0xff] %vm2209, %v3544
      %3772 = vst.msk [vmem:[#allocation2 + $0xe8] sm:$0xff] %vm2209, %v3546
      %3773 = vst.msk [vmem:[#allocation2 + $0xf0] sm:$0xff] %vm2209, %v3548
      %3774 = vst.msk [vmem:[#allocation2 + $0xf8] sm:$0xff] %vm2209, %v3550
      %3775 = vst.msk [vmem:[#allocation2 + $0x100] sm:$0xff] %vm2209, %v3552
      %3776 = vst.msk [vmem:[#allocation2 + $0x108] sm:$0xff] %vm2209, %v3554
      %3777 = vst.msk [vmem:[#allocation2 + $0x110] sm:$0xff] %vm2209, %v3556
      %3778 = vst.msk [vmem:[#allocation2 + $0x118] sm:$0xff] %vm2209, %v3558
      %3779 = vst.msk [vmem:[#allocation2 + $0x120] sm:$0xff] %vm2209, %v3560
      %3780 = vst.msk [vmem:[#allocation2 + $0x128] sm:$0xff] %vm2209, %v3562
      %3781 = vst.msk [vmem:[#allocation2 + $0x130] sm:$0xff] %vm2209, %v3564
      %3782 = vst.msk [vmem:[#allocation2 + $0x138] sm:$0xff] %vm2209, %v3566
      %3783 = vst.msk [vmem:[#allocation2 + $0x140] sm:$0xff] %vm2209, %v3568
      %3784 = vst.msk [vmem:[#allocation2 + $0x148] sm:$0xff] %vm2209, %v3570
      %3785 = vst.msk [vmem:[#allocation2 + $0x150] sm:$0xff] %vm2209, %v3572
      %3786 = vst.msk [vmem:[#allocation2 + $0x158] sm:$0xff] %vm2209, %v3574
      %3787 = vst.msk [vmem:[#allocation2 + $0x160] sm:$0xff] %vm2209, %v3576
      %3788 = vst.msk [vmem:[#allocation2 + $0x168] sm:$0xff] %vm2209, %v3578
      %3789 = vst.msk [vmem:[#allocation2 + $0x170] sm:$0xff] %vm2209, %v3580
      %3790 = vst.msk [vmem:[#allocation2 + $0x178] sm:$0xff] %vm2209, %v3582
      %3791 = vst.msk [vmem:[#allocation2 + $0x180] sm:$0xff] %vm2209, %v3584
      %3792 = vst.msk [vmem:[#allocation2 + $0x188] sm:$0xff] %vm2209, %v3586
      %3793 = vst.msk [vmem:[#allocation2 + $0x190] sm:$0xff] %vm2209, %v3588
      %3794 = vst.msk [vmem:[#allocation2 + $0x198] sm:$0xff] %vm2209, %v3590
      %3795 = vst.msk [vmem:[#allocation2 + $0x1a0] sm:$0xff] %vm2209, %v3592
      %3796 = vst.msk [vmem:[#allocation2 + $0x1a8] sm:$0xff] %vm2209, %v3594
      %3797 = vst.msk [vmem:[#allocation2 + $0x1b0] sm:$0xff] %vm2209, %v3596
      %3798 = vst.msk [vmem:[#allocation2 + $0x1b8] sm:$0xff] %vm2209, %v3598
      %3799 = vst.msk [vmem:[#allocation2 + $0x1c0] sm:$0xff] %vm2209, %v3600
      %3800 = vst.msk [vmem:[#allocation2 + $0x1c8] sm:$0xff] %vm2209, %v3602
      %3801 = vst.msk [vmem:[#allocation2 + $0x1d0] sm:$0xff] %vm2209, %v3604
      %3802 = vst.msk [vmem:[#allocation2 + $0x1d8] sm:$0xff] %vm2209, %v3606
      %3803 = vst.msk [vmem:[#allocation2 + $0x1e0] sm:$0xff] %vm2209, %v3608
      %3804 = vst.msk [vmem:[#allocation2 + $0x1e8] sm:$0xff] %vm2209, %v3610
      %3805 = vst.msk [vmem:[#allocation2 + $0x1f0] sm:$0xff] %vm2209, %v3612
      %3806 = vst.msk [vmem:[#allocation2 + $0x1f8] sm:$0xff] %vm2209, %v3614
      %3807 = vst.msk [vmem:[#allocation2 + $0x200] sm:$0xff] %vm2209, %v3616
      %3808 = vst.msk [vmem:[#allocation2 + $0x208] sm:$0xff] %vm2209, %v3618
      %3809 = vst.msk [vmem:[#allocation2 + $0x210] sm:$0xff] %vm2209, %v3620
      %3810 = vst.msk [vmem:[#allocation2 + $0x218] sm:$0xff] %vm2209, %v3622
      %3811 = vst.msk [vmem:[#allocation2 + $0x220] sm:$0xff] %vm2209, %v3624
      %3812 = vst.msk [vmem:[#allocation2 + $0x228] sm:$0xff] %vm2209, %v3626
      %3813 = vst.msk [vmem:[#allocation2 + $0x230] sm:$0xff] %vm2209, %v3628
      %3814 = vst.msk [vmem:[#allocation2 + $0x238] sm:$0xff] %vm2209, %v3630
      %3815 = vst.msk [vmem:[#allocation2 + $0x240] sm:$0xff] %vm2209, %v3632
      %3816 = vst.msk [vmem:[#allocation2 + $0x248] sm:$0xff] %vm2209, %v3634
      %3817 = vst.msk [vmem:[#allocation2 + $0x250] sm:$0xff] %vm2209, %v3636
      %3818 = vst.msk [vmem:[#allocation2 + $0x258] sm:$0xff] %vm2209, %v3638
      %3819 = vst.msk [vmem:[#allocation2 + $0x260] sm:$0xff] %vm2209, %v3640
      %3820 = vst.msk [vmem:[#allocation2 + $0x268] sm:$0xff] %vm2209, %v3642
      %3821 = vst.msk [vmem:[#allocation2 + $0x270] sm:$0xff] %vm2209, %v3644
      %3822 = vst.msk [vmem:[#allocation2 + $0x278] sm:$0xff] %vm2209, %v3646
      %3823 = vst.msk [vmem:[#allocation2 + $0x280] sm:$0xff] %vm2209, %v3648
      %3824 = vst.msk [vmem:[#allocation2 + $0x288] sm:$0xff] %vm2209, %v3650
      %3825 = vst.msk [vmem:[#allocation2 + $0x290] sm:$0xff] %vm2209, %v3652
      %3826 = vst.msk [vmem:[#allocation2 + $0x298] sm:$0xff] %vm2209, %v3654
      %3827 = vst.msk [vmem:[#allocation2 + $0x2a0] sm:$0xff] %vm2209, %v3656
      %3828 = vst.msk [vmem:[#allocation2 + $0x2a8] sm:$0xff] %vm2209, %v3658
      %3829 = vst.msk [vmem:[#allocation2 + $0x2b0] sm:$0xff] %vm2209, %v3660
      %3830 = vst.msk [vmem:[#allocation2 + $0x2b8] sm:$0xff] %vm2209, %v3662
      %3831 = vst.msk [vmem:[#allocation2 + $0x2c0] sm:$0xff] %vm2209, %v3664
      %3832 = vst.msk [vmem:[#allocation2 + $0x2c8] sm:$0xff] %vm2209, %v3666
      %3833 = vst.msk [vmem:[#allocation2 + $0x2d0] sm:$0xff] %vm2209, %v3668
      %3834 = vst.msk [vmem:[#allocation2 + $0x2d8] sm:$0xff] %vm2209, %v3670
      %3835 = vst.msk [vmem:[#allocation2 + $0x2e0] sm:$0xff] %vm2209, %v3672
      %3836 = vst.msk [vmem:[#allocation2 + $0x2e8] sm:$0xff] %vm2209, %v3674
      %3837 = vst.msk [vmem:[#allocation2 + $0x2f0] sm:$0xff] %vm2209, %v3676
      %3838 = vst.msk [vmem:[#allocation2 + $0x2f8] sm:$0xff] %vm2209, %v3678
      %3839 = vst.msk [vmem:[#allocation2 + $0x300] sm:$0xff] %vm2209, %v3680
      %3840 = vst.msk [vmem:[#allocation2 + $0x308] sm:$0xff] %vm2209, %v3682
      %3841 = vst.msk [vmem:[#allocation2 + $0x310] sm:$0xff] %vm2209, %v3684
      %3842 = vst.msk [vmem:[#allocation2 + $0x318] sm:$0xff] %vm2209, %v3686
      %3843 = vst.msk [vmem:[#allocation2 + $0x320] sm:$0xff] %vm2209, %v3688
      %3844 = vst.msk [vmem:[#allocation2 + $0x328] sm:$0xff] %vm2209, %v3690
      %3845 = vst.msk [vmem:[#allocation2 + $0x330] sm:$0xff] %vm2209, %v3692
      %3846 = vst.msk [vmem:[#allocation2 + $0x338] sm:$0xff] %vm2209, %v3694
      %3847 = vst.msk [vmem:[#allocation2 + $0x340] sm:$0xff] %vm2209, %v3696
      %3848 = vst.msk [vmem:[#allocation2 + $0x348] sm:$0xff] %vm2209, %v3698
      %3849 = vst.msk [vmem:[#allocation2 + $0x350] sm:$0xff] %vm2209, %v3700
      %3850 = vst.msk [vmem:[#allocation2 + $0x358] sm:$0xff] %vm2209, %v3702
      %3851 = vst.msk [vmem:[#allocation2 + $0x360] sm:$0xff] %vm2209, %v3704
      %3852 = vst.msk [vmem:[#allocation2 + $0x368] sm:$0xff] %vm2209, %v3706
      %3853 = vst.msk [vmem:[#allocation2 + $0x370] sm:$0xff] %vm2209, %v3708
      %3854 = vst.msk [vmem:[#allocation2 + $0x378] sm:$0xff] %vm2209, %v3710
      %3855 = vst.msk [vmem:[#allocation2 + $0x380] sm:$0xff] %vm2209, %v3712
      %3856 = vst.msk [vmem:[#allocation2 + $0x388] sm:$0xff] %vm2209, %v3714
      %3857 = vst.msk [vmem:[#allocation2 + $0x390] sm:$0xff] %vm2209, %v3716
      %3858 = vst.msk [vmem:[#allocation2 + $0x398] sm:$0xff] %vm2209, %v3718
      %3859 = vst.msk [vmem:[#allocation2 + $0x3a0] sm:$0xff] %vm2209, %v3720
      %3860 = vst.msk [vmem:[#allocation2 + $0x3a8] sm:$0xff] %vm2209, %v3722
      %3861 = vst.msk [vmem:[#allocation2 + $0x3b0] sm:$0xff] %vm2209, %v3724
      %3862 = vst.msk [vmem:[#allocation2 + $0x3b8] sm:$0xff] %vm2209, %v3726
      %3863 = vst.msk [vmem:[#allocation2 + $0x3c0] sm:$0xff] %vm2209, %v3728
      %3864 = vst.msk [vmem:[#allocation2 + $0x3c8] sm:$0xff] %vm2209, %v3730
      %3865 = vst.msk [vmem:[#allocation2 + $0x3d0] sm:$0xff] %vm2209, %v3732
      %3866 = vst.msk [vmem:[#allocation2 + $0x3d8] sm:$0xff] %vm2209, %v3734
      %3867 = vst.msk [vmem:[#allocation2 + $0x3e0] sm:$0xff] %vm2209, %v3736
      %3868 = vst.msk [vmem:[#allocation2 + $0x3e8] sm:$0xff] %vm2209, %v3738
      %3869 = vst.msk [vmem:[#allocation2 + $0x3f0] sm:$0xff] %vm2209, %v3740
      %3870 = vst.msk [vmem:[#allocation2 + $0x3f8] sm:$0xff] %vm2209, %v3742
      %v3871 = vlaneseq
      %v3872 = vshrl.u32 %v3871, 7
      %v3873 = vsub.s32 0, %v3872
      %v3874 = vrot.slane %v2486, %v3873
      %3876 = vbcast.lane.b32.xlu0 %v3874, 256
      %v3877 = vpop.permute.xlu0 %3876
      %s3879 = sor.u32 256, 8
      %3880 = vbcast.lane.b32.xlu0 %v3874, %s3879
      %v3881 = vpop.permute.xlu0 %3880
      %v3882 = vlaneseq
      %v3883 = vshrl.u32 %v3882, 7
      %v3884 = vsub.s32 1, %v3883
      %v3885 = vrot.slane %v2486, %v3884
      %3887 = vbcast.lane.b32.xlu0 %v3885, 256
      %v3888 = vpop.permute.xlu0 %3887
      %s3890 = sor.u32 256, 8
      %3891 = vbcast.lane.b32.xlu0 %v3885, %s3890
      %v3892 = vpop.permute.xlu0 %3891
      %v3893 = vlaneseq
      %v3894 = vshrl.u32 %v3893, 7
      %v3895 = vsub.s32 2, %v3894
      %v3896 = vrot.slane %v2486, %v3895
      %3898 = vbcast.lane.b32.xlu0 %v3896, 256
      %v3899 = vpop.permute.xlu0 %3898
      %s3901 = sor.u32 256, 8
      %3902 = vbcast.lane.b32.xlu0 %v3896, %s3901
      %v3903 = vpop.permute.xlu0 %3902
      %v3904 = vlaneseq
      %v3905 = vshrl.u32 %v3904, 7
      %v3906 = vsub.s32 3, %v3905
      %v3907 = vrot.slane %v2486, %v3906
      %3909 = vbcast.lane.b32.xlu0 %v3907, 256
      %v3910 = vpop.permute.xlu0 %3909
      %s3912 = sor.u32 256, 8
      %3913 = vbcast.lane.b32.xlu0 %v3907, %s3912
      %v3914 = vpop.permute.xlu0 %3913
      %v3915 = vlaneseq
      %v3916 = vshrl.u32 %v3915, 7
      %v3917 = vsub.s32 4, %v3916
      %v3918 = vrot.slane %v2486, %v3917
      %3920 = vbcast.lane.b32.xlu0 %v3918, 256
      %v3921 = vpop.permute.xlu0 %3920
      %s3923 = sor.u32 256, 8
      %3924 = vbcast.lane.b32.xlu0 %v3918, %s3923
      %v3925 = vpop.permute.xlu0 %3924
      %v3926 = vlaneseq
      %v3927 = vshrl.u32 %v3926, 7
      %v3928 = vsub.s32 5, %v3927
      %v3929 = vrot.slane %v2486, %v3928
      %3931 = vbcast.lane.b32.xlu0 %v3929, 256
      %v3932 = vpop.permute.xlu0 %3931
      %s3934 = sor.u32 256, 8
      %3935 = vbcast.lane.b32.xlu0 %v3929, %s3934
      %v3936 = vpop.permute.xlu0 %3935
      %v3937 = vlaneseq
      %v3938 = vshrl.u32 %v3937, 7
      %v3939 = vsub.s32 6, %v3938
      %v3940 = vrot.slane %v2486, %v3939
      %3942 = vbcast.lane.b32.xlu0 %v3940, 256
      %v3943 = vpop.permute.xlu0 %3942
      %s3945 = sor.u32 256, 8
      %3946 = vbcast.lane.b32.xlu0 %v3940, %s3945
      %v3947 = vpop.permute.xlu0 %3946
      %v3948 = vlaneseq
      %v3949 = vshrl.u32 %v3948, 7
      %v3950 = vsub.s32 7, %v3949
      %v3951 = vrot.slane %v2486, %v3950
      %3953 = vbcast.lane.b32.xlu0 %v3951, 256
      %v3954 = vpop.permute.xlu0 %3953
      %s3956 = sor.u32 256, 8
      %3957 = vbcast.lane.b32.xlu0 %v3951, %s3956
      %v3958 = vpop.permute.xlu0 %3957
      %v3959 = vlaneseq
      %v3960 = vshrl.u32 %v3959, 7
      %v3961 = vsub.s32 0, %v3960
      %v3962 = vrot.slane %v2491, %v3961
      %3964 = vbcast.lane.b32.xlu0 %v3962, 256
      %v3965 = vpop.permute.xlu0 %3964
      %s3967 = sor.u32 256, 8
      %3968 = vbcast.lane.b32.xlu0 %v3962, %s3967
      %v3969 = vpop.permute.xlu0 %3968
      %v3970 = vlaneseq
      %v3971 = vshrl.u32 %v3970, 7
      %v3972 = vsub.s32 1, %v3971
      %v3973 = vrot.slane %v2491, %v3972
      %3975 = vbcast.lane.b32.xlu0 %v3973, 256
      %v3976 = vpop.permute.xlu0 %3975
      %s3978 = sor.u32 256, 8
      %3979 = vbcast.lane.b32.xlu0 %v3973, %s3978
      %v3980 = vpop.permute.xlu0 %3979
      %v3981 = vlaneseq
      %v3982 = vshrl.u32 %v3981, 7
      %v3983 = vsub.s32 2, %v3982
      %v3984 = vrot.slane %v2491, %v3983
      %3986 = vbcast.lane.b32.xlu0 %v3984, 256
      %v3987 = vpop.permute.xlu0 %3986
      %s3989 = sor.u32 256, 8
      %3990 = vbcast.lane.b32.xlu0 %v3984, %s3989
      %v3991 = vpop.permute.xlu0 %3990
      %v3992 = vlaneseq
      %v3993 = vshrl.u32 %v3992, 7
      %v3994 = vsub.s32 3, %v3993
      %v3995 = vrot.slane %v2491, %v3994
      %3997 = vbcast.lane.b32.xlu0 %v3995, 256
      %v3998 = vpop.permute.xlu0 %3997
      %s4000 = sor.u32 256, 8
      %4001 = vbcast.lane.b32.xlu0 %v3995, %s4000
      %v4002 = vpop.permute.xlu0 %4001
      %v4003 = vlaneseq
      %v4004 = vshrl.u32 %v4003, 7
      %v4005 = vsub.s32 4, %v4004
      %v4006 = vrot.slane %v2491, %v4005
      %4008 = vbcast.lane.b32.xlu0 %v4006, 256
      %v4009 = vpop.permute.xlu0 %4008
      %s4011 = sor.u32 256, 8
      %4012 = vbcast.lane.b32.xlu0 %v4006, %s4011
      %v4013 = vpop.permute.xlu0 %4012
      %v4014 = vlaneseq
      %v4015 = vshrl.u32 %v4014, 7
      %v4016 = vsub.s32 5, %v4015
      %v4017 = vrot.slane %v2491, %v4016
      %4019 = vbcast.lane.b32.xlu0 %v4017, 256
      %v4020 = vpop.permute.xlu0 %4019
      %s4022 = sor.u32 256, 8
      %4023 = vbcast.lane.b32.xlu0 %v4017, %s4022
      %v4024 = vpop.permute.xlu0 %4023
      %v4025 = vlaneseq
      %v4026 = vshrl.u32 %v4025, 7
      %v4027 = vsub.s32 6, %v4026
      %v4028 = vrot.slane %v2491, %v4027
      %4030 = vbcast.lane.b32.xlu0 %v4028, 256
      %v4031 = vpop.permute.xlu0 %4030
      %s4033 = sor.u32 256, 8
      %4034 = vbcast.lane.b32.xlu0 %v4028, %s4033
      %v4035 = vpop.permute.xlu0 %4034
      %v4036 = vlaneseq
      %v4037 = vshrl.u32 %v4036, 7
      %v4038 = vsub.s32 7, %v4037
      %v4039 = vrot.slane %v2491, %v4038
      %4041 = vbcast.lane.b32.xlu0 %v4039, 256
      %v4042 = vpop.permute.xlu0 %4041
      %s4044 = sor.u32 256, 8
      %4045 = vbcast.lane.b32.xlu0 %v4039, %s4044
      %v4046 = vpop.permute.xlu0 %4045
      %v4047 = vlaneseq
      %v4048 = vshrl.u32 %v4047, 7
      %v4049 = vsub.s32 0, %v4048
      %v4050 = vrot.slane %v2496, %v4049
      %4052 = vbcast.lane.b32.xlu0 %v4050, 256
      %v4053 = vpop.permute.xlu0 %4052
      %s4055 = sor.u32 256, 8
      %4056 = vbcast.lane.b32.xlu0 %v4050, %s4055
      %v4057 = vpop.permute.xlu0 %4056
      %v4058 = vlaneseq
      %v4059 = vshrl.u32 %v4058, 7
      %v4060 = vsub.s32 1, %v4059
      %v4061 = vrot.slane %v2496, %v4060
      %4063 = vbcast.lane.b32.xlu0 %v4061, 256
      %v4064 = vpop.permute.xlu0 %4063
      %s4066 = sor.u32 256, 8
      %4067 = vbcast.lane.b32.xlu0 %v4061, %s4066
      %v4068 = vpop.permute.xlu0 %4067
      %v4069 = vlaneseq
      %v4070 = vshrl.u32 %v4069, 7
      %v4071 = vsub.s32 2, %v4070
      %v4072 = vrot.slane %v2496, %v4071
      %4074 = vbcast.lane.b32.xlu0 %v4072, 256
      %v4075 = vpop.permute.xlu0 %4074
      %s4077 = sor.u32 256, 8
      %4078 = vbcast.lane.b32.xlu0 %v4072, %s4077
      %v4079 = vpop.permute.xlu0 %4078
      %v4080 = vlaneseq
      %v4081 = vshrl.u32 %v4080, 7
      %v4082 = vsub.s32 3, %v4081
      %v4083 = vrot.slane %v2496, %v4082
      %4085 = vbcast.lane.b32.xlu0 %v4083, 256
      %v4086 = vpop.permute.xlu0 %4085
      %s4088 = sor.u32 256, 8
      %4089 = vbcast.lane.b32.xlu0 %v4083, %s4088
      %v4090 = vpop.permute.xlu0 %4089
      %v4091 = vlaneseq
      %v4092 = vshrl.u32 %v4091, 7
      %v4093 = vsub.s32 4, %v4092
      %v4094 = vrot.slane %v2496, %v4093
      %4096 = vbcast.lane.b32.xlu0 %v4094, 256
      %v4097 = vpop.permute.xlu0 %4096
      %s4099 = sor.u32 256, 8
      %4100 = vbcast.lane.b32.xlu0 %v4094, %s4099
      %v4101 = vpop.permute.xlu0 %4100
      %v4102 = vlaneseq
      %v4103 = vshrl.u32 %v4102, 7
      %v4104 = vsub.s32 5, %v4103
      %v4105 = vrot.slane %v2496, %v4104
      %4107 = vbcast.lane.b32.xlu0 %v4105, 256
      %v4108 = vpop.permute.xlu0 %4107
      %s4110 = sor.u32 256, 8
      %4111 = vbcast.lane.b32.xlu0 %v4105, %s4110
      %v4112 = vpop.permute.xlu0 %4111
      %v4113 = vlaneseq
      %v4114 = vshrl.u32 %v4113, 7
      %v4115 = vsub.s32 6, %v4114
      %v4116 = vrot.slane %v2496, %v4115
      %4118 = vbcast.lane.b32.xlu0 %v4116, 256
      %v4119 = vpop.permute.xlu0 %4118
      %s4121 = sor.u32 256, 8
      %4122 = vbcast.lane.b32.xlu0 %v4116, %s4121
      %v4123 = vpop.permute.xlu0 %4122
      %v4124 = vlaneseq
      %v4125 = vshrl.u32 %v4124, 7
      %v4126 = vsub.s32 7, %v4125
      %v4127 = vrot.slane %v2496, %v4126
      %4129 = vbcast.lane.b32.xlu0 %v4127, 256
      %v4130 = vpop.permute.xlu0 %4129
      %s4132 = sor.u32 256, 8
      %4133 = vbcast.lane.b32.xlu0 %v4127, %s4132
      %v4134 = vpop.permute.xlu0 %4133
      %v4135 = vlaneseq
      %v4136 = vshrl.u32 %v4135, 7
      %v4137 = vsub.s32 0, %v4136
      %v4138 = vrot.slane %v2501, %v4137
      %4140 = vbcast.lane.b32.xlu0 %v4138, 256
      %v4141 = vpop.permute.xlu0 %4140
      %s4143 = sor.u32 256, 8
      %4144 = vbcast.lane.b32.xlu0 %v4138, %s4143
      %v4145 = vpop.permute.xlu0 %4144
      %v4146 = vlaneseq
      %v4147 = vshrl.u32 %v4146, 7
      %v4148 = vsub.s32 1, %v4147
      %v4149 = vrot.slane %v2501, %v4148
      %4151 = vbcast.lane.b32.xlu0 %v4149, 256
      %v4152 = vpop.permute.xlu0 %4151
      %s4154 = sor.u32 256, 8
      %4155 = vbcast.lane.b32.xlu0 %v4149, %s4154
      %v4156 = vpop.permute.xlu0 %4155
      %v4157 = vlaneseq
      %v4158 = vshrl.u32 %v4157, 7
      %v4159 = vsub.s32 2, %v4158
      %v4160 = vrot.slane %v2501, %v4159
      %4162 = vbcast.lane.b32.xlu0 %v4160, 256
      %v4163 = vpop.permute.xlu0 %4162
      %s4165 = sor.u32 256, 8
      %4166 = vbcast.lane.b32.xlu0 %v4160, %s4165
      %v4167 = vpop.permute.xlu0 %4166
      %v4168 = vlaneseq
      %v4169 = vshrl.u32 %v4168, 7
      %v4170 = vsub.s32 3, %v4169
      %v4171 = vrot.slane %v2501, %v4170
      %4173 = vbcast.lane.b32.xlu0 %v4171, 256
      %v4174 = vpop.permute.xlu0 %4173
      %s4176 = sor.u32 256, 8
      %4177 = vbcast.lane.b32.xlu0 %v4171, %s4176
      %v4178 = vpop.permute.xlu0 %4177
      %v4179 = vlaneseq
      %v4180 = vshrl.u32 %v4179, 7
      %v4181 = vsub.s32 4, %v4180
      %v4182 = vrot.slane %v2501, %v4181
      %4184 = vbcast.lane.b32.xlu0 %v4182, 256
      %v4185 = vpop.permute.xlu0 %4184
      %s4187 = sor.u32 256, 8
      %4188 = vbcast.lane.b32.xlu0 %v4182, %s4187
      %v4189 = vpop.permute.xlu0 %4188
      %v4190 = vlaneseq
      %v4191 = vshrl.u32 %v4190, 7
      %v4192 = vsub.s32 5, %v4191
      %v4193 = vrot.slane %v2501, %v4192
      %4195 = vbcast.lane.b32.xlu0 %v4193, 256
      %v4196 = vpop.permute.xlu0 %4195
      %s4198 = sor.u32 256, 8
      %4199 = vbcast.lane.b32.xlu0 %v4193, %s4198
      %v4200 = vpop.permute.xlu0 %4199
      %v4201 = vlaneseq
      %v4202 = vshrl.u32 %v4201, 7
      %v4203 = vsub.s32 6, %v4202
      %v4204 = vrot.slane %v2501, %v4203
      %4206 = vbcast.lane.b32.xlu0 %v4204, 256
      %v4207 = vpop.permute.xlu0 %4206
      %s4209 = sor.u32 256, 8
      %4210 = vbcast.lane.b32.xlu0 %v4204, %s4209
      %v4211 = vpop.permute.xlu0 %4210
      %v4212 = vlaneseq
      %v4213 = vshrl.u32 %v4212, 7
      %v4214 = vsub.s32 7, %v4213
      %v4215 = vrot.slane %v2501, %v4214
      %4217 = vbcast.lane.b32.xlu0 %v4215, 256
      %v4218 = vpop.permute.xlu0 %4217
      %s4220 = sor.u32 256, 8
      %4221 = vbcast.lane.b32.xlu0 %v4215, %s4220
      %v4222 = vpop.permute.xlu0 %4221
      %v4223 = vlaneseq
      %v4224 = vshrl.u32 %v4223, 7
      %v4225 = vsub.s32 0, %v4224
      %v4226 = vrot.slane %v2506, %v4225
      %4228 = vbcast.lane.b32.xlu0 %v4226, 256
      %v4229 = vpop.permute.xlu0 %4228
      %s4231 = sor.u32 256, 8
      %4232 = vbcast.lane.b32.xlu0 %v4226, %s4231
      %v4233 = vpop.permute.xlu0 %4232
      %v4234 = vlaneseq
      %v4235 = vshrl.u32 %v4234, 7
      %v4236 = vsub.s32 1, %v4235
      %v4237 = vrot.slane %v2506, %v4236
      %4239 = vbcast.lane.b32.xlu0 %v4237, 256
      %v4240 = vpop.permute.xlu0 %4239
      %s4242 = sor.u32 256, 8
      %4243 = vbcast.lane.b32.xlu0 %v4237, %s4242
      %v4244 = vpop.permute.xlu0 %4243
      %v4245 = vlaneseq
      %v4246 = vshrl.u32 %v4245, 7
      %v4247 = vsub.s32 2, %v4246
      %v4248 = vrot.slane %v2506, %v4247
      %4250 = vbcast.lane.b32.xlu0 %v4248, 256
      %v4251 = vpop.permute.xlu0 %4250
      %s4253 = sor.u32 256, 8
      %4254 = vbcast.lane.b32.xlu0 %v4248, %s4253
      %v4255 = vpop.permute.xlu0 %4254
      %v4256 = vlaneseq
      %v4257 = vshrl.u32 %v4256, 7
      %v4258 = vsub.s32 3, %v4257
      %v4259 = vrot.slane %v2506, %v4258
      %4261 = vbcast.lane.b32.xlu0 %v4259, 256
      %v4262 = vpop.permute.xlu0 %4261
      %s4264 = sor.u32 256, 8
      %4265 = vbcast.lane.b32.xlu0 %v4259, %s4264
      %v4266 = vpop.permute.xlu0 %4265
      %v4267 = vlaneseq
      %v4268 = vshrl.u32 %v4267, 7
      %v4269 = vsub.s32 4, %v4268
      %v4270 = vrot.slane %v2506, %v4269
      %4272 = vbcast.lane.b32.xlu0 %v4270, 256
      %v4273 = vpop.permute.xlu0 %4272
      %s4275 = sor.u32 256, 8
      %4276 = vbcast.lane.b32.xlu0 %v4270, %s4275
      %v4277 = vpop.permute.xlu0 %4276
      %v4278 = vlaneseq
      %v4279 = vshrl.u32 %v4278, 7
      %v4280 = vsub.s32 5, %v4279
      %v4281 = vrot.slane %v2506, %v4280
      %4283 = vbcast.lane.b32.xlu0 %v4281, 256
      %v4284 = vpop.permute.xlu0 %4283
      %s4286 = sor.u32 256, 8
      %4287 = vbcast.lane.b32.xlu0 %v4281, %s4286
      %v4288 = vpop.permute.xlu0 %4287
      %v4289 = vlaneseq
      %v4290 = vshrl.u32 %v4289, 7
      %v4291 = vsub.s32 6, %v4290
      %v4292 = vrot.slane %v2506, %v4291
      %4294 = vbcast.lane.b32.xlu0 %v4292, 256
      %v4295 = vpop.permute.xlu0 %4294
      %s4297 = sor.u32 256, 8
      %4298 = vbcast.lane.b32.xlu0 %v4292, %s4297
      %v4299 = vpop.permute.xlu0 %4298
      %v4300 = vlaneseq
      %v4301 = vshrl.u32 %v4300, 7
      %v4302 = vsub.s32 7, %v4301
      %v4303 = vrot.slane %v2506, %v4302
      %4305 = vbcast.lane.b32.xlu0 %v4303, 256
      %v4306 = vpop.permute.xlu0 %4305
      %s4308 = sor.u32 256, 8
      %4309 = vbcast.lane.b32.xlu0 %v4303, %s4308
      %v4310 = vpop.permute.xlu0 %4309
      %v4311 = vlaneseq
      %v4312 = vshrl.u32 %v4311, 7
      %v4313 = vsub.s32 0, %v4312
      %v4314 = vrot.slane %v2511, %v4313
      %4316 = vbcast.lane.b32.xlu0 %v4314, 256
      %v4317 = vpop.permute.xlu0 %4316
      %s4319 = sor.u32 256, 8
      %4320 = vbcast.lane.b32.xlu0 %v4314, %s4319
      %v4321 = vpop.permute.xlu0 %4320
      %v4322 = vlaneseq
      %v4323 = vshrl.u32 %v4322, 7
      %v4324 = vsub.s32 1, %v4323
      %v4325 = vrot.slane %v2511, %v4324
      %4327 = vbcast.lane.b32.xlu0 %v4325, 256
      %v4328 = vpop.permute.xlu0 %4327
      %s4330 = sor.u32 256, 8
      %4331 = vbcast.lane.b32.xlu0 %v4325, %s4330
      %v4332 = vpop.permute.xlu0 %4331
      %v4333 = vlaneseq
      %v4334 = vshrl.u32 %v4333, 7
      %v4335 = vsub.s32 2, %v4334
      %v4336 = vrot.slane %v2511, %v4335
      %4338 = vbcast.lane.b32.xlu0 %v4336, 256
      %v4339 = vpop.permute.xlu0 %4338
      %s4341 = sor.u32 256, 8
      %4342 = vbcast.lane.b32.xlu0 %v4336, %s4341
      %v4343 = vpop.permute.xlu0 %4342
      %v4344 = vlaneseq
      %v4345 = vshrl.u32 %v4344, 7
      %v4346 = vsub.s32 3, %v4345
      %v4347 = vrot.slane %v2511, %v4346
      %4349 = vbcast.lane.b32.xlu0 %v4347, 256
      %v4350 = vpop.permute.xlu0 %4349
      %s4352 = sor.u32 256, 8
      %4353 = vbcast.lane.b32.xlu0 %v4347, %s4352
      %v4354 = vpop.permute.xlu0 %4353
      %v4355 = vlaneseq
      %v4356 = vshrl.u32 %v4355, 7
      %v4357 = vsub.s32 4, %v4356
      %v4358 = vrot.slane %v2511, %v4357
      %4360 = vbcast.lane.b32.xlu0 %v4358, 256
      %v4361 = vpop.permute.xlu0 %4360
      %s4363 = sor.u32 256, 8
      %4364 = vbcast.lane.b32.xlu0 %v4358, %s4363
      %v4365 = vpop.permute.xlu0 %4364
      %v4366 = vlaneseq
      %v4367 = vshrl.u32 %v4366, 7
      %v4368 = vsub.s32 5, %v4367
      %v4369 = vrot.slane %v2511, %v4368
      %4371 = vbcast.lane.b32.xlu0 %v4369, 256
      %v4372 = vpop.permute.xlu0 %4371
      %s4374 = sor.u32 256, 8
      %4375 = vbcast.lane.b32.xlu0 %v4369, %s4374
      %v4376 = vpop.permute.xlu0 %4375
      %v4377 = vlaneseq
      %v4378 = vshrl.u32 %v4377, 7
      %v4379 = vsub.s32 6, %v4378
      %v4380 = vrot.slane %v2511, %v4379
      %4382 = vbcast.lane.b32.xlu0 %v4380, 256
      %v4383 = vpop.permute.xlu0 %4382
      %s4385 = sor.u32 256, 8
      %4386 = vbcast.lane.b32.xlu0 %v4380, %s4385
      %v4387 = vpop.permute.xlu0 %4386
      %v4388 = vlaneseq
      %v4389 = vshrl.u32 %v4388, 7
      %v4390 = vsub.s32 7, %v4389
      %v4391 = vrot.slane %v2511, %v4390
      %4393 = vbcast.lane.b32.xlu0 %v4391, 256
      %v4394 = vpop.permute.xlu0 %4393
      %s4396 = sor.u32 256, 8
      %4397 = vbcast.lane.b32.xlu0 %v4391, %s4396
      %v4398 = vpop.permute.xlu0 %4397
      %v4399 = vlaneseq
      %v4400 = vshrl.u32 %v4399, 7
      %v4401 = vsub.s32 0, %v4400
      %v4402 = vrot.slane %v2516, %v4401
      %4404 = vbcast.lane.b32.xlu0 %v4402, 256
      %v4405 = vpop.permute.xlu0 %4404
      %s4407 = sor.u32 256, 8
      %4408 = vbcast.lane.b32.xlu0 %v4402, %s4407
      %v4409 = vpop.permute.xlu0 %4408
      %v4410 = vlaneseq
      %v4411 = vshrl.u32 %v4410, 7
      %v4412 = vsub.s32 1, %v4411
      %v4413 = vrot.slane %v2516, %v4412
      %4415 = vbcast.lane.b32.xlu0 %v4413, 256
      %v4416 = vpop.permute.xlu0 %4415
      %s4418 = sor.u32 256, 8
      %4419 = vbcast.lane.b32.xlu0 %v4413, %s4418
      %v4420 = vpop.permute.xlu0 %4419
      %v4421 = vlaneseq
      %v4422 = vshrl.u32 %v4421, 7
      %v4423 = vsub.s32 2, %v4422
      %v4424 = vrot.slane %v2516, %v4423
      %4426 = vbcast.lane.b32.xlu0 %v4424, 256
      %v4427 = vpop.permute.xlu0 %4426
      %s4429 = sor.u32 256, 8
      %4430 = vbcast.lane.b32.xlu0 %v4424, %s4429
      %v4431 = vpop.permute.xlu0 %4430
      %v4432 = vlaneseq
      %v4433 = vshrl.u32 %v4432, 7
      %v4434 = vsub.s32 3, %v4433
      %v4435 = vrot.slane %v2516, %v4434
      %4437 = vbcast.lane.b32.xlu0 %v4435, 256
      %v4438 = vpop.permute.xlu0 %4437
      %s4440 = sor.u32 256, 8
      %4441 = vbcast.lane.b32.xlu0 %v4435, %s4440
      %v4442 = vpop.permute.xlu0 %4441
      %v4443 = vlaneseq
      %v4444 = vshrl.u32 %v4443, 7
      %v4445 = vsub.s32 4, %v4444
      %v4446 = vrot.slane %v2516, %v4445
      %4448 = vbcast.lane.b32.xlu0 %v4446, 256
      %v4449 = vpop.permute.xlu0 %4448
      %s4451 = sor.u32 256, 8
      %4452 = vbcast.lane.b32.xlu0 %v4446, %s4451
      %v4453 = vpop.permute.xlu0 %4452
      %v4454 = vlaneseq
      %v4455 = vshrl.u32 %v4454, 7
      %v4456 = vsub.s32 5, %v4455
      %v4457 = vrot.slane %v2516, %v4456
      %4459 = vbcast.lane.b32.xlu0 %v4457, 256
      %v4460 = vpop.permute.xlu0 %4459
      %s4462 = sor.u32 256, 8
      %4463 = vbcast.lane.b32.xlu0 %v4457, %s4462
      %v4464 = vpop.permute.xlu0 %4463
      %v4465 = vlaneseq
      %v4466 = vshrl.u32 %v4465, 7
      %v4467 = vsub.s32 6, %v4466
      %v4468 = vrot.slane %v2516, %v4467
      %4470 = vbcast.lane.b32.xlu0 %v4468, 256
      %v4471 = vpop.permute.xlu0 %4470
      %s4473 = sor.u32 256, 8
      %4474 = vbcast.lane.b32.xlu0 %v4468, %s4473
      %v4475 = vpop.permute.xlu0 %4474
      %v4476 = vlaneseq
      %v4477 = vshrl.u32 %v4476, 7
      %v4478 = vsub.s32 7, %v4477
      %v4479 = vrot.slane %v2516, %v4478
      %4481 = vbcast.lane.b32.xlu0 %v4479, 256
      %v4482 = vpop.permute.xlu0 %4481
      %s4484 = sor.u32 256, 8
      %4485 = vbcast.lane.b32.xlu0 %v4479, %s4484
      %v4486 = vpop.permute.xlu0 %4485
      %v4487 = vlaneseq
      %v4488 = vshrl.u32 %v4487, 7
      %v4489 = vsub.s32 0, %v4488
      %v4490 = vrot.slane %v2521, %v4489
      %4492 = vbcast.lane.b32.xlu0 %v4490, 256
      %v4493 = vpop.permute.xlu0 %4492
      %s4495 = sor.u32 256, 8
      %4496 = vbcast.lane.b32.xlu0 %v4490, %s4495
      %v4497 = vpop.permute.xlu0 %4496
      %v4498 = vlaneseq
      %v4499 = vshrl.u32 %v4498, 7
      %v4500 = vsub.s32 1, %v4499
      %v4501 = vrot.slane %v2521, %v4500
      %4503 = vbcast.lane.b32.xlu0 %v4501, 256
      %v4504 = vpop.permute.xlu0 %4503
      %s4506 = sor.u32 256, 8
      %4507 = vbcast.lane.b32.xlu0 %v4501, %s4506
      %v4508 = vpop.permute.xlu0 %4507
      %v4509 = vlaneseq
      %v4510 = vshrl.u32 %v4509, 7
      %v4511 = vsub.s32 2, %v4510
      %v4512 = vrot.slane %v2521, %v4511
      %4514 = vbcast.lane.b32.xlu0 %v4512, 256
      %v4515 = vpop.permute.xlu0 %4514
      %s4517 = sor.u32 256, 8
      %4518 = vbcast.lane.b32.xlu0 %v4512, %s4517
      %v4519 = vpop.permute.xlu0 %4518
      %v4520 = vlaneseq
      %v4521 = vshrl.u32 %v4520, 7
      %v4522 = vsub.s32 3, %v4521
      %v4523 = vrot.slane %v2521, %v4522
      %4525 = vbcast.lane.b32.xlu0 %v4523, 256
      %v4526 = vpop.permute.xlu0 %4525
      %s4528 = sor.u32 256, 8
      %4529 = vbcast.lane.b32.xlu0 %v4523, %s4528
      %v4530 = vpop.permute.xlu0 %4529
      %v4531 = vlaneseq
      %v4532 = vshrl.u32 %v4531, 7
      %v4533 = vsub.s32 4, %v4532
      %v4534 = vrot.slane %v2521, %v4533
      %4536 = vbcast.lane.b32.xlu0 %v4534, 256
      %v4537 = vpop.permute.xlu0 %4536
      %s4539 = sor.u32 256, 8
      %4540 = vbcast.lane.b32.xlu0 %v4534, %s4539
      %v4541 = vpop.permute.xlu0 %4540
      %v4542 = vlaneseq
      %v4543 = vshrl.u32 %v4542, 7
      %v4544 = vsub.s32 5, %v4543
      %v4545 = vrot.slane %v2521, %v4544
      %4547 = vbcast.lane.b32.xlu0 %v4545, 256
      %v4548 = vpop.permute.xlu0 %4547
      %s4550 = sor.u32 256, 8
      %4551 = vbcast.lane.b32.xlu0 %v4545, %s4550
      %v4552 = vpop.permute.xlu0 %4551
      %v4553 = vlaneseq
      %v4554 = vshrl.u32 %v4553, 7
      %v4555 = vsub.s32 6, %v4554
      %v4556 = vrot.slane %v2521, %v4555
      %4558 = vbcast.lane.b32.xlu0 %v4556, 256
      %v4559 = vpop.permute.xlu0 %4558
      %s4561 = sor.u32 256, 8
      %4562 = vbcast.lane.b32.xlu0 %v4556, %s4561
      %v4563 = vpop.permute.xlu0 %4562
      %v4564 = vlaneseq
      %v4565 = vshrl.u32 %v4564, 7
      %v4566 = vsub.s32 7, %v4565
      %v4567 = vrot.slane %v2521, %v4566
      %4569 = vbcast.lane.b32.xlu0 %v4567, 256
      %v4570 = vpop.permute.xlu0 %4569
      %s4572 = sor.u32 256, 8
      %4573 = vbcast.lane.b32.xlu0 %v4567, %s4572
      %v4574 = vpop.permute.xlu0 %4573
      %v4575 = vmul.f32 %v2403, %v1962
      %v4576 = vmul.f32 %v2404, %v1963
      %v4577 = vmul.f32 %v2405, %v1964
      %v4578 = vmul.f32 %v2406, %v1965
      %v4579 = vmul.f32 %v2407, %v1966
      %v4580 = vmul.f32 %v2408, %v1967
      %v4581 = vmul.f32 %v2409, %v1968
      %v4582 = vmul.f32 %v2410, %v1969
      %v4591 = vcombine.high %v4575, %v4575
      %v4593 = vunpack.c.l.s4 1966171168
      %v4594 = vunpack.c.0.s8 %v4593
      %v4595 = vlaneseq
      %v4596 = vshrl.u32 %v4595, 7
      %v4597 = vsub.s32 %v4594, %v4596
      %v4598 = vrot.slane %v4575, %v4597
      %v4600 = vunpack.c.l.s4 1966171168
      %v4601 = vunpack.c.0.s8 %v4600
      %v4602 = vlaneseq
      %v4603 = vshrl.u32 %v4602, 7
      %v4604 = vsub.s32 %v4601, %v4603
      %v4605 = vrot.slane %v4591, %v4604
      %v4606 = vcombine.high %v4598, %v4598
      %v4607 = vcombine.high %v4605, %v4605
      %v4609 = vunpack.c.l.s4 1966171168
      %v4610 = vunpack.c.0.s8 %v4609
      %v4611 = vlaneseq
      %v4612 = vshrl.u32 %v4611, 7
      %v4613 = vsub.s32 %v4610, %v4612
      %v4614 = vrot.slane %v4598, %v4613
      %v4616 = vunpack.c.l.s4 1966171168
      %v4617 = vunpack.c.0.s8 %v4616
      %v4618 = vlaneseq
      %v4619 = vshrl.u32 %v4618, 7
      %v4620 = vsub.s32 %v4617, %v4619
      %v4621 = vrot.slane %v4605, %v4620
      %v4623 = vunpack.c.l.s4 1966171168
      %v4624 = vunpack.c.0.s8 %v4623
      %v4625 = vlaneseq
      %v4626 = vshrl.u32 %v4625, 7
      %v4627 = vsub.s32 %v4624, %v4626
      %v4628 = vrot.slane %v4606, %v4627
      %v4630 = vunpack.c.l.s4 1966171168
      %v4631 = vunpack.c.0.s8 %v4630
      %v4632 = vlaneseq
      %v4633 = vshrl.u32 %v4632, 7
      %v4634 = vsub.s32 %v4631, %v4633
      %v4635 = vrot.slane %v4607, %v4634
      %v4636 = vcombine.high %v4614, %v4614
      %v4637 = vcombine.high %v4621, %v4621
      %v4638 = vcombine.high %v4628, %v4628
      %v4639 = vcombine.high %v4635, %v4635
      %v4640 = vcombine.high %v4576, %v4576
      %v4642 = vunpack.c.l.s4 1966171168
      %v4643 = vunpack.c.0.s8 %v4642
      %v4644 = vlaneseq
      %v4645 = vshrl.u32 %v4644, 7
      %v4646 = vsub.s32 %v4643, %v4645
      %v4647 = vrot.slane %v4576, %v4646
      %v4649 = vunpack.c.l.s4 1966171168
      %v4650 = vunpack.c.0.s8 %v4649
      %v4651 = vlaneseq
      %v4652 = vshrl.u32 %v4651, 7
      %v4653 = vsub.s32 %v4650, %v4652
      %v4654 = vrot.slane %v4640, %v4653
      %v4655 = vcombine.high %v4647, %v4647
      %v4656 = vcombine.high %v4654, %v4654
      %v4658 = vunpack.c.l.s4 1966171168
      %v4659 = vunpack.c.0.s8 %v4658
      %v4660 = vlaneseq
      %v4661 = vshrl.u32 %v4660, 7
      %v4662 = vsub.s32 %v4659, %v4661
      %v4663 = vrot.slane %v4647, %v4662
      %v4665 = vunpack.c.l.s4 1966171168
      %v4666 = vunpack.c.0.s8 %v4665
      %v4667 = vlaneseq
      %v4668 = vshrl.u32 %v4667, 7
      %v4669 = vsub.s32 %v4666, %v4668
      %v4670 = vrot.slane %v4654, %v4669
      %v4672 = vunpack.c.l.s4 1966171168
      %v4673 = vunpack.c.0.s8 %v4672
      %v4674 = vlaneseq
      %v4675 = vshrl.u32 %v4674, 7
      %v4676 = vsub.s32 %v4673, %v4675
      %v4677 = vrot.slane %v4655, %v4676
      %v4679 = vunpack.c.l.s4 1966171168
      %v4680 = vunpack.c.0.s8 %v4679
      %v4681 = vlaneseq
      %v4682 = vshrl.u32 %v4681, 7
      %v4683 = vsub.s32 %v4680, %v4682
      %v4684 = vrot.slane %v4656, %v4683
      %v4685 = vcombine.high %v4663, %v4663
      %v4686 = vcombine.high %v4670, %v4670
      %v4687 = vcombine.high %v4677, %v4677
      %v4688 = vcombine.high %v4684, %v4684
      %v4689 = vcombine.high %v4577, %v4577
      %v4691 = vunpack.c.l.s4 1966171168
      %v4692 = vunpack.c.0.s8 %v4691
      %v4693 = vlaneseq
      %v4694 = vshrl.u32 %v4693, 7
      %v4695 = vsub.s32 %v4692, %v4694
      %v4696 = vrot.slane %v4577, %v4695
      %v4698 = vunpack.c.l.s4 1966171168
      %v4699 = vunpack.c.0.s8 %v4698
      %v4700 = vlaneseq
      %v4701 = vshrl.u32 %v4700, 7
      %v4702 = vsub.s32 %v4699, %v4701
      %v4703 = vrot.slane %v4689, %v4702
      %v4704 = vcombine.high %v4696, %v4696
      %v4705 = vcombine.high %v4703, %v4703
      %v4707 = vunpack.c.l.s4 1966171168
      %v4708 = vunpack.c.0.s8 %v4707
      %v4709 = vlaneseq
      %v4710 = vshrl.u32 %v4709, 7
      %v4711 = vsub.s32 %v4708, %v4710
      %v4712 = vrot.slane %v4696, %v4711
      %v4714 = vunpack.c.l.s4 1966171168
      %v4715 = vunpack.c.0.s8 %v4714
      %v4716 = vlaneseq
      %v4717 = vshrl.u32 %v4716, 7
      %v4718 = vsub.s32 %v4715, %v4717
      %v4719 = vrot.slane %v4703, %v4718
      %v4721 = vunpack.c.l.s4 1966171168
      %v4722 = vunpack.c.0.s8 %v4721
      %v4723 = vlaneseq
      %v4724 = vshrl.u32 %v4723, 7
      %v4725 = vsub.s32 %v4722, %v4724
      %v4726 = vrot.slane %v4704, %v4725
      %v4728 = vunpack.c.l.s4 1966171168
      %v4729 = vunpack.c.0.s8 %v4728
      %v4730 = vlaneseq
      %v4731 = vshrl.u32 %v4730, 7
      %v4732 = vsub.s32 %v4729, %v4731
      %v4733 = vrot.slane %v4705, %v4732
      %v4734 = vcombine.high %v4712, %v4712
      %v4735 = vcombine.high %v4719, %v4719
      %v4736 = vcombine.high %v4726, %v4726
      %v4737 = vcombine.high %v4733, %v4733
      %v4738 = vcombine.high %v4578, %v4578
      %v4740 = vunpack.c.l.s4 1966171168
      %v4741 = vunpack.c.0.s8 %v4740
      %v4742 = vlaneseq
      %v4743 = vshrl.u32 %v4742, 7
      %v4744 = vsub.s32 %v4741, %v4743
      %v4745 = vrot.slane %v4578, %v4744
      %v4747 = vunpack.c.l.s4 1966171168
      %v4748 = vunpack.c.0.s8 %v4747
      %v4749 = vlaneseq
      %v4750 = vshrl.u32 %v4749, 7
      %v4751 = vsub.s32 %v4748, %v4750
      %v4752 = vrot.slane %v4738, %v4751
      %v4753 = vcombine.high %v4745, %v4745
      %v4754 = vcombine.high %v4752, %v4752
      %v4756 = vunpack.c.l.s4 1966171168
      %v4757 = vunpack.c.0.s8 %v4756
      %v4758 = vlaneseq
      %v4759 = vshrl.u32 %v4758, 7
      %v4760 = vsub.s32 %v4757, %v4759
      %v4761 = vrot.slane %v4745, %v4760
      %v4763 = vunpack.c.l.s4 1966171168
      %v4764 = vunpack.c.0.s8 %v4763
      %v4765 = vlaneseq
      %v4766 = vshrl.u32 %v4765, 7
      %v4767 = vsub.s32 %v4764, %v4766
      %v4768 = vrot.slane %v4752, %v4767
      %v4770 = vunpack.c.l.s4 1966171168
      %v4771 = vunpack.c.0.s8 %v4770
      %v4772 = vlaneseq
      %v4773 = vshrl.u32 %v4772, 7
      %v4774 = vsub.s32 %v4771, %v4773
      %v4775 = vrot.slane %v4753, %v4774
      %v4777 = vunpack.c.l.s4 1966171168
      %v4778 = vunpack.c.0.s8 %v4777
      %v4779 = vlaneseq
      %v4780 = vshrl.u32 %v4779, 7
      %v4781 = vsub.s32 %v4778, %v4780
      %v4782 = vrot.slane %v4754, %v4781
      %v4783 = vcombine.high %v4761, %v4761
      %v4784 = vcombine.high %v4768, %v4768
      %v4785 = vcombine.high %v4775, %v4775
      %v4786 = vcombine.high %v4782, %v4782
      %v4787 = vcombine.high %v4579, %v4579
      %v4789 = vunpack.c.l.s4 1966171168
      %v4790 = vunpack.c.0.s8 %v4789
      %v4791 = vlaneseq
      %v4792 = vshrl.u32 %v4791, 7
      %v4793 = vsub.s32 %v4790, %v4792
      %v4794 = vrot.slane %v4579, %v4793
      %v4796 = vunpack.c.l.s4 1966171168
      %v4797 = vunpack.c.0.s8 %v4796
      %v4798 = vlaneseq
      %v4799 = vshrl.u32 %v4798, 7
      %v4800 = vsub.s32 %v4797, %v4799
      %v4801 = vrot.slane %v4787, %v4800
      %v4802 = vcombine.high %v4794, %v4794
      %v4803 = vcombine.high %v4801, %v4801
      %v4805 = vunpack.c.l.s4 1966171168
      %v4806 = vunpack.c.0.s8 %v4805
      %v4807 = vlaneseq
      %v4808 = vshrl.u32 %v4807, 7
      %v4809 = vsub.s32 %v4806, %v4808
      %v4810 = vrot.slane %v4794, %v4809
      %v4812 = vunpack.c.l.s4 1966171168
      %v4813 = vunpack.c.0.s8 %v4812
      %v4814 = vlaneseq
      %v4815 = vshrl.u32 %v4814, 7
      %v4816 = vsub.s32 %v4813, %v4815
      %v4817 = vrot.slane %v4801, %v4816
      %v4819 = vunpack.c.l.s4 1966171168
      %v4820 = vunpack.c.0.s8 %v4819
      %v4821 = vlaneseq
      %v4822 = vshrl.u32 %v4821, 7
      %v4823 = vsub.s32 %v4820, %v4822
      %v4824 = vrot.slane %v4802, %v4823
      %v4826 = vunpack.c.l.s4 1966171168
      %v4827 = vunpack.c.0.s8 %v4826
      %v4828 = vlaneseq
      %v4829 = vshrl.u32 %v4828, 7
      %v4830 = vsub.s32 %v4827, %v4829
      %v4831 = vrot.slane %v4803, %v4830
      %v4832 = vcombine.high %v4810, %v4810
      %v4833 = vcombine.high %v4817, %v4817
      %v4834 = vcombine.high %v4824, %v4824
      %v4835 = vcombine.high %v4831, %v4831
      %v4836 = vcombine.high %v4580, %v4580
      %v4838 = vunpack.c.l.s4 1966171168
      %v4839 = vunpack.c.0.s8 %v4838
      %v4840 = vlaneseq
      %v4841 = vshrl.u32 %v4840, 7
      %v4842 = vsub.s32 %v4839, %v4841
      %v4843 = vrot.slane %v4580, %v4842
      %v4845 = vunpack.c.l.s4 1966171168
      %v4846 = vunpack.c.0.s8 %v4845
      %v4847 = vlaneseq
      %v4848 = vshrl.u32 %v4847, 7
      %v4849 = vsub.s32 %v4846, %v4848
      %v4850 = vrot.slane %v4836, %v4849
      %v4851 = vcombine.high %v4843, %v4843
      %v4852 = vcombine.high %v4850, %v4850
      %v4854 = vunpack.c.l.s4 1966171168
      %v4855 = vunpack.c.0.s8 %v4854
      %v4856 = vlaneseq
      %v4857 = vshrl.u32 %v4856, 7
      %v4858 = vsub.s32 %v4855, %v4857
      %v4859 = vrot.slane %v4843, %v4858
      %v4861 = vunpack.c.l.s4 1966171168
      %v4862 = vunpack.c.0.s8 %v4861
      %v4863 = vlaneseq
      %v4864 = vshrl.u32 %v4863, 7
      %v4865 = vsub.s32 %v4862, %v4864
      %v4866 = vrot.slane %v4850, %v4865
      %v4868 = vunpack.c.l.s4 1966171168
      %v4869 = vunpack.c.0.s8 %v4868
      %v4870 = vlaneseq
      %v4871 = vshrl.u32 %v4870, 7
      %v4872 = vsub.s32 %v4869, %v4871
      %v4873 = vrot.slane %v4851, %v4872
      %v4875 = vunpack.c.l.s4 1966171168
      %v4876 = vunpack.c.0.s8 %v4875
      %v4877 = vlaneseq
      %v4878 = vshrl.u32 %v4877, 7
      %v4879 = vsub.s32 %v4876, %v4878
      %v4880 = vrot.slane %v4852, %v4879
      %v4881 = vcombine.high %v4859, %v4859
      %v4882 = vcombine.high %v4866, %v4866
      %v4883 = vcombine.high %v4873, %v4873
      %v4884 = vcombine.high %v4880, %v4880
      %v4885 = vcombine.high %v4581, %v4581
      %v4887 = vunpack.c.l.s4 1966171168
      %v4888 = vunpack.c.0.s8 %v4887
      %v4889 = vlaneseq
      %v4890 = vshrl.u32 %v4889, 7
      %v4891 = vsub.s32 %v4888, %v4890
      %v4892 = vrot.slane %v4581, %v4891
      %v4894 = vunpack.c.l.s4 1966171168
      %v4895 = vunpack.c.0.s8 %v4894
      %v4896 = vlaneseq
      %v4897 = vshrl.u32 %v4896, 7
      %v4898 = vsub.s32 %v4895, %v4897
      %v4899 = vrot.slane %v4885, %v4898
      %v4900 = vcombine.high %v4892, %v4892
      %v4901 = vcombine.high %v4899, %v4899
      %v4903 = vunpack.c.l.s4 1966171168
      %v4904 = vunpack.c.0.s8 %v4903
      %v4905 = vlaneseq
      %v4906 = vshrl.u32 %v4905, 7
      %v4907 = vsub.s32 %v4904, %v4906
      %v4908 = vrot.slane %v4892, %v4907
      %v4910 = vunpack.c.l.s4 1966171168
      %v4911 = vunpack.c.0.s8 %v4910
      %v4912 = vlaneseq
      %v4913 = vshrl.u32 %v4912, 7
      %v4914 = vsub.s32 %v4911, %v4913
      %v4915 = vrot.slane %v4899, %v4914
      %v4917 = vunpack.c.l.s4 1966171168
      %v4918 = vunpack.c.0.s8 %v4917
      %v4919 = vlaneseq
      %v4920 = vshrl.u32 %v4919, 7
      %v4921 = vsub.s32 %v4918, %v4920
      %v4922 = vrot.slane %v4900, %v4921
      %v4924 = vunpack.c.l.s4 1966171168
      %v4925 = vunpack.c.0.s8 %v4924
      %v4926 = vlaneseq
      %v4927 = vshrl.u32 %v4926, 7
      %v4928 = vsub.s32 %v4925, %v4927
      %v4929 = vrot.slane %v4901, %v4928
      %v4930 = vcombine.high %v4908, %v4908
      %v4931 = vcombine.high %v4915, %v4915
      %v4932 = vcombine.high %v4922, %v4922
      %v4933 = vcombine.high %v4929, %v4929
      %v4934 = vcombine.high %v4582, %v4582
      %v4936 = vunpack.c.l.s4 1966171168
      %v4937 = vunpack.c.0.s8 %v4936
      %v4938 = vlaneseq
      %v4939 = vshrl.u32 %v4938, 7
      %v4940 = vsub.s32 %v4937, %v4939
      %v4941 = vrot.slane %v4582, %v4940
      %v4943 = vunpack.c.l.s4 1966171168
      %v4944 = vunpack.c.0.s8 %v4943
      %v4945 = vlaneseq
      %v4946 = vshrl.u32 %v4945, 7
      %v4947 = vsub.s32 %v4944, %v4946
      %v4948 = vrot.slane %v4934, %v4947
      %v4949 = vcombine.high %v4941, %v4941
      %v4950 = vcombine.high %v4948, %v4948
      %v4952 = vunpack.c.l.s4 1966171168
      %v4953 = vunpack.c.0.s8 %v4952
      %v4954 = vlaneseq
      %v4955 = vshrl.u32 %v4954, 7
      %v4956 = vsub.s32 %v4953, %v4955
      %v4957 = vrot.slane %v4941, %v4956
      %v4959 = vunpack.c.l.s4 1966171168
      %v4960 = vunpack.c.0.s8 %v4959
      %v4961 = vlaneseq
      %v4962 = vshrl.u32 %v4961, 7
      %v4963 = vsub.s32 %v4960, %v4962
      %v4964 = vrot.slane %v4948, %v4963
      %v4966 = vunpack.c.l.s4 1966171168
      %v4967 = vunpack.c.0.s8 %v4966
      %v4968 = vlaneseq
      %v4969 = vshrl.u32 %v4968, 7
      %v4970 = vsub.s32 %v4967, %v4969
      %v4971 = vrot.slane %v4949, %v4970
      %v4973 = vunpack.c.l.s4 1966171168
      %v4974 = vunpack.c.0.s8 %v4973
      %v4975 = vlaneseq
      %v4976 = vshrl.u32 %v4975, 7
      %v4977 = vsub.s32 %v4974, %v4976
      %v4978 = vrot.slane %v4950, %v4977
      %v4979 = vcombine.high %v4957, %v4957
      %v4980 = vcombine.high %v4964, %v4964
      %v4981 = vcombine.high %v4971, %v4971
      %v4982 = vcombine.high %v4978, %v4978
      %v4983 = vlaneseq
      %v4984 = vshrl.u32 %v4983, 7
      %v4985 = vsub.s32 0, %v4984
      %v4986 = vrot.slane %v4614, %v4985
      %v4987 = vlaneseq
      %v4988 = vshrl.u32 %v4987, 7
      %v4989 = vsub.s32 0, %v4988
      %v4990 = vrot.slane %v4628, %v4989
      %v4991 = vlaneseq
      %v4992 = vshrl.u32 %v4991, 7
      %v4993 = vsub.s32 0, %v4992
      %v4994 = vrot.slane %v4636, %v4993
      %v4995 = vlaneseq
      %v4996 = vshrl.u32 %v4995, 7
      %v4997 = vsub.s32 0, %v4996
      %v4998 = vrot.slane %v4638, %v4997
      %v4999 = vlaneseq
      %v5000 = vshrl.u32 %v4999, 7
      %v5001 = vsub.s32 0, %v5000
      %v5002 = vrot.slane %v4621, %v5001
      %v5003 = vlaneseq
      %v5004 = vshrl.u32 %v5003, 7
      %v5005 = vsub.s32 0, %v5004
      %v5006 = vrot.slane %v4635, %v5005
      %v5007 = vlaneseq
      %v5008 = vshrl.u32 %v5007, 7
      %v5009 = vsub.s32 0, %v5008
      %v5010 = vrot.slane %v4637, %v5009
      %v5011 = vlaneseq
      %v5012 = vshrl.u32 %v5011, 7
      %v5013 = vsub.s32 0, %v5012
      %v5014 = vrot.slane %v4639, %v5013
      %v5015 = vlaneseq
      %v5016 = vshrl.u32 %v5015, 7
      %v5017 = vsub.s32 0, %v5016
      %v5018 = vrot.slane %v4663, %v5017
      %v5019 = vlaneseq
      %v5020 = vshrl.u32 %v5019, 7
      %v5021 = vsub.s32 0, %v5020
      %v5022 = vrot.slane %v4677, %v5021
      %v5023 = vlaneseq
      %v5024 = vshrl.u32 %v5023, 7
      %v5025 = vsub.s32 0, %v5024
      %v5026 = vrot.slane %v4685, %v5025
      %v5027 = vlaneseq
      %v5028 = vshrl.u32 %v5027, 7
      %v5029 = vsub.s32 0, %v5028
      %v5030 = vrot.slane %v4687, %v5029
      %v5031 = vlaneseq
      %v5032 = vshrl.u32 %v5031, 7
      %v5033 = vsub.s32 0, %v5032
      %v5034 = vrot.slane %v4670, %v5033
      %v5035 = vlaneseq
      %v5036 = vshrl.u32 %v5035, 7
      %v5037 = vsub.s32 0, %v5036
      %v5038 = vrot.slane %v4684, %v5037
      %v5039 = vlaneseq
      %v5040 = vshrl.u32 %v5039, 7
      %v5041 = vsub.s32 0, %v5040
      %v5042 = vrot.slane %v4686, %v5041
      %v5043 = vlaneseq
      %v5044 = vshrl.u32 %v5043, 7
      %v5045 = vsub.s32 0, %v5044
      %v5046 = vrot.slane %v4688, %v5045
      %v5047 = vlaneseq
      %v5048 = vshrl.u32 %v5047, 7
      %v5049 = vsub.s32 0, %v5048
      %v5050 = vrot.slane %v4712, %v5049
      %v5051 = vlaneseq
      %v5052 = vshrl.u32 %v5051, 7
      %v5053 = vsub.s32 0, %v5052
      %v5054 = vrot.slane %v4726, %v5053
      %v5055 = vlaneseq
      %v5056 = vshrl.u32 %v5055, 7
      %v5057 = vsub.s32 0, %v5056
      %v5058 = vrot.slane %v4734, %v5057
      %v5059 = vlaneseq
      %v5060 = vshrl.u32 %v5059, 7
      %v5061 = vsub.s32 0, %v5060
      %v5062 = vrot.slane %v4736, %v5061
      %v5063 = vlaneseq
      %v5064 = vshrl.u32 %v5063, 7
      %v5065 = vsub.s32 0, %v5064
      %v5066 = vrot.slane %v4719, %v5065
      %v5067 = vlaneseq
      %v5068 = vshrl.u32 %v5067, 7
      %v5069 = vsub.s32 0, %v5068
      %v5070 = vrot.slane %v4733, %v5069
      %v5071 = vlaneseq
      %v5072 = vshrl.u32 %v5071, 7
      %v5073 = vsub.s32 0, %v5072
      %v5074 = vrot.slane %v4735, %v5073
      %v5075 = vlaneseq
      %v5076 = vshrl.u32 %v5075, 7
      %v5077 = vsub.s32 0, %v5076
      %v5078 = vrot.slane %v4737, %v5077
      %v5079 = vlaneseq
      %v5080 = vshrl.u32 %v5079, 7
      %v5081 = vsub.s32 0, %v5080
      %v5082 = vrot.slane %v4761, %v5081
      %v5083 = vlaneseq
      %v5084 = vshrl.u32 %v5083, 7
      %v5085 = vsub.s32 0, %v5084
      %v5086 = vrot.slane %v4775, %v5085
      %v5087 = vlaneseq
      %v5088 = vshrl.u32 %v5087, 7
      %v5089 = vsub.s32 0, %v5088
      %v5090 = vrot.slane %v4783, %v5089
      %v5091 = vlaneseq
      %v5092 = vshrl.u32 %v5091, 7
      %v5093 = vsub.s32 0, %v5092
      %v5094 = vrot.slane %v4785, %v5093
      %v5095 = vlaneseq
      %v5096 = vshrl.u32 %v5095, 7
      %v5097 = vsub.s32 0, %v5096
      %v5098 = vrot.slane %v4768, %v5097
      %v5099 = vlaneseq
      %v5100 = vshrl.u32 %v5099, 7
      %v5101 = vsub.s32 0, %v5100
      %v5102 = vrot.slane %v4782, %v5101
      %v5103 = vlaneseq
      %v5104 = vshrl.u32 %v5103, 7
      %v5105 = vsub.s32 0, %v5104
      %v5106 = vrot.slane %v4784, %v5105
      %v5107 = vlaneseq
      %v5108 = vshrl.u32 %v5107, 7
      %v5109 = vsub.s32 0, %v5108
      %v5110 = vrot.slane %v4786, %v5109
      %v5111 = vlaneseq
      %v5112 = vshrl.u32 %v5111, 7
      %v5113 = vsub.s32 0, %v5112
      %v5114 = vrot.slane %v4810, %v5113
      %v5115 = vlaneseq
      %v5116 = vshrl.u32 %v5115, 7
      %v5117 = vsub.s32 0, %v5116
      %v5118 = vrot.slane %v4824, %v5117
      %v5119 = vlaneseq
      %v5120 = vshrl.u32 %v5119, 7
      %v5121 = vsub.s32 0, %v5120
      %v5122 = vrot.slane %v4832, %v5121
      %v5123 = vlaneseq
      %v5124 = vshrl.u32 %v5123, 7
      %v5125 = vsub.s32 0, %v5124
      %v5126 = vrot.slane %v4834, %v5125
      %v5127 = vlaneseq
      %v5128 = vshrl.u32 %v5127, 7
      %v5129 = vsub.s32 0, %v5128
      %v5130 = vrot.slane %v4817, %v5129
      %v5131 = vlaneseq
      %v5132 = vshrl.u32 %v5131, 7
      %v5133 = vsub.s32 0, %v5132
      %v5134 = vrot.slane %v4831, %v5133
      %v5135 = vlaneseq
      %v5136 = vshrl.u32 %v5135, 7
      %v5137 = vsub.s32 0, %v5136
      %v5138 = vrot.slane %v4833, %v5137
      %v5139 = vlaneseq
      %v5140 = vshrl.u32 %v5139, 7
      %v5141 = vsub.s32 0, %v5140
      %v5142 = vrot.slane %v4835, %v5141
      %v5143 = vlaneseq
      %v5144 = vshrl.u32 %v5143, 7
      %v5145 = vsub.s32 0, %v5144
      %v5146 = vrot.slane %v4859, %v5145
      %v5147 = vlaneseq
      %v5148 = vshrl.u32 %v5147, 7
      %v5149 = vsub.s32 0, %v5148
      %v5150 = vrot.slane %v4873, %v5149
      %v5151 = vlaneseq
      %v5152 = vshrl.u32 %v5151, 7
      %v5153 = vsub.s32 0, %v5152
      %v5154 = vrot.slane %v4881, %v5153
      %v5155 = vlaneseq
      %v5156 = vshrl.u32 %v5155, 7
      %v5157 = vsub.s32 0, %v5156
      %v5158 = vrot.slane %v4883, %v5157
      %v5159 = vlaneseq
      %v5160 = vshrl.u32 %v5159, 7
      %v5161 = vsub.s32 0, %v5160
      %v5162 = vrot.slane %v4866, %v5161
      %v5163 = vlaneseq
      %v5164 = vshrl.u32 %v5163, 7
      %v5165 = vsub.s32 0, %v5164
      %v5166 = vrot.slane %v4880, %v5165
      %v5167 = vlaneseq
      %v5168 = vshrl.u32 %v5167, 7
      %v5169 = vsub.s32 0, %v5168
      %v5170 = vrot.slane %v4882, %v5169
      %v5171 = vlaneseq
      %v5172 = vshrl.u32 %v5171, 7
      %v5173 = vsub.s32 0, %v5172
      %v5174 = vrot.slane %v4884, %v5173
      %v5175 = vlaneseq
      %v5176 = vshrl.u32 %v5175, 7
      %v5177 = vsub.s32 0, %v5176
      %v5178 = vrot.slane %v4908, %v5177
      %v5179 = vlaneseq
      %v5180 = vshrl.u32 %v5179, 7
      %v5181 = vsub.s32 0, %v5180
      %v5182 = vrot.slane %v4922, %v5181
      %v5183 = vlaneseq
      %v5184 = vshrl.u32 %v5183, 7
      %v5185 = vsub.s32 0, %v5184
      %v5186 = vrot.slane %v4930, %v5185
      %v5187 = vlaneseq
      %v5188 = vshrl.u32 %v5187, 7
      %v5189 = vsub.s32 0, %v5188
      %v5190 = vrot.slane %v4932, %v5189
      %v5191 = vlaneseq
      %v5192 = vshrl.u32 %v5191, 7
      %v5193 = vsub.s32 0, %v5192
      %v5194 = vrot.slane %v4915, %v5193
      %v5195 = vlaneseq
      %v5196 = vshrl.u32 %v5195, 7
      %v5197 = vsub.s32 0, %v5196
      %v5198 = vrot.slane %v4929, %v5197
      %v5199 = vlaneseq
      %v5200 = vshrl.u32 %v5199, 7
      %v5201 = vsub.s32 0, %v5200
      %v5202 = vrot.slane %v4931, %v5201
      %v5203 = vlaneseq
      %v5204 = vshrl.u32 %v5203, 7
      %v5205 = vsub.s32 0, %v5204
      %v5206 = vrot.slane %v4933, %v5205
      %v5207 = vlaneseq
      %v5208 = vshrl.u32 %v5207, 7
      %v5209 = vsub.s32 0, %v5208
      %v5210 = vrot.slane %v4957, %v5209
      %v5211 = vlaneseq
      %v5212 = vshrl.u32 %v5211, 7
      %v5213 = vsub.s32 0, %v5212
      %v5214 = vrot.slane %v4971, %v5213
      %v5215 = vlaneseq
      %v5216 = vshrl.u32 %v5215, 7
      %v5217 = vsub.s32 0, %v5216
      %v5218 = vrot.slane %v4979, %v5217
      %v5219 = vlaneseq
      %v5220 = vshrl.u32 %v5219, 7
      %v5221 = vsub.s32 0, %v5220
      %v5222 = vrot.slane %v4981, %v5221
      %v5223 = vlaneseq
      %v5224 = vshrl.u32 %v5223, 7
      %v5225 = vsub.s32 0, %v5224
      %v5226 = vrot.slane %v4964, %v5225
      %v5227 = vlaneseq
      %v5228 = vshrl.u32 %v5227, 7
      %v5229 = vsub.s32 0, %v5228
      %v5230 = vrot.slane %v4978, %v5229
      %v5231 = vlaneseq
      %v5232 = vshrl.u32 %v5231, 7
      %v5233 = vsub.s32 0, %v5232
      %v5234 = vrot.slane %v4980, %v5233
      %v5235 = vlaneseq
      %v5236 = vshrl.u32 %v5235, 7
      %v5237 = vsub.s32 0, %v5236
      %v5238 = vrot.slane %v4982, %v5237
      %v5303 = vmul.f32 %v3877, %v4986
      %v5304 = vmul.f32 %v3881, %v4986
      %v5305 = vmul.f32 %v3888, %v4990
      %v5306 = vmul.f32 %v3892, %v4990
      %v5307 = vmul.f32 %v3899, %v4994
      %v5308 = vmul.f32 %v3903, %v4994
      %v5309 = vmul.f32 %v3910, %v4998
      %v5310 = vmul.f32 %v3914, %v4998
      %v5311 = vmul.f32 %v3921, %v5002
      %v5312 = vmul.f32 %v3925, %v5002
      %v5313 = vmul.f32 %v3932, %v5006
      %v5314 = vmul.f32 %v3936, %v5006
      %v5315 = vmul.f32 %v3943, %v5010
      %v5316 = vmul.f32 %v3947, %v5010
      %v5317 = vmul.f32 %v3954, %v5014
      %v5318 = vmul.f32 %v3958, %v5014
      %v5319 = vmul.f32 %v3965, %v5018
      %v5320 = vmul.f32 %v3969, %v5018
      %v5321 = vmul.f32 %v3976, %v5022
      %v5322 = vmul.f32 %v3980, %v5022
      %v5323 = vmul.f32 %v3987, %v5026
      %v5324 = vmul.f32 %v3991, %v5026
      %v5325 = vmul.f32 %v3998, %v5030
      %v5326 = vmul.f32 %v4002, %v5030
      %v5327 = vmul.f32 %v4009, %v5034
      %v5328 = vmul.f32 %v4013, %v5034
      %v5329 = vmul.f32 %v4020, %v5038
      %v5330 = vmul.f32 %v4024, %v5038
      %v5331 = vmul.f32 %v4031, %v5042
      %v5332 = vmul.f32 %v4035, %v5042
      %v5333 = vmul.f32 %v4042, %v5046
      %v5334 = vmul.f32 %v4046, %v5046
      %v5335 = vmul.f32 %v4053, %v5050
      %v5336 = vmul.f32 %v4057, %v5050
      %v5337 = vmul.f32 %v4064, %v5054
      %v5338 = vmul.f32 %v4068, %v5054
      %v5339 = vmul.f32 %v4075, %v5058
      %v5340 = vmul.f32 %v4079, %v5058
      %v5341 = vmul.f32 %v4086, %v5062
      %v5342 = vmul.f32 %v4090, %v5062
      %v5343 = vmul.f32 %v4097, %v5066
      %v5344 = vmul.f32 %v4101, %v5066
      %v5345 = vmul.f32 %v4108, %v5070
      %v5346 = vmul.f32 %v4112, %v5070
      %v5347 = vmul.f32 %v4119, %v5074
      %v5348 = vmul.f32 %v4123, %v5074
      %v5349 = vmul.f32 %v4130, %v5078
      %v5350 = vmul.f32 %v4134, %v5078
      %v5351 = vmul.f32 %v4141, %v5082
      %v5352 = vmul.f32 %v4145, %v5082
      %v5353 = vmul.f32 %v4152, %v5086
      %v5354 = vmul.f32 %v4156, %v5086
      %v5355 = vmul.f32 %v4163, %v5090
      %v5356 = vmul.f32 %v4167, %v5090
      %v5357 = vmul.f32 %v4174, %v5094
      %v5358 = vmul.f32 %v4178, %v5094
      %v5359 = vmul.f32 %v4185, %v5098
      %v5360 = vmul.f32 %v4189, %v5098
      %v5361 = vmul.f32 %v4196, %v5102
      %v5362 = vmul.f32 %v4200, %v5102
      %v5363 = vmul.f32 %v4207, %v5106
      %v5364 = vmul.f32 %v4211, %v5106
      %v5365 = vmul.f32 %v4218, %v5110
      %v5366 = vmul.f32 %v4222, %v5110
      %v5367 = vmul.f32 %v4229, %v5114
      %v5368 = vmul.f32 %v4233, %v5114
      %v5369 = vmul.f32 %v4240, %v5118
      %v5370 = vmul.f32 %v4244, %v5118
      %v5371 = vmul.f32 %v4251, %v5122
      %v5372 = vmul.f32 %v4255, %v5122
      %v5373 = vmul.f32 %v4262, %v5126
      %v5374 = vmul.f32 %v4266, %v5126
      %v5375 = vmul.f32 %v4273, %v5130
      %v5376 = vmul.f32 %v4277, %v5130
      %v5377 = vmul.f32 %v4284, %v5134
      %v5378 = vmul.f32 %v4288, %v5134
      %v5379 = vmul.f32 %v4295, %v5138
      %v5380 = vmul.f32 %v4299, %v5138
      %v5381 = vmul.f32 %v4306, %v5142
      %v5382 = vmul.f32 %v4310, %v5142
      %v5383 = vmul.f32 %v4317, %v5146
      %v5384 = vmul.f32 %v4321, %v5146
      %v5385 = vmul.f32 %v4328, %v5150
      %v5386 = vmul.f32 %v4332, %v5150
      %v5387 = vmul.f32 %v4339, %v5154
      %v5388 = vmul.f32 %v4343, %v5154
      %v5389 = vmul.f32 %v4350, %v5158
      %v5390 = vmul.f32 %v4354, %v5158
      %v5391 = vmul.f32 %v4361, %v5162
      %v5392 = vmul.f32 %v4365, %v5162
      %v5393 = vmul.f32 %v4372, %v5166
      %v5394 = vmul.f32 %v4376, %v5166
      %v5395 = vmul.f32 %v4383, %v5170
      %v5396 = vmul.f32 %v4387, %v5170
      %v5397 = vmul.f32 %v4394, %v5174
      %v5398 = vmul.f32 %v4398, %v5174
      %v5399 = vmul.f32 %v4405, %v5178
      %v5400 = vmul.f32 %v4409, %v5178
      %v5401 = vmul.f32 %v4416, %v5182
      %v5402 = vmul.f32 %v4420, %v5182
      %v5403 = vmul.f32 %v4427, %v5186
      %v5404 = vmul.f32 %v4431, %v5186
      %v5405 = vmul.f32 %v4438, %v5190
      %v5406 = vmul.f32 %v4442, %v5190
      %v5407 = vmul.f32 %v4449, %v5194
      %v5408 = vmul.f32 %v4453, %v5194
      %v5409 = vmul.f32 %v4460, %v5198
      %v5410 = vmul.f32 %v4464, %v5198
      %v5411 = vmul.f32 %v4471, %v5202
      %v5412 = vmul.f32 %v4475, %v5202
      %v5413 = vmul.f32 %v4482, %v5206
      %v5414 = vmul.f32 %v4486, %v5206
      %v5415 = vmul.f32 %v4493, %v5210
      %v5416 = vmul.f32 %v4497, %v5210
      %v5417 = vmul.f32 %v4504, %v5214
      %v5418 = vmul.f32 %v4508, %v5214
      %v5419 = vmul.f32 %v4515, %v5218
      %v5420 = vmul.f32 %v4519, %v5218
      %v5421 = vmul.f32 %v4526, %v5222
      %v5422 = vmul.f32 %v4530, %v5222
      %v5423 = vmul.f32 %v4537, %v5226
      %v5424 = vmul.f32 %v4541, %v5226
      %v5425 = vmul.f32 %v4548, %v5230
      %v5426 = vmul.f32 %v4552, %v5230
      %v5427 = vmul.f32 %v4559, %v5234
      %v5428 = vmul.f32 %v4563, %v5234
      %v5429 = vmul.f32 %v4570, %v5238
      %v5430 = vmul.f32 %v4574, %v5238
      %5431 = vst.msk [vmem:[#allocation3] sm:$0xff] %vm2209, %v5303
      %5432 = vst.msk [vmem:[#allocation3 + $0x8] sm:$0xff] %vm2209, %v5304
      %5433 = vst.msk [vmem:[#allocation3 + $0x10] sm:$0xff] %vm2209, %v5305
      %5434 = vst.msk [vmem:[#allocation3 + $0x18] sm:$0xff] %vm2209, %v5306
      %5435 = vst.msk [vmem:[#allocation3 + $0x20] sm:$0xff] %vm2209, %v5307
      %5436 = vst.msk [vmem:[#allocation3 + $0x28] sm:$0xff] %vm2209, %v5308
      %5437 = vst.msk [vmem:[#allocation3 + $0x30] sm:$0xff] %vm2209, %v5309
      %5438 = vst.msk [vmem:[#allocation3 + $0x38] sm:$0xff] %vm2209, %v5310
      %5439 = vst.msk [vmem:[#allocation3 + $0x40] sm:$0xff] %vm2209, %v5311
      %5440 = vst.msk [vmem:[#allocation3 + $0x48] sm:$0xff] %vm2209, %v5312
      %5441 = vst.msk [vmem:[#allocation3 + $0x50] sm:$0xff] %vm2209, %v5313
      %5442 = vst.msk [vmem:[#allocation3 + $0x58] sm:$0xff] %vm2209, %v5314
      %5443 = vst.msk [vmem:[#allocation3 + $0x60] sm:$0xff] %vm2209, %v5315
      %5444 = vst.msk [vmem:[#allocation3 + $0x68] sm:$0xff] %vm2209, %v5316
      %5445 = vst.msk [vmem:[#allocation3 + $0x70] sm:$0xff] %vm2209, %v5317
      %5446 = vst.msk [vmem:[#allocation3 + $0x78] sm:$0xff] %vm2209, %v5318
      %5447 = vst.msk [vmem:[#allocation3 + $0x80] sm:$0xff] %vm2209, %v5319
      %5448 = vst.msk [vmem:[#allocation3 + $0x88] sm:$0xff] %vm2209, %v5320
      %5449 = vst.msk [vmem:[#allocation3 + $0x90] sm:$0xff] %vm2209, %v5321
      %5450 = vst.msk [vmem:[#allocation3 + $0x98] sm:$0xff] %vm2209, %v5322
      %5451 = vst.msk [vmem:[#allocation3 + $0xa0] sm:$0xff] %vm2209, %v5323
      %5452 = vst.msk [vmem:[#allocation3 + $0xa8] sm:$0xff] %vm2209, %v5324
      %5453 = vst.msk [vmem:[#allocation3 + $0xb0] sm:$0xff] %vm2209, %v5325
      %5454 = vst.msk [vmem:[#allocation3 + $0xb8] sm:$0xff] %vm2209, %v5326
      %5455 = vst.msk [vmem:[#allocation3 + $0xc0] sm:$0xff] %vm2209, %v5327
      %5456 = vst.msk [vmem:[#allocation3 + $0xc8] sm:$0xff] %vm2209, %v5328
      %5457 = vst.msk [vmem:[#allocation3 + $0xd0] sm:$0xff] %vm2209, %v5329
      %5458 = vst.msk [vmem:[#allocation3 + $0xd8] sm:$0xff] %vm2209, %v5330
      %5459 = vst.msk [vmem:[#allocation3 + $0xe0] sm:$0xff] %vm2209, %v5331
      %5460 = vst.msk [vmem:[#allocation3 + $0xe8] sm:$0xff] %vm2209, %v5332
      %5461 = vst.msk [vmem:[#allocation3 + $0xf0] sm:$0xff] %vm2209, %v5333
      %5462 = vst.msk [vmem:[#allocation3 + $0xf8] sm:$0xff] %vm2209, %v5334
      %5463 = vst.msk [vmem:[#allocation3 + $0x100] sm:$0xff] %vm2209, %v5335
      %5464 = vst.msk [vmem:[#allocation3 + $0x108] sm:$0xff] %vm2209, %v5336
      %5465 = vst.msk [vmem:[#allocation3 + $0x110] sm:$0xff] %vm2209, %v5337
      %5466 = vst.msk [vmem:[#allocation3 + $0x118] sm:$0xff] %vm2209, %v5338
      %5467 = vst.msk [vmem:[#allocation3 + $0x120] sm:$0xff] %vm2209, %v5339
      %5468 = vst.msk [vmem:[#allocation3 + $0x128] sm:$0xff] %vm2209, %v5340
      %5469 = vst.msk [vmem:[#allocation3 + $0x130] sm:$0xff] %vm2209, %v5341
      %5470 = vst.msk [vmem:[#allocation3 + $0x138] sm:$0xff] %vm2209, %v5342
      %5471 = vst.msk [vmem:[#allocation3 + $0x140] sm:$0xff] %vm2209, %v5343
      %5472 = vst.msk [vmem:[#allocation3 + $0x148] sm:$0xff] %vm2209, %v5344
      %5473 = vst.msk [vmem:[#allocation3 + $0x150] sm:$0xff] %vm2209, %v5345
      %5474 = vst.msk [vmem:[#allocation3 + $0x158] sm:$0xff] %vm2209, %v5346
      %5475 = vst.msk [vmem:[#allocation3 + $0x160] sm:$0xff] %vm2209, %v5347
      %5476 = vst.msk [vmem:[#allocation3 + $0x168] sm:$0xff] %vm2209, %v5348
      %5477 = vst.msk [vmem:[#allocation3 + $0x170] sm:$0xff] %vm2209, %v5349
      %5478 = vst.msk [vmem:[#allocation3 + $0x178] sm:$0xff] %vm2209, %v5350
      %5479 = vst.msk [vmem:[#allocation3 + $0x180] sm:$0xff] %vm2209, %v5351
      %5480 = vst.msk [vmem:[#allocation3 + $0x188] sm:$0xff] %vm2209, %v5352
      %5481 = vst.msk [vmem:[#allocation3 + $0x190] sm:$0xff] %vm2209, %v5353
      %5482 = vst.msk [vmem:[#allocation3 + $0x198] sm:$0xff] %vm2209, %v5354
      %5483 = vst.msk [vmem:[#allocation3 + $0x1a0] sm:$0xff] %vm2209, %v5355
      %5484 = vst.msk [vmem:[#allocation3 + $0x1a8] sm:$0xff] %vm2209, %v5356
      %5485 = vst.msk [vmem:[#allocation3 + $0x1b0] sm:$0xff] %vm2209, %v5357
      %5486 = vst.msk [vmem:[#allocation3 + $0x1b8] sm:$0xff] %vm2209, %v5358
      %5487 = vst.msk [vmem:[#allocation3 + $0x1c0] sm:$0xff] %vm2209, %v5359
      %5488 = vst.msk [vmem:[#allocation3 + $0x1c8] sm:$0xff] %vm2209, %v5360
      %5489 = vst.msk [vmem:[#allocation3 + $0x1d0] sm:$0xff] %vm2209, %v5361
      %5490 = vst.msk [vmem:[#allocation3 + $0x1d8] sm:$0xff] %vm2209, %v5362
      %5491 = vst.msk [vmem:[#allocation3 + $0x1e0] sm:$0xff] %vm2209, %v5363
      %5492 = vst.msk [vmem:[#allocation3 + $0x1e8] sm:$0xff] %vm2209, %v5364
      %5493 = vst.msk [vmem:[#allocation3 + $0x1f0] sm:$0xff] %vm2209, %v5365
      %5494 = vst.msk [vmem:[#allocation3 + $0x1f8] sm:$0xff] %vm2209, %v5366
      %5495 = vst.msk [vmem:[#allocation3 + $0x200] sm:$0xff] %vm2209, %v5367
      %5496 = vst.msk [vmem:[#allocation3 + $0x208] sm:$0xff] %vm2209, %v5368
      %5497 = vst.msk [vmem:[#allocation3 + $0x210] sm:$0xff] %vm2209, %v5369
      %5498 = vst.msk [vmem:[#allocation3 + $0x218] sm:$0xff] %vm2209, %v5370
      %5499 = vst.msk [vmem:[#allocation3 + $0x220] sm:$0xff] %vm2209, %v5371
      %5500 = vst.msk [vmem:[#allocation3 + $0x228] sm:$0xff] %vm2209, %v5372
      %5501 = vst.msk [vmem:[#allocation3 + $0x230] sm:$0xff] %vm2209, %v5373
      %5502 = vst.msk [vmem:[#allocation3 + $0x238] sm:$0xff] %vm2209, %v5374
      %5503 = vst.msk [vmem:[#allocation3 + $0x240] sm:$0xff] %vm2209, %v5375
      %5504 = vst.msk [vmem:[#allocation3 + $0x248] sm:$0xff] %vm2209, %v5376
      %5505 = vst.msk [vmem:[#allocation3 + $0x250] sm:$0xff] %vm2209, %v5377
      %5506 = vst.msk [vmem:[#allocation3 + $0x258] sm:$0xff] %vm2209, %v5378
      %5507 = vst.msk [vmem:[#allocation3 + $0x260] sm:$0xff] %vm2209, %v5379
      %5508 = vst.msk [vmem:[#allocation3 + $0x268] sm:$0xff] %vm2209, %v5380
      %5509 = vst.msk [vmem:[#allocation3 + $0x270] sm:$0xff] %vm2209, %v5381
      %5510 = vst.msk [vmem:[#allocation3 + $0x278] sm:$0xff] %vm2209, %v5382
      %5511 = vst.msk [vmem:[#allocation3 + $0x280] sm:$0xff] %vm2209, %v5383
      %5512 = vst.msk [vmem:[#allocation3 + $0x288] sm:$0xff] %vm2209, %v5384
      %5513 = vst.msk [vmem:[#allocation3 + $0x290] sm:$0xff] %vm2209, %v5385
      %5514 = vst.msk [vmem:[#allocation3 + $0x298] sm:$0xff] %vm2209, %v5386
      %5515 = vst.msk [vmem:[#allocation3 + $0x2a0] sm:$0xff] %vm2209, %v5387
      %5516 = vst.msk [vmem:[#allocation3 + $0x2a8] sm:$0xff] %vm2209, %v5388
      %5517 = vst.msk [vmem:[#allocation3 + $0x2b0] sm:$0xff] %vm2209, %v5389
      %5518 = vst.msk [vmem:[#allocation3 + $0x2b8] sm:$0xff] %vm2209, %v5390
      %5519 = vst.msk [vmem:[#allocation3 + $0x2c0] sm:$0xff] %vm2209, %v5391
      %5520 = vst.msk [vmem:[#allocation3 + $0x2c8] sm:$0xff] %vm2209, %v5392
      %5521 = vst.msk [vmem:[#allocation3 + $0x2d0] sm:$0xff] %vm2209, %v5393
      %5522 = vst.msk [vmem:[#allocation3 + $0x2d8] sm:$0xff] %vm2209, %v5394
      %5523 = vst.msk [vmem:[#allocation3 + $0x2e0] sm:$0xff] %vm2209, %v5395
      %5524 = vst.msk [vmem:[#allocation3 + $0x2e8] sm:$0xff] %vm2209, %v5396
      %5525 = vst.msk [vmem:[#allocation3 + $0x2f0] sm:$0xff] %vm2209, %v5397
      %5526 = vst.msk [vmem:[#allocation3 + $0x2f8] sm:$0xff] %vm2209, %v5398
      %5527 = vst.msk [vmem:[#allocation3 + $0x300] sm:$0xff] %vm2209, %v5399
      %5528 = vst.msk [vmem:[#allocation3 + $0x308] sm:$0xff] %vm2209, %v5400
      %5529 = vst.msk [vmem:[#allocation3 + $0x310] sm:$0xff] %vm2209, %v5401
      %5530 = vst.msk [vmem:[#allocation3 + $0x318] sm:$0xff] %vm2209, %v5402
      %5531 = vst.msk [vmem:[#allocation3 + $0x320] sm:$0xff] %vm2209, %v5403
      %5532 = vst.msk [vmem:[#allocation3 + $0x328] sm:$0xff] %vm2209, %v5404
      %5533 = vst.msk [vmem:[#allocation3 + $0x330] sm:$0xff] %vm2209, %v5405
      %5534 = vst.msk [vmem:[#allocation3 + $0x338] sm:$0xff] %vm2209, %v5406
      %5535 = vst.msk [vmem:[#allocation3 + $0x340] sm:$0xff] %vm2209, %v5407
      %5536 = vst.msk [vmem:[#allocation3 + $0x348] sm:$0xff] %vm2209, %v5408
      %5537 = vst.msk [vmem:[#allocation3 + $0x350] sm:$0xff] %vm2209, %v5409
      %5538 = vst.msk [vmem:[#allocation3 + $0x358] sm:$0xff] %vm2209, %v5410
      %5539 = vst.msk [vmem:[#allocation3 + $0x360] sm:$0xff] %vm2209, %v5411
      %5540 = vst.msk [vmem:[#allocation3 + $0x368] sm:$0xff] %vm2209, %v5412
      %5541 = vst.msk [vmem:[#allocation3 + $0x370] sm:$0xff] %vm2209, %v5413
      %5542 = vst.msk [vmem:[#allocation3 + $0x378] sm:$0xff] %vm2209, %v5414
      %5543 = vst.msk [vmem:[#allocation3 + $0x380] sm:$0xff] %vm2209, %v5415
      %5544 = vst.msk [vmem:[#allocation3 + $0x388] sm:$0xff] %vm2209, %v5416
      %5545 = vst.msk [vmem:[#allocation3 + $0x390] sm:$0xff] %vm2209, %v5417
      %5546 = vst.msk [vmem:[#allocation3 + $0x398] sm:$0xff] %vm2209, %v5418
      %5547 = vst.msk [vmem:[#allocation3 + $0x3a0] sm:$0xff] %vm2209, %v5419
      %5548 = vst.msk [vmem:[#allocation3 + $0x3a8] sm:$0xff] %vm2209, %v5420
      %5549 = vst.msk [vmem:[#allocation3 + $0x3b0] sm:$0xff] %vm2209, %v5421
      %5550 = vst.msk [vmem:[#allocation3 + $0x3b8] sm:$0xff] %vm2209, %v5422
      %5551 = vst.msk [vmem:[#allocation3 + $0x3c0] sm:$0xff] %vm2209, %v5423
      %5552 = vst.msk [vmem:[#allocation3 + $0x3c8] sm:$0xff] %vm2209, %v5424
      %5553 = vst.msk [vmem:[#allocation3 + $0x3d0] sm:$0xff] %vm2209, %v5425
      %5554 = vst.msk [vmem:[#allocation3 + $0x3d8] sm:$0xff] %vm2209, %v5426
      %5555 = vst.msk [vmem:[#allocation3 + $0x3e0] sm:$0xff] %vm2209, %v5427
      %5556 = vst.msk [vmem:[#allocation3 + $0x3e8] sm:$0xff] %vm2209, %v5428
      %5557 = vst.msk [vmem:[#allocation3 + $0x3f0] sm:$0xff] %vm2209, %v5429
      %5558 = vst.msk [vmem:[#allocation3 + $0x3f8] sm:$0xff] %vm2209, %v5430
      loop: start=0, step=1, limit=64
      $region117: #{cross_mamba_forward.1} parent=115 // loop_pre_header
        _
      $region118: #{cross_mamba_forward.1} parent=115 // loop_header
        %s5560 = sphi 0, %s5564
        %p5561 = scmp.ge.s32.totalorder %s5560, 64
        %v5565 = vphi 0.0, %v5576
        %v5566 = vphi 0.0, %v5577
      $region119: #{cross_mamba_forward.1} parent=115 // loop_header_branch
        %5563 = sbr.rel (%p5561) target = $region123
      $region120: #{cross_mamba_forward.1} parent=115 // loop_body
        %s5567 = smul.u32 %s5560, 16
        %s5568 = scalar_lea.vmem [#allocation2], %s5567
        %v5569 = vld [vmem:[%s5568] sm:$0xff]
        %v5570 = vld [vmem:[%s5568 + $0x8] sm:$0xff]
        %v5571 = vmul.f32 %v5569, %v5565
        %v5572 = vmul.f32 %v5570, %v5566
        %s5573 = scalar_lea.vmem [#allocation3], %s5567
        %v5574 = vld [vmem:[%s5573] sm:$0xff]
        %v5575 = vld [vmem:[%s5573 + $0x8] sm:$0xff]
        %v5576 = vadd.f32 %v5571, %v5574
        %v5577 = vadd.f32 %v5572, %v5575
        %s5578 = scalar_lea.vmem [#allocation4], %s5567
        %5579 = vst.msk [vmem:[%s5578] sm:$0xff] %vm2209, %v5576
        %5580 = vst.msk [vmem:[%s5578 + $0x8] sm:$0xff] %vm2209, %v5577
      $region121: #{cross_mamba_forward.1} parent=115 // loop_footer
        %s5564 = sadd.s32 1, %s5560
      $region122: #{cross_mamba_forward.1} parent=115 // loop_footer_branch
        %5559 = sbr.rel target = $region118
      $region123: #{cross_mamba_forward.1} parent=115 // loop_exit
        _
      %v5581 = vld [vmem:[#allocation4] sm:$0xff]
      %v5582 = vld [vmem:[#allocation4 + $0x8] sm:$0xff]
      %v5583 = vld [vmem:[#allocation4 + $0x10] sm:$0xff]
      %v5584 = vld [vmem:[#allocation4 + $0x18] sm:$0xff]
      %v5585 = vld [vmem:[#allocation4 + $0x20] sm:$0xff]
      %v5586 = vld [vmem:[#allocation4 + $0x28] sm:$0xff]
      %v5587 = vld [vmem:[#allocation4 + $0x30] sm:$0xff]
      %v5588 = vld [vmem:[#allocation4 + $0x38] sm:$0xff]
      %v5589 = vld [vmem:[#allocation4 + $0x40] sm:$0xff]
      %v5590 = vld [vmem:[#allocation4 + $0x48] sm:$0xff]
      %v5591 = vld [vmem:[#allocation4 + $0x50] sm:$0xff]
      %v5592 = vld [vmem:[#allocation4 + $0x58] sm:$0xff]
      %v5593 = vld [vmem:[#allocation4 + $0x60] sm:$0xff]
      %v5594 = vld [vmem:[#allocation4 + $0x68] sm:$0xff]
      %v5595 = vld [vmem:[#allocation4 + $0x70] sm:$0xff]
      %v5596 = vld [vmem:[#allocation4 + $0x78] sm:$0xff]
      %v5597 = vld [vmem:[#allocation4 + $0x80] sm:$0xff]
      %v5598 = vld [vmem:[#allocation4 + $0x88] sm:$0xff]
      %v5599 = vld [vmem:[#allocation4 + $0x90] sm:$0xff]
      %v5600 = vld [vmem:[#allocation4 + $0x98] sm:$0xff]
      %v5601 = vld [vmem:[#allocation4 + $0xa0] sm:$0xff]
      %v5602 = vld [vmem:[#allocation4 + $0xa8] sm:$0xff]
      %v5603 = vld [vmem:[#allocation4 + $0xb0] sm:$0xff]
      %v5604 = vld [vmem:[#allocation4 + $0xb8] sm:$0xff]
      %v5605 = vld [vmem:[#allocation4 + $0xc0] sm:$0xff]
      %v5606 = vld [vmem:[#allocation4 + $0xc8] sm:$0xff]
      %v5607 = vld [vmem:[#allocation4 + $0xd0] sm:$0xff]
      %v5608 = vld [vmem:[#allocation4 + $0xd8] sm:$0xff]
      %v5609 = vld [vmem:[#allocation4 + $0xe0] sm:$0xff]
      %v5610 = vld [vmem:[#allocation4 + $0xe8] sm:$0xff]
      %v5611 = vld [vmem:[#allocation4 + $0xf0] sm:$0xff]
      %v5612 = vld [vmem:[#allocation4 + $0xf8] sm:$0xff]
      %v5613 = vld [vmem:[#allocation4 + $0x100] sm:$0xff]
      %v5614 = vld [vmem:[#allocation4 + $0x108] sm:$0xff]
      %v5615 = vld [vmem:[#allocation4 + $0x110] sm:$0xff]
      %v5616 = vld [vmem:[#allocation4 + $0x118] sm:$0xff]
      %v5617 = vld [vmem:[#allocation4 + $0x120] sm:$0xff]
      %v5618 = vld [vmem:[#allocation4 + $0x128] sm:$0xff]
      %v5619 = vld [vmem:[#allocation4 + $0x130] sm:$0xff]
      %v5620 = vld [vmem:[#allocation4 + $0x138] sm:$0xff]
      %v5621 = vld [vmem:[#allocation4 + $0x140] sm:$0xff]
      %v5622 = vld [vmem:[#allocation4 + $0x148] sm:$0xff]
      %v5623 = vld [vmem:[#allocation4 + $0x150] sm:$0xff]
      %v5624 = vld [vmem:[#allocation4 + $0x158] sm:$0xff]
      %v5625 = vld [vmem:[#allocation4 + $0x160] sm:$0xff]
      %v5626 = vld [vmem:[#allocation4 + $0x168] sm:$0xff]
      %v5627 = vld [vmem:[#allocation4 + $0x170] sm:$0xff]
      %v5628 = vld [vmem:[#allocation4 + $0x178] sm:$0xff]
      %v5629 = vld [vmem:[#allocation4 + $0x180] sm:$0xff]
      %v5630 = vld [vmem:[#allocation4 + $0x188] sm:$0xff]
      %v5631 = vld [vmem:[#allocation4 + $0x190] sm:$0xff]
      %v5632 = vld [vmem:[#allocation4 + $0x198] sm:$0xff]
      %v5633 = vld [vmem:[#allocation4 + $0x1a0] sm:$0xff]
      %v5634 = vld [vmem:[#allocation4 + $0x1a8] sm:$0xff]
      %v5635 = vld [vmem:[#allocation4 + $0x1b0] sm:$0xff]
      %v5636 = vld [vmem:[#allocation4 + $0x1b8] sm:$0xff]
      %v5637 = vld [vmem:[#allocation4 + $0x1c0] sm:$0xff]
      %v5638 = vld [vmem:[#allocation4 + $0x1c8] sm:$0xff]
      %v5639 = vld [vmem:[#allocation4 + $0x1d0] sm:$0xff]
      %v5640 = vld [vmem:[#allocation4 + $0x1d8] sm:$0xff]
      %v5641 = vld [vmem:[#allocation4 + $0x1e0] sm:$0xff]
      %v5642 = vld [vmem:[#allocation4 + $0x1e8] sm:$0xff]
      %v5643 = vld [vmem:[#allocation4 + $0x1f0] sm:$0xff]
      %v5644 = vld [vmem:[#allocation4 + $0x1f8] sm:$0xff]
      %v5645 = vld [vmem:[#allocation4 + $0x200] sm:$0xff]
      %v5646 = vld [vmem:[#allocation4 + $0x208] sm:$0xff]
      %v5647 = vld [vmem:[#allocation4 + $0x210] sm:$0xff]
      %v5648 = vld [vmem:[#allocation4 + $0x218] sm:$0xff]
      %v5649 = vld [vmem:[#allocation4 + $0x220] sm:$0xff]
      %v5650 = vld [vmem:[#allocation4 + $0x228] sm:$0xff]
      %v5651 = vld [vmem:[#allocation4 + $0x230] sm:$0xff]
      %v5652 = vld [vmem:[#allocation4 + $0x238] sm:$0xff]
      %v5653 = vld [vmem:[#allocation4 + $0x240] sm:$0xff]
      %v5654 = vld [vmem:[#allocation4 + $0x248] sm:$0xff]
      %v5655 = vld [vmem:[#allocation4 + $0x250] sm:$0xff]
      %v5656 = vld [vmem:[#allocation4 + $0x258] sm:$0xff]
      %v5657 = vld [vmem:[#allocation4 + $0x260] sm:$0xff]
      %v5658 = vld [vmem:[#allocation4 + $0x268] sm:$0xff]
      %v5659 = vld [vmem:[#allocation4 + $0x270] sm:$0xff]
      %v5660 = vld [vmem:[#allocation4 + $0x278] sm:$0xff]
      %v5661 = vld [vmem:[#allocation4 + $0x280] sm:$0xff]
      %v5662 = vld [vmem:[#allocation4 + $0x288] sm:$0xff]
      %v5663 = vld [vmem:[#allocation4 + $0x290] sm:$0xff]
      %v5664 = vld [vmem:[#allocation4 + $0x298] sm:$0xff]
      %v5665 = vld [vmem:[#allocation4 + $0x2a0] sm:$0xff]
      %v5666 = vld [vmem:[#allocation4 + $0x2a8] sm:$0xff]
      %v5667 = vld [vmem:[#allocation4 + $0x2b0] sm:$0xff]
      %v5668 = vld [vmem:[#allocation4 + $0x2b8] sm:$0xff]
      %v5669 = vld [vmem:[#allocation4 + $0x2c0] sm:$0xff]
      %v5670 = vld [vmem:[#allocation4 + $0x2c8] sm:$0xff]
      %v5671 = vld [vmem:[#allocation4 + $0x2d0] sm:$0xff]
      %v5672 = vld [vmem:[#allocation4 + $0x2d8] sm:$0xff]
      %v5673 = vld [vmem:[#allocation4 + $0x2e0] sm:$0xff]
      %v5674 = vld [vmem:[#allocation4 + $0x2e8] sm:$0xff]
      %v5675 = vld [vmem:[#allocation4 + $0x2f0] sm:$0xff]
      %v5676 = vld [vmem:[#allocation4 + $0x2f8] sm:$0xff]
      %v5677 = vld [vmem:[#allocation4 + $0x300] sm:$0xff]
      %v5678 = vld [vmem:[#allocation4 + $0x308] sm:$0xff]
      %v5679 = vld [vmem:[#allocation4 + $0x310] sm:$0xff]
      %v5680 = vld [vmem:[#allocation4 + $0x318] sm:$0xff]
      %v5681 = vld [vmem:[#allocation4 + $0x320] sm:$0xff]
      %v5682 = vld [vmem:[#allocation4 + $0x328] sm:$0xff]
      %v5683 = vld [vmem:[#allocation4 + $0x330] sm:$0xff]
      %v5684 = vld [vmem:[#allocation4 + $0x338] sm:$0xff]
      %v5685 = vld [vmem:[#allocation4 + $0x340] sm:$0xff]
      %v5686 = vld [vmem:[#allocation4 + $0x348] sm:$0xff]
      %v5687 = vld [vmem:[#allocation4 + $0x350] sm:$0xff]
      %v5688 = vld [vmem:[#allocation4 + $0x358] sm:$0xff]
      %v5689 = vld [vmem:[#allocation4 + $0x360] sm:$0xff]
      %v5690 = vld [vmem:[#allocation4 + $0x368] sm:$0xff]
      %v5691 = vld [vmem:[#allocation4 + $0x370] sm:$0xff]
      %v5692 = vld [vmem:[#allocation4 + $0x378] sm:$0xff]
      %v5693 = vld [vmem:[#allocation4 + $0x380] sm:$0xff]
      %v5694 = vld [vmem:[#allocation4 + $0x388] sm:$0xff]
      %v5695 = vld [vmem:[#allocation4 + $0x390] sm:$0xff]
      %v5696 = vld [vmem:[#allocation4 + $0x398] sm:$0xff]
      %v5697 = vld [vmem:[#allocation4 + $0x3a0] sm:$0xff]
      %v5698 = vld [vmem:[#allocation4 + $0x3a8] sm:$0xff]
      %v5699 = vld [vmem:[#allocation4 + $0x3b0] sm:$0xff]
      %v5700 = vld [vmem:[#allocation4 + $0x3b8] sm:$0xff]
      %v5701 = vld [vmem:[#allocation4 + $0x3c0] sm:$0xff]
      %v5702 = vld [vmem:[#allocation4 + $0x3c8] sm:$0xff]
      %v5703 = vld [vmem:[#allocation4 + $0x3d0] sm:$0xff]
      %v5704 = vld [vmem:[#allocation4 + $0x3d8] sm:$0xff]
      %v5705 = vld [vmem:[#allocation4 + $0x3e0] sm:$0xff]
      %v5706 = vld [vmem:[#allocation4 + $0x3e8] sm:$0xff]
      %v5707 = vld [vmem:[#allocation4 + $0x3f0] sm:$0xff]
      %v5708 = vld [vmem:[#allocation4 + $0x3f8] sm:$0xff]
      %v5709 = vlaneseq
      %v5710 = vshrl.u32 %v5709, 7
      %v5711 = vsub.s32 0, %v5710
      %v5712 = vrot.slane %v2599, %v5711
      %5714 = vbcast.lane.b32.xlu0 %v5712, 256
      %v5715 = vpop.permute.xlu0 %5714
      %s5717 = sor.u32 256, 8
      %5718 = vbcast.lane.b32.xlu0 %v5712, %s5717
      %v5719 = vpop.permute.xlu0 %5718
      %v5720 = vlaneseq
      %v5721 = vshrl.u32 %v5720, 7
      %v5722 = vsub.s32 1, %v5721
      %v5723 = vrot.slane %v2599, %v5722
      %5725 = vbcast.lane.b32.xlu0 %v5723, 256
      %v5726 = vpop.permute.xlu0 %5725
      %s5728 = sor.u32 256, 8
      %5729 = vbcast.lane.b32.xlu0 %v5723, %s5728
      %v5730 = vpop.permute.xlu0 %5729
      %v5731 = vlaneseq
      %v5732 = vshrl.u32 %v5731, 7
      %v5733 = vsub.s32 2, %v5732
      %v5734 = vrot.slane %v2599, %v5733
      %5736 = vbcast.lane.b32.xlu0 %v5734, 256
      %v5737 = vpop.permute.xlu0 %5736
      %s5739 = sor.u32 256, 8
      %5740 = vbcast.lane.b32.xlu0 %v5734, %s5739
      %v5741 = vpop.permute.xlu0 %5740
      %v5742 = vlaneseq
      %v5743 = vshrl.u32 %v5742, 7
      %v5744 = vsub.s32 3, %v5743
      %v5745 = vrot.slane %v2599, %v5744
      %5747 = vbcast.lane.b32.xlu0 %v5745, 256
      %v5748 = vpop.permute.xlu0 %5747
      %s5750 = sor.u32 256, 8
      %5751 = vbcast.lane.b32.xlu0 %v5745, %s5750
      %v5752 = vpop.permute.xlu0 %5751
      %v5753 = vlaneseq
      %v5754 = vshrl.u32 %v5753, 7
      %v5755 = vsub.s32 4, %v5754
      %v5756 = vrot.slane %v2599, %v5755
      %5758 = vbcast.lane.b32.xlu0 %v5756, 256
      %v5759 = vpop.permute.xlu0 %5758
      %s5761 = sor.u32 256, 8
      %5762 = vbcast.lane.b32.xlu0 %v5756, %s5761
      %v5763 = vpop.permute.xlu0 %5762
      %v5764 = vlaneseq
      %v5765 = vshrl.u32 %v5764, 7
      %v5766 = vsub.s32 5, %v5765
      %v5767 = vrot.slane %v2599, %v5766
      %5769 = vbcast.lane.b32.xlu0 %v5767, 256
      %v5770 = vpop.permute.xlu0 %5769
      %s5772 = sor.u32 256, 8
      %5773 = vbcast.lane.b32.xlu0 %v5767, %s5772
      %v5774 = vpop.permute.xlu0 %5773
      %v5775 = vlaneseq
      %v5776 = vshrl.u32 %v5775, 7
      %v5777 = vsub.s32 6, %v5776
      %v5778 = vrot.slane %v2599, %v5777
      %5780 = vbcast.lane.b32.xlu0 %v5778, 256
      %v5781 = vpop.permute.xlu0 %5780
      %s5783 = sor.u32 256, 8
      %5784 = vbcast.lane.b32.xlu0 %v5778, %s5783
      %v5785 = vpop.permute.xlu0 %5784
      %v5786 = vlaneseq
      %v5787 = vshrl.u32 %v5786, 7
      %v5788 = vsub.s32 7, %v5787
      %v5789 = vrot.slane %v2599, %v5788
      %5791 = vbcast.lane.b32.xlu0 %v5789, 256
      %v5792 = vpop.permute.xlu0 %5791
      %s5794 = sor.u32 256, 8
      %5795 = vbcast.lane.b32.xlu0 %v5789, %s5794
      %v5796 = vpop.permute.xlu0 %5795
      %v5797 = vlaneseq
      %v5798 = vshrl.u32 %v5797, 7
      %v5799 = vsub.s32 0, %v5798
      %v5800 = vrot.slane %v2604, %v5799
      %5802 = vbcast.lane.b32.xlu0 %v5800, 256
      %v5803 = vpop.permute.xlu0 %5802
      %s5805 = sor.u32 256, 8
      %5806 = vbcast.lane.b32.xlu0 %v5800, %s5805
      %v5807 = vpop.permute.xlu0 %5806
      %v5808 = vlaneseq
      %v5809 = vshrl.u32 %v5808, 7
      %v5810 = vsub.s32 1, %v5809
      %v5811 = vrot.slane %v2604, %v5810
      %5813 = vbcast.lane.b32.xlu0 %v5811, 256
      %v5814 = vpop.permute.xlu0 %5813
      %s5816 = sor.u32 256, 8
      %5817 = vbcast.lane.b32.xlu0 %v5811, %s5816
      %v5818 = vpop.permute.xlu0 %5817
      %v5819 = vlaneseq
      %v5820 = vshrl.u32 %v5819, 7
      %v5821 = vsub.s32 2, %v5820
      %v5822 = vrot.slane %v2604, %v5821
      %5824 = vbcast.lane.b32.xlu0 %v5822, 256
      %v5825 = vpop.permute.xlu0 %5824
      %s5827 = sor.u32 256, 8
      %5828 = vbcast.lane.b32.xlu0 %v5822, %s5827
      %v5829 = vpop.permute.xlu0 %5828
      %v5830 = vlaneseq
      %v5831 = vshrl.u32 %v5830, 7
      %v5832 = vsub.s32 3, %v5831
      %v5833 = vrot.slane %v2604, %v5832
      %5835 = vbcast.lane.b32.xlu0 %v5833, 256
      %v5836 = vpop.permute.xlu0 %5835
      %s5838 = sor.u32 256, 8
      %5839 = vbcast.lane.b32.xlu0 %v5833, %s5838
      %v5840 = vpop.permute.xlu0 %5839
      %v5841 = vlaneseq
      %v5842 = vshrl.u32 %v5841, 7
      %v5843 = vsub.s32 4, %v5842
      %v5844 = vrot.slane %v2604, %v5843
      %5846 = vbcast.lane.b32.xlu0 %v5844, 256
      %v5847 = vpop.permute.xlu0 %5846
      %s5849 = sor.u32 256, 8
      %5850 = vbcast.lane.b32.xlu0 %v5844, %s5849
      %v5851 = vpop.permute.xlu0 %5850
      %v5852 = vlaneseq
      %v5853 = vshrl.u32 %v5852, 7
      %v5854 = vsub.s32 5, %v5853
      %v5855 = vrot.slane %v2604, %v5854
      %5857 = vbcast.lane.b32.xlu0 %v5855, 256
      %v5858 = vpop.permute.xlu0 %5857
      %s5860 = sor.u32 256, 8
      %5861 = vbcast.lane.b32.xlu0 %v5855, %s5860
      %v5862 = vpop.permute.xlu0 %5861
      %v5863 = vlaneseq
      %v5864 = vshrl.u32 %v5863, 7
      %v5865 = vsub.s32 6, %v5864
      %v5866 = vrot.slane %v2604, %v5865
      %5868 = vbcast.lane.b32.xlu0 %v5866, 256
      %v5869 = vpop.permute.xlu0 %5868
      %s5871 = sor.u32 256, 8
      %5872 = vbcast.lane.b32.xlu0 %v5866, %s5871
      %v5873 = vpop.permute.xlu0 %5872
      %v5874 = vlaneseq
      %v5875 = vshrl.u32 %v5874, 7
      %v5876 = vsub.s32 7, %v5875
      %v5877 = vrot.slane %v2604, %v5876
      %5879 = vbcast.lane.b32.xlu0 %v5877, 256
      %v5880 = vpop.permute.xlu0 %5879
      %s5882 = sor.u32 256, 8
      %5883 = vbcast.lane.b32.xlu0 %v5877, %s5882
      %v5884 = vpop.permute.xlu0 %5883
      %v5885 = vlaneseq
      %v5886 = vshrl.u32 %v5885, 7
      %v5887 = vsub.s32 0, %v5886
      %v5888 = vrot.slane %v2609, %v5887
      %5890 = vbcast.lane.b32.xlu0 %v5888, 256
      %v5891 = vpop.permute.xlu0 %5890
      %s5893 = sor.u32 256, 8
      %5894 = vbcast.lane.b32.xlu0 %v5888, %s5893
      %v5895 = vpop.permute.xlu0 %5894
      %v5896 = vlaneseq
      %v5897 = vshrl.u32 %v5896, 7
      %v5898 = vsub.s32 1, %v5897
      %v5899 = vrot.slane %v2609, %v5898
      %5901 = vbcast.lane.b32.xlu0 %v5899, 256
      %v5902 = vpop.permute.xlu0 %5901
      %s5904 = sor.u32 256, 8
      %5905 = vbcast.lane.b32.xlu0 %v5899, %s5904
      %v5906 = vpop.permute.xlu0 %5905
      %v5907 = vlaneseq
      %v5908 = vshrl.u32 %v5907, 7
      %v5909 = vsub.s32 2, %v5908
      %v5910 = vrot.slane %v2609, %v5909
      %5912 = vbcast.lane.b32.xlu0 %v5910, 256
      %v5913 = vpop.permute.xlu0 %5912
      %s5915 = sor.u32 256, 8
      %5916 = vbcast.lane.b32.xlu0 %v5910, %s5915
      %v5917 = vpop.permute.xlu0 %5916
      %v5918 = vlaneseq
      %v5919 = vshrl.u32 %v5918, 7
      %v5920 = vsub.s32 3, %v5919
      %v5921 = vrot.slane %v2609, %v5920
      %5923 = vbcast.lane.b32.xlu0 %v5921, 256
      %v5924 = vpop.permute.xlu0 %5923
      %s5926 = sor.u32 256, 8
      %5927 = vbcast.lane.b32.xlu0 %v5921, %s5926
      %v5928 = vpop.permute.xlu0 %5927
      %v5929 = vlaneseq
      %v5930 = vshrl.u32 %v5929, 7
      %v5931 = vsub.s32 4, %v5930
      %v5932 = vrot.slane %v2609, %v5931
      %5934 = vbcast.lane.b32.xlu0 %v5932, 256
      %v5935 = vpop.permute.xlu0 %5934
      %s5937 = sor.u32 256, 8
      %5938 = vbcast.lane.b32.xlu0 %v5932, %s5937
      %v5939 = vpop.permute.xlu0 %5938
      %v5940 = vlaneseq
      %v5941 = vshrl.u32 %v5940, 7
      %v5942 = vsub.s32 5, %v5941
      %v5943 = vrot.slane %v2609, %v5942
      %5945 = vbcast.lane.b32.xlu0 %v5943, 256
      %v5946 = vpop.permute.xlu0 %5945
      %s5948 = sor.u32 256, 8
      %5949 = vbcast.lane.b32.xlu0 %v5943, %s5948
      %v5950 = vpop.permute.xlu0 %5949
      %v5951 = vlaneseq
      %v5952 = vshrl.u32 %v5951, 7
      %v5953 = vsub.s32 6, %v5952
      %v5954 = vrot.slane %v2609, %v5953
      %5956 = vbcast.lane.b32.xlu0 %v5954, 256
      %v5957 = vpop.permute.xlu0 %5956
      %s5959 = sor.u32 256, 8
      %5960 = vbcast.lane.b32.xlu0 %v5954, %s5959
      %v5961 = vpop.permute.xlu0 %5960
      %v5962 = vlaneseq
      %v5963 = vshrl.u32 %v5962, 7
      %v5964 = vsub.s32 7, %v5963
      %v5965 = vrot.slane %v2609, %v5964
      %5967 = vbcast.lane.b32.xlu0 %v5965, 256
      %v5968 = vpop.permute.xlu0 %5967
      %s5970 = sor.u32 256, 8
      %5971 = vbcast.lane.b32.xlu0 %v5965, %s5970
      %v5972 = vpop.permute.xlu0 %5971
      %v5973 = vlaneseq
      %v5974 = vshrl.u32 %v5973, 7
      %v5975 = vsub.s32 0, %v5974
      %v5976 = vrot.slane %v2614, %v5975
      %5978 = vbcast.lane.b32.xlu0 %v5976, 256
      %v5979 = vpop.permute.xlu0 %5978
      %s5981 = sor.u32 256, 8
      %5982 = vbcast.lane.b32.xlu0 %v5976, %s5981
      %v5983 = vpop.permute.xlu0 %5982
      %v5984 = vlaneseq
      %v5985 = vshrl.u32 %v5984, 7
      %v5986 = vsub.s32 1, %v5985
      %v5987 = vrot.slane %v2614, %v5986
      %5989 = vbcast.lane.b32.xlu0 %v5987, 256
      %v5990 = vpop.permute.xlu0 %5989
      %s5992 = sor.u32 256, 8
      %5993 = vbcast.lane.b32.xlu0 %v5987, %s5992
      %v5994 = vpop.permute.xlu0 %5993
      %v5995 = vlaneseq
      %v5996 = vshrl.u32 %v5995, 7
      %v5997 = vsub.s32 2, %v5996
      %v5998 = vrot.slane %v2614, %v5997
      %6000 = vbcast.lane.b32.xlu0 %v5998, 256
      %v6001 = vpop.permute.xlu0 %6000
      %s6003 = sor.u32 256, 8
      %6004 = vbcast.lane.b32.xlu0 %v5998, %s6003
      %v6005 = vpop.permute.xlu0 %6004
      %v6006 = vlaneseq
      %v6007 = vshrl.u32 %v6006, 7
      %v6008 = vsub.s32 3, %v6007
      %v6009 = vrot.slane %v2614, %v6008
      %6011 = vbcast.lane.b32.xlu0 %v6009, 256
      %v6012 = vpop.permute.xlu0 %6011
      %s6014 = sor.u32 256, 8
      %6015 = vbcast.lane.b32.xlu0 %v6009, %s6014
      %v6016 = vpop.permute.xlu0 %6015
      %v6017 = vlaneseq
      %v6018 = vshrl.u32 %v6017, 7
      %v6019 = vsub.s32 4, %v6018
      %v6020 = vrot.slane %v2614, %v6019
      %6022 = vbcast.lane.b32.xlu0 %v6020, 256
      %v6023 = vpop.permute.xlu0 %6022
      %s6025 = sor.u32 256, 8
      %6026 = vbcast.lane.b32.xlu0 %v6020, %s6025
      %v6027 = vpop.permute.xlu0 %6026
      %v6028 = vlaneseq
      %v6029 = vshrl.u32 %v6028, 7
      %v6030 = vsub.s32 5, %v6029
      %v6031 = vrot.slane %v2614, %v6030
      %6033 = vbcast.lane.b32.xlu0 %v6031, 256
      %v6034 = vpop.permute.xlu0 %6033
      %s6036 = sor.u32 256, 8
      %6037 = vbcast.lane.b32.xlu0 %v6031, %s6036
      %v6038 = vpop.permute.xlu0 %6037
      %v6039 = vlaneseq
      %v6040 = vshrl.u32 %v6039, 7
      %v6041 = vsub.s32 6, %v6040
      %v6042 = vrot.slane %v2614, %v6041
      %6044 = vbcast.lane.b32.xlu0 %v6042, 256
      %v6045 = vpop.permute.xlu0 %6044
      %s6047 = sor.u32 256, 8
      %6048 = vbcast.lane.b32.xlu0 %v6042, %s6047
      %v6049 = vpop.permute.xlu0 %6048
      %v6050 = vlaneseq
      %v6051 = vshrl.u32 %v6050, 7
      %v6052 = vsub.s32 7, %v6051
      %v6053 = vrot.slane %v2614, %v6052
      %6055 = vbcast.lane.b32.xlu0 %v6053, 256
      %v6056 = vpop.permute.xlu0 %6055
      %s6058 = sor.u32 256, 8
      %6059 = vbcast.lane.b32.xlu0 %v6053, %s6058
      %v6060 = vpop.permute.xlu0 %6059
      %v6061 = vlaneseq
      %v6062 = vshrl.u32 %v6061, 7
      %v6063 = vsub.s32 0, %v6062
      %v6064 = vrot.slane %v2619, %v6063
      %6066 = vbcast.lane.b32.xlu0 %v6064, 256
      %v6067 = vpop.permute.xlu0 %6066
      %s6069 = sor.u32 256, 8
      %6070 = vbcast.lane.b32.xlu0 %v6064, %s6069
      %v6071 = vpop.permute.xlu0 %6070
      %v6072 = vlaneseq
      %v6073 = vshrl.u32 %v6072, 7
      %v6074 = vsub.s32 1, %v6073
      %v6075 = vrot.slane %v2619, %v6074
      %6077 = vbcast.lane.b32.xlu0 %v6075, 256
      %v6078 = vpop.permute.xlu0 %6077
      %s6080 = sor.u32 256, 8
      %6081 = vbcast.lane.b32.xlu0 %v6075, %s6080
      %v6082 = vpop.permute.xlu0 %6081
      %v6083 = vlaneseq
      %v6084 = vshrl.u32 %v6083, 7
      %v6085 = vsub.s32 2, %v6084
      %v6086 = vrot.slane %v2619, %v6085
      %6088 = vbcast.lane.b32.xlu0 %v6086, 256
      %v6089 = vpop.permute.xlu0 %6088
      %s6091 = sor.u32 256, 8
      %6092 = vbcast.lane.b32.xlu0 %v6086, %s6091
      %v6093 = vpop.permute.xlu0 %6092
      %v6094 = vlaneseq
      %v6095 = vshrl.u32 %v6094, 7
      %v6096 = vsub.s32 3, %v6095
      %v6097 = vrot.slane %v2619, %v6096
      %6099 = vbcast.lane.b32.xlu0 %v6097, 256
      %v6100 = vpop.permute.xlu0 %6099
      %s6102 = sor.u32 256, 8
      %6103 = vbcast.lane.b32.xlu0 %v6097, %s6102
      %v6104 = vpop.permute.xlu0 %6103
      %v6105 = vlaneseq
      %v6106 = vshrl.u32 %v6105, 7
      %v6107 = vsub.s32 4, %v6106
      %v6108 = vrot.slane %v2619, %v6107
      %6110 = vbcast.lane.b32.xlu0 %v6108, 256
      %v6111 = vpop.permute.xlu0 %6110
      %s6113 = sor.u32 256, 8
      %6114 = vbcast.lane.b32.xlu0 %v6108, %s6113
      %v6115 = vpop.permute.xlu0 %6114
      %v6116 = vlaneseq
      %v6117 = vshrl.u32 %v6116, 7
      %v6118 = vsub.s32 5, %v6117
      %v6119 = vrot.slane %v2619, %v6118
      %6121 = vbcast.lane.b32.xlu0 %v6119, 256
      %v6122 = vpop.permute.xlu0 %6121
      %s6124 = sor.u32 256, 8
      %6125 = vbcast.lane.b32.xlu0 %v6119, %s6124
      %v6126 = vpop.permute.xlu0 %6125
      %v6127 = vlaneseq
      %v6128 = vshrl.u32 %v6127, 7
      %v6129 = vsub.s32 6, %v6128
      %v6130 = vrot.slane %v2619, %v6129
      %6132 = vbcast.lane.b32.xlu0 %v6130, 256
      %v6133 = vpop.permute.xlu0 %6132
      %s6135 = sor.u32 256, 8
      %6136 = vbcast.lane.b32.xlu0 %v6130, %s6135
      %v6137 = vpop.permute.xlu0 %6136
      %v6138 = vlaneseq
      %v6139 = vshrl.u32 %v6138, 7
      %v6140 = vsub.s32 7, %v6139
      %v6141 = vrot.slane %v2619, %v6140
      %6143 = vbcast.lane.b32.xlu0 %v6141, 256
      %v6144 = vpop.permute.xlu0 %6143
      %s6146 = sor.u32 256, 8
      %6147 = vbcast.lane.b32.xlu0 %v6141, %s6146
      %v6148 = vpop.permute.xlu0 %6147
      %v6149 = vlaneseq
      %v6150 = vshrl.u32 %v6149, 7
      %v6151 = vsub.s32 0, %v6150
      %v6152 = vrot.slane %v2624, %v6151
      %6154 = vbcast.lane.b32.xlu0 %v6152, 256
      %v6155 = vpop.permute.xlu0 %6154
      %s6157 = sor.u32 256, 8
      %6158 = vbcast.lane.b32.xlu0 %v6152, %s6157
      %v6159 = vpop.permute.xlu0 %6158
      %v6160 = vlaneseq
      %v6161 = vshrl.u32 %v6160, 7
      %v6162 = vsub.s32 1, %v6161
      %v6163 = vrot.slane %v2624, %v6162
      %6165 = vbcast.lane.b32.xlu0 %v6163, 256
      %v6166 = vpop.permute.xlu0 %6165
      %s6168 = sor.u32 256, 8
      %6169 = vbcast.lane.b32.xlu0 %v6163, %s6168
      %v6170 = vpop.permute.xlu0 %6169
      %v6171 = vlaneseq
      %v6172 = vshrl.u32 %v6171, 7
      %v6173 = vsub.s32 2, %v6172
      %v6174 = vrot.slane %v2624, %v6173
      %6176 = vbcast.lane.b32.xlu0 %v6174, 256
      %v6177 = vpop.permute.xlu0 %6176
      %s6179 = sor.u32 256, 8
      %6180 = vbcast.lane.b32.xlu0 %v6174, %s6179
      %v6181 = vpop.permute.xlu0 %6180
      %v6182 = vlaneseq
      %v6183 = vshrl.u32 %v6182, 7
      %v6184 = vsub.s32 3, %v6183
      %v6185 = vrot.slane %v2624, %v6184
      %6187 = vbcast.lane.b32.xlu0 %v6185, 256
      %v6188 = vpop.permute.xlu0 %6187
      %s6190 = sor.u32 256, 8
      %6191 = vbcast.lane.b32.xlu0 %v6185, %s6190
      %v6192 = vpop.permute.xlu0 %6191
      %v6193 = vlaneseq
      %v6194 = vshrl.u32 %v6193, 7
      %v6195 = vsub.s32 4, %v6194
      %v6196 = vrot.slane %v2624, %v6195
      %6198 = vbcast.lane.b32.xlu0 %v6196, 256
      %v6199 = vpop.permute.xlu0 %6198
      %s6201 = sor.u32 256, 8
      %6202 = vbcast.lane.b32.xlu0 %v6196, %s6201
      %v6203 = vpop.permute.xlu0 %6202
      %v6204 = vlaneseq
      %v6205 = vshrl.u32 %v6204, 7
      %v6206 = vsub.s32 5, %v6205
      %v6207 = vrot.slane %v2624, %v6206
      %6209 = vbcast.lane.b32.xlu0 %v6207, 256
      %v6210 = vpop.permute.xlu0 %6209
      %s6212 = sor.u32 256, 8
      %6213 = vbcast.lane.b32.xlu0 %v6207, %s6212
      %v6214 = vpop.permute.xlu0 %6213
      %v6215 = vlaneseq
      %v6216 = vshrl.u32 %v6215, 7
      %v6217 = vsub.s32 6, %v6216
      %v6218 = vrot.slane %v2624, %v6217
      %6220 = vbcast.lane.b32.xlu0 %v6218, 256
      %v6221 = vpop.permute.xlu0 %6220
      %s6223 = sor.u32 256, 8
      %6224 = vbcast.lane.b32.xlu0 %v6218, %s6223
      %v6225 = vpop.permute.xlu0 %6224
      %v6226 = vlaneseq
      %v6227 = vshrl.u32 %v6226, 7
      %v6228 = vsub.s32 7, %v6227
      %v6229 = vrot.slane %v2624, %v6228
      %6231 = vbcast.lane.b32.xlu0 %v6229, 256
      %v6232 = vpop.permute.xlu0 %6231
      %s6234 = sor.u32 256, 8
      %6235 = vbcast.lane.b32.xlu0 %v6229, %s6234
      %v6236 = vpop.permute.xlu0 %6235
      %v6237 = vlaneseq
      %v6238 = vshrl.u32 %v6237, 7
      %v6239 = vsub.s32 0, %v6238
      %v6240 = vrot.slane %v2629, %v6239
      %6242 = vbcast.lane.b32.xlu0 %v6240, 256
      %v6243 = vpop.permute.xlu0 %6242
      %s6245 = sor.u32 256, 8
      %6246 = vbcast.lane.b32.xlu0 %v6240, %s6245
      %v6247 = vpop.permute.xlu0 %6246
      %v6248 = vlaneseq
      %v6249 = vshrl.u32 %v6248, 7
      %v6250 = vsub.s32 1, %v6249
      %v6251 = vrot.slane %v2629, %v6250
      %6253 = vbcast.lane.b32.xlu0 %v6251, 256
      %v6254 = vpop.permute.xlu0 %6253
      %s6256 = sor.u32 256, 8
      %6257 = vbcast.lane.b32.xlu0 %v6251, %s6256
      %v6258 = vpop.permute.xlu0 %6257
      %v6259 = vlaneseq
      %v6260 = vshrl.u32 %v6259, 7
      %v6261 = vsub.s32 2, %v6260
      %v6262 = vrot.slane %v2629, %v6261
      %6264 = vbcast.lane.b32.xlu0 %v6262, 256
      %v6265 = vpop.permute.xlu0 %6264
      %s6267 = sor.u32 256, 8
      %6268 = vbcast.lane.b32.xlu0 %v6262, %s6267
      %v6269 = vpop.permute.xlu0 %6268
      %v6270 = vlaneseq
      %v6271 = vshrl.u32 %v6270, 7
      %v6272 = vsub.s32 3, %v6271
      %v6273 = vrot.slane %v2629, %v6272
      %6275 = vbcast.lane.b32.xlu0 %v6273, 256
      %v6276 = vpop.permute.xlu0 %6275
      %s6278 = sor.u32 256, 8
      %6279 = vbcast.lane.b32.xlu0 %v6273, %s6278
      %v6280 = vpop.permute.xlu0 %6279
      %v6281 = vlaneseq
      %v6282 = vshrl.u32 %v6281, 7
      %v6283 = vsub.s32 4, %v6282
      %v6284 = vrot.slane %v2629, %v6283
      %6286 = vbcast.lane.b32.xlu0 %v6284, 256
      %v6287 = vpop.permute.xlu0 %6286
      %s6289 = sor.u32 256, 8
      %6290 = vbcast.lane.b32.xlu0 %v6284, %s6289
      %v6291 = vpop.permute.xlu0 %6290
      %v6292 = vlaneseq
      %v6293 = vshrl.u32 %v6292, 7
      %v6294 = vsub.s32 5, %v6293
      %v6295 = vrot.slane %v2629, %v6294
      %6297 = vbcast.lane.b32.xlu0 %v6295, 256
      %v6298 = vpop.permute.xlu0 %6297
      %s6300 = sor.u32 256, 8
      %6301 = vbcast.lane.b32.xlu0 %v6295, %s6300
      %v6302 = vpop.permute.xlu0 %6301
      %v6303 = vlaneseq
      %v6304 = vshrl.u32 %v6303, 7
      %v6305 = vsub.s32 6, %v6304
      %v6306 = vrot.slane %v2629, %v6305
      %6308 = vbcast.lane.b32.xlu0 %v6306, 256
      %v6309 = vpop.permute.xlu0 %6308
      %s6311 = sor.u32 256, 8
      %6312 = vbcast.lane.b32.xlu0 %v6306, %s6311
      %v6313 = vpop.permute.xlu0 %6312
      %v6314 = vlaneseq
      %v6315 = vshrl.u32 %v6314, 7
      %v6316 = vsub.s32 7, %v6315
      %v6317 = vrot.slane %v2629, %v6316
      %6319 = vbcast.lane.b32.xlu0 %v6317, 256
      %v6320 = vpop.permute.xlu0 %6319
      %s6322 = sor.u32 256, 8
      %6323 = vbcast.lane.b32.xlu0 %v6317, %s6322
      %v6324 = vpop.permute.xlu0 %6323
      %v6325 = vlaneseq
      %v6326 = vshrl.u32 %v6325, 7
      %v6327 = vsub.s32 0, %v6326
      %v6328 = vrot.slane %v2634, %v6327
      %6330 = vbcast.lane.b32.xlu0 %v6328, 256
      %v6331 = vpop.permute.xlu0 %6330
      %s6333 = sor.u32 256, 8
      %6334 = vbcast.lane.b32.xlu0 %v6328, %s6333
      %v6335 = vpop.permute.xlu0 %6334
      %v6336 = vlaneseq
      %v6337 = vshrl.u32 %v6336, 7
      %v6338 = vsub.s32 1, %v6337
      %v6339 = vrot.slane %v2634, %v6338
      %6341 = vbcast.lane.b32.xlu0 %v6339, 256
      %v6342 = vpop.permute.xlu0 %6341
      %s6344 = sor.u32 256, 8
      %6345 = vbcast.lane.b32.xlu0 %v6339, %s6344
      %v6346 = vpop.permute.xlu0 %6345
      %v6347 = vlaneseq
      %v6348 = vshrl.u32 %v6347, 7
      %v6349 = vsub.s32 2, %v6348
      %v6350 = vrot.slane %v2634, %v6349
      %6352 = vbcast.lane.b32.xlu0 %v6350, 256
      %v6353 = vpop.permute.xlu0 %6352
      %s6355 = sor.u32 256, 8
      %6356 = vbcast.lane.b32.xlu0 %v6350, %s6355
      %v6357 = vpop.permute.xlu0 %6356
      %v6358 = vlaneseq
      %v6359 = vshrl.u32 %v6358, 7
      %v6360 = vsub.s32 3, %v6359
      %v6361 = vrot.slane %v2634, %v6360
      %6363 = vbcast.lane.b32.xlu0 %v6361, 256
      %v6364 = vpop.permute.xlu0 %6363
      %s6366 = sor.u32 256, 8
      %6367 = vbcast.lane.b32.xlu0 %v6361, %s6366
      %v6368 = vpop.permute.xlu0 %6367
      %v6369 = vlaneseq
      %v6370 = vshrl.u32 %v6369, 7
      %v6371 = vsub.s32 4, %v6370
      %v6372 = vrot.slane %v2634, %v6371
      %6374 = vbcast.lane.b32.xlu0 %v6372, 256
      %v6375 = vpop.permute.xlu0 %6374
      %s6377 = sor.u32 256, 8
      %6378 = vbcast.lane.b32.xlu0 %v6372, %s6377
      %v6379 = vpop.permute.xlu0 %6378
      %v6380 = vlaneseq
      %v6381 = vshrl.u32 %v6380, 7
      %v6382 = vsub.s32 5, %v6381
      %v6383 = vrot.slane %v2634, %v6382
      %6385 = vbcast.lane.b32.xlu0 %v6383, 256
      %v6386 = vpop.permute.xlu0 %6385
      %s6388 = sor.u32 256, 8
      %6389 = vbcast.lane.b32.xlu0 %v6383, %s6388
      %v6390 = vpop.permute.xlu0 %6389
      %v6391 = vlaneseq
      %v6392 = vshrl.u32 %v6391, 7
      %v6393 = vsub.s32 6, %v6392
      %v6394 = vrot.slane %v2634, %v6393
      %6396 = vbcast.lane.b32.xlu0 %v6394, 256
      %v6397 = vpop.permute.xlu0 %6396
      %s6399 = sor.u32 256, 8
      %6400 = vbcast.lane.b32.xlu0 %v6394, %s6399
      %v6401 = vpop.permute.xlu0 %6400
      %v6402 = vlaneseq
      %v6403 = vshrl.u32 %v6402, 7
      %v6404 = vsub.s32 7, %v6403
      %v6405 = vrot.slane %v2634, %v6404
      %6407 = vbcast.lane.b32.xlu0 %v6405, 256
      %v6408 = vpop.permute.xlu0 %6407
      %s6410 = sor.u32 256, 8
      %6411 = vbcast.lane.b32.xlu0 %v6405, %s6410
      %v6412 = vpop.permute.xlu0 %6411
      %v6413 = vmul.f32 %v5581, %v5715
      %v6414 = vmul.f32 %v5582, %v5719
      %v6415 = vmul.f32 %v5583, %v5726
      %v6416 = vmul.f32 %v5584, %v5730
      %v6417 = vmul.f32 %v5585, %v5737
      %v6418 = vmul.f32 %v5586, %v5741
      %v6419 = vmul.f32 %v5587, %v5748
      %v6420 = vmul.f32 %v5588, %v5752
      %v6421 = vmul.f32 %v5589, %v5759
      %v6422 = vmul.f32 %v5590, %v5763
      %v6423 = vmul.f32 %v5591, %v5770
      %v6424 = vmul.f32 %v5592, %v5774
      %v6425 = vmul.f32 %v5593, %v5781
      %v6426 = vmul.f32 %v5594, %v5785
      %v6427 = vmul.f32 %v5595, %v5792
      %v6428 = vmul.f32 %v5596, %v5796
      %v6429 = vmul.f32 %v5597, %v5803
      %v6430 = vmul.f32 %v5598, %v5807
      %v6431 = vmul.f32 %v5599, %v5814
      %v6432 = vmul.f32 %v5600, %v5818
      %v6433 = vmul.f32 %v5601, %v5825
      %v6434 = vmul.f32 %v5602, %v5829
      %v6435 = vmul.f32 %v5603, %v5836
      %v6436 = vmul.f32 %v5604, %v5840
      %v6437 = vmul.f32 %v5605, %v5847
      %v6438 = vmul.f32 %v5606, %v5851
      %v6439 = vmul.f32 %v5607, %v5858
      %v6440 = vmul.f32 %v5608, %v5862
      %v6441 = vmul.f32 %v5609, %v5869
      %v6442 = vmul.f32 %v5610, %v5873
      %v6443 = vmul.f32 %v5611, %v5880
      %v6444 = vmul.f32 %v5612, %v5884
      %v6445 = vmul.f32 %v5613, %v5891
      %v6446 = vmul.f32 %v5614, %v5895
      %v6447 = vmul.f32 %v5615, %v5902
      %v6448 = vmul.f32 %v5616, %v5906
      %v6449 = vmul.f32 %v5617, %v5913
      %v6450 = vmul.f32 %v5618, %v5917
      %v6451 = vmul.f32 %v5619, %v5924
      %v6452 = vmul.f32 %v5620, %v5928
      %v6453 = vmul.f32 %v5621, %v5935
      %v6454 = vmul.f32 %v5622, %v5939
      %v6455 = vmul.f32 %v5623, %v5946
      %v6456 = vmul.f32 %v5624, %v5950
      %v6457 = vmul.f32 %v5625, %v5957
      %v6458 = vmul.f32 %v5626, %v5961
      %v6459 = vmul.f32 %v5627, %v5968
      %v6460 = vmul.f32 %v5628, %v5972
      %v6461 = vmul.f32 %v5629, %v5979
      %v6462 = vmul.f32 %v5630, %v5983
      %v6463 = vmul.f32 %v5631, %v5990
      %v6464 = vmul.f32 %v5632, %v5994
      %v6465 = vmul.f32 %v5633, %v6001
      %v6466 = vmul.f32 %v5634, %v6005
      %v6467 = vmul.f32 %v5635, %v6012
      %v6468 = vmul.f32 %v5636, %v6016
      %v6469 = vmul.f32 %v5637, %v6023
      %v6470 = vmul.f32 %v5638, %v6027
      %v6471 = vmul.f32 %v5639, %v6034
      %v6472 = vmul.f32 %v5640, %v6038
      %v6473 = vmul.f32 %v5641, %v6045
      %v6474 = vmul.f32 %v5642, %v6049
      %v6475 = vmul.f32 %v5643, %v6056
      %v6476 = vmul.f32 %v5644, %v6060
      %v6477 = vmul.f32 %v5645, %v6067
      %v6478 = vmul.f32 %v5646, %v6071
      %v6479 = vmul.f32 %v5647, %v6078
      %v6480 = vmul.f32 %v5648, %v6082
      %v6481 = vmul.f32 %v5649, %v6089
      %v6482 = vmul.f32 %v5650, %v6093
      %v6483 = vmul.f32 %v5651, %v6100
      %v6484 = vmul.f32 %v5652, %v6104
      %v6485 = vmul.f32 %v5653, %v6111
      %v6486 = vmul.f32 %v5654, %v6115
      %v6487 = vmul.f32 %v5655, %v6122
      %v6488 = vmul.f32 %v5656, %v6126
      %v6489 = vmul.f32 %v5657, %v6133
      %v6490 = vmul.f32 %v5658, %v6137
      %v6491 = vmul.f32 %v5659, %v6144
      %v6492 = vmul.f32 %v5660, %v6148
      %v6493 = vmul.f32 %v5661, %v6155
      %v6494 = vmul.f32 %v5662, %v6159
      %v6495 = vmul.f32 %v5663, %v6166
      %v6496 = vmul.f32 %v5664, %v6170
      %v6497 = vmul.f32 %v5665, %v6177
      %v6498 = vmul.f32 %v5666, %v6181
      %v6499 = vmul.f32 %v5667, %v6188
      %v6500 = vmul.f32 %v5668, %v6192
      %v6501 = vmul.f32 %v5669, %v6199
      %v6502 = vmul.f32 %v5670, %v6203
      %v6503 = vmul.f32 %v5671, %v6210
      %v6504 = vmul.f32 %v5672, %v6214
      %v6505 = vmul.f32 %v5673, %v6221
      %v6506 = vmul.f32 %v5674, %v6225
      %v6507 = vmul.f32 %v5675, %v6232
      %v6508 = vmul.f32 %v5676, %v6236
      %v6509 = vmul.f32 %v5677, %v6243
      %v6510 = vmul.f32 %v5678, %v6247
      %v6511 = vmul.f32 %v5679, %v6254
      %v6512 = vmul.f32 %v5680, %v6258
      %v6513 = vmul.f32 %v5681, %v6265
      %v6514 = vmul.f32 %v5682, %v6269
      %v6515 = vmul.f32 %v5683, %v6276
      %v6516 = vmul.f32 %v5684, %v6280
      %v6517 = vmul.f32 %v5685, %v6287
      %v6518 = vmul.f32 %v5686, %v6291
      %v6519 = vmul.f32 %v5687, %v6298
      %v6520 = vmul.f32 %v5688, %v6302
      %v6521 = vmul.f32 %v5689, %v6309
      %v6522 = vmul.f32 %v5690, %v6313
      %v6523 = vmul.f32 %v5691, %v6320
      %v6524 = vmul.f32 %v5692, %v6324
      %v6525 = vmul.f32 %v5693, %v6331
      %v6526 = vmul.f32 %v5694, %v6335
      %v6527 = vmul.f32 %v5695, %v6342
      %v6528 = vmul.f32 %v5696, %v6346
      %v6529 = vmul.f32 %v5697, %v6353
      %v6530 = vmul.f32 %v5698, %v6357
      %v6531 = vmul.f32 %v5699, %v6364
      %v6532 = vmul.f32 %v5700, %v6368
      %v6533 = vmul.f32 %v5701, %v6375
      %v6534 = vmul.f32 %v5702, %v6379
      %v6535 = vmul.f32 %v5703, %v6386
      %v6536 = vmul.f32 %v5704, %v6390
      %v6537 = vmul.f32 %v5705, %v6397
      %v6538 = vmul.f32 %v5706, %v6401
      %v6539 = vmul.f32 %v5707, %v6408
      %v6540 = vmul.f32 %v5708, %v6412
      %v6541 = vsel %vm2209, %v6413, 0.0
      %v6542 = vsel %vm2209, %v6414, 0.0
      %v6543 = vadd.f32 %v6541, %v6542
      %v6544 = vrot.slane %v6543, 4
      %v6545 = vadd.f32 %v6543, %v6544
      %v6546 = vrot.slane %v6545, 2
      %v6547 = vadd.f32 %v6545, %v6546
      %v6548 = vrot.slane %v6547, 1
      %v6549 = vadd.f32 %v6547, %v6548
      %v6550 = vsel %vm2209, %v6415, 0.0
      %v6551 = vsel %vm2209, %v6416, 0.0
      %v6552 = vadd.f32 %v6550, %v6551
      %v6553 = vrot.slane %v6552, 4
      %v6554 = vadd.f32 %v6552, %v6553
      %v6555 = vrot.slane %v6554, 2
      %v6556 = vadd.f32 %v6554, %v6555
      %v6557 = vrot.slane %v6556, 1
      %v6558 = vadd.f32 %v6556, %v6557
      %v6559 = vsel %vm2209, %v6417, 0.0
      %v6560 = vsel %vm2209, %v6418, 0.0
      %v6561 = vadd.f32 %v6559, %v6560
      %v6562 = vrot.slane %v6561, 4
      %v6563 = vadd.f32 %v6561, %v6562
      %v6564 = vrot.slane %v6563, 2
      %v6565 = vadd.f32 %v6563, %v6564
      %v6566 = vrot.slane %v6565, 1
      %v6567 = vadd.f32 %v6565, %v6566
      %v6568 = vsel %vm2209, %v6419, 0.0
      %v6569 = vsel %vm2209, %v6420, 0.0
      %v6570 = vadd.f32 %v6568, %v6569
      %v6571 = vrot.slane %v6570, 4
      %v6572 = vadd.f32 %v6570, %v6571
      %v6573 = vrot.slane %v6572, 2
      %v6574 = vadd.f32 %v6572, %v6573
      %v6575 = vrot.slane %v6574, 1
      %v6576 = vadd.f32 %v6574, %v6575
      %v6577 = vsel %vm2209, %v6421, 0.0
      %v6578 = vsel %vm2209, %v6422, 0.0
      %v6579 = vadd.f32 %v6577, %v6578
      %v6580 = vrot.slane %v6579, 4
      %v6581 = vadd.f32 %v6579, %v6580
      %v6582 = vrot.slane %v6581, 2
      %v6583 = vadd.f32 %v6581, %v6582
      %v6584 = vrot.slane %v6583, 1
      %v6585 = vadd.f32 %v6583, %v6584
      %v6586 = vsel %vm2209, %v6423, 0.0
      %v6587 = vsel %vm2209, %v6424, 0.0
      %v6588 = vadd.f32 %v6586, %v6587
      %v6589 = vrot.slane %v6588, 4
      %v6590 = vadd.f32 %v6588, %v6589
      %v6591 = vrot.slane %v6590, 2
      %v6592 = vadd.f32 %v6590, %v6591
      %v6593 = vrot.slane %v6592, 1
      %v6594 = vadd.f32 %v6592, %v6593
      %v6595 = vsel %vm2209, %v6425, 0.0
      %v6596 = vsel %vm2209, %v6426, 0.0
      %v6597 = vadd.f32 %v6595, %v6596
      %v6598 = vrot.slane %v6597, 4
      %v6599 = vadd.f32 %v6597, %v6598
      %v6600 = vrot.slane %v6599, 2
      %v6601 = vadd.f32 %v6599, %v6600
      %v6602 = vrot.slane %v6601, 1
      %v6603 = vadd.f32 %v6601, %v6602
      %v6604 = vsel %vm2209, %v6427, 0.0
      %v6605 = vsel %vm2209, %v6428, 0.0
      %v6606 = vadd.f32 %v6604, %v6605
      %v6607 = vrot.slane %v6606, 4
      %v6608 = vadd.f32 %v6606, %v6607
      %v6609 = vrot.slane %v6608, 2
      %v6610 = vadd.f32 %v6608, %v6609
      %v6611 = vrot.slane %v6610, 1
      %v6612 = vadd.f32 %v6610, %v6611
      %v6613 = vsel %vm2209, %v6429, 0.0
      %v6614 = vsel %vm2209, %v6430, 0.0
      %v6615 = vadd.f32 %v6613, %v6614
      %v6616 = vrot.slane %v6615, 4
      %v6617 = vadd.f32 %v6615, %v6616
      %v6618 = vrot.slane %v6617, 2
      %v6619 = vadd.f32 %v6617, %v6618
      %v6620 = vrot.slane %v6619, 1
      %v6621 = vadd.f32 %v6619, %v6620
      %v6622 = vsel %vm2209, %v6431, 0.0
      %v6623 = vsel %vm2209, %v6432, 0.0
      %v6624 = vadd.f32 %v6622, %v6623
      %v6625 = vrot.slane %v6624, 4
      %v6626 = vadd.f32 %v6624, %v6625
      %v6627 = vrot.slane %v6626, 2
      %v6628 = vadd.f32 %v6626, %v6627
      %v6629 = vrot.slane %v6628, 1
      %v6630 = vadd.f32 %v6628, %v6629
      %v6631 = vsel %vm2209, %v6433, 0.0
      %v6632 = vsel %vm2209, %v6434, 0.0
      %v6633 = vadd.f32 %v6631, %v6632
      %v6634 = vrot.slane %v6633, 4
      %v6635 = vadd.f32 %v6633, %v6634
      %v6636 = vrot.slane %v6635, 2
      %v6637 = vadd.f32 %v6635, %v6636
      %v6638 = vrot.slane %v6637, 1
      %v6639 = vadd.f32 %v6637, %v6638
      %v6640 = vsel %vm2209, %v6435, 0.0
      %v6641 = vsel %vm2209, %v6436, 0.0
      %v6642 = vadd.f32 %v6640, %v6641
      %v6643 = vrot.slane %v6642, 4
      %v6644 = vadd.f32 %v6642, %v6643
      %v6645 = vrot.slane %v6644, 2
      %v6646 = vadd.f32 %v6644, %v6645
      %v6647 = vrot.slane %v6646, 1
      %v6648 = vadd.f32 %v6646, %v6647
      %v6649 = vsel %vm2209, %v6437, 0.0
      %v6650 = vsel %vm2209, %v6438, 0.0
      %v6651 = vadd.f32 %v6649, %v6650
      %v6652 = vrot.slane %v6651, 4
      %v6653 = vadd.f32 %v6651, %v6652
      %v6654 = vrot.slane %v6653, 2
      %v6655 = vadd.f32 %v6653, %v6654
      %v6656 = vrot.slane %v6655, 1
      %v6657 = vadd.f32 %v6655, %v6656
      %v6658 = vsel %vm2209, %v6439, 0.0
      %v6659 = vsel %vm2209, %v6440, 0.0
      %v6660 = vadd.f32 %v6658, %v6659
      %v6661 = vrot.slane %v6660, 4
      %v6662 = vadd.f32 %v6660, %v6661
      %v6663 = vrot.slane %v6662, 2
      %v6664 = vadd.f32 %v6662, %v6663
      %v6665 = vrot.slane %v6664, 1
      %v6666 = vadd.f32 %v6664, %v6665
      %v6667 = vsel %vm2209, %v6441, 0.0
      %v6668 = vsel %vm2209, %v6442, 0.0
      %v6669 = vadd.f32 %v6667, %v6668
      %v6670 = vrot.slane %v6669, 4
      %v6671 = vadd.f32 %v6669, %v6670
      %v6672 = vrot.slane %v6671, 2
      %v6673 = vadd.f32 %v6671, %v6672
      %v6674 = vrot.slane %v6673, 1
      %v6675 = vadd.f32 %v6673, %v6674
      %v6676 = vsel %vm2209, %v6443, 0.0
      %v6677 = vsel %vm2209, %v6444, 0.0
      %v6678 = vadd.f32 %v6676, %v6677
      %v6679 = vrot.slane %v6678, 4
      %v6680 = vadd.f32 %v6678, %v6679
      %v6681 = vrot.slane %v6680, 2
      %v6682 = vadd.f32 %v6680, %v6681
      %v6683 = vrot.slane %v6682, 1
      %v6684 = vadd.f32 %v6682, %v6683
      %v6685 = vsel %vm2209, %v6445, 0.0
      %v6686 = vsel %vm2209, %v6446, 0.0
      %v6687 = vadd.f32 %v6685, %v6686
      %v6688 = vrot.slane %v6687, 4
      %v6689 = vadd.f32 %v6687, %v6688
      %v6690 = vrot.slane %v6689, 2
      %v6691 = vadd.f32 %v6689, %v6690
      %v6692 = vrot.slane %v6691, 1
      %v6693 = vadd.f32 %v6691, %v6692
      %v6694 = vsel %vm2209, %v6447, 0.0
      %v6695 = vsel %vm2209, %v6448, 0.0
      %v6696 = vadd.f32 %v6694, %v6695
      %v6697 = vrot.slane %v6696, 4
      %v6698 = vadd.f32 %v6696, %v6697
      %v6699 = vrot.slane %v6698, 2
      %v6700 = vadd.f32 %v6698, %v6699
      %v6701 = vrot.slane %v6700, 1
      %v6702 = vadd.f32 %v6700, %v6701
      %v6703 = vsel %vm2209, %v6449, 0.0
      %v6704 = vsel %vm2209, %v6450, 0.0
      %v6705 = vadd.f32 %v6703, %v6704
      %v6706 = vrot.slane %v6705, 4
      %v6707 = vadd.f32 %v6705, %v6706
      %v6708 = vrot.slane %v6707, 2
      %v6709 = vadd.f32 %v6707, %v6708
      %v6710 = vrot.slane %v6709, 1
      %v6711 = vadd.f32 %v6709, %v6710
      %v6712 = vsel %vm2209, %v6451, 0.0
      %v6713 = vsel %vm2209, %v6452, 0.0
      %v6714 = vadd.f32 %v6712, %v6713
      %v6715 = vrot.slane %v6714, 4
      %v6716 = vadd.f32 %v6714, %v6715
      %v6717 = vrot.slane %v6716, 2
      %v6718 = vadd.f32 %v6716, %v6717
      %v6719 = vrot.slane %v6718, 1
      %v6720 = vadd.f32 %v6718, %v6719
      %v6721 = vsel %vm2209, %v6453, 0.0
      %v6722 = vsel %vm2209, %v6454, 0.0
      %v6723 = vadd.f32 %v6721, %v6722
      %v6724 = vrot.slane %v6723, 4
      %v6725 = vadd.f32 %v6723, %v6724
      %v6726 = vrot.slane %v6725, 2
      %v6727 = vadd.f32 %v6725, %v6726
      %v6728 = vrot.slane %v6727, 1
      %v6729 = vadd.f32 %v6727, %v6728
      %v6730 = vsel %vm2209, %v6455, 0.0
      %v6731 = vsel %vm2209, %v6456, 0.0
      %v6732 = vadd.f32 %v6730, %v6731
      %v6733 = vrot.slane %v6732, 4
      %v6734 = vadd.f32 %v6732, %v6733
      %v6735 = vrot.slane %v6734, 2
      %v6736 = vadd.f32 %v6734, %v6735
      %v6737 = vrot.slane %v6736, 1
      %v6738 = vadd.f32 %v6736, %v6737
      %v6739 = vsel %vm2209, %v6457, 0.0
      %v6740 = vsel %vm2209, %v6458, 0.0
      %v6741 = vadd.f32 %v6739, %v6740
      %v6742 = vrot.slane %v6741, 4
      %v6743 = vadd.f32 %v6741, %v6742
      %v6744 = vrot.slane %v6743, 2
      %v6745 = vadd.f32 %v6743, %v6744
      %v6746 = vrot.slane %v6745, 1
      %v6747 = vadd.f32 %v6745, %v6746
      %v6748 = vsel %vm2209, %v6459, 0.0
      %v6749 = vsel %vm2209, %v6460, 0.0
      %v6750 = vadd.f32 %v6748, %v6749
      %v6751 = vrot.slane %v6750, 4
      %v6752 = vadd.f32 %v6750, %v6751
      %v6753 = vrot.slane %v6752, 2
      %v6754 = vadd.f32 %v6752, %v6753
      %v6755 = vrot.slane %v6754, 1
      %v6756 = vadd.f32 %v6754, %v6755
      %v6757 = vsel %vm2209, %v6461, 0.0
      %v6758 = vsel %vm2209, %v6462, 0.0
      %v6759 = vadd.f32 %v6757, %v6758
      %v6760 = vrot.slane %v6759, 4
      %v6761 = vadd.f32 %v6759, %v6760
      %v6762 = vrot.slane %v6761, 2
      %v6763 = vadd.f32 %v6761, %v6762
      %v6764 = vrot.slane %v6763, 1
      %v6765 = vadd.f32 %v6763, %v6764
      %v6766 = vsel %vm2209, %v6463, 0.0
      %v6767 = vsel %vm2209, %v6464, 0.0
      %v6768 = vadd.f32 %v6766, %v6767
      %v6769 = vrot.slane %v6768, 4
      %v6770 = vadd.f32 %v6768, %v6769
      %v6771 = vrot.slane %v6770, 2
      %v6772 = vadd.f32 %v6770, %v6771
      %v6773 = vrot.slane %v6772, 1
      %v6774 = vadd.f32 %v6772, %v6773
      %v6775 = vsel %vm2209, %v6465, 0.0
      %v6776 = vsel %vm2209, %v6466, 0.0
      %v6777 = vadd.f32 %v6775, %v6776
      %v6778 = vrot.slane %v6777, 4
      %v6779 = vadd.f32 %v6777, %v6778
      %v6780 = vrot.slane %v6779, 2
      %v6781 = vadd.f32 %v6779, %v6780
      %v6782 = vrot.slane %v6781, 1
      %v6783 = vadd.f32 %v6781, %v6782
      %v6784 = vsel %vm2209, %v6467, 0.0
      %v6785 = vsel %vm2209, %v6468, 0.0
      %v6786 = vadd.f32 %v6784, %v6785
      %v6787 = vrot.slane %v6786, 4
      %v6788 = vadd.f32 %v6786, %v6787
      %v6789 = vrot.slane %v6788, 2
      %v6790 = vadd.f32 %v6788, %v6789
      %v6791 = vrot.slane %v6790, 1
      %v6792 = vadd.f32 %v6790, %v6791
      %v6793 = vsel %vm2209, %v6469, 0.0
      %v6794 = vsel %vm2209, %v6470, 0.0
      %v6795 = vadd.f32 %v6793, %v6794
      %v6796 = vrot.slane %v6795, 4
      %v6797 = vadd.f32 %v6795, %v6796
      %v6798 = vrot.slane %v6797, 2
      %v6799 = vadd.f32 %v6797, %v6798
      %v6800 = vrot.slane %v6799, 1
      %v6801 = vadd.f32 %v6799, %v6800
      %v6802 = vsel %vm2209, %v6471, 0.0
      %v6803 = vsel %vm2209, %v6472, 0.0
      %v6804 = vadd.f32 %v6802, %v6803
      %v6805 = vrot.slane %v6804, 4
      %v6806 = vadd.f32 %v6804, %v6805
      %v6807 = vrot.slane %v6806, 2
      %v6808 = vadd.f32 %v6806, %v6807
      %v6809 = vrot.slane %v6808, 1
      %v6810 = vadd.f32 %v6808, %v6809
      %v6811 = vsel %vm2209, %v6473, 0.0
      %v6812 = vsel %vm2209, %v6474, 0.0
      %v6813 = vadd.f32 %v6811, %v6812
      %v6814 = vrot.slane %v6813, 4
      %v6815 = vadd.f32 %v6813, %v6814
      %v6816 = vrot.slane %v6815, 2
      %v6817 = vadd.f32 %v6815, %v6816
      %v6818 = vrot.slane %v6817, 1
      %v6819 = vadd.f32 %v6817, %v6818
      %v6820 = vsel %vm2209, %v6475, 0.0
      %v6821 = vsel %vm2209, %v6476, 0.0
      %v6822 = vadd.f32 %v6820, %v6821
      %v6823 = vrot.slane %v6822, 4
      %v6824 = vadd.f32 %v6822, %v6823
      %v6825 = vrot.slane %v6824, 2
      %v6826 = vadd.f32 %v6824, %v6825
      %v6827 = vrot.slane %v6826, 1
      %v6828 = vadd.f32 %v6826, %v6827
      %v6829 = vsel %vm2209, %v6477, 0.0
      %v6830 = vsel %vm2209, %v6478, 0.0
      %v6831 = vadd.f32 %v6829, %v6830
      %v6832 = vrot.slane %v6831, 4
      %v6833 = vadd.f32 %v6831, %v6832
      %v6834 = vrot.slane %v6833, 2
      %v6835 = vadd.f32 %v6833, %v6834
      %v6836 = vrot.slane %v6835, 1
      %v6837 = vadd.f32 %v6835, %v6836
      %v6838 = vsel %vm2209, %v6479, 0.0
      %v6839 = vsel %vm2209, %v6480, 0.0
      %v6840 = vadd.f32 %v6838, %v6839
      %v6841 = vrot.slane %v6840, 4
      %v6842 = vadd.f32 %v6840, %v6841
      %v6843 = vrot.slane %v6842, 2
      %v6844 = vadd.f32 %v6842, %v6843
      %v6845 = vrot.slane %v6844, 1
      %v6846 = vadd.f32 %v6844, %v6845
      %v6847 = vsel %vm2209, %v6481, 0.0
      %v6848 = vsel %vm2209, %v6482, 0.0
      %v6849 = vadd.f32 %v6847, %v6848
      %v6850 = vrot.slane %v6849, 4
      %v6851 = vadd.f32 %v6849, %v6850
      %v6852 = vrot.slane %v6851, 2
      %v6853 = vadd.f32 %v6851, %v6852
      %v6854 = vrot.slane %v6853, 1
      %v6855 = vadd.f32 %v6853, %v6854
      %v6856 = vsel %vm2209, %v6483, 0.0
      %v6857 = vsel %vm2209, %v6484, 0.0
      %v6858 = vadd.f32 %v6856, %v6857
      %v6859 = vrot.slane %v6858, 4
      %v6860 = vadd.f32 %v6858, %v6859
      %v6861 = vrot.slane %v6860, 2
      %v6862 = vadd.f32 %v6860, %v6861
      %v6863 = vrot.slane %v6862, 1
      %v6864 = vadd.f32 %v6862, %v6863
      %v6865 = vsel %vm2209, %v6485, 0.0
      %v6866 = vsel %vm2209, %v6486, 0.0
      %v6867 = vadd.f32 %v6865, %v6866
      %v6868 = vrot.slane %v6867, 4
      %v6869 = vadd.f32 %v6867, %v6868
      %v6870 = vrot.slane %v6869, 2
      %v6871 = vadd.f32 %v6869, %v6870
      %v6872 = vrot.slane %v6871, 1
      %v6873 = vadd.f32 %v6871, %v6872
      %v6874 = vsel %vm2209, %v6487, 0.0
      %v6875 = vsel %vm2209, %v6488, 0.0
      %v6876 = vadd.f32 %v6874, %v6875
      %v6877 = vrot.slane %v6876, 4
      %v6878 = vadd.f32 %v6876, %v6877
      %v6879 = vrot.slane %v6878, 2
      %v6880 = vadd.f32 %v6878, %v6879
      %v6881 = vrot.slane %v6880, 1
      %v6882 = vadd.f32 %v6880, %v6881
      %v6883 = vsel %vm2209, %v6489, 0.0
      %v6884 = vsel %vm2209, %v6490, 0.0
      %v6885 = vadd.f32 %v6883, %v6884
      %v6886 = vrot.slane %v6885, 4
      %v6887 = vadd.f32 %v6885, %v6886
      %v6888 = vrot.slane %v6887, 2
      %v6889 = vadd.f32 %v6887, %v6888
      %v6890 = vrot.slane %v6889, 1
      %v6891 = vadd.f32 %v6889, %v6890
      %v6892 = vsel %vm2209, %v6491, 0.0
      %v6893 = vsel %vm2209, %v6492, 0.0
      %v6894 = vadd.f32 %v6892, %v6893
      %v6895 = vrot.slane %v6894, 4
      %v6896 = vadd.f32 %v6894, %v6895
      %v6897 = vrot.slane %v6896, 2
      %v6898 = vadd.f32 %v6896, %v6897
      %v6899 = vrot.slane %v6898, 1
      %v6900 = vadd.f32 %v6898, %v6899
      %v6901 = vsel %vm2209, %v6493, 0.0
      %v6902 = vsel %vm2209, %v6494, 0.0
      %v6903 = vadd.f32 %v6901, %v6902
      %v6904 = vrot.slane %v6903, 4
      %v6905 = vadd.f32 %v6903, %v6904
      %v6906 = vrot.slane %v6905, 2
      %v6907 = vadd.f32 %v6905, %v6906
      %v6908 = vrot.slane %v6907, 1
      %v6909 = vadd.f32 %v6907, %v6908
      %v6910 = vsel %vm2209, %v6495, 0.0
      %v6911 = vsel %vm2209, %v6496, 0.0
      %v6912 = vadd.f32 %v6910, %v6911
      %v6913 = vrot.slane %v6912, 4
      %v6914 = vadd.f32 %v6912, %v6913
      %v6915 = vrot.slane %v6914, 2
      %v6916 = vadd.f32 %v6914, %v6915
      %v6917 = vrot.slane %v6916, 1
      %v6918 = vadd.f32 %v6916, %v6917
      %v6919 = vsel %vm2209, %v6497, 0.0
      %v6920 = vsel %vm2209, %v6498, 0.0
      %v6921 = vadd.f32 %v6919, %v6920
      %v6922 = vrot.slane %v6921, 4
      %v6923 = vadd.f32 %v6921, %v6922
      %v6924 = vrot.slane %v6923, 2
      %v6925 = vadd.f32 %v6923, %v6924
      %v6926 = vrot.slane %v6925, 1
      %v6927 = vadd.f32 %v6925, %v6926
      %v6928 = vsel %vm2209, %v6499, 0.0
      %v6929 = vsel %vm2209, %v6500, 0.0
      %v6930 = vadd.f32 %v6928, %v6929
      %v6931 = vrot.slane %v6930, 4
      %v6932 = vadd.f32 %v6930, %v6931
      %v6933 = vrot.slane %v6932, 2
      %v6934 = vadd.f32 %v6932, %v6933
      %v6935 = vrot.slane %v6934, 1
      %v6936 = vadd.f32 %v6934, %v6935
      %v6937 = vsel %vm2209, %v6501, 0.0
      %v6938 = vsel %vm2209, %v6502, 0.0
      %v6939 = vadd.f32 %v6937, %v6938
      %v6940 = vrot.slane %v6939, 4
      %v6941 = vadd.f32 %v6939, %v6940
      %v6942 = vrot.slane %v6941, 2
      %v6943 = vadd.f32 %v6941, %v6942
      %v6944 = vrot.slane %v6943, 1
      %v6945 = vadd.f32 %v6943, %v6944
      %v6946 = vsel %vm2209, %v6503, 0.0
      %v6947 = vsel %vm2209, %v6504, 0.0
      %v6948 = vadd.f32 %v6946, %v6947
      %v6949 = vrot.slane %v6948, 4
      %v6950 = vadd.f32 %v6948, %v6949
      %v6951 = vrot.slane %v6950, 2
      %v6952 = vadd.f32 %v6950, %v6951
      %v6953 = vrot.slane %v6952, 1
      %v6954 = vadd.f32 %v6952, %v6953
      %v6955 = vsel %vm2209, %v6505, 0.0
      %v6956 = vsel %vm2209, %v6506, 0.0
      %v6957 = vadd.f32 %v6955, %v6956
      %v6958 = vrot.slane %v6957, 4
      %v6959 = vadd.f32 %v6957, %v6958
      %v6960 = vrot.slane %v6959, 2
      %v6961 = vadd.f32 %v6959, %v6960
      %v6962 = vrot.slane %v6961, 1
      %v6963 = vadd.f32 %v6961, %v6962
      %v6964 = vsel %vm2209, %v6507, 0.0
      %v6965 = vsel %vm2209, %v6508, 0.0
      %v6966 = vadd.f32 %v6964, %v6965
      %v6967 = vrot.slane %v6966, 4
      %v6968 = vadd.f32 %v6966, %v6967
      %v6969 = vrot.slane %v6968, 2
      %v6970 = vadd.f32 %v6968, %v6969
      %v6971 = vrot.slane %v6970, 1
      %v6972 = vadd.f32 %v6970, %v6971
      %v6973 = vsel %vm2209, %v6509, 0.0
      %v6974 = vsel %vm2209, %v6510, 0.0
      %v6975 = vadd.f32 %v6973, %v6974
      %v6976 = vrot.slane %v6975, 4
      %v6977 = vadd.f32 %v6975, %v6976
      %v6978 = vrot.slane %v6977, 2
      %v6979 = vadd.f32 %v6977, %v6978
      %v6980 = vrot.slane %v6979, 1
      %v6981 = vadd.f32 %v6979, %v6980
      %v6982 = vsel %vm2209, %v6511, 0.0
      %v6983 = vsel %vm2209, %v6512, 0.0
      %v6984 = vadd.f32 %v6982, %v6983
      %v6985 = vrot.slane %v6984, 4
      %v6986 = vadd.f32 %v6984, %v6985
      %v6987 = vrot.slane %v6986, 2
      %v6988 = vadd.f32 %v6986, %v6987
      %v6989 = vrot.slane %v6988, 1
      %v6990 = vadd.f32 %v6988, %v6989
      %v6991 = vsel %vm2209, %v6513, 0.0
      %v6992 = vsel %vm2209, %v6514, 0.0
      %v6993 = vadd.f32 %v6991, %v6992
      %v6994 = vrot.slane %v6993, 4
      %v6995 = vadd.f32 %v6993, %v6994
      %v6996 = vrot.slane %v6995, 2
      %v6997 = vadd.f32 %v6995, %v6996
      %v6998 = vrot.slane %v6997, 1
      %v6999 = vadd.f32 %v6997, %v6998
      %v7000 = vsel %vm2209, %v6515, 0.0
      %v7001 = vsel %vm2209, %v6516, 0.0
      %v7002 = vadd.f32 %v7000, %v7001
      %v7003 = vrot.slane %v7002, 4
      %v7004 = vadd.f32 %v7002, %v7003
      %v7005 = vrot.slane %v7004, 2
      %v7006 = vadd.f32 %v7004, %v7005
      %v7007 = vrot.slane %v7006, 1
      %v7008 = vadd.f32 %v7006, %v7007
      %v7009 = vsel %vm2209, %v6517, 0.0
      %v7010 = vsel %vm2209, %v6518, 0.0
      %v7011 = vadd.f32 %v7009, %v7010
      %v7012 = vrot.slane %v7011, 4
      %v7013 = vadd.f32 %v7011, %v7012
      %v7014 = vrot.slane %v7013, 2
      %v7015 = vadd.f32 %v7013, %v7014
      %v7016 = vrot.slane %v7015, 1
      %v7017 = vadd.f32 %v7015, %v7016
      %v7018 = vsel %vm2209, %v6519, 0.0
      %v7019 = vsel %vm2209, %v6520, 0.0
      %v7020 = vadd.f32 %v7018, %v7019
      %v7021 = vrot.slane %v7020, 4
      %v7022 = vadd.f32 %v7020, %v7021
      %v7023 = vrot.slane %v7022, 2
      %v7024 = vadd.f32 %v7022, %v7023
      %v7025 = vrot.slane %v7024, 1
      %v7026 = vadd.f32 %v7024, %v7025
      %v7027 = vsel %vm2209, %v6521, 0.0
      %v7028 = vsel %vm2209, %v6522, 0.0
      %v7029 = vadd.f32 %v7027, %v7028
      %v7030 = vrot.slane %v7029, 4
      %v7031 = vadd.f32 %v7029, %v7030
      %v7032 = vrot.slane %v7031, 2
      %v7033 = vadd.f32 %v7031, %v7032
      %v7034 = vrot.slane %v7033, 1
      %v7035 = vadd.f32 %v7033, %v7034
      %v7036 = vsel %vm2209, %v6523, 0.0
      %v7037 = vsel %vm2209, %v6524, 0.0
      %v7038 = vadd.f32 %v7036, %v7037
      %v7039 = vrot.slane %v7038, 4
      %v7040 = vadd.f32 %v7038, %v7039
      %v7041 = vrot.slane %v7040, 2
      %v7042 = vadd.f32 %v7040, %v7041
      %v7043 = vrot.slane %v7042, 1
      %v7044 = vadd.f32 %v7042, %v7043
      %v7045 = vsel %vm2209, %v6525, 0.0
      %v7046 = vsel %vm2209, %v6526, 0.0
      %v7047 = vadd.f32 %v7045, %v7046
      %v7048 = vrot.slane %v7047, 4
      %v7049 = vadd.f32 %v7047, %v7048
      %v7050 = vrot.slane %v7049, 2
      %v7051 = vadd.f32 %v7049, %v7050
      %v7052 = vrot.slane %v7051, 1
      %v7053 = vadd.f32 %v7051, %v7052
      %v7054 = vsel %vm2209, %v6527, 0.0
      %v7055 = vsel %vm2209, %v6528, 0.0
      %v7056 = vadd.f32 %v7054, %v7055
      %v7057 = vrot.slane %v7056, 4
      %v7058 = vadd.f32 %v7056, %v7057
      %v7059 = vrot.slane %v7058, 2
      %v7060 = vadd.f32 %v7058, %v7059
      %v7061 = vrot.slane %v7060, 1
      %v7062 = vadd.f32 %v7060, %v7061
      %v7063 = vsel %vm2209, %v6529, 0.0
      %v7064 = vsel %vm2209, %v6530, 0.0
      %v7065 = vadd.f32 %v7063, %v7064
      %v7066 = vrot.slane %v7065, 4
      %v7067 = vadd.f32 %v7065, %v7066
      %v7068 = vrot.slane %v7067, 2
      %v7069 = vadd.f32 %v7067, %v7068
      %v7070 = vrot.slane %v7069, 1
      %v7071 = vadd.f32 %v7069, %v7070
      %v7072 = vsel %vm2209, %v6531, 0.0
      %v7073 = vsel %vm2209, %v6532, 0.0
      %v7074 = vadd.f32 %v7072, %v7073
      %v7075 = vrot.slane %v7074, 4
      %v7076 = vadd.f32 %v7074, %v7075
      %v7077 = vrot.slane %v7076, 2
      %v7078 = vadd.f32 %v7076, %v7077
      %v7079 = vrot.slane %v7078, 1
      %v7080 = vadd.f32 %v7078, %v7079
      %v7081 = vsel %vm2209, %v6533, 0.0
      %v7082 = vsel %vm2209, %v6534, 0.0
      %v7083 = vadd.f32 %v7081, %v7082
      %v7084 = vrot.slane %v7083, 4
      %v7085 = vadd.f32 %v7083, %v7084
      %v7086 = vrot.slane %v7085, 2
      %v7087 = vadd.f32 %v7085, %v7086
      %v7088 = vrot.slane %v7087, 1
      %v7089 = vadd.f32 %v7087, %v7088
      %v7090 = vsel %vm2209, %v6535, 0.0
      %v7091 = vsel %vm2209, %v6536, 0.0
      %v7092 = vadd.f32 %v7090, %v7091
      %v7093 = vrot.slane %v7092, 4
      %v7094 = vadd.f32 %v7092, %v7093
      %v7095 = vrot.slane %v7094, 2
      %v7096 = vadd.f32 %v7094, %v7095
      %v7097 = vrot.slane %v7096, 1
      %v7098 = vadd.f32 %v7096, %v7097
      %v7099 = vsel %vm2209, %v6537, 0.0
      %v7100 = vsel %vm2209, %v6538, 0.0
      %v7101 = vadd.f32 %v7099, %v7100
      %v7102 = vrot.slane %v7101, 4
      %v7103 = vadd.f32 %v7101, %v7102
      %v7104 = vrot.slane %v7103, 2
      %v7105 = vadd.f32 %v7103, %v7104
      %v7106 = vrot.slane %v7105, 1
      %v7107 = vadd.f32 %v7105, %v7106
      %v7108 = vsel %vm2209, %v6539, 0.0
      %v7109 = vsel %vm2209, %v6540, 0.0
      %v7110 = vadd.f32 %v7108, %v7109
      %v7111 = vrot.slane %v7110, 4
      %v7112 = vadd.f32 %v7110, %v7111
      %v7113 = vrot.slane %v7112, 2
      %v7114 = vadd.f32 %v7112, %v7113
      %v7115 = vrot.slane %v7114, 1
      %v7116 = vadd.f32 %v7114, %v7115
      %v7117 = vld [vmem:[%s19] sm:$0x1]
      %v7119 = vlaneseq
      %v7120 = vshrl.u32 %v7119, 7
      %v7121 = vsub.s32 0, %v7120
      %v7122 = vrot.slane %v7117, %v7121
      %v7124 = vmul.f32 %v1962, %v7122
      %v7125 = vmul.f32 %v1963, %v7122
      %v7126 = vmul.f32 %v1964, %v7122
      %v7127 = vmul.f32 %v1965, %v7122
      %v7128 = vmul.f32 %v1966, %v7122
      %v7129 = vmul.f32 %v1967, %v7122
      %v7130 = vmul.f32 %v1968, %v7122
      %v7131 = vmul.f32 %v1969, %v7122
      %v7140 = vrot.slane %v7124, 1
      %v7141 = vrot.slane %v7124, 2
      %v7142 = vrot.slane %v7124, 3
      %v7143 = vrot.slane %v7124, 4
      %v7144 = vrot.slane %v7124, 5
      %v7145 = vrot.slane %v7124, 6
      %v7146 = vrot.slane %v7124, 7
      %v7147 = vrot.slane %v7125, 1
      %v7148 = vrot.slane %v7125, 2
      %v7149 = vrot.slane %v7125, 3
      %v7150 = vrot.slane %v7125, 4
      %v7151 = vrot.slane %v7125, 5
      %v7152 = vrot.slane %v7125, 6
      %v7153 = vrot.slane %v7125, 7
      %v7154 = vrot.slane %v7126, 1
      %v7155 = vrot.slane %v7126, 2
      %v7156 = vrot.slane %v7126, 3
      %v7157 = vrot.slane %v7126, 4
      %v7158 = vrot.slane %v7126, 5
      %v7159 = vrot.slane %v7126, 6
      %v7160 = vrot.slane %v7126, 7
      %v7161 = vrot.slane %v7127, 1
      %v7162 = vrot.slane %v7127, 2
      %v7163 = vrot.slane %v7127, 3
      %v7164 = vrot.slane %v7127, 4
      %v7165 = vrot.slane %v7127, 5
      %v7166 = vrot.slane %v7127, 6
      %v7167 = vrot.slane %v7127, 7
      %v7168 = vrot.slane %v7128, 1
      %v7169 = vrot.slane %v7128, 2
      %v7170 = vrot.slane %v7128, 3
      %v7171 = vrot.slane %v7128, 4
      %v7172 = vrot.slane %v7128, 5
      %v7173 = vrot.slane %v7128, 6
      %v7174 = vrot.slane %v7128, 7
      %v7175 = vrot.slane %v7129, 1
      %v7176 = vrot.slane %v7129, 2
      %v7177 = vrot.slane %v7129, 3
      %v7178 = vrot.slane %v7129, 4
      %v7179 = vrot.slane %v7129, 5
      %v7180 = vrot.slane %v7129, 6
      %v7181 = vrot.slane %v7129, 7
      %v7182 = vrot.slane %v7130, 1
      %v7183 = vrot.slane %v7130, 2
      %v7184 = vrot.slane %v7130, 3
      %v7185 = vrot.slane %v7130, 4
      %v7186 = vrot.slane %v7130, 5
      %v7187 = vrot.slane %v7130, 6
      %v7188 = vrot.slane %v7130, 7
      %v7189 = vrot.slane %v7131, 1
      %v7190 = vrot.slane %v7131, 2
      %v7191 = vrot.slane %v7131, 3
      %v7192 = vrot.slane %v7131, 4
      %v7193 = vrot.slane %v7131, 5
      %v7194 = vrot.slane %v7131, 6
      %v7195 = vrot.slane %v7131, 7
      %v7260 = vadd.f32 %v6549, %v7124
      %v7261 = vadd.f32 %v6558, %v7140
      %v7262 = vadd.f32 %v6567, %v7141
      %v7263 = vadd.f32 %v6576, %v7142
      %v7264 = vadd.f32 %v6585, %v7143
      %v7265 = vadd.f32 %v6594, %v7144
      %v7266 = vadd.f32 %v6603, %v7145
      %v7267 = vadd.f32 %v6612, %v7146
      %v7268 = vadd.f32 %v6621, %v7125
      %v7269 = vadd.f32 %v6630, %v7147
      %v7270 = vadd.f32 %v6639, %v7148
      %v7271 = vadd.f32 %v6648, %v7149
      %v7272 = vadd.f32 %v6657, %v7150
      %v7273 = vadd.f32 %v6666, %v7151
      %v7274 = vadd.f32 %v6675, %v7152
      %v7275 = vadd.f32 %v6684, %v7153
      %v7276 = vadd.f32 %v6693, %v7126
      %v7277 = vadd.f32 %v6702, %v7154
      %v7278 = vadd.f32 %v6711, %v7155
      %v7279 = vadd.f32 %v6720, %v7156
      %v7280 = vadd.f32 %v6729, %v7157
      %v7281 = vadd.f32 %v6738, %v7158
      %v7282 = vadd.f32 %v6747, %v7159
      %v7283 = vadd.f32 %v6756, %v7160
      %v7284 = vadd.f32 %v6765, %v7127
      %v7285 = vadd.f32 %v6774, %v7161
      %v7286 = vadd.f32 %v6783, %v7162
      %v7287 = vadd.f32 %v6792, %v7163
      %v7288 = vadd.f32 %v6801, %v7164
      %v7289 = vadd.f32 %v6810, %v7165
      %v7290 = vadd.f32 %v6819, %v7166
      %v7291 = vadd.f32 %v6828, %v7167
      %v7292 = vadd.f32 %v6837, %v7128
      %v7293 = vadd.f32 %v6846, %v7168
      %v7294 = vadd.f32 %v6855, %v7169
      %v7295 = vadd.f32 %v6864, %v7170
      %v7296 = vadd.f32 %v6873, %v7171
      %v7297 = vadd.f32 %v6882, %v7172
      %v7298 = vadd.f32 %v6891, %v7173
      %v7299 = vadd.f32 %v6900, %v7174
      %v7300 = vadd.f32 %v6909, %v7129
      %v7301 = vadd.f32 %v6918, %v7175
      %v7302 = vadd.f32 %v6927, %v7176
      %v7303 = vadd.f32 %v6936, %v7177
      %v7304 = vadd.f32 %v6945, %v7178
      %v7305 = vadd.f32 %v6954, %v7179
      %v7306 = vadd.f32 %v6963, %v7180
      %v7307 = vadd.f32 %v6972, %v7181
      %v7308 = vadd.f32 %v6981, %v7130
      %v7309 = vadd.f32 %v6990, %v7182
      %v7310 = vadd.f32 %v6999, %v7183
      %v7311 = vadd.f32 %v7008, %v7184
      %v7312 = vadd.f32 %v7017, %v7185
      %v7313 = vadd.f32 %v7026, %v7186
      %v7314 = vadd.f32 %v7035, %v7187
      %v7315 = vadd.f32 %v7044, %v7188
      %v7316 = vadd.f32 %v7053, %v7131
      %v7317 = vadd.f32 %v7062, %v7189
      %v7318 = vadd.f32 %v7071, %v7190
      %v7319 = vadd.f32 %v7080, %v7191
      %v7320 = vadd.f32 %v7089, %v7192
      %v7321 = vadd.f32 %v7098, %v7193
      %v7322 = vadd.f32 %v7107, %v7194
      %v7323 = vadd.f32 %v7116, %v7195
      %v7324 = vxor.u32 %v1572, 2147483648
      %v7325 = vxor.u32 %v1577, 2147483648
      %v7326 = vxor.u32 %v1582, 2147483648
      %v7327 = vxor.u32 %v1587, 2147483648
      %v7328 = vxor.u32 %v1592, 2147483648
      %v7329 = vxor.u32 %v1597, 2147483648
      %v7330 = vxor.u32 %v1602, 2147483648
      %v7331 = vxor.u32 %v1607, 2147483648
      %v7332 = vmul.f32 %v7324, 1.442695
      %v7333 = vpow.pop %v7332
      %v7334 = vmul.f32 %v7325, 1.442695
      %v7335 = vpow.pop %v7334
      %v7336 = vmul.f32 %v7326, 1.442695
      %v7337 = vpow.pop %v7336
      %v7338 = vmul.f32 %v7327, 1.442695
      %v7339 = vpow.pop %v7338
      %v7340 = vmul.f32 %v7328, 1.442695
      %v7341 = vpow.pop %v7340
      %v7342 = vmul.f32 %v7329, 1.442695
      %v7343 = vpow.pop %v7342
      %v7344 = vmul.f32 %v7330, 1.442695
      %v7345 = vpow.pop %v7344
      %v7346 = vmul.f32 %v7331, 1.442695
      %v7347 = vpow.pop %v7346
      %v7348 = vadd.f32 %v7333, 1.0
      %v7349 = vadd.f32 %v7335, 1.0
      %v7350 = vadd.f32 %v7337, 1.0
      %v7351 = vadd.f32 %v7339, 1.0
      %v7352 = vadd.f32 %v7341, 1.0
      %v7353 = vadd.f32 %v7343, 1.0
      %v7354 = vadd.f32 %v7345, 1.0
      %v7355 = vadd.f32 %v7347, 1.0
      %v7356 = vrcp.pop %v7348
      %v7357 = vmul.f32 1.0, %v7356
      %v7358 = vrcp.pop %v7349
      %v7359 = vmul.f32 1.0, %v7358
      %v7360 = vrcp.pop %v7350
      %v7361 = vmul.f32 1.0, %v7360
      %v7362 = vrcp.pop %v7351
      %v7363 = vmul.f32 1.0, %v7362
      %v7364 = vrcp.pop %v7352
      %v7365 = vmul.f32 1.0, %v7364
      %v7366 = vrcp.pop %v7353
      %v7367 = vmul.f32 1.0, %v7366
      %v7368 = vrcp.pop %v7354
      %v7369 = vmul.f32 1.0, %v7368
      %v7370 = vrcp.pop %v7355
      %v7371 = vmul.f32 1.0, %v7370
      %v7372 = vmul.f32 %v1572, %v7357
      %v7373 = vmul.f32 %v1577, %v7359
      %v7374 = vmul.f32 %v1582, %v7361
      %v7375 = vmul.f32 %v1587, %v7363
      %v7376 = vmul.f32 %v1592, %v7365
      %v7377 = vmul.f32 %v1597, %v7367
      %v7378 = vmul.f32 %v1602, %v7369
      %v7379 = vmul.f32 %v1607, %v7371
      %v7388 = vrot.slane %v7372, 1
      %v7389 = vrot.slane %v7372, 2
      %v7390 = vrot.slane %v7372, 3
      %v7391 = vrot.slane %v7372, 4
      %v7392 = vrot.slane %v7372, 5
      %v7393 = vrot.slane %v7372, 6
      %v7394 = vrot.slane %v7372, 7
      %v7395 = vrot.slane %v7373, 1
      %v7396 = vrot.slane %v7373, 2
      %v7397 = vrot.slane %v7373, 3
      %v7398 = vrot.slane %v7373, 4
      %v7399 = vrot.slane %v7373, 5
      %v7400 = vrot.slane %v7373, 6
      %v7401 = vrot.slane %v7373, 7
      %v7402 = vrot.slane %v7374, 1
      %v7403 = vrot.slane %v7374, 2
      %v7404 = vrot.slane %v7374, 3
      %v7405 = vrot.slane %v7374, 4
      %v7406 = vrot.slane %v7374, 5
      %v7407 = vrot.slane %v7374, 6
      %v7408 = vrot.slane %v7374, 7
      %v7409 = vrot.slane %v7375, 1
      %v7410 = vrot.slane %v7375, 2
      %v7411 = vrot.slane %v7375, 3
      %v7412 = vrot.slane %v7375, 4
      %v7413 = vrot.slane %v7375, 5
      %v7414 = vrot.slane %v7375, 6
      %v7415 = vrot.slane %v7375, 7
      %v7416 = vrot.slane %v7376, 1
      %v7417 = vrot.slane %v7376, 2
      %v7418 = vrot.slane %v7376, 3
      %v7419 = vrot.slane %v7376, 4
      %v7420 = vrot.slane %v7376, 5
      %v7421 = vrot.slane %v7376, 6
      %v7422 = vrot.slane %v7376, 7
      %v7423 = vrot.slane %v7377, 1
      %v7424 = vrot.slane %v7377, 2
      %v7425 = vrot.slane %v7377, 3
      %v7426 = vrot.slane %v7377, 4
      %v7427 = vrot.slane %v7377, 5
      %v7428 = vrot.slane %v7377, 6
      %v7429 = vrot.slane %v7377, 7
      %v7430 = vrot.slane %v7378, 1
      %v7431 = vrot.slane %v7378, 2
      %v7432 = vrot.slane %v7378, 3
      %v7433 = vrot.slane %v7378, 4
      %v7434 = vrot.slane %v7378, 5
      %v7435 = vrot.slane %v7378, 6
      %v7436 = vrot.slane %v7378, 7
      %v7437 = vrot.slane %v7379, 1
      %v7438 = vrot.slane %v7379, 2
      %v7439 = vrot.slane %v7379, 3
      %v7440 = vrot.slane %v7379, 4
      %v7441 = vrot.slane %v7379, 5
      %v7442 = vrot.slane %v7379, 6
      %v7443 = vrot.slane %v7379, 7
      %v7508 = vmul.f32 %v7260, %v7372
      %v7509 = vmul.f32 %v7261, %v7388
      %v7510 = vmul.f32 %v7262, %v7389
      %v7511 = vmul.f32 %v7263, %v7390
      %v7512 = vmul.f32 %v7264, %v7391
      %v7513 = vmul.f32 %v7265, %v7392
      %v7514 = vmul.f32 %v7266, %v7393
      %v7515 = vmul.f32 %v7267, %v7394
      %v7516 = vmul.f32 %v7268, %v7373
      %v7517 = vmul.f32 %v7269, %v7395
      %v7518 = vmul.f32 %v7270, %v7396
      %v7519 = vmul.f32 %v7271, %v7397
      %v7520 = vmul.f32 %v7272, %v7398
      %v7521 = vmul.f32 %v7273, %v7399
      %v7522 = vmul.f32 %v7274, %v7400
      %v7523 = vmul.f32 %v7275, %v7401
      %v7524 = vmul.f32 %v7276, %v7374
      %v7525 = vmul.f32 %v7277, %v7402
      %v7526 = vmul.f32 %v7278, %v7403
      %v7527 = vmul.f32 %v7279, %v7404
      %v7528 = vmul.f32 %v7280, %v7405
      %v7529 = vmul.f32 %v7281, %v7406
      %v7530 = vmul.f32 %v7282, %v7407
      %v7531 = vmul.f32 %v7283, %v7408
      %v7532 = vmul.f32 %v7284, %v7375
      %v7533 = vmul.f32 %v7285, %v7409
      %v7534 = vmul.f32 %v7286, %v7410
      %v7535 = vmul.f32 %v7287, %v7411
      %v7536 = vmul.f32 %v7288, %v7412
      %v7537 = vmul.f32 %v7289, %v7413
      %v7538 = vmul.f32 %v7290, %v7414
      %v7539 = vmul.f32 %v7291, %v7415
      %v7540 = vmul.f32 %v7292, %v7376
      %v7541 = vmul.f32 %v7293, %v7416
      %v7542 = vmul.f32 %v7294, %v7417
      %v7543 = vmul.f32 %v7295, %v7418
      %v7544 = vmul.f32 %v7296, %v7419
      %v7545 = vmul.f32 %v7297, %v7420
      %v7546 = vmul.f32 %v7298, %v7421
      %v7547 = vmul.f32 %v7299, %v7422
      %v7548 = vmul.f32 %v7300, %v7377
      %v7549 = vmul.f32 %v7301, %v7423
      %v7550 = vmul.f32 %v7302, %v7424
      %v7551 = vmul.f32 %v7303, %v7425
      %v7552 = vmul.f32 %v7304, %v7426
      %v7553 = vmul.f32 %v7305, %v7427
      %v7554 = vmul.f32 %v7306, %v7428
      %v7555 = vmul.f32 %v7307, %v7429
      %v7556 = vmul.f32 %v7308, %v7378
      %v7557 = vmul.f32 %v7309, %v7430
      %v7558 = vmul.f32 %v7310, %v7431
      %v7559 = vmul.f32 %v7311, %v7432
      %v7560 = vmul.f32 %v7312, %v7433
      %v7561 = vmul.f32 %v7313, %v7434
      %v7562 = vmul.f32 %v7314, %v7435
      %v7563 = vmul.f32 %v7315, %v7436
      %v7564 = vmul.f32 %v7316, %v7379
      %v7565 = vmul.f32 %v7317, %v7437
      %v7566 = vmul.f32 %v7318, %v7438
      %v7567 = vmul.f32 %v7319, %v7439
      %v7568 = vmul.f32 %v7320, %v7440
      %v7569 = vmul.f32 %v7321, %v7441
      %v7570 = vmul.f32 %v7322, %v7442
      %v7571 = vmul.f32 %v7323, %v7443
      %v7572 = vld [vmem:[%s20] sm:$0xff]
      %v7573 = vld [vmem:[%s20 + $0x8] sm:$0xff]
      %v7574 = vld [vmem:[%s20 + $0x10] sm:$0xff]
      %v7575 = vld [vmem:[%s20 + $0x18] sm:$0xff]
      %v7576 = vld [vmem:[%s20 + $0x20] sm:$0xff]
      %v7577 = vld [vmem:[%s20 + $0x28] sm:$0xff]
      %v7578 = vld [vmem:[%s20 + $0x30] sm:$0xff]
      %v7579 = vld [vmem:[%s20 + $0x38] sm:$0xff]
      %v7580 = vld [vmem:[%s21] sm:$0x1]
      %v7582 = vlaneseq
      %v7583 = vshrl.u32 %v7582, 7
      %v7584 = vsub.s32 0, %v7583
      %v7585 = vrot.slane %v7580, %v7584
      %v7651 = vrot.slane %v7509, 7
      %vm7652 = vcmask 1041409
      %v7653 = vsel %vm7652, %v7651, %v7508
      %v7654 = vrot.slane %v7510, 6
      %vm7655 = vcmask 1042434
      %v7656 = vsel %vm7655, %v7654, %v7653
      %v7657 = vrot.slane %v7511, 5
      %vm7658 = vcmask 1043459
      %v7659 = vsel %vm7658, %v7657, %v7656
      %v7660 = vrot.slane %v7512, 4
      %vm7661 = vcmask 1044484
      %v7662 = vsel %vm7661, %v7660, %v7659
      %v7663 = vrot.slane %v7513, 3
      %vm7664 = vcmask 1045509
      %v7665 = vsel %vm7664, %v7663, %v7662
      %v7666 = vrot.slane %v7514, 2
      %vm7667 = vcmask 1046534
      %v7668 = vsel %vm7667, %v7666, %v7665
      %v7669 = vrot.slane %v7515, 1
      %vm7670 = vcmask 1047559
      %v7671 = vsel %vm7670, %v7669, %v7668
      %v7672 = vrot.slane %v7517, 7
      %v7673 = vsel %vm7652, %v7672, %v7516
      %v7674 = vrot.slane %v7518, 6
      %v7675 = vsel %vm7655, %v7674, %v7673
      %v7676 = vrot.slane %v7519, 5
      %v7677 = vsel %vm7658, %v7676, %v7675
      %v7678 = vrot.slane %v7520, 4
      %v7679 = vsel %vm7661, %v7678, %v7677
      %v7680 = vrot.slane %v7521, 3
      %v7681 = vsel %vm7664, %v7680, %v7679
      %v7682 = vrot.slane %v7522, 2
      %v7683 = vsel %vm7667, %v7682, %v7681
      %v7684 = vrot.slane %v7523, 1
      %v7685 = vsel %vm7670, %v7684, %v7683
      %v7686 = vrot.slane %v7525, 7
      %v7687 = vsel %vm7652, %v7686, %v7524
      %v7688 = vrot.slane %v7526, 6
      %v7689 = vsel %vm7655, %v7688, %v7687
      %v7690 = vrot.slane %v7527, 5
      %v7691 = vsel %vm7658, %v7690, %v7689
      %v7692 = vrot.slane %v7528, 4
      %v7693 = vsel %vm7661, %v7692, %v7691
      %v7694 = vrot.slane %v7529, 3
      %v7695 = vsel %vm7664, %v7694, %v7693
      %v7696 = vrot.slane %v7530, 2
      %v7697 = vsel %vm7667, %v7696, %v7695
      %v7698 = vrot.slane %v7531, 1
      %v7699 = vsel %vm7670, %v7698, %v7697
      %v7700 = vrot.slane %v7533, 7
      %v7701 = vsel %vm7652, %v7700, %v7532
      %v7702 = vrot.slane %v7534, 6
      %v7703 = vsel %vm7655, %v7702, %v7701
      %v7704 = vrot.slane %v7535, 5
      %v7705 = vsel %vm7658, %v7704, %v7703
      %v7706 = vrot.slane %v7536, 4
      %v7707 = vsel %vm7661, %v7706, %v7705
      %v7708 = vrot.slane %v7537, 3
      %v7709 = vsel %vm7664, %v7708, %v7707
      %v7710 = vrot.slane %v7538, 2
      %v7711 = vsel %vm7667, %v7710, %v7709
      %v7712 = vrot.slane %v7539, 1
      %v7713 = vsel %vm7670, %v7712, %v7711
      %v7714 = vrot.slane %v7541, 7
      %v7715 = vsel %vm7652, %v7714, %v7540
      %v7716 = vrot.slane %v7542, 6
      %v7717 = vsel %vm7655, %v7716, %v7715
      %v7718 = vrot.slane %v7543, 5
      %v7719 = vsel %vm7658, %v7718, %v7717
      %v7720 = vrot.slane %v7544, 4
      %v7721 = vsel %vm7661, %v7720, %v7719
      %v7722 = vrot.slane %v7545, 3
      %v7723 = vsel %vm7664, %v7722, %v7721
      %v7724 = vrot.slane %v7546, 2
      %v7725 = vsel %vm7667, %v7724, %v7723
      %v7726 = vrot.slane %v7547, 1
      %v7727 = vsel %vm7670, %v7726, %v7725
      %v7728 = vrot.slane %v7549, 7
      %v7729 = vsel %vm7652, %v7728, %v7548
      %v7730 = vrot.slane %v7550, 6
      %v7731 = vsel %vm7655, %v7730, %v7729
      %v7732 = vrot.slane %v7551, 5
      %v7733 = vsel %vm7658, %v7732, %v7731
      %v7734 = vrot.slane %v7552, 4
      %v7735 = vsel %vm7661, %v7734, %v7733
      %v7736 = vrot.slane %v7553, 3
      %v7737 = vsel %vm7664, %v7736, %v7735
      %v7738 = vrot.slane %v7554, 2
      %v7739 = vsel %vm7667, %v7738, %v7737
      %v7740 = vrot.slane %v7555, 1
      %v7741 = vsel %vm7670, %v7740, %v7739
      %v7742 = vrot.slane %v7557, 7
      %v7743 = vsel %vm7652, %v7742, %v7556
      %v7744 = vrot.slane %v7558, 6
      %v7745 = vsel %vm7655, %v7744, %v7743
      %v7746 = vrot.slane %v7559, 5
      %v7747 = vsel %vm7658, %v7746, %v7745
      %v7748 = vrot.slane %v7560, 4
      %v7749 = vsel %vm7661, %v7748, %v7747
      %v7750 = vrot.slane %v7561, 3
      %v7751 = vsel %vm7664, %v7750, %v7749
      %v7752 = vrot.slane %v7562, 2
      %v7753 = vsel %vm7667, %v7752, %v7751
      %v7754 = vrot.slane %v7563, 1
      %v7755 = vsel %vm7670, %v7754, %v7753
      %v7756 = vrot.slane %v7565, 7
      %v7757 = vsel %vm7652, %v7756, %v7564
      %v7758 = vrot.slane %v7566, 6
      %v7759 = vsel %vm7655, %v7758, %v7757
      %v7760 = vrot.slane %v7567, 5
      %v7761 = vsel %vm7658, %v7760, %v7759
      %v7762 = vrot.slane %v7568, 4
      %v7763 = vsel %vm7661, %v7762, %v7761
      %v7764 = vrot.slane %v7569, 3
      %v7765 = vsel %vm7664, %v7764, %v7763
      %v7766 = vrot.slane %v7570, 2
      %v7767 = vsel %vm7667, %v7766, %v7765
      %v7768 = vrot.slane %v7571, 1
      %v7769 = vsel %vm7670, %v7768, %v7767
      %v7770 = vsel %vm2209, %v7671, 0
      %v7772 = vsel %vm2209, %v7685, 0
      %v7774 = vsel %vm2209, %v7699, 0
      %v7776 = vsel %vm2209, %v7713, 0
      %v7778 = vsel %vm2209, %v7727, 0
      %v7780 = vsel %vm2209, %v7741, 0
      %v7782 = vsel %vm2209, %v7755, 0
      %v7784 = vsel %vm2209, %v7769, 0
      %7786 = vmatprep.subr.mxu0 0.0
      %7787 = vmatpush1.msra.mxu0 %v7572
      %7788 = vmatprep.subr.mxu0 0.0
      %7789 = vmatpush1.msra.mxu0 %v7573
      %7790 = vmatprep.subr.mxu0 0.0
      %7791 = vmatpush1.msra.mxu0 %v7574
      %7792 = vmatprep.subr.mxu0 0.0
      %7793 = vmatpush1.msra.mxu0 %v7575
      %7794 = vmatprep.subr.mxu0 0.0
      %7795 = vmatpush1.msra.mxu0 %v7576
      %7796 = vmatprep.subr.mxu0 0.0
      %7797 = vmatpush1.msra.mxu0 %v7577
      %7798 = vmatprep.subr.mxu0 0.0
      %7799 = vmatpush1.msra.mxu0 %v7578
      %7800 = vmatprep.subr.mxu0 0.0
      %7801 = vmatpush1.msra.mxu0 %v7579
      %7802 = vmatprep.subr.mxu0 0.0
      %7803 = vmatpush1.msra.mxu0 0.0
      %7804 = vmatprep.subr.mxu0 0.0
      %7805 = vmatpush1.msra.mxu0 0.0
      %7806 = vmatprep.subr.mxu0 0.0
      %7807 = vmatpush1.msra.mxu0 0.0
      %7808 = vmatprep.subr.mxu0 0.0
      %7809 = vmatpush1.msra.mxu0 0.0
      %7810 = vmatprep.subr.mxu0 0.0
      %7811 = vmatpush1.msra.mxu0 0.0
      %7812 = vmatprep.subr.mxu0 0.0
      %7813 = vmatpush1.msra.mxu0 0.0
      %7814 = vmatprep.subr.mxu0 0.0
      %7815 = vmatpush1.msra.mxu0 0.0
      %7816 = vmatprep.subr.mxu0 0.0
      %7817 = vmatpush1.msra.mxu0 0.0
      %7818 = vmatprep.subr.mxu0 0.0
      %7819 = vmatpush1.msra.mxu0 0.0
      %7820 = vmatprep.subr.mxu0 0.0
      %7821 = vmatpush1.msra.mxu0 0.0
      %7822 = vmatprep.subr.mxu0 0.0
      %7823 = vmatpush1.msra.mxu0 0.0
      %7824 = vmatprep.subr.mxu0 0.0
      %7825 = vmatpush1.msra.mxu0 0.0
      %7826 = vmatprep.subr.mxu0 0.0
      %7827 = vmatpush1.msra.mxu0 0.0
      %7828 = vmatprep.subr.mxu0 0.0
      %7829 = vmatpush1.msra.mxu0 0.0
      %7830 = vmatprep.subr.mxu0 0.0
      %7831 = vmatpush1.msra.mxu0 0.0
      %7832 = vmatprep.subr.mxu0 0.0
      %7833 = vmatpush1.msra.mxu0 0.0
      %7834 = vmatprep.subr.mxu0 0.0
      %7835 = vmatpush1.msra.mxu0 0.0
      %7836 = vmatprep.subr.mxu0 0.0
      %7837 = vmatpush1.msra.mxu0 0.0
      %7838 = vmatprep.subr.mxu0 0.0
      %7839 = vmatpush1.msra.mxu0 0.0
      %7840 = vmatprep.subr.mxu0 0.0
      %7841 = vmatpush1.msra.mxu0 0.0
      %7842 = vmatprep.subr.mxu0 0.0
      %7843 = vmatpush1.msra.mxu0 0.0
      %7844 = vmatprep.subr.mxu0 0.0
      %7845 = vmatpush1.msra.mxu0 0.0
      %7846 = vmatprep.subr.mxu0 0.0
      %7847 = vmatpush1.msra.mxu0 0.0
      %7848 = vmatprep.subr.mxu0 0.0
      %7849 = vmatpush1.msra.mxu0 0.0
      %7850 = vmatprep.mubr.f32.mxu0 0.0
      %7851 = vmatmul.mubr.f32.gmra.mrb[0].mxu0 %v7770
      %v7852 = vpop.f32.mrb[0].mxu0
      %v7853 = vadd.f32 %v7585, %v7852
      %v7854 = vpop.f32.mrb[0].mxu0
      %7855 = vmatprep.mubr.f32.mxu0 0.0
      %7856 = vmatmul.mubr.f32.gmra.mrb[0].mxu0 %v7772
      %v7857 = vpop.f32.mrb[0].mxu0
      %v7858 = vadd.f32 %v7585, %v7857
      %v7859 = vpop.f32.mrb[0].mxu0
      %7860 = vmatprep.mubr.f32.mxu0 0.0
      %7861 = vmatmul.mubr.f32.gmra.mrb[0].mxu0 %v7774
      %v7862 = vpop.f32.mrb[0].mxu0
      %v7863 = vadd.f32 %v7585, %v7862
      %v7864 = vpop.f32.mrb[0].mxu0
      %7865 = vmatprep.mubr.f32.mxu0 0.0
      %7866 = vmatmul.mubr.f32.gmra.mrb[0].mxu0 %v7776
      %v7867 = vpop.f32.mrb[0].mxu0
      %v7868 = vadd.f32 %v7585, %v7867
      %v7869 = vpop.f32.mrb[0].mxu0
      %7870 = vmatprep.mubr.f32.mxu0 0.0
      %7871 = vmatmul.mubr.f32.gmra.mrb[0].mxu0 %v7778
      %v7872 = vpop.f32.mrb[0].mxu0
      %v7873 = vadd.f32 %v7585, %v7872
      %v7874 = vpop.f32.mrb[0].mxu0
      %7875 = vmatprep.mubr.f32.mxu0 0.0
      %7876 = vmatmul.mubr.f32.gmra.mrb[0].mxu0 %v7780
      %v7877 = vpop.f32.mrb[0].mxu0
      %v7878 = vadd.f32 %v7585, %v7877
      %v7879 = vpop.f32.mrb[0].mxu0
      %7880 = vmatprep.mubr.f32.mxu0 0.0
      %7881 = vmatmul.mubr.f32.gmra.mrb[0].mxu0 %v7782
      %v7882 = vpop.f32.mrb[0].mxu0
      %v7883 = vadd.f32 %v7585, %v7882
      %v7884 = vpop.f32.mrb[0].mxu0
      %7885 = vmatprep.mubr.f32.mxu0 0.0
      %7886 = vmatmul.mubr.f32.gmra.mrb[0].mxu0 %v7784
      %v7887 = vpop.f32.mrb[0].mxu0
      %v7888 = vadd.f32 %v7585, %v7887
      %v7889 = vpop.f32.mrb[0].mxu0
      %7890 = vdwg.mxu0
      %v7891 = vld [vmem:[%s23] sm:$0x1]
      %v7893 = vlaneseq
      %v7894 = vshrl.u32 %v7893, 7
      %v7895 = vsub.s32 0, %v7894
      %v7896 = vrot.slane %v7891, %v7895
      %v7898 = vadd.f32 %v7896, 0.0
      %v7907 = vrot.slane 0.0, 7
      %v7908 = vrot.slane %v7853, 7
      %v7909 = vrot.slane %v7858, 7
      %v7910 = vrot.slane %v7863, 7
      %v7911 = vrot.slane %v7868, 7
      %v7912 = vrot.slane %v7873, 7
      %v7913 = vrot.slane %v7878, 7
      %v7914 = vrot.slane %v7883, 7
      %v7923 = vsel %vm1779, 0.0, %v7907
      %v7924 = vsel %vm1779, 0.0, %v7908
      %v7925 = vsel %vm1779, 0.0, %v7909
      %v7926 = vsel %vm1779, 0.0, %v7910
      %v7927 = vsel %vm1779, 0.0, %v7911
      %v7928 = vsel %vm1779, 0.0, %v7912
      %v7929 = vsel %vm1779, 0.0, %v7913
      %v7930 = vsel %vm1779, 0.0, %v7914
      %v7931 = vld [vmem:[%s22] sm:$0x1]
      %v7932 = vlaneseq
      %v7933 = vshrl.u32 %v7932, 7
      %v7934 = vsub.s32 0, %v7933
      %v7935 = vrot.slane %v7931, %v7934
      %v7936 = vmul.f32 %v7923, %v7935
      %v7937 = vmul.f32 %v7924, %v7935
      %v7938 = vmul.f32 %v7925, %v7935
      %v7939 = vmul.f32 %v7926, %v7935
      %v7940 = vmul.f32 %v7927, %v7935
      %v7941 = vmul.f32 %v7928, %v7935
      %v7942 = vmul.f32 %v7929, %v7935
      %v7943 = vmul.f32 %v7930, %v7935
      %v7944 = vadd.f32 %v7898, %v7936
      %v7945 = vadd.f32 %v7898, %v7937
      %v7946 = vadd.f32 %v7898, %v7938
      %v7947 = vadd.f32 %v7898, %v7939
      %v7948 = vadd.f32 %v7898, %v7940
      %v7949 = vadd.f32 %v7898, %v7941
      %v7950 = vadd.f32 %v7898, %v7942
      %v7951 = vadd.f32 %v7898, %v7943
      %v7952 = vld [vmem:[%s22 + $0x1] sm:$0x1]
      %v7953 = vlaneseq
      %v7954 = vshrl.u32 %v7953, 7
      %v7955 = vsub.s32 0, %v7954
      %v7956 = vrot.slane %v7952, %v7955
      %v7957 = vmul.f32 %v7956, 0.0
      %v7958 = vmul.f32 %v7853, %v7956
      %v7959 = vmul.f32 %v7858, %v7956
      %v7960 = vmul.f32 %v7863, %v7956
      %v7961 = vmul.f32 %v7868, %v7956
      %v7962 = vmul.f32 %v7873, %v7956
      %v7963 = vmul.f32 %v7878, %v7956
      %v7964 = vmul.f32 %v7883, %v7956
      %v7965 = vadd.f32 %v7944, %v7957
      %v7966 = vadd.f32 %v7945, %v7958
      %v7967 = vadd.f32 %v7946, %v7959
      %v7968 = vadd.f32 %v7947, %v7960
      %v7969 = vadd.f32 %v7948, %v7961
      %v7970 = vadd.f32 %v7949, %v7962
      %v7971 = vadd.f32 %v7950, %v7963
      %v7972 = vadd.f32 %v7951, %v7964
      %v7973 = vrot.slane 0.0, 1
      %v7974 = vrot.slane %v7853, 1
      %v7975 = vrot.slane %v7858, 1
      %v7976 = vrot.slane %v7863, 1
      %v7977 = vrot.slane %v7868, 1
      %v7978 = vrot.slane %v7873, 1
      %v7979 = vrot.slane %v7878, 1
      %v7980 = vrot.slane %v7883, 1
      %vm7989 = vcmask 1046528
      %v7990 = vsel %vm7989, %v7973, 0.0
      %v7991 = vsel %vm7989, %v7974, 0.0
      %v7992 = vsel %vm7989, %v7975, 0.0
      %v7993 = vsel %vm7989, %v7976, 0.0
      %v7994 = vsel %vm7989, %v7977, 0.0
      %v7995 = vsel %vm7989, %v7978, 0.0
      %v7996 = vsel %vm7989, %v7979, 0.0
      %v7997 = vsel %vm7989, %v7980, 0.0
      %v7998 = vld [vmem:[%s22 + $0x2] sm:$0x1]
      %v7999 = vlaneseq
      %v8000 = vshrl.u32 %v7999, 7
      %v8001 = vsub.s32 0, %v8000
      %v8002 = vrot.slane %v7998, %v8001
      %v8003 = vmul.f32 %v7990, %v8002
      %v8004 = vmul.f32 %v7991, %v8002
      %v8005 = vmul.f32 %v7992, %v8002
      %v8006 = vmul.f32 %v7993, %v8002
      %v8007 = vmul.f32 %v7994, %v8002
      %v8008 = vmul.f32 %v7995, %v8002
      %v8009 = vmul.f32 %v7996, %v8002
      %v8010 = vmul.f32 %v7997, %v8002
      %v8011 = vadd.f32 %v7965, %v8003
      %v8012 = vadd.f32 %v7966, %v8004
      %v8013 = vadd.f32 %v7967, %v8005
      %v8014 = vadd.f32 %v7968, %v8006
      %v8015 = vadd.f32 %v7969, %v8007
      %v8016 = vadd.f32 %v7970, %v8008
      %v8017 = vadd.f32 %v7971, %v8009
      %v8018 = vadd.f32 %v7972, %v8010
      %v8020 = vrot.slane %v7888, 7
      %v8022 = vsel %vm1779, 0.0, %v8020
      %v8023 = vld [vmem:[%s22 + $0x3] sm:$0x1]
      %v8024 = vlaneseq
      %v8025 = vshrl.u32 %v8024, 7
      %v8026 = vsub.s32 0, %v8025
      %v8027 = vrot.slane %v8023, %v8026
      %v8028 = vmul.f32 %v7924, %v8027
      %v8029 = vmul.f32 %v7925, %v8027
      %v8030 = vmul.f32 %v7926, %v8027
      %v8031 = vmul.f32 %v7927, %v8027
      %v8032 = vmul.f32 %v7928, %v8027
      %v8033 = vmul.f32 %v7929, %v8027
      %v8034 = vmul.f32 %v7930, %v8027
      %v8035 = vmul.f32 %v8022, %v8027
      %v8036 = vadd.f32 %v8011, %v8028
      %v8037 = vadd.f32 %v8012, %v8029
      %v8038 = vadd.f32 %v8013, %v8030
      %v8039 = vadd.f32 %v8014, %v8031
      %v8040 = vadd.f32 %v8015, %v8032
      %v8041 = vadd.f32 %v8016, %v8033
      %v8042 = vadd.f32 %v8017, %v8034
      %v8043 = vadd.f32 %v8018, %v8035
      %v8044 = vld [vmem:[%s22 + $0x4] sm:$0x1]
      %v8045 = vlaneseq
      %v8046 = vshrl.u32 %v8045, 7
      %v8047 = vsub.s32 0, %v8046
      %v8048 = vrot.slane %v8044, %v8047
      %v8049 = vmul.f32 %v7853, %v8048
      %v8050 = vmul.f32 %v7858, %v8048
      %v8051 = vmul.f32 %v7863, %v8048
      %v8052 = vmul.f32 %v7868, %v8048
      %v8053 = vmul.f32 %v7873, %v8048
      %v8054 = vmul.f32 %v7878, %v8048
      %v8055 = vmul.f32 %v7883, %v8048
      %v8056 = vmul.f32 %v7888, %v8048
      %v8057 = vadd.f32 %v8036, %v8049
      %v8058 = vadd.f32 %v8037, %v8050
      %v8059 = vadd.f32 %v8038, %v8051
      %v8060 = vadd.f32 %v8039, %v8052
      %v8061 = vadd.f32 %v8040, %v8053
      %v8062 = vadd.f32 %v8041, %v8054
      %v8063 = vadd.f32 %v8042, %v8055
      %v8064 = vadd.f32 %v8043, %v8056
      %v8065 = vrot.slane %v7888, 1
      %v8067 = vsel %vm7989, %v8065, 0.0
      %v8068 = vld [vmem:[%s22 + $0x5] sm:$0x1]
      %v8069 = vlaneseq
      %v8070 = vshrl.u32 %v8069, 7
      %v8071 = vsub.s32 0, %v8070
      %v8072 = vrot.slane %v8068, %v8071
      %v8073 = vmul.f32 %v7991, %v8072
      %v8074 = vmul.f32 %v7992, %v8072
      %v8075 = vmul.f32 %v7993, %v8072
      %v8076 = vmul.f32 %v7994, %v8072
      %v8077 = vmul.f32 %v7995, %v8072
      %v8078 = vmul.f32 %v7996, %v8072
      %v8079 = vmul.f32 %v7997, %v8072
      %v8080 = vmul.f32 %v8067, %v8072
      %v8081 = vadd.f32 %v8057, %v8073
      %v8082 = vadd.f32 %v8058, %v8074
      %v8083 = vadd.f32 %v8059, %v8075
      %v8084 = vadd.f32 %v8060, %v8076
      %v8085 = vadd.f32 %v8061, %v8077
      %v8086 = vadd.f32 %v8062, %v8078
      %v8087 = vadd.f32 %v8063, %v8079
      %v8088 = vadd.f32 %v8064, %v8080
      %v8089 = vld [vmem:[%s22 + $0x6] sm:$0x1]
      %v8090 = vlaneseq
      %v8091 = vshrl.u32 %v8090, 7
      %v8092 = vsub.s32 0, %v8091
      %v8093 = vrot.slane %v8089, %v8092
      %v8094 = vmul.f32 %v7925, %v8093
      %v8095 = vmul.f32 %v7926, %v8093
      %v8096 = vmul.f32 %v7927, %v8093
      %v8097 = vmul.f32 %v7928, %v8093
      %v8098 = vmul.f32 %v7929, %v8093
      %v8099 = vmul.f32 %v7930, %v8093
      %v8100 = vmul.f32 %v8022, %v8093
      %v8101 = vmul.f32 %v7923, %v8093
      %v8102 = vadd.f32 %v8081, %v8094
      %v8103 = vadd.f32 %v8082, %v8095
      %v8104 = vadd.f32 %v8083, %v8096
      %v8105 = vadd.f32 %v8084, %v8097
      %v8106 = vadd.f32 %v8085, %v8098
      %v8107 = vadd.f32 %v8086, %v8099
      %v8108 = vadd.f32 %v8087, %v8100
      %v8109 = vadd.f32 %v8088, %v8101
      %v8110 = vld [vmem:[%s22 + $0x7] sm:$0x1]
      %v8111 = vlaneseq
      %v8112 = vshrl.u32 %v8111, 7
      %v8113 = vsub.s32 0, %v8112
      %v8114 = vrot.slane %v8110, %v8113
      %v8115 = vmul.f32 %v7858, %v8114
      %v8116 = vmul.f32 %v7863, %v8114
      %v8117 = vmul.f32 %v7868, %v8114
      %v8118 = vmul.f32 %v7873, %v8114
      %v8119 = vmul.f32 %v7878, %v8114
      %v8120 = vmul.f32 %v7883, %v8114
      %v8121 = vmul.f32 %v7888, %v8114
      %v8122 = vmul.f32 %v8114, 0.0
      %v8123 = vadd.f32 %v8102, %v8115
      %v8124 = vadd.f32 %v8103, %v8116
      %v8125 = vadd.f32 %v8104, %v8117
      %v8126 = vadd.f32 %v8105, %v8118
      %v8127 = vadd.f32 %v8106, %v8119
      %v8128 = vadd.f32 %v8107, %v8120
      %v8129 = vadd.f32 %v8108, %v8121
      %v8130 = vadd.f32 %v8109, %v8122
      %v8131 = vld [vmem:[%s22 + $0x8] sm:$0x1]
      %v8132 = vlaneseq
      %v8133 = vshrl.u32 %v8132, 7
      %v8134 = vsub.s32 0, %v8133
      %v8135 = vrot.slane %v8131, %v8134
      %v8136 = vmul.f32 %v7992, %v8135
      %v8137 = vmul.f32 %v7993, %v8135
      %v8138 = vmul.f32 %v7994, %v8135
      %v8139 = vmul.f32 %v7995, %v8135
      %v8140 = vmul.f32 %v7996, %v8135
      %v8141 = vmul.f32 %v7997, %v8135
      %v8142 = vmul.f32 %v8067, %v8135
      %v8143 = vmul.f32 %v7990, %v8135
      %v8144 = vadd.f32 %v8123, %v8136
      %v8145 = vadd.f32 %v8124, %v8137
      %v8146 = vadd.f32 %v8125, %v8138
      %v8147 = vadd.f32 %v8126, %v8139
      %v8148 = vadd.f32 %v8127, %v8140
      %v8149 = vadd.f32 %v8128, %v8141
      %v8150 = vadd.f32 %v8129, %v8142
      %v8151 = vadd.f32 %v8130, %v8143
      %v8152 = vadd.f32 %v8144, %v7853
      %v8153 = vadd.f32 %v8145, %v7858
      %v8154 = vadd.f32 %v8146, %v7863
      %v8155 = vadd.f32 %v8147, %v7868
      %v8156 = vadd.f32 %v8148, %v7873
      %v8157 = vadd.f32 %v8149, %v7878
      %v8158 = vadd.f32 %v8150, %v7883
      %v8159 = vadd.f32 %v8151, %v7888
      %8160 = vst.msk [vmem:[%s812] sm:$0xff] %vm842, %v8152
      %8161 = vst.msk [vmem:[%s812 + $0x8] sm:$0xff] %vm842, %v8153
      %8162 = vst.msk [vmem:[%s812 + $0x10] sm:$0xff] %vm842, %v8154
      %8163 = vst.msk [vmem:[%s812 + $0x18] sm:$0xff] %vm842, %v8155
      %8164 = vst.msk [vmem:[%s812 + $0x20] sm:$0xff] %vm842, %v8156
      %8165 = vst.msk [vmem:[%s812 + $0x28] sm:$0xff] %vm842, %v8157
      %8166 = vst.msk [vmem:[%s812 + $0x30] sm:$0xff] %vm842, %v8158
      %8167 = vst.msk [vmem:[%s812 + $0x38] sm:$0xff] %vm842, %v8159
      %p8168 = scmp.lt.s32.totalorder %s37, 1
      %s8169 = scalar_select %p8168, %s37, 1
      %s8170 = smul.addr %s8169, 8
      %s8171 = smul.addr %s8170, 8
      %s8172 = scalar_lea.vmem %s24, %s8171
      %p8173 = scmp.lt.s32.totalorder %s37, 1
      %s8174 = scalar_select %p8173, %s37, 1
      %s8175 = smul.addr %s8174, 8
      %s8176 = smul.addr %s8175, 8
      %s8177 = scalar_lea.vmem %s25, %s8176
      // Predicated region
      $region124: #{cross_mamba_forward.1} parent=115 // pred_check
        %p8178 = pneg %p574
      $region125: #{cross_mamba_forward.1} parent=115 // pred_check_branch
        %8180 = sbr.rel (%p8178) target = $region127
      $region126: #{cross_mamba_forward.1} parent=115 // pred_region
        _
      $region127: #{cross_mamba_forward.1} parent=115 // pred_fallthru
        _
      // Predicated region
      $region128: #{cross_mamba_forward.1} parent=115 // pred_check
        %p8181 = pneg %p600
      $region129: #{cross_mamba_forward.1} parent=115 // pred_check_branch
        %8183 = sbr.rel (%p8181) target = $region131
      $region130: #{cross_mamba_forward.1} parent=115 // pred_region
        _
      $region131: #{cross_mamba_forward.1} parent=115 // pred_fallthru
        _
    $region116: #{cross_mamba_forward.1} parent=5 // pred_fallthru
      _
    %p8184 = scmp.le.s32.totalorder 2, %s32
    // Predicated region
    $region132: #{cross_mamba_forward.1} parent=5 // pred_check
      %p8185 = pneg %p8184
    $region133: #{cross_mamba_forward.1} parent=5 // pred_check_branch
      %8187 = sbr.rel (%p8185) target = $region135
    $region134: #{cross_mamba_forward.1} parent=5 // pred_region
      %s8188 = ssub.s32 %s32, 2
      // Predicated region
      $region136: #{cross_mamba_forward.1} parent=134 // pred_check
        %p8189 = pneg %p580
      $region137: #{cross_mamba_forward.1} parent=134 // pred_check_branch
        %8191 = sbr.rel (%p8189) target = $region139
      $region138: #{cross_mamba_forward.1} parent=134 // pred_region
        %p8192 = scmp.lt.s32.totalorder %s38, 1
        %s8193 = scalar_select %p8192, %s38, 1
        %s8194 = smul.addr %s8193, 8
        %s8195 = smul.addr %s8194, 8
        %s8196 = scalar_lea.vmem %s24, %s8195
      $region139: #{cross_mamba_forward.1} parent=134 // pred_fallthru
        _
      // Predicated region
      $region140: #{cross_mamba_forward.1} parent=134 // pred_check
        %p8197 = pneg %p606
      $region141: #{cross_mamba_forward.1} parent=134 // pred_check_branch
        %8199 = sbr.rel (%p8197) target = $region143
      $region142: #{cross_mamba_forward.1} parent=134 // pred_region
        %p8200 = scmp.lt.s32.totalorder %s38, 1
        %s8201 = scalar_select %p8200, %s38, 1
        %s8202 = smul.addr %s8201, 8
        %s8203 = smul.addr %s8202, 8
        %s8204 = scalar_lea.vmem %s25, %s8203
      $region143: #{cross_mamba_forward.1} parent=134 // pred_fallthru
        _
    $region135: #{cross_mamba_forward.1} parent=5 // pred_fallthru
      _
  $region6: #{cross_mamba_forward.1} parent=0 // loop_footer
    %s36 = sadd.s32 1, %s32
  $region7: #{cross_mamba_forward.1} parent=0 // loop_footer_branch
    %31 = sbr.rel target = $region3
  $region8: #{cross_mamba_forward.1} parent=0 // loop_exit
    _

</llo_original>
